<compile_context>
chip_gen: v7x
topology: tpu7x:2x2x1
jax: 0.10.0
libtpu: 0.0.40
codegen_flags: <defaults>
</compile_context>

<pallas_src>
import functools
import re

import jax
import jax.numpy as jnp
from jax.experimental import pallas as pl
from jax.experimental.pallas import tpu as pltpu


def _round_up(x, m):
    return ((x + m - 1) // m) * m


def _tpu_generation():
    try:
        kind = jax.devices()[0].device_kind
    except Exception:
        return 0
    m = re.search(r"(\d+)", kind)
    return int(m.group(1)) if m else 0


def _has_bf16_vpu():
    # v6e / v7x have bf16 VALU; v5e and older do not.
    return _tpu_generation() >= 6


def _vmem_capacity_bytes():
    try:
        return int(pltpu.get_tpu_info().vmem_capacity_bytes)
    except Exception:
        return 64 * 1024 * 1024          # conservative (v7x per-TensorCore capacity)


def _pad_tile_bytes(rows, cols, esz):
    # VMEM buffers are padded to (8, 128) tiles along the last two dims.
    return _round_up(max(rows, 1), 8) * _round_up(max(cols, 1), 128) * esz


def _pick_tiling(P, A, F, Cin, Cout, KK, c_esz, fold_esz, smp_esz, out_esz,
                 vmem_limit, p_tile):
    """Pick the P-tile TP (multiple of 128) and the fold-axis chunk FC from a VMEM budget."""
    p_cap = _round_up(P, 128)
    if p_tile is not None:
        cands = [min(max(128, _round_up(p_tile, 128)), p_cap)]
    else:
        cands = sorted({min(c, p_cap) for c in (512, 384, 256, 128)}, reverse=True)

    chunk_bytes = 2 * 1024 * 1024        # per-tap tmp target (review: keep it to a few MiB)
    # Resident (double-buffered) image + weights do not scale with TP.
    fixed = (2 * _pad_tile_bytes(F * Cin, A, c_esz)
             + 2 * _pad_tile_bytes(Cout, KK * Cin, c_esz))

    def fc_for(tp, budget):
        return max(1, min(F, budget // max(1, Cin * tp * fold_esz)))

    for tp in cands:
        fc = fc_for(tp, chunk_bytes)
        var = (2 * _pad_tile_bytes(2 * KK, tp, 4)            # packed coords (double buffered)
               + 2 * _pad_tile_bytes(Cout, tp, out_esz)       # output tile (double buffered)
               + _pad_tile_bytes(KK * Cin, tp, smp_esz)       # tap scratch
               + 2 * _pad_tile_bytes(fc * Cin, tp, fold_esz)  # tmp scratch + matmul result
               + _pad_tile_bytes(Cin, tp, fold_esz)           # fold accumulator
               + _pad_tile_bytes(A, tp, 4)                    # wa (f32 relu math)
               + _pad_tile_bytes(A, tp, c_esz)                # wa cast for the MXU
               + _pad_tile_bytes(Cout, tp, 4))                # final f32 matmul result
        need = int(1.2 * (fixed + var)) + 2 * 1024 * 1024
        if need <= vmem_limit:
            return tp, fc
    tp = cands[-1]
    return tp, fc_for(tp, 1024 * 1024)


def _deform_conv_kernel(x_ref, coord_ref, w_ref, out_ref, tmp_ref, smp_ref, *,
                        A, F, Cin, KK, FC, TP, compute_dtype, fold_dtype,
                        smp_dtype, cast_smp):
    # x_ref    : (1, F*Cin, A)   image (compute_dtype), resident across the P tiles of b
    # coord_ref: (1, 2*KK, TP)   f32; rows [0,KK) = MXU-contraction-axis coords,
    #                                 rows [KK,2KK) = fold-axis coords
    # w_ref    : (Cout, KK*Cin)  conv weights (compute_dtype)
    # out_ref  : (1, Cout, TP)   lane-dense output tile
    # tmp_ref  : (FC*Cin, TP)    fold_dtype scratch: row-contracted image for one F-chunk
    # smp_ref  : (KK*Cin, TP)    smp_dtype scratch: all sampled taps
    a_idx = jax.lax.broadcasted_iota(jnp.int32, (A, 1), 0).astype(jnp.float32)

    # KK is small & static -> full unroll; slice offsets are all static Python ints.
    for t in range(KK):
        ca = coord_ref[0, t:t + 1, :]                        # (1, TP) f32
        cf = coord_ref[0, KK + t:KK + t + 1, :]              # (1, TP) f32
        # Bilinear weight along the MXU contraction axis: relu math in f32, one cast
        # for the MXU.  (Coordinates must stay f32; the relu result is in [0, 1].)
        wa = jnp.maximum(0.0, 1.0 - jnp.abs(ca - a_idx)).astype(compute_dtype)   # (A, TP)

        acc = jnp.zeros((Cin, TP), dtype=fold_dtype)
        # Chunk the fold axis so the per-tap temporary stays a few MiB at large F*Cin.
        for f0 in range(0, F, FC):
            fc = min(FC, F - f0)
            # (fc*Cin, A) @ (A, TP) on the MXU: contraction over the larger spatial dim.
            tmp_ref[0:fc * Cin, :] = jnp.dot(
                x_ref[0, f0 * Cin:(f0 + fc) * Cin, :], wa,
                preferred_element_type=fold_dtype)
            # Fold the smaller spatial dim on the VPU: one multiply-add per fold row,
            # with the (1, TP) row weight computed inline (no Cin-expanded weights and
            # no 0/1 selection matmul).
            for df in range(fc):
                wf = jnp.maximum(0.0, 1.0 - jnp.abs(cf - float(f0 + df)))         # (1, TP)
                acc = acc + tmp_ref[df * Cin:(df + 1) * Cin, :] * wf.astype(fold_dtype)

        smp_ref[t * Cin:(t + 1) * Cin, :] = acc.astype(smp_dtype)

    # Single fused contraction over (tap, channel).
    smp = smp_ref[...]
    if cast_smp:
        smp = smp.astype(compute_dtype)
    out = jnp.dot(w_ref[...], smp, preferred_element_type=jnp.float32)            # (Cout, TP)
    out_ref[0] = out.astype(out_ref.dtype)


def deform_conv2d(x, offset, weight, *, kernel_size, stride=1, padding=0,
                  dilation=1, compute_dtype=jnp.bfloat16, out_dtype=jnp.float32,
                  p_tile=None):
    """x: [B, Cin, H, W]; offset: [B, 2*K*K, OH, OW]; weight: [Cout, Cin, K, K]."""
    B, Cin, H, W = x.shape
    Cout = weight.shape[0]
    k, s, p, d = kernel_size, stride, padding, dilation
    KK = k * k
    assert weight.shape == (Cout, Cin, k, k), weight.shape

    OH = (H + 2 * p - (d * (k - 1) + 1)) // s + 1
    OW = (W + 2 * p - (d * (k - 1) + 1)) // s + 1
    assert OH > 0 and OW > 0, "convolution input is too small"
    P = OH * OW
    assert offset.shape == (B, 2 * KK, OH, OW), offset.shape

    compute_dtype = jnp.dtype(compute_dtype)
    out_dtype = jnp.dtype(out_dtype)
    c_esz = compute_dtype.itemsize

    # MXU contracts the larger spatial dim A; the smaller one F is folded on the VPU.
    swap = W > H
    A, F = (W, H) if swap else (H, W)

    # dtype plumbing: keep narrow types only where row blocks of Cin stay 32-bit-word
    # aligned along sublanes; use a bf16 VPU fold only on generations with a bf16 VALU.
    elem_ok = (Cin * c_esz) % 4 == 0
    smp_dtype = compute_dtype if elem_ok else jnp.dtype(jnp.float32)
    if compute_dtype == jnp.dtype(jnp.bfloat16) and elem_ok and _has_bf16_vpu():
        fold_dtype = jnp.dtype(jnp.bfloat16)
    else:
        fold_dtype = jnp.dtype(jnp.float32)

    # ---- VMEM budget -> TP / fold chunk ----
    cap = _vmem_capacity_bytes()
    vmem_limit = max(32 << 20, min(int(0.8 * cap), cap - (8 << 20)))
    TP, FC = _pick_tiling(P, A, F, Cin, Cout, KK, c_esz, fold_dtype.itemsize,
                          smp_dtype.itemsize, out_dtype.itemsize, vmem_limit, p_tile)
    P_pad = _round_up(P, TP)

    # ---- glue: transposed image, packed fractional coords, flattened weights ----
    if swap:   # contract over W, fold over H: rows = h*Cin + c
        x_t = x.transpose(0, 2, 1, 3).reshape(B, F * Cin, A).astype(compute_dtype)
    else:      # contract over H, fold over W: rows = w*Cin + c
        x_t = x.transpose(0, 3, 1, 2).reshape(B, F * Cin, A).astype(compute_dtype)

    # Sampling coords in the UNPADDED frame: zero padding is reproduced exactly by the
    # ReLU-bilinear weights vanishing outside [0, H-1] x [0, W-1].
    # TODO(synk): convention matches this file's forward() (start = k//2 + d - 1 - p, +0.5
    #             shift), not torchvision/mmcv deform_conv2d.
    start = k // 2 + d - 1 - p
    off = offset.reshape(B, KK, 2, OH, OW).astype(jnp.float32)
    ki = jnp.arange(k, dtype=jnp.float32)
    tap = (ki - k // 2) * d
    tap_y = jnp.repeat(tap, k)                   # tap t = i*k + j -> row offset i
    tap_x = jnp.tile(tap, k)                     #                -> col offset j
    oh = jnp.arange(OH, dtype=jnp.float32)
    ow = jnp.arange(OW, dtype=jnp.float32)
    ys = (start + oh * s)[None, None, :, None] + tap_y[None, :, None, None] \
        + off[:, :, 0] + 0.5
    xs = (start + ow * s)[None, None, None, :] + tap_x[None, :, None, None] \
        + off[:, :, 1] + 0.5
    ys = ys.reshape(B, KK, P)
    xs = xs.reshape(B, KK, P)
    a_coord, f_coord = (xs, ys) if swap else (ys, xs)
    coords = jnp.concatenate([a_coord, f_coord], axis=1)       # (B, 2*KK, P), one DMA stream
    if P_pad != P:
        pad_val = float(-2 * (A + F))            # far outside -> zero bilinear weight
        coords = jnp.pad(coords, ((0, 0), (0, 0), (0, P_pad - P)),
                         constant_values=pad_val)

    # weight [Cout, Cin, kh, kw] -> [Cout, KK*Cin] with flat index (kh*k+kw)*Cin + c.
    w_fT = weight.transpose(0, 2, 3, 1).reshape(Cout, KK * Cin).astype(compute_dtype)

    kernel = functools.partial(
        _deform_conv_kernel, A=A, F=F, Cin=Cin, KK=KK, FC=FC, TP=TP,
        compute_dtype=compute_dtype, fold_dtype=fold_dtype, smp_dtype=smp_dtype,
        cast_smp=(smp_dtype != compute_dtype))

    flops = 2 * B * P_pad * (KK * (F * Cin * A + F * Cin) + Cout * KK * Cin)
    bytes_accessed = (B * F * Cin * A * c_esz           # image (resident per batch entry)
                      + B * 2 * KK * P_pad * 4          # packed coords
                      + Cout * KK * Cin * c_esz         # weights
                      + B * Cout * P_pad * out_dtype.itemsize)

    out_t = pl.pallas_call(
        kernel,
        out_shape=jax.ShapeDtypeStruct((B, Cout, P_pad), out_dtype),
        grid_spec=pltpu.PrefetchScalarGridSpec(
            num_scalar_prefetch=0,
            grid=(B, P_pad // TP),
            in_specs=[
                # image stays resident in VMEM across all P tiles of a batch entry
                pl.BlockSpec((1, F * Cin, A), lambda b, pt: (b, 0, 0)),
                pl.BlockSpec((1, 2 * KK, TP), lambda b, pt: (b, 0, pt)),
                pl.BlockSpec((Cout, KK * Cin), lambda b, pt: (0, 0)),
            ],
            out_specs=pl.BlockSpec((1, Cout, TP), lambda b, pt: (b, 0, pt)),
            scratch_shapes=[pltpu.VMEM((FC * Cin, TP), fold_dtype),
                            pltpu.VMEM((KK * Cin, TP), smp_dtype)],
        ),
        compiler_params=pltpu.CompilerParams(
            dimension_semantics=("parallel", "parallel"),
            vmem_limit_bytes=int(vmem_limit)),
        cost_estimate=pl.CostEstimate(flops=int(flops), transcendentals=0,
                                      bytes_accessed=int(bytes_accessed)),
    )(x_t, coords, w_fT)

    # Already (B, Cout, P): slice off the P padding and reshape -> NCHW, no transpose.
    return out_t[:, :, :P].reshape(B, Cout, OH, OW)


def _reference_deform_conv(x, offset, weight, *, kernel_size, stride, padding,
                           dilation):
    """Pure-JAX dense reference of the same assumed sampling math (padded-image
    formulation, f32) — independent of the kernel's pad-free / separable / fused path."""
    B, Cin, H, W = x.shape
    Cout = weight.shape[0]
    k, s, p, d = kernel_size, stride, padding, dilation
    KK = k * k
    OH = (H + 2 * p - (d * (k - 1) + 1)) // s + 1
    OW = (W + 2 * p - (d * (k - 1) + 1)) // s + 1
    P = OH * OW
    hi = jax.lax.Precision.HIGHEST

    xp = jnp.pad(x, ((0, 0), (0, 0), (p, p), (p, p))).astype(jnp.float32)
    XH, XW = H + 2 * p, W + 2 * p
    Q = XH * XW
    xp_flat = xp.transpose(0, 2, 3, 1).reshape(B, Q, Cin)

    off = offset.reshape(B, KK, 2, OH, OW).astype(jnp.float32)
    ki = jnp.arange(k, dtype=jnp.float32)
    tap = (ki - k // 2) * d
    tap_y = jnp.repeat(tap, k)
    tap_x = jnp.tile(tap, k)
    start = k // 2 + d - 1
    ys = (start + jnp.arange(OH, dtype=jnp.float32) * s)[None, None, :, None] \
        + tap_y[None, :, None, None] + off[:, :, 0] + 0.5
    xs = (start + jnp.arange(OW, dtype=jnp.float32) * s)[None, None, None, :] \
        + tap_x[None, :, None, None] + off[:, :, 1] + 0.5
    ys = ys.reshape(B, KK, P)
    xs = xs.reshape(B, KK, P)

    rows = (jnp.arange(Q) // XW).astype(jnp.float32)
    cols = (jnp.arange(Q) % XW).astype(jnp.float32)
    wy = jnp.maximum(0.0, 1.0 - jnp.abs(ys[..., None] - rows))   # [B,KK,P,Q]
    wx = jnp.maximum(0.0, 1.0 - jnp.abs(xs[..., None] - cols))
    m = wy * wx
    sampled = jnp.einsum('bkpq,bqc->bkpc', m, xp_flat, precision=hi)
    w_flat = weight.transpose(2, 3, 1, 0).reshape(KK, Cin, Cout).astype(jnp.float32)
    out = jnp.einsum('bkpc,kco->bpo', sampled, w_flat, precision=hi)
    return out.reshape(B, OH, OW, Cout).transpose(0, 3, 1, 2)


if __name__ == "__main__":
    key = jax.random.PRNGKey(0)

    def run_case(case_id, B, Cin, Cout, H, W, k, s, p, d, compute_dtype, p_tile,
                 atol, rtol):
        kx, koff, kw_ = jax.random.split(jax.random.fold_in(key, case_id), 3)
        OH = (H + 2 * p - (d * (k - 1) + 1)) // s + 1
        OW = (W + 2 * p - (d * (k - 1) + 1)) // s + 1
        x = jax.random.normal(kx, (B, Cin, H, W), dtype=jnp.float32)
        offset = 0.5 * jax.random.normal(koff, (B, 2 * k * k, OH, OW),
                                         dtype=jnp.float32)
        # kaiming_uniform_ (nonlinearity='relu'): bound = sqrt(6 / fan_in)
        fan_in = Cin * k * k
        bound = (6.0 / fan_in) ** 0.5
        weight = jax.random.uniform(kw_, (Cout, Cin, k, k), dtype=jnp.float32,
                                    minval=-bound, maxval=bound)

        out = deform_conv2d(x, offset, weight, kernel_size=k, stride=s,
                            padding=p, dilation=d, compute_dtype=compute_dtype,
                            p_tile=p_tile)
        out = jax.block_until_ready(out)
        assert out.shape == (B, Cout, OH, OW), (case_id, out.shape)

        ref = _reference_deform_conv(x, offset, weight, kernel_size=k, stride=s,
                                     padding=p, dilation=d)
        err = float(jnp.max(jnp.abs(out - ref)))
        assert bool(jnp.allclose(out, ref, atol=atol, rtol=rtol)), (case_id, err)

    # 1) Default perf path: bf16 MXU operands (+ bf16 fold on >= v6), f32 accumulation.
    run_case(1, B=2, Cin=4, Cout=8, H=16, W=16, k=3, s=1, p=1, d=1,
             compute_dtype=jnp.bfloat16, p_tile=None, atol=1e-1, rtol=5e-2)
    # 2) f32 operands, explicit p_tile=128 -> multiple P tiles per batch entry.
    run_case(2, B=2, Cin=4, Cout=8, H=16, W=16, k=3, s=1, p=1, d=1,
             compute_dtype=jnp.float32, p_tile=128, atol=1e-1, rtol=5e-2)
    # 3) f32, stride 2, W > H (exercises the axis swap), odd Cin, P padded to the tile.
    run_case(3, B=1, Cin=3, Cout=8, H=10, W=12, k=3, s=2, p=1, d=1,
             compute_dtype=jnp.float32, p_tile=None, atol=1e-1, rtol=5e-2)
    # 4) bf16 with 8-aligned Cin (bf16 scratch/fold path), W > H, dilation 2.
    run_case(4, B=1, Cin=8, Cout=16, H=8, W=20, k=3, s=1, p=2, d=2,
             compute_dtype=jnp.bfloat16, p_tile=None, atol=1.5e-1, rtol=5e-2)

    print("KERNEL_OK")
</pallas_src>

<mosaic_0001>
module attributes {stable_mosaic.version = 11 : i64} {
  func.func @_deform_conv_kernel(%arg0: i32, %arg1: i32, %arg2: memref<1x64x16xbf16, #tpu.memory_space<vmem>>, %arg3: memref<1x18x256xf32, #tpu.memory_space<vmem>>, %arg4: memref<8x36xbf16, #tpu.memory_space<vmem>>, %arg5: memref<1x8x256xf32, #tpu.memory_space<vmem>>, %arg6: memref<64x256xf32, #tpu.memory_space<vmem>>, %arg7: memref<36x256xbf16, #tpu.memory_space<vmem>>) attributes {dimension_semantics = [#tpu.dimension_semantics<parallel>, #tpu.dimension_semantics<parallel>], iteration_bounds = array<i64: 2, 1>, scalar_prefetch = 0 : i64, scratch_operands = 2 : i64, tpu.core_type = #tpu.core_type<tc>, window_params = [{transform_indices = @transform_0, window_bounds = array<i64: 1, 64, 16>}, {transform_indices = @transform_1, window_bounds = array<i64: 1, 18, 256>}, {pipeline_mode = #tpu.pipeline_mode<synchronous>, transform_indices = @transform_2, window_bounds = array<i64: 8, 36>}, {transform_indices = @transform_3, window_bounds = array<i64: 1, 8, 256>}]} {
    %0 = tpu.iota {dimensions = array<i32: 0>} : vector<16x1xi32>
    %1 = arith.sitofp %0 : vector<16x1xi32> to vector<16x1xf32>
    %c0 = arith.constant 0 : index
    %c0_0 = arith.constant 0 : index
    %c0_1 = arith.constant 0 : index
    %2 = vector.load %arg3[%c0, %c0_0, %c0_1] : memref<1x18x256xf32, #tpu.memory_space<vmem>>, vector<1x1x256xf32>
    %3 = vector.shape_cast %2 : vector<1x1x256xf32> to vector<1x256xf32>
    %c0_2 = arith.constant 0 : index
    %c9 = arith.constant 9 : index
    %c0_3 = arith.constant 0 : index
    %4 = vector.load %arg3[%c0_2, %c9, %c0_3] : memref<1x18x256xf32, #tpu.memory_space<vmem>>, vector<1x1x256xf32>
    %5 = vector.shape_cast %4 : vector<1x1x256xf32> to vector<1x256xf32>
    %6 = vector.broadcast %3 : vector<1x256xf32> to vector<16x256xf32>
    %7 = vector.broadcast %1 : vector<16x1xf32> to vector<16x256xf32>
    %8 = arith.subf %6, %7 : vector<16x256xf32>
    %9 = math.absf %8 : vector<16x256xf32>
    %cst = arith.constant 1.000000e+00 : f32
    %10 = vector.broadcast %cst : f32 to vector<16x256xf32>
    %11 = arith.subf %10, %9 : vector<16x256xf32>
    %cst_4 = arith.constant 0.000000e+00 : f32
    %12 = vector.broadcast %cst_4 : f32 to vector<16x256xf32>
    %13 = arith.maximumf %12, %11 : vector<16x256xf32>
    %14 = arith.truncf %13 : vector<16x256xf32> to vector<16x256xbf16>
    %cst_5 = arith.constant 0.000000e+00 : f32
    %15 = vector.broadcast %cst_5 : f32 to vector<4x256xf32>
    %c0_6 = arith.constant 0 : index
    %c0_7 = arith.constant 0 : index
    %c0_8 = arith.constant 0 : index
    %16 = vector.load %arg2[%c0_6, %c0_7, %c0_8] : memref<1x64x16xbf16, #tpu.memory_space<vmem>>, vector<1x64x16xbf16>
    %17 = vector.shape_cast %16 : vector<1x64x16xbf16> to vector<64x16xbf16>
    %cst_9 = arith.constant dense<0.000000e+00> : vector<64x256xf32>
    %18 = tpu.matmul %17, %14, %cst_9 {dimension_numbers = #tpu.dot_dimension_numbers<[1], [0], [0], [1], [0, 0, 1, 1], [], []>} : vector<64x16xbf16>, vector<16x256xbf16>, vector<64x256xf32> -> vector<64x256xf32>
    %c0_10 = arith.constant 0 : index
    %c0_11 = arith.constant 0 : index
    %19 = vector.load %arg6[%c0_10, %c0_11] : memref<64x256xf32, #tpu.memory_space<vmem>>, vector<64x256xf32>
    tpu.vector_store %arg6[%c0_10, %c0_11], %18 {strides = array<i32>} : memref<64x256xf32, #tpu.memory_space<vmem>>, vector<64x256xf32>,
    %cst_12 = arith.constant 0.000000e+00 : f32
    %20 = vector.broadcast %cst_12 : f32 to vector<1x256xf32>
    %21 = arith.subf %5, %20 : vector<1x256xf32>
    %22 = math.absf %21 : vector<1x256xf32>
    %cst_13 = arith.constant 1.000000e+00 : f32
    %23 = vector.broadcast %cst_13 : f32 to vector<1x256xf32>
    %24 = arith.subf %23, %22 : vector<1x256xf32>
    %cst_14 = arith.constant 0.000000e+00 : f32
    %25 = vector.broadcast %cst_14 : f32 to vector<1x256xf32>
    %26 = arith.maximumf %25, %24 : vector<1x256xf32>
    %c0_15 = arith.constant 0 : index
    %c0_16 = arith.constant 0 : index
    %27 = vector.load %arg6[%c0_15, %c0_16] : memref<64x256xf32, #tpu.memory_space<vmem>>, vector<4x256xf32>
    %28 = vector.broadcast %26 : vector<1x256xf32> to vector<4x256xf32>
    %29 = arith.mulf %27, %28 : vector<4x256xf32>
    %30 = arith.addf %15, %29 : vector<4x256xf32>
    %cst_17 = arith.constant 1.000000e+00 : f32
    %31 = vector.broadcast %cst_17 : f32 to vector<1x256xf32>
    %32 = arith.subf %5, %31 : vector<1x256xf32>
    %33 = math.absf %32 : vector<1x256xf32>
    %cst_18 = arith.constant 1.000000e+00 : f32
    %34 = vector.broadcast %cst_18 : f32 to vector<1x256xf32>
    %35 = arith.subf %34, %33 : vector<1x256xf32>
    %cst_19 = arith.constant 0.000000e+00 : f32
    %36 = vector.broadcast %cst_19 : f32 to vector<1x256xf32>
    %37 = arith.maximumf %36, %35 : vector<1x256xf32>
    %c4 = arith.constant 4 : index
    %c0_20 = arith.constant 0 : index
    %38 = vector.load %arg6[%c4, %c0_20] : memref<64x256xf32, #tpu.memory_space<vmem>>, vector<4x256xf32>
    %39 = vector.broadcast %37 : vector<1x256xf32> to vector<4x256xf32>
    %40 = arith.mulf %38, %39 : vector<4x256xf32>
    %41 = arith.addf %30, %40 : vector<4x256xf32>
    %cst_21 = arith.constant 2.000000e+00 : f32
    %42 = vector.broadcast %cst_21 : f32 to vector<1x256xf32>
    %43 = arith.subf %5, %42 : vector<1x256xf32>
    %44 = math.absf %43 : vector<1x256xf32>
    %cst_22 = arith.constant 1.000000e+00 : f32
    %45 = vector.broadcast %cst_22 : f32 to vector<1x256xf32>
    %46 = arith.subf %45, %44 : vector<1x256xf32>
    %cst_23 = arith.constant 0.000000e+00 : f32
    %47 = vector.broadcast %cst_23 : f32 to vector<1x256xf32>
    %48 = arith.maximumf %47, %46 : vector<1x256xf32>
    %c8 = arith.constant 8 : index
    %c0_24 = arith.constant 0 : index
    %49 = vector.load %arg6[%c8, %c0_24] : memref<64x256xf32, #tpu.memory_space<vmem>>, vector<4x256xf32>
    %50 = vector.broadcast %48 : vector<1x256xf32> to vector<4x256xf32>
    %51 = arith.mulf %49, %50 : vector<4x256xf32>
    %52 = arith.addf %41, %51 : vector<4x256xf32>
    %cst_25 = arith.constant 3.000000e+00 : f32
    %53 = vector.broadcast %cst_25 : f32 to vector<1x256xf32>
    %54 = arith.subf %5, %53 : vector<1x256xf32>
    %55 = math.absf %54 : vector<1x256xf32>
    %cst_26 = arith.constant 1.000000e+00 : f32
    %56 = vector.broadcast %cst_26 : f32 to vector<1x256xf32>
    %57 = arith.subf %56, %55 : vector<1x256xf32>
    %cst_27 = arith.constant 0.000000e+00 : f32
    %58 = vector.broadcast %cst_27 : f32 to vector<1x256xf32>
    %59 = arith.maximumf %58, %57 : vector<1x256xf32>
    %c12 = arith.constant 12 : index
    %c0_28 = arith.constant 0 : index
    %60 = vector.load %arg6[%c12, %c0_28] : memref<64x256xf32, #tpu.memory_space<vmem>>, vector<4x256xf32>
    %61 = vector.broadcast %59 : vector<1x256xf32> to vector<4x256xf32>
    %62 = arith.mulf %60, %61 : vector<4x256xf32>
    %63 = arith.addf %52, %62 : vector<4x256xf32>
    %cst_29 = arith.constant 4.000000e+00 : f32
    %64 = vector.broadcast %cst_29 : f32 to vector<1x256xf32>
    %65 = arith.subf %5, %64 : vector<1x256xf32>
    %66 = math.absf %65 : vector<1x256xf32>
    %cst_30 = arith.constant 1.000000e+00 : f32
    %67 = vector.broadcast %cst_30 : f32 to vector<1x256xf32>
    %68 = arith.subf %67, %66 : vector<1x256xf32>
    %cst_31 = arith.constant 0.000000e+00 : f32
    %69 = vector.broadcast %cst_31 : f32 to vector<1x256xf32>
    %70 = arith.maximumf %69, %68 : vector<1x256xf32>
    %c16 = arith.constant 16 : index
    %c0_32 = arith.constant 0 : index
    %71 = vector.load %arg6[%c16, %c0_32] : memref<64x256xf32, #tpu.memory_space<vmem>>, vector<4x256xf32>
    %72 = vector.broadcast %70 : vector<1x256xf32> to vector<4x256xf32>
    %73 = arith.mulf %71, %72 : vector<4x256xf32>
    %74 = arith.addf %63, %73 : vector<4x256xf32>
    %cst_33 = arith.constant 5.000000e+00 : f32
    %75 = vector.broadcast %cst_33 : f32 to vector<1x256xf32>
    %76 = arith.subf %5, %75 : vector<1x256xf32>
    %77 = math.absf %76 : vector<1x256xf32>
    %cst_34 = arith.constant 1.000000e+00 : f32
    %78 = vector.broadcast %cst_34 : f32 to vector<1x256xf32>
    %79 = arith.subf %78, %77 : vector<1x256xf32>
    %cst_35 = arith.constant 0.000000e+00 : f32
    %80 = vector.broadcast %cst_35 : f32 to vector<1x256xf32>
    %81 = arith.maximumf %80, %79 : vector<1x256xf32>
    %c20 = arith.constant 20 : index
    %c0_36 = arith.constant 0 : index
    %82 = vector.load %arg6[%c20, %c0_36] : memref<64x256xf32, #tpu.memory_space<vmem>>, vector<4x256xf32>
    %83 = vector.broadcast %81 : vector<1x256xf32> to vector<4x256xf32>
    %84 = arith.mulf %82, %83 : vector<4x256xf32>
    %85 = arith.addf %74, %84 : vector<4x256xf32>
    %cst_37 = arith.constant 6.000000e+00 : f32
    %86 = vector.broadcast %cst_37 : f32 to vector<1x256xf32>
    %87 = arith.subf %5, %86 : vector<1x256xf32>
    %88 = math.absf %87 : vector<1x256xf32>
    %cst_38 = arith.constant 1.000000e+00 : f32
    %89 = vector.broadcast %cst_38 : f32 to vector<1x256xf32>
    %90 = arith.subf %89, %88 : vector<1x256xf32>
    %cst_39 = arith.constant 0.000000e+00 : f32
    %91 = vector.broadcast %cst_39 : f32 to vector<1x256xf32>
    %92 = arith.maximumf %91, %90 : vector<1x256xf32>
    %c24 = arith.constant 24 : index
    %c0_40 = arith.constant 0 : index
    %93 = vector.load %arg6[%c24, %c0_40] : memref<64x256xf32, #tpu.memory_space<vmem>>, vector<4x256xf32>
    %94 = vector.broadcast %92 : vector<1x256xf32> to vector<4x256xf32>
    %95 = arith.mulf %93, %94 : vector<4x256xf32>
    %96 = arith.addf %85, %95 : vector<4x256xf32>
    %cst_41 = arith.constant 7.000000e+00 : f32
    %97 = vector.broadcast %cst_41 : f32 to vector<1x256xf32>
    %98 = arith.subf %5, %97 : vector<1x256xf32>
    %99 = math.absf %98 : vector<1x256xf32>
    %cst_42 = arith.constant 1.000000e+00 : f32
    %100 = vector.broadcast %cst_42 : f32 to vector<1x256xf32>
    %101 = arith.subf %100, %99 : vector<1x256xf32>
    %cst_43 = arith.constant 0.000000e+00 : f32
    %102 = vector.broadcast %cst_43 : f32 to vector<1x256xf32>
    %103 = arith.maximumf %102, %101 : vector<1x256xf32>
    %c28 = arith.constant 28 : index
    %c0_44 = arith.constant 0 : index
    %104 = vector.load %arg6[%c28, %c0_44] : memref<64x256xf32, #tpu.memory_space<vmem>>, vector<4x256xf32>
    %105 = vector.broadcast %103 : vector<1x256xf32> to vector<4x256xf32>
    %106 = arith.mulf %104, %105 : vector<4x256xf32>
    %107 = arith.addf %96, %106 : vector<4x256xf32>
    %cst_45 = arith.constant 8.000000e+00 : f32
    %108 = vector.broadcast %cst_45 : f32 to vector<1x256xf32>
    %109 = arith.subf %5, %108 : vector<1x256xf32>
    %110 = math.absf %109 : vector<1x256xf32>
    %cst_46 = arith.constant 1.000000e+00 : f32
    %111 = vector.broadcast %cst_46 : f32 to vector<1x256xf32>
    %112 = arith.subf %111, %110 : vector<1x256xf32>
    %cst_47 = arith.constant 0.000000e+00 : f32
    %113 = vector.broadcast %cst_47 : f32 to vector<1x256xf32>
    %114 = arith.maximumf %113, %112 : vector<1x256xf32>
    %c32 = arith.constant 32 : index
    %c0_48 = arith.constant 0 : index
    %115 = vector.load %arg6[%c32, %c0_48] : memref<64x256xf32, #tpu.memory_space<vmem>>, vector<4x256xf32>
    %116 = vector.broadcast %114 : vector<1x256xf32> to vector<4x256xf32>
    %117 = arith.mulf %115, %116 : vector<4x256xf32>
    %118 = arith.addf %107, %117 : vector<4x256xf32>
    %cst_49 = arith.constant 9.000000e+00 : f32
    %119 = vector.broadcast %cst_49 : f32 to vector<1x256xf32>
    %120 = arith.subf %5, %119 : vector<1x256xf32>
    %121 = math.absf %120 : vector<1x256xf32>
    %cst_50 = arith.constant 1.000000e+00 : f32
    %122 = vector.broadcast %cst_50 : f32 to vector<1x256xf32>
    %123 = arith.subf %122, %121 : vector<1x256xf32>
    %cst_51 = arith.constant 0.000000e+00 : f32
    %124 = vector.broadcast %cst_51 : f32 to vector<1x256xf32>
    %125 = arith.maximumf %124, %123 : vector<1x256xf32>
    %c36 = arith.constant 36 : index
    %c0_52 = arith.constant 0 : index
    %126 = vector.load %arg6[%c36, %c0_52] : memref<64x256xf32, #tpu.memory_space<vmem>>, vector<4x256xf32>
    %127 = vector.broadcast %125 : vector<1x256xf32> to vector<4x256xf32>
    %128 = arith.mulf %126, %127 : vector<4x256xf32>
    %129 = arith.addf %118, %128 : vector<4x256xf32>
    %cst_53 = arith.constant 1.000000e+01 : f32
    %130 = vector.broadcast %cst_53 : f32 to vector<1x256xf32>
    %131 = arith.subf %5, %130 : vector<1x256xf32>
    %132 = math.absf %131 : vector<1x256xf32>
    %cst_54 = arith.constant 1.000000e+00 : f32
    %133 = vector.broadcast %cst_54 : f32 to vector<1x256xf32>
    %134 = arith.subf %133, %132 : vector<1x256xf32>
    %cst_55 = arith.constant 0.000000e+00 : f32
    %135 = vector.broadcast %cst_55 : f32 to vector<1x256xf32>
    %136 = arith.maximumf %135, %134 : vector<1x256xf32>
    %c40 = arith.constant 40 : index
    %c0_56 = arith.constant 0 : index
    %137 = vector.load %arg6[%c40, %c0_56] : memref<64x256xf32, #tpu.memory_space<vmem>>, vector<4x256xf32>
    %138 = vector.broadcast %136 : vector<1x256xf32> to vector<4x256xf32>
    %139 = arith.mulf %137, %138 : vector<4x256xf32>
    %140 = arith.addf %129, %139 : vector<4x256xf32>
    %cst_57 = arith.constant 1.100000e+01 : f32
    %141 = vector.broadcast %cst_57 : f32 to vector<1x256xf32>
    %142 = arith.subf %5, %141 : vector<1x256xf32>
    %143 = math.absf %142 : vector<1x256xf32>
    %cst_58 = arith.constant 1.000000e+00 : f32
    %144 = vector.broadcast %cst_58 : f32 to vector<1x256xf32>
    %145 = arith.subf %144, %143 : vector<1x256xf32>
    %cst_59 = arith.constant 0.000000e+00 : f32
    %146 = vector.broadcast %cst_59 : f32 to vector<1x256xf32>
    %147 = arith.maximumf %146, %145 : vector<1x256xf32>
    %c44 = arith.constant 44 : index
    %c0_60 = arith.constant 0 : index
    %148 = vector.load %arg6[%c44, %c0_60] : memref<64x256xf32, #tpu.memory_space<vmem>>, vector<4x256xf32>
    %149 = vector.broadcast %147 : vector<1x256xf32> to vector<4x256xf32>
    %150 = arith.mulf %148, %149 : vector<4x256xf32>
    %151 = arith.addf %140, %150 : vector<4x256xf32>
    %cst_61 = arith.constant 1.200000e+01 : f32
    %152 = vector.broadcast %cst_61 : f32 to vector<1x256xf32>
    %153 = arith.subf %5, %152 : vector<1x256xf32>
    %154 = math.absf %153 : vector<1x256xf32>
    %cst_62 = arith.constant 1.000000e+00 : f32
    %155 = vector.broadcast %cst_62 : f32 to vector<1x256xf32>
    %156 = arith.subf %155, %154 : vector<1x256xf32>
    %cst_63 = arith.constant 0.000000e+00 : f32
    %157 = vector.broadcast %cst_63 : f32 to vector<1x256xf32>
    %158 = arith.maximumf %157, %156 : vector<1x256xf32>
    %c48 = arith.constant 48 : index
    %c0_64 = arith.constant 0 : index
    %159 = vector.load %arg6[%c48, %c0_64] : memref<64x256xf32, #tpu.memory_space<vmem>>, vector<4x256xf32>
    %160 = vector.broadcast %158 : vector<1x256xf32> to vector<4x256xf32>
    %161 = arith.mulf %159, %160 : vector<4x256xf32>
    %162 = arith.addf %151, %161 : vector<4x256xf32>
    %cst_65 = arith.constant 1.300000e+01 : f32
    %163 = vector.broadcast %cst_65 : f32 to vector<1x256xf32>
    %164 = arith.subf %5, %163 : vector<1x256xf32>
    %165 = math.absf %164 : vector<1x256xf32>
    %cst_66 = arith.constant 1.000000e+00 : f32
    %166 = vector.broadcast %cst_66 : f32 to vector<1x256xf32>
    %167 = arith.subf %166, %165 : vector<1x256xf32>
    %cst_67 = arith.constant 0.000000e+00 : f32
    %168 = vector.broadcast %cst_67 : f32 to vector<1x256xf32>
    %169 = arith.maximumf %168, %167 : vector<1x256xf32>
    %c52 = arith.constant 52 : index
    %c0_68 = arith.constant 0 : index
    %170 = vector.load %arg6[%c52, %c0_68] : memref<64x256xf32, #tpu.memory_space<vmem>>, vector<4x256xf32>
    %171 = vector.broadcast %169 : vector<1x256xf32> to vector<4x256xf32>
    %172 = arith.mulf %170, %171 : vector<4x256xf32>
    %173 = arith.addf %162, %172 : vector<4x256xf32>
    %cst_69 = arith.constant 1.400000e+01 : f32
    %174 = vector.broadcast %cst_69 : f32 to vector<1x256xf32>
    %175 = arith.subf %5, %174 : vector<1x256xf32>
    %176 = math.absf %175 : vector<1x256xf32>
    %cst_70 = arith.constant 1.000000e+00 : f32
    %177 = vector.broadcast %cst_70 : f32 to vector<1x256xf32>
    %178 = arith.subf %177, %176 : vector<1x256xf32>
    %cst_71 = arith.constant 0.000000e+00 : f32
    %179 = vector.broadcast %cst_71 : f32 to vector<1x256xf32>
    %180 = arith.maximumf %179, %178 : vector<1x256xf32>
    %c56 = arith.constant 56 : index
    %c0_72 = arith.constant 0 : index
    %181 = vector.load %arg6[%c56, %c0_72] : memref<64x256xf32, #tpu.memory_space<vmem>>, vector<4x256xf32>
    %182 = vector.broadcast %180 : vector<1x256xf32> to vector<4x256xf32>
    %183 = arith.mulf %181, %182 : vector<4x256xf32>
    %184 = arith.addf %173, %183 : vector<4x256xf32>
    %cst_73 = arith.constant 1.500000e+01 : f32
    %185 = vector.broadcast %cst_73 : f32 to vector<1x256xf32>
    %186 = arith.subf %5, %185 : vector<1x256xf32>
    %187 = math.absf %186 : vector<1x256xf32>
    %cst_74 = arith.constant 1.000000e+00 : f32
    %188 = vector.broadcast %cst_74 : f32 to vector<1x256xf32>
    %189 = arith.subf %188, %187 : vector<1x256xf32>
    %cst_75 = arith.constant 0.000000e+00 : f32
    %190 = vector.broadcast %cst_75 : f32 to vector<1x256xf32>
    %191 = arith.maximumf %190, %189 : vector<1x256xf32>
    %c60 = arith.constant 60 : index
    %c0_76 = arith.constant 0 : index
    %192 = vector.load %arg6[%c60, %c0_76] : memref<64x256xf32, #tpu.memory_space<vmem>>, vector<4x256xf32>
    %193 = vector.broadcast %191 : vector<1x256xf32> to vector<4x256xf32>
    %194 = arith.mulf %192, %193 : vector<4x256xf32>
    %195 = arith.addf %184, %194 : vector<4x256xf32>
    %196 = arith.truncf %195 : vector<4x256xf32> to vector<4x256xbf16>
    %c0_77 = arith.constant 0 : index
    %c0_78 = arith.constant 0 : index
    %197 = vector.load %arg7[%c0_77, %c0_78] : memref<36x256xbf16, #tpu.memory_space<vmem>>, vector<4x256xbf16>
    tpu.vector_store %arg7[%c0_77, %c0_78], %196 {strides = array<i32>} : memref<36x256xbf16, #tpu.memory_space<vmem>>, vector<4x256xbf16>,
    %c0_79 = arith.constant 0 : index
    %c1 = arith.constant 1 : index
    %c0_80 = arith.constant 0 : index
    %198 = vector.load %arg3[%c0_79, %c1, %c0_80] : memref<1x18x256xf32, #tpu.memory_space<vmem>>, vector<1x1x256xf32>
    %199 = vector.shape_cast %198 : vector<1x1x256xf32> to vector<1x256xf32>
    %c0_81 = arith.constant 0 : index
    %c10 = arith.constant 10 : index
    %c0_82 = arith.constant 0 : index
    %200 = vector.load %arg3[%c0_81, %c10, %c0_82] : memref<1x18x256xf32, #tpu.memory_space<vmem>>, vector<1x1x256xf32>
    %201 = vector.shape_cast %200 : vector<1x1x256xf32> to vector<1x256xf32>
    %202 = vector.broadcast %199 : vector<1x256xf32> to vector<16x256xf32>
    %203 = vector.broadcast %1 : vector<16x1xf32> to vector<16x256xf32>
    %204 = arith.subf %202, %203 : vector<16x256xf32>
    %205 = math.absf %204 : vector<16x256xf32>
    %cst_83 = arith.constant 1.000000e+00 : f32
    %206 = vector.broadcast %cst_83 : f32 to vector<16x256xf32>
    %207 = arith.subf %206, %205 : vector<16x256xf32>
    %cst_84 = arith.constant 0.000000e+00 : f32
    %208 = vector.broadcast %cst_84 : f32 to vector<16x256xf32>
    %209 = arith.maximumf %208, %207 : vector<16x256xf32>
    %210 = arith.truncf %209 : vector<16x256xf32> to vector<16x256xbf16>
    %cst_85 = arith.constant 0.000000e+00 : f32
    %211 = vector.broadcast %cst_85 : f32 to vector<4x256xf32>
    %c0_86 = arith.constant 0 : index
    %c0_87 = arith.constant 0 : index
    %c0_88 = arith.constant 0 : index
    %212 = vector.load %arg2[%c0_86, %c0_87, %c0_88] : memref<1x64x16xbf16, #tpu.memory_space<vmem>>, vector<1x64x16xbf16>
    %213 = vector.shape_cast %212 : vector<1x64x16xbf16> to vector<64x16xbf16>
    %cst_89 = arith.constant dense<0.000000e+00> : vector<64x256xf32>
    %214 = tpu.matmul %213, %210, %cst_89 {dimension_numbers = #tpu.dot_dimension_numbers<[1], [0], [0], [1], [0, 0, 1, 1], [], []>} : vector<64x16xbf16>, vector<16x256xbf16>, vector<64x256xf32> -> vector<64x256xf32>
    %c0_90 = arith.constant 0 : index
    %c0_91 = arith.constant 0 : index
    %215 = vector.load %arg6[%c0_90, %c0_91] : memref<64x256xf32, #tpu.memory_space<vmem>>, vector<64x256xf32>
    tpu.vector_store %arg6[%c0_90, %c0_91], %214 {strides = array<i32>} : memref<64x256xf32, #tpu.memory_space<vmem>>, vector<64x256xf32>,
    %cst_92 = arith.constant 0.000000e+00 : f32
    %216 = vector.broadcast %cst_92 : f32 to vector<1x256xf32>
    %217 = arith.subf %201, %216 : vector<1x256xf32>
    %218 = math.absf %217 : vector<1x256xf32>
    %cst_93 = arith.constant 1.000000e+00 : f32
    %219 = vector.broadcast %cst_93 : f32 to vector<1x256xf32>
    %220 = arith.subf %219, %218 : vector<1x256xf32>
    %cst_94 = arith.constant 0.000000e+00 : f32
    %221 = vector.broadcast %cst_94 : f32 to vector<1x256xf32>
    %222 = arith.maximumf %221, %220 : vector<1x256xf32>
    %c0_95 = arith.constant 0 : index
    %c0_96 = arith.constant 0 : index
    %223 = vector.load %arg6[%c0_95, %c0_96] : memref<64x256xf32, #tpu.memory_space<vmem>>, vector<4x256xf32>
    %224 = vector.broadcast %222 : vector<1x256xf32> to vector<4x256xf32>
    %225 = arith.mulf %223, %224 : vector<4x256xf32>
    %226 = arith.addf %211, %225 : vector<4x256xf32>
    %cst_97 = arith.constant 1.000000e+00 : f32
    %227 = vector.broadcast %cst_97 : f32 to vector<1x256xf32>
    %228 = arith.subf %201, %227 : vector<1x256xf32>
    %229 = math.absf %228 : vector<1x256xf32>
    %cst_98 = arith.constant 1.000000e+00 : f32
    %230 = vector.broadcast %cst_98 : f32 to vector<1x256xf32>
    %231 = arith.subf %230, %229 : vector<1x256xf32>
    %cst_99 = arith.constant 0.000000e+00 : f32
    %232 = vector.broadcast %cst_99 : f32 to vector<1x256xf32>
    %233 = arith.maximumf %232, %231 : vector<1x256xf32>
    %c4_100 = arith.constant 4 : index
    %c0_101 = arith.constant 0 : index
    %234 = vector.load %arg6[%c4_100, %c0_101] : memref<64x256xf32, #tpu.memory_space<vmem>>, vector<4x256xf32>
    %235 = vector.broadcast %233 : vector<1x256xf32> to vector<4x256xf32>
    %236 = arith.mulf %234, %235 : vector<4x256xf32>
    %237 = arith.addf %226, %236 : vector<4x256xf32>
    %cst_102 = arith.constant 2.000000e+00 : f32
    %238 = vector.broadcast %cst_102 : f32 to vector<1x256xf32>
    %239 = arith.subf %201, %238 : vector<1x256xf32>
    %240 = math.absf %239 : vector<1x256xf32>
    %cst_103 = arith.constant 1.000000e+00 : f32
    %241 = vector.broadcast %cst_103 : f32 to vector<1x256xf32>
    %242 = arith.subf %241, %240 : vector<1x256xf32>
    %cst_104 = arith.constant 0.000000e+00 : f32
    %243 = vector.broadcast %cst_104 : f32 to vector<1x256xf32>
    %244 = arith.maximumf %243, %242 : vector<1x256xf32>
    %c8_105 = arith.constant 8 : index
    %c0_106 = arith.constant 0 : index
    %245 = vector.load %arg6[%c8_105, %c0_106] : memref<64x256xf32, #tpu.memory_space<vmem>>, vector<4x256xf32>
    %246 = vector.broadcast %244 : vector<1x256xf32> to vector<4x256xf32>
    %247 = arith.mulf %245, %246 : vector<4x256xf32>
    %248 = arith.addf %237, %247 : vector<4x256xf32>
    %cst_107 = arith.constant 3.000000e+00 : f32
    %249 = vector.broadcast %cst_107 : f32 to vector<1x256xf32>
    %250 = arith.subf %201, %249 : vector<1x256xf32>
    %251 = math.absf %250 : vector<1x256xf32>
    %cst_108 = arith.constant 1.000000e+00 : f32
    %252 = vector.broadcast %cst_108 : f32 to vector<1x256xf32>
    %253 = arith.subf %252, %251 : vector<1x256xf32>
    %cst_109 = arith.constant 0.000000e+00 : f32
    %254 = vector.broadcast %cst_109 : f32 to vector<1x256xf32>
    %255 = arith.maximumf %254, %253 : vector<1x256xf32>
    %c12_110 = arith.constant 12 : index
    %c0_111 = arith.constant 0 : index
    %256 = vector.load %arg6[%c12_110, %c0_111] : memref<64x256xf32, #tpu.memory_space<vmem>>, vector<4x256xf32>
    %257 = vector.broadcast %255 : vector<1x256xf32> to vector<4x256xf32>
    %258 = arith.mulf %256, %257 : vector<4x256xf32>
    %259 = arith.addf %248, %258 : vector<4x256xf32>
    %cst_112 = arith.constant 4.000000e+00 : f32
    %260 = vector.broadcast %cst_112 : f32 to vector<1x256xf32>
    %261 = arith.subf %201, %260 : vector<1x256xf32>
    %262 = math.absf %261 : vector<1x256xf32>
    %cst_113 = arith.constant 1.000000e+00 : f32
    %263 = vector.broadcast %cst_113 : f32 to vector<1x256xf32>
    %264 = arith.subf %263, %262 : vector<1x256xf32>
    %cst_114 = arith.constant 0.000000e+00 : f32
    %265 = vector.broadcast %cst_114 : f32 to vector<1x256xf32>
    %266 = arith.maximumf %265, %264 : vector<1x256xf32>
    %c16_115 = arith.constant 16 : index
    %c0_116 = arith.constant 0 : index
    %267 = vector.load %arg6[%c16_115, %c0_116] : memref<64x256xf32, #tpu.memory_space<vmem>>, vector<4x256xf32>
    %268 = vector.broadcast %266 : vector<1x256xf32> to vector<4x256xf32>
    %269 = arith.mulf %267, %268 : vector<4x256xf32>
    %270 = arith.addf %259, %269 : vector<4x256xf32>
    %cst_117 = arith.constant 5.000000e+00 : f32
    %271 = vector.broadcast %cst_117 : f32 to vector<1x256xf32>
    %272 = arith.subf %201, %271 : vector<1x256xf32>
    %273 = math.absf %272 : vector<1x256xf32>
    %cst_118 = arith.constant 1.000000e+00 : f32
    %274 = vector.broadcast %cst_118 : f32 to vector<1x256xf32>
    %275 = arith.subf %274, %273 : vector<1x256xf32>
    %cst_119 = arith.constant 0.000000e+00 : f32
    %276 = vector.broadcast %cst_119 : f32 to vector<1x256xf32>
    %277 = arith.maximumf %276, %275 : vector<1x256xf32>
    %c20_120 = arith.constant 20 : index
    %c0_121 = arith.constant 0 : index
    %278 = vector.load %arg6[%c20_120, %c0_121] : memref<64x256xf32, #tpu.memory_space<vmem>>, vector<4x256xf32>
    %279 = vector.broadcast %277 : vector<1x256xf32> to vector<4x256xf32>
    %280 = arith.mulf %278, %279 : vector<4x256xf32>
    %281 = arith.addf %270, %280 : vector<4x256xf32>
    %cst_122 = arith.constant 6.000000e+00 : f32
    %282 = vector.broadcast %cst_122 : f32 to vector<1x256xf32>
    %283 = arith.subf %201, %282 : vector<1x256xf32>
    %284 = math.absf %283 : vector<1x256xf32>
    %cst_123 = arith.constant 1.000000e+00 : f32
    %285 = vector.broadcast %cst_123 : f32 to vector<1x256xf32>
    %286 = arith.subf %285, %284 : vector<1x256xf32>
    %cst_124 = arith.constant 0.000000e+00 : f32
    %287 = vector.broadcast %cst_124 : f32 to vector<1x256xf32>
    %288 = arith.maximumf %287, %286 : vector<1x256xf32>
    %c24_125 = arith.constant 24 : index
    %c0_126 = arith.constant 0 : index
    %289 = vector.load %arg6[%c24_125, %c0_126] : memref<64x256xf32, #tpu.memory_space<vmem>>, vector<4x256xf32>
    %290 = vector.broadcast %288 : vector<1x256xf32> to vector<4x256xf32>
    %291 = arith.mulf %289, %290 : vector<4x256xf32>
    %292 = arith.addf %281, %291 : vector<4x256xf32>
    %cst_127 = arith.constant 7.000000e+00 : f32
    %293 = vector.broadcast %cst_127 : f32 to vector<1x256xf32>
    %294 = arith.subf %201, %293 : vector<1x256xf32>
    %295 = math.absf %294 : vector<1x256xf32>
    %cst_128 = arith.constant 1.000000e+00 : f32
    %296 = vector.broadcast %cst_128 : f32 to vector<1x256xf32>
    %297 = arith.subf %296, %295 : vector<1x256xf32>
    %cst_129 = arith.constant 0.000000e+00 : f32
    %298 = vector.broadcast %cst_129 : f32 to vector<1x256xf32>
    %299 = arith.maximumf %298, %297 : vector<1x256xf32>
    %c28_130 = arith.constant 28 : index
    %c0_131 = arith.constant 0 : index
    %300 = vector.load %arg6[%c28_130, %c0_131] : memref<64x256xf32, #tpu.memory_space<vmem>>, vector<4x256xf32>
    %301 = vector.broadcast %299 : vector<1x256xf32> to vector<4x256xf32>
    %302 = arith.mulf %300, %301 : vector<4x256xf32>
    %303 = arith.addf %292, %302 : vector<4x256xf32>
    %cst_132 = arith.constant 8.000000e+00 : f32
    %304 = vector.broadcast %cst_132 : f32 to vector<1x256xf32>
    %305 = arith.subf %201, %304 : vector<1x256xf32>
    %306 = math.absf %305 : vector<1x256xf32>
    %cst_133 = arith.constant 1.000000e+00 : f32
    %307 = vector.broadcast %cst_133 : f32 to vector<1x256xf32>
    %308 = arith.subf %307, %306 : vector<1x256xf32>
    %cst_134 = arith.constant 0.000000e+00 : f32
    %309 = vector.broadcast %cst_134 : f32 to vector<1x256xf32>
    %310 = arith.maximumf %309, %308 : vector<1x256xf32>
    %c32_135 = arith.constant 32 : index
    %c0_136 = arith.constant 0 : index
    %311 = vector.load %arg6[%c32_135, %c0_136] : memref<64x256xf32, #tpu.memory_space<vmem>>, vector<4x256xf32>
    %312 = vector.broadcast %310 : vector<1x256xf32> to vector<4x256xf32>
    %313 = arith.mulf %311, %312 : vector<4x256xf32>
    %314 = arith.addf %303, %313 : vector<4x256xf32>
    %cst_137 = arith.constant 9.000000e+00 : f32
    %315 = vector.broadcast %cst_137 : f32 to vector<1x256xf32>
    %316 = arith.subf %201, %315 : vector<1x256xf32>
    %317 = math.absf %316 : vector<1x256xf32>
    %cst_138 = arith.constant 1.000000e+00 : f32
    %318 = vector.broadcast %cst_138 : f32 to vector<1x256xf32>
    %319 = arith.subf %318, %317 : vector<1x256xf32>
    %cst_139 = arith.constant 0.000000e+00 : f32
    %320 = vector.broadcast %cst_139 : f32 to vector<1x256xf32>
    %321 = arith.maximumf %320, %319 : vector<1x256xf32>
    %c36_140 = arith.constant 36 : index
    %c0_141 = arith.constant 0 : index
    %322 = vector.load %arg6[%c36_140, %c0_141] : memref<64x256xf32, #tpu.memory_space<vmem>>, vector<4x256xf32>
    %323 = vector.broadcast %321 : vector<1x256xf32> to vector<4x256xf32>
    %324 = arith.mulf %322, %323 : vector<4x256xf32>
    %325 = arith.addf %314, %324 : vector<4x256xf32>
    %cst_142 = arith.constant 1.000000e+01 : f32
    %326 = vector.broadcast %cst_142 : f32 to vector<1x256xf32>
    %327 = arith.subf %201, %326 : vector<1x256xf32>
    %328 = math.absf %327 : vector<1x256xf32>
    %cst_143 = arith.constant 1.000000e+00 : f32
    %329 = vector.broadcast %cst_143 : f32 to vector<1x256xf32>
    %330 = arith.subf %329, %328 : vector<1x256xf32>
    %cst_144 = arith.constant 0.000000e+00 : f32
    %331 = vector.broadcast %cst_144 : f32 to vector<1x256xf32>
    %332 = arith.maximumf %331, %330 : vector<1x256xf32>
    %c40_145 = arith.constant 40 : index
    %c0_146 = arith.constant 0 : index
    %333 = vector.load %arg6[%c40_145, %c0_146] : memref<64x256xf32, #tpu.memory_space<vmem>>, vector<4x256xf32>
    %334 = vector.broadcast %332 : vector<1x256xf32> to vector<4x256xf32>
    %335 = arith.mulf %333, %334 : vector<4x256xf32>
    %336 = arith.addf %325, %335 : vector<4x256xf32>
    %cst_147 = arith.constant 1.100000e+01 : f32
    %337 = vector.broadcast %cst_147 : f32 to vector<1x256xf32>
    %338 = arith.subf %201, %337 : vector<1x256xf32>
    %339 = math.absf %338 : vector<1x256xf32>
    %cst_148 = arith.constant 1.000000e+00 : f32
    %340 = vector.broadcast %cst_148 : f32 to vector<1x256xf32>
    %341 = arith.subf %340, %339 : vector<1x256xf32>
    %cst_149 = arith.constant 0.000000e+00 : f32
    %342 = vector.broadcast %cst_149 : f32 to vector<1x256xf32>
    %343 = arith.maximumf %342, %341 : vector<1x256xf32>
    %c44_150 = arith.constant 44 : index
    %c0_151 = arith.constant 0 : index
    %344 = vector.load %arg6[%c44_150, %c0_151] : memref<64x256xf32, #tpu.memory_space<vmem>>, vector<4x256xf32>
    %345 = vector.broadcast %343 : vector<1x256xf32> to vector<4x256xf32>
    %346 = arith.mulf %344, %345 : vector<4x256xf32>
    %347 = arith.addf %336, %346 : vector<4x256xf32>
    %cst_152 = arith.constant 1.200000e+01 : f32
    %348 = vector.broadcast %cst_152 : f32 to vector<1x256xf32>
    %349 = arith.subf %201, %348 : vector<1x256xf32>
    %350 = math.absf %349 : vector<1x256xf32>
    %cst_153 = arith.constant 1.000000e+00 : f32
    %351 = vector.broadcast %cst_153 : f32 to vector<1x256xf32>
    %352 = arith.subf %351, %350 : vector<1x256xf32>
    %cst_154 = arith.constant 0.000000e+00 : f32
    %353 = vector.broadcast %cst_154 : f32 to vector<1x256xf32>
    %354 = arith.maximumf %353, %352 : vector<1x256xf32>
    %c48_155 = arith.constant 48 : index
    %c0_156 = arith.constant 0 : index
    %355 = vector.load %arg6[%c48_155, %c0_156] : memref<64x256xf32, #tpu.memory_space<vmem>>, vector<4x256xf32>
    %356 = vector.broadcast %354 : vector<1x256xf32> to vector<4x256xf32>
    %357 = arith.mulf %355, %356 : vector<4x256xf32>
    %358 = arith.addf %347, %357 : vector<4x256xf32>
    %cst_157 = arith.constant 1.300000e+01 : f32
    %359 = vector.broadcast %cst_157 : f32 to vector<1x256xf32>
    %360 = arith.subf %201, %359 : vector<1x256xf32>
    %361 = math.absf %360 : vector<1x256xf32>
    %cst_158 = arith.constant 1.000000e+00 : f32
    %362 = vector.broadcast %cst_158 : f32 to vector<1x256xf32>
    %363 = arith.subf %362, %361 : vector<1x256xf32>
    %cst_159 = arith.constant 0.000000e+00 : f32
    %364 = vector.broadcast %cst_159 : f32 to vector<1x256xf32>
    %365 = arith.maximumf %364, %363 : vector<1x256xf32>
    %c52_160 = arith.constant 52 : index
    %c0_161 = arith.constant 0 : index
    %366 = vector.load %arg6[%c52_160, %c0_161] : memref<64x256xf32, #tpu.memory_space<vmem>>, vector<4x256xf32>
    %367 = vector.broadcast %365 : vector<1x256xf32> to vector<4x256xf32>
    %368 = arith.mulf %366, %367 : vector<4x256xf32>
    %369 = arith.addf %358, %368 : vector<4x256xf32>
    %cst_162 = arith.constant 1.400000e+01 : f32
    %370 = vector.broadcast %cst_162 : f32 to vector<1x256xf32>
    %371 = arith.subf %201, %370 : vector<1x256xf32>
    %372 = math.absf %371 : vector<1x256xf32>
    %cst_163 = arith.constant 1.000000e+00 : f32
    %373 = vector.broadcast %cst_163 : f32 to vector<1x256xf32>
    %374 = arith.subf %373, %372 : vector<1x256xf32>
    %cst_164 = arith.constant 0.000000e+00 : f32
    %375 = vector.broadcast %cst_164 : f32 to vector<1x256xf32>
    %376 = arith.maximumf %375, %374 : vector<1x256xf32>
    %c56_165 = arith.constant 56 : index
    %c0_166 = arith.constant 0 : index
    %377 = vector.load %arg6[%c56_165, %c0_166] : memref<64x256xf32, #tpu.memory_space<vmem>>, vector<4x256xf32>
    %378 = vector.broadcast %376 : vector<1x256xf32> to vector<4x256xf32>
    %379 = arith.mulf %377, %378 : vector<4x256xf32>
    %380 = arith.addf %369, %379 : vector<4x256xf32>
    %cst_167 = arith.constant 1.500000e+01 : f32
    %381 = vector.broadcast %cst_167 : f32 to vector<1x256xf32>
    %382 = arith.subf %201, %381 : vector<1x256xf32>
    %383 = math.absf %382 : vector<1x256xf32>
    %cst_168 = arith.constant 1.000000e+00 : f32
    %384 = vector.broadcast %cst_168 : f32 to vector<1x256xf32>
    %385 = arith.subf %384, %383 : vector<1x256xf32>
    %cst_169 = arith.constant 0.000000e+00 : f32
    %386 = vector.broadcast %cst_169 : f32 to vector<1x256xf32>
    %387 = arith.maximumf %386, %385 : vector<1x256xf32>
    %c60_170 = arith.constant 60 : index
    %c0_171 = arith.constant 0 : index
    %388 = vector.load %arg6[%c60_170, %c0_171] : memref<64x256xf32, #tpu.memory_space<vmem>>, vector<4x256xf32>
    %389 = vector.broadcast %387 : vector<1x256xf32> to vector<4x256xf32>
    %390 = arith.mulf %388, %389 : vector<4x256xf32>
    %391 = arith.addf %380, %390 : vector<4x256xf32>
    %392 = arith.truncf %391 : vector<4x256xf32> to vector<4x256xbf16>
    %c4_172 = arith.constant 4 : index
    %c0_173 = arith.constant 0 : index
    %393 = vector.load %arg7[%c4_172, %c0_173] : memref<36x256xbf16, #tpu.memory_space<vmem>>, vector<4x256xbf16>
    tpu.vector_store %arg7[%c4_172, %c0_173], %392 {strides = array<i32>} : memref<36x256xbf16, #tpu.memory_space<vmem>>, vector<4x256xbf16>,
    %c0_174 = arith.constant 0 : index
    %c2 = arith.constant 2 : index
    %c0_175 = arith.constant 0 : index
    %394 = vector.load %arg3[%c0_174, %c2, %c0_175] : memref<1x18x256xf32, #tpu.memory_space<vmem>>, vector<1x1x256xf32>
    %395 = vector.shape_cast %394 : vector<1x1x256xf32> to vector<1x256xf32>
    %c0_176 = arith.constant 0 : index
    %c11 = arith.constant 11 : index
    %c0_177 = arith.constant 0 : index
    %396 = vector.load %arg3[%c0_176, %c11, %c0_177] : memref<1x18x256xf32, #tpu.memory_space<vmem>>, vector<1x1x256xf32>
    %397 = vector.shape_cast %396 : vector<1x1x256xf32> to vector<1x256xf32>
    %398 = vector.broadcast %395 : vector<1x256xf32> to vector<16x256xf32>
    %399 = vector.broadcast %1 : vector<16x1xf32> to vector<16x256xf32>
    %400 = arith.subf %398, %399 : vector<16x256xf32>
    %401 = math.absf %400 : vector<16x256xf32>
    %cst_178 = arith.constant 1.000000e+00 : f32
    %402 = vector.broadcast %cst_178 : f32 to vector<16x256xf32>
    %403 = arith.subf %402, %401 : vector<16x256xf32>
    %cst_179 = arith.constant 0.000000e+00 : f32
    %404 = vector.broadcast %cst_179 : f32 to vector<16x256xf32>
    %405 = arith.maximumf %404, %403 : vector<16x256xf32>
    %406 = arith.truncf %405 : vector<16x256xf32> to vector<16x256xbf16>
    %cst_180 = arith.constant 0.000000e+00 : f32
    %407 = vector.broadcast %cst_180 : f32 to vector<4x256xf32>
    %c0_181 = arith.constant 0 : index
    %c0_182 = arith.constant 0 : index
    %c0_183 = arith.constant 0 : index
    %408 = vector.load %arg2[%c0_181, %c0_182, %c0_183] : memref<1x64x16xbf16, #tpu.memory_space<vmem>>, vector<1x64x16xbf16>
    %409 = vector.shape_cast %408 : vector<1x64x16xbf16> to vector<64x16xbf16>
    %cst_184 = arith.constant dense<0.000000e+00> : vector<64x256xf32>
    %410 = tpu.matmul %409, %406, %cst_184 {dimension_numbers = #tpu.dot_dimension_numbers<[1], [0], [0], [1], [0, 0, 1, 1], [], []>} : vector<64x16xbf16>, vector<16x256xbf16>, vector<64x256xf32> -> vector<64x256xf32>
    %c0_185 = arith.constant 0 : index
    %c0_186 = arith.constant 0 : index
    %411 = vector.load %arg6[%c0_185, %c0_186] : memref<64x256xf32, #tpu.memory_space<vmem>>, vector<64x256xf32>
    tpu.vector_store %arg6[%c0_185, %c0_186], %410 {strides = array<i32>} : memref<64x256xf32, #tpu.memory_space<vmem>>, vector<64x256xf32>,
    %cst_187 = arith.constant 0.000000e+00 : f32
    %412 = vector.broadcast %cst_187 : f32 to vector<1x256xf32>
    %413 = arith.subf %397, %412 : vector<1x256xf32>
    %414 = math.absf %413 : vector<1x256xf32>
    %cst_188 = arith.constant 1.000000e+00 : f32
    %415 = vector.broadcast %cst_188 : f32 to vector<1x256xf32>
    %416 = arith.subf %415, %414 : vector<1x256xf32>
    %cst_189 = arith.constant 0.000000e+00 : f32
    %417 = vector.broadcast %cst_189 : f32 to vector<1x256xf32>
    %418 = arith.maximumf %417, %416 : vector<1x256xf32>
    %c0_190 = arith.constant 0 : index
    %c0_191 = arith.constant 0 : index
    %419 = vector.load %arg6[%c0_190, %c0_191] : memref<64x256xf32, #tpu.memory_space<vmem>>, vector<4x256xf32>
    %420 = vector.broadcast %418 : vector<1x256xf32> to vector<4x256xf32>
    %421 = arith.mulf %419, %420 : vector<4x256xf32>
    %422 = arith.addf %407, %421 : vector<4x256xf32>
    %cst_192 = arith.constant 1.000000e+00 : f32
    %423 = vector.broadcast %cst_192 : f32 to vector<1x256xf32>
    %424 = arith.subf %397, %423 : vector<1x256xf32>
    %425 = math.absf %424 : vector<1x256xf32>
    %cst_193 = arith.constant 1.000000e+00 : f32
    %426 = vector.broadcast %cst_193 : f32 to vector<1x256xf32>
    %427 = arith.subf %426, %425 : vector<1x256xf32>
    %cst_194 = arith.constant 0.000000e+00 : f32
    %428 = vector.broadcast %cst_194 : f32 to vector<1x256xf32>
    %429 = arith.maximumf %428, %427 : vector<1x256xf32>
    %c4_195 = arith.constant 4 : index
    %c0_196 = arith.constant 0 : index
    %430 = vector.load %arg6[%c4_195, %c0_196] : memref<64x256xf32, #tpu.memory_space<vmem>>, vector<4x256xf32>
    %431 = vector.broadcast %429 : vector<1x256xf32> to vector<4x256xf32>
    %432 = arith.mulf %430, %431 : vector<4x256xf32>
    %433 = arith.addf %422, %432 : vector<4x256xf32>
    %cst_197 = arith.constant 2.000000e+00 : f32
    %434 = vector.broadcast %cst_197 : f32 to vector<1x256xf32>
    %435 = arith.subf %397, %434 : vector<1x256xf32>
    %436 = math.absf %435 : vector<1x256xf32>
    %cst_198 = arith.constant 1.000000e+00 : f32
    %437 = vector.broadcast %cst_198 : f32 to vector<1x256xf32>
    %438 = arith.subf %437, %436 : vector<1x256xf32>
    %cst_199 = arith.constant 0.000000e+00 : f32
    %439 = vector.broadcast %cst_199 : f32 to vector<1x256xf32>
    %440 = arith.maximumf %439, %438 : vector<1x256xf32>
    %c8_200 = arith.constant 8 : index
    %c0_201 = arith.constant 0 : index
    %441 = vector.load %arg6[%c8_200, %c0_201] : memref<64x256xf32, #tpu.memory_space<vmem>>, vector<4x256xf32>
    %442 = vector.broadcast %440 : vector<1x256xf32> to vector<4x256xf32>
    %443 = arith.mulf %441, %442 : vector<4x256xf32>
    %444 = arith.addf %433, %443 : vector<4x256xf32>
    %cst_202 = arith.constant 3.000000e+00 : f32
    %445 = vector.broadcast %cst_202 : f32 to vector<1x256xf32>
    %446 = arith.subf %397, %445 : vector<1x256xf32>
    %447 = math.absf %446 : vector<1x256xf32>
    %cst_203 = arith.constant 1.000000e+00 : f32
    %448 = vector.broadcast %cst_203 : f32 to vector<1x256xf32>
    %449 = arith.subf %448, %447 : vector<1x256xf32>
    %cst_204 = arith.constant 0.000000e+00 : f32
    %450 = vector.broadcast %cst_204 : f32 to vector<1x256xf32>
    %451 = arith.maximumf %450, %449 : vector<1x256xf32>
    %c12_205 = arith.constant 12 : index
    %c0_206 = arith.constant 0 : index
    %452 = vector.load %arg6[%c12_205, %c0_206] : memref<64x256xf32, #tpu.memory_space<vmem>>, vector<4x256xf32>
    %453 = vector.broadcast %451 : vector<1x256xf32> to vector<4x256xf32>
    %454 = arith.mulf %452, %453 : vector<4x256xf32>
    %455 = arith.addf %444, %454 : vector<4x256xf32>
    %cst_207 = arith.constant 4.000000e+00 : f32
    %456 = vector.broadcast %cst_207 : f32 to vector<1x256xf32>
    %457 = arith.subf %397, %456 : vector<1x256xf32>
    %458 = math.absf %457 : vector<1x256xf32>
    %cst_208 = arith.constant 1.000000e+00 : f32
    %459 = vector.broadcast %cst_208 : f32 to vector<1x256xf32>
    %460 = arith.subf %459, %458 : vector<1x256xf32>
    %cst_209 = arith.constant 0.000000e+00 : f32
    %461 = vector.broadcast %cst_209 : f32 to vector<1x256xf32>
    %462 = arith.maximumf %461, %460 : vector<1x256xf32>
    %c16_210 = arith.constant 16 : index
    %c0_211 = arith.constant 0 : index
    %463 = vector.load %arg6[%c16_210, %c0_211] : memref<64x256xf32, #tpu.memory_space<vmem>>, vector<4x256xf32>
    %464 = vector.broadcast %462 : vector<1x256xf32> to vector<4x256xf32>
    %465 = arith.mulf %463, %464 : vector<4x256xf32>
    %466 = arith.addf %455, %465 : vector<4x256xf32>
    %cst_212 = arith.constant 5.000000e+00 : f32
    %467 = vector.broadcast %cst_212 : f32 to vector<1x256xf32>
    %468 = arith.subf %397, %467 : vector<1x256xf32>
    %469 = math.absf %468 : vector<1x256xf32>
    %cst_213 = arith.constant 1.000000e+00 : f32
    %470 = vector.broadcast %cst_213 : f32 to vector<1x256xf32>
    %471 = arith.subf %470, %469 : vector<1x256xf32>
    %cst_214 = arith.constant 0.000000e+00 : f32
    %472 = vector.broadcast %cst_214 : f32 to vector<1x256xf32>
    %473 = arith.maximumf %472, %471 : vector<1x256xf32>
    %c20_215 = arith.constant 20 : index
    %c0_216 = arith.constant 0 : index
    %474 = vector.load %arg6[%c20_215, %c0_216] : memref<64x256xf32, #tpu.memory_space<vmem>>, vector<4x256xf32>
    %475 = vector.broadcast %473 : vector<1x256xf32> to vector<4x256xf32>
    %476 = arith.mulf %474, %475 : vector<4x256xf32>
    %477 = arith.addf %466, %476 : vector<4x256xf32>
    %cst_217 = arith.constant 6.000000e+00 : f32
    %478 = vector.broadcast %cst_217 : f32 to vector<1x256xf32>
    %479 = arith.subf %397, %478 : vector<1x256xf32>
    %480 = math.absf %479 : vector<1x256xf32>
    %cst_218 = arith.constant 1.000000e+00 : f32
    %481 = vector.broadcast %cst_218 : f32 to vector<1x256xf32>
    %482 = arith.subf %481, %480 : vector<1x256xf32>
    %cst_219 = arith.constant 0.000000e+00 : f32
    %483 = vector.broadcast %cst_219 : f32 to vector<1x256xf32>
    %484 = arith.maximumf %483, %482 : vector<1x256xf32>
    %c24_220 = arith.constant 24 : index
    %c0_221 = arith.constant 0 : index
    %485 = vector.load %arg6[%c24_220, %c0_221] : memref<64x256xf32, #tpu.memory_space<vmem>>, vector<4x256xf32>
    %486 = vector.broadcast %484 : vector<1x256xf32> to vector<4x256xf32>
    %487 = arith.mulf %485, %486 : vector<4x256xf32>
    %488 = arith.addf %477, %487 : vector<4x256xf32>
    %cst_222 = arith.constant 7.000000e+00 : f32
    %489 = vector.broadcast %cst_222 : f32 to vector<1x256xf32>
    %490 = arith.subf %397, %489 : vector<1x256xf32>
    %491 = math.absf %490 : vector<1x256xf32>
    %cst_223 = arith.constant 1.000000e+00 : f32
    %492 = vector.broadcast %cst_223 : f32 to vector<1x256xf32>
    %493 = arith.subf %492, %491 : vector<1x256xf32>
    %cst_224 = arith.constant 0.000000e+00 : f32
    %494 = vector.broadcast %cst_224 : f32 to vector<1x256xf32>
    %495 = arith.maximumf %494, %493 : vector<1x256xf32>
    %c28_225 = arith.constant 28 : index
    %c0_226 = arith.constant 0 : index
    %496 = vector.load %arg6[%c28_225, %c0_226] : memref<64x256xf32, #tpu.memory_space<vmem>>, vector<4x256xf32>
    %497 = vector.broadcast %495 : vector<1x256xf32> to vector<4x256xf32>
    %498 = arith.mulf %496, %497 : vector<4x256xf32>
    %499 = arith.addf %488, %498 : vector<4x256xf32>
    %cst_227 = arith.constant 8.000000e+00 : f32
    %500 = vector.broadcast %cst_227 : f32 to vector<1x256xf32>
    %501 = arith.subf %397, %500 : vector<1x256xf32>
    %502 = math.absf %501 : vector<1x256xf32>
    %cst_228 = arith.constant 1.000000e+00 : f32
    %503 = vector.broadcast %cst_228 : f32 to vector<1x256xf32>
    %504 = arith.subf %503, %502 : vector<1x256xf32>
    %cst_229 = arith.constant 0.000000e+00 : f32
    %505 = vector.broadcast %cst_229 : f32 to vector<1x256xf32>
    %506 = arith.maximumf %505, %504 : vector<1x256xf32>
    %c32_230 = arith.constant 32 : index
    %c0_231 = arith.constant 0 : index
    %507 = vector.load %arg6[%c32_230, %c0_231] : memref<64x256xf32, #tpu.memory_space<vmem>>, vector<4x256xf32>
    %508 = vector.broadcast %506 : vector<1x256xf32> to vector<4x256xf32>
    %509 = arith.mulf %507, %508 : vector<4x256xf32>
    %510 = arith.addf %499, %509 : vector<4x256xf32>
    %cst_232 = arith.constant 9.000000e+00 : f32
    %511 = vector.broadcast %cst_232 : f32 to vector<1x256xf32>
    %512 = arith.subf %397, %511 : vector<1x256xf32>
    %513 = math.absf %512 : vector<1x256xf32>
    %cst_233 = arith.constant 1.000000e+00 : f32
    %514 = vector.broadcast %cst_233 : f32 to vector<1x256xf32>
    %515 = arith.subf %514, %513 : vector<1x256xf32>
    %cst_234 = arith.constant 0.000000e+00 : f32
    %516 = vector.broadcast %cst_234 : f32 to vector<1x256xf32>
    %517 = arith.maximumf %516, %515 : vector<1x256xf32>
    %c36_235 = arith.constant 36 : index
    %c0_236 = arith.constant 0 : index
    %518 = vector.load %arg6[%c36_235, %c0_236] : memref<64x256xf32, #tpu.memory_space<vmem>>, vector<4x256xf32>
    %519 = vector.broadcast %517 : vector<1x256xf32> to vector<4x256xf32>
    %520 = arith.mulf %518, %519 : vector<4x256xf32>
    %521 = arith.addf %510, %520 : vector<4x256xf32>
    %cst_237 = arith.constant 1.000000e+01 : f32
    %522 = vector.broadcast %cst_237 : f32 to vector<1x256xf32>
    %523 = arith.subf %397, %522 : vector<1x256xf32>
    %524 = math.absf %523 : vector<1x256xf32>
    %cst_238 = arith.constant 1.000000e+00 : f32
    %525 = vector.broadcast %cst_238 : f32 to vector<1x256xf32>
    %526 = arith.subf %525, %524 : vector<1x256xf32>
    %cst_239 = arith.constant 0.000000e+00 : f32
    %527 = vector.broadcast %cst_239 : f32 to vector<1x256xf32>
    %528 = arith.maximumf %527, %526 : vector<1x256xf32>
    %c40_240 = arith.constant 40 : index
    %c0_241 = arith.constant 0 : index
    %529 = vector.load %arg6[%c40_240, %c0_241] : memref<64x256xf32, #tpu.memory_space<vmem>>, vector<4x256xf32>
    %530 = vector.broadcast %528 : vector<1x256xf32> to vector<4x256xf32>
    %531 = arith.mulf %529, %530 : vector<4x256xf32>
    %532 = arith.addf %521, %531 : vector<4x256xf32>
    %cst_242 = arith.constant 1.100000e+01 : f32
    %533 = vector.broadcast %cst_242 : f32 to vector<1x256xf32>
    %534 = arith.subf %397, %533 : vector<1x256xf32>
    %535 = math.absf %534 : vector<1x256xf32>
    %cst_243 = arith.constant 1.000000e+00 : f32
    %536 = vector.broadcast %cst_243 : f32 to vector<1x256xf32>
    %537 = arith.subf %536, %535 : vector<1x256xf32>
    %cst_244 = arith.constant 0.000000e+00 : f32
    %538 = vector.broadcast %cst_244 : f32 to vector<1x256xf32>
    %539 = arith.maximumf %538, %537 : vector<1x256xf32>
    %c44_245 = arith.constant 44 : index
    %c0_246 = arith.constant 0 : index
    %540 = vector.load %arg6[%c44_245, %c0_246] : memref<64x256xf32, #tpu.memory_space<vmem>>, vector<4x256xf32>
    %541 = vector.broadcast %539 : vector<1x256xf32> to vector<4x256xf32>
    %542 = arith.mulf %540, %541 : vector<4x256xf32>
    %543 = arith.addf %532, %542 : vector<4x256xf32>
    %cst_247 = arith.constant 1.200000e+01 : f32
    %544 = vector.broadcast %cst_247 : f32 to vector<1x256xf32>
    %545 = arith.subf %397, %544 : vector<1x256xf32>
    %546 = math.absf %545 : vector<1x256xf32>
    %cst_248 = arith.constant 1.000000e+00 : f32
    %547 = vector.broadcast %cst_248 : f32 to vector<1x256xf32>
    %548 = arith.subf %547, %546 : vector<1x256xf32>
    %cst_249 = arith.constant 0.000000e+00 : f32
    %549 = vector.broadcast %cst_249 : f32 to vector<1x256xf32>
    %550 = arith.maximumf %549, %548 : vector<1x256xf32>
    %c48_250 = arith.constant 48 : index
    %c0_251 = arith.constant 0 : index
    %551 = vector.load %arg6[%c48_250, %c0_251] : memref<64x256xf32, #tpu.memory_space<vmem>>, vector<4x256xf32>
    %552 = vector.broadcast %550 : vector<1x256xf32> to vector<4x256xf32>
    %553 = arith.mulf %551, %552 : vector<4x256xf32>
    %554 = arith.addf %543, %553 : vector<4x256xf32>
    %cst_252 = arith.constant 1.300000e+01 : f32
    %555 = vector.broadcast %cst_252 : f32 to vector<1x256xf32>
    %556 = arith.subf %397, %555 : vector<1x256xf32>
    %557 = math.absf %556 : vector<1x256xf32>
    %cst_253 = arith.constant 1.000000e+00 : f32
    %558 = vector.broadcast %cst_253 : f32 to vector<1x256xf32>
    %559 = arith.subf %558, %557 : vector<1x256xf32>
    %cst_254 = arith.constant 0.000000e+00 : f32
    %560 = vector.broadcast %cst_254 : f32 to vector<1x256xf32>
    %561 = arith.maximumf %560, %559 : vector<1x256xf32>
    %c52_255 = arith.constant 52 : index
    %c0_256 = arith.constant 0 : index
    %562 = vector.load %arg6[%c52_255, %c0_256] : memref<64x256xf32, #tpu.memory_space<vmem>>, vector<4x256xf32>
    %563 = vector.broadcast %561 : vector<1x256xf32> to vector<4x256xf32>
    %564 = arith.mulf %562, %563 : vector<4x256xf32>
    %565 = arith.addf %554, %564 : vector<4x256xf32>
    %cst_257 = arith.constant 1.400000e+01 : f32
    %566 = vector.broadcast %cst_257 : f32 to vector<1x256xf32>
    %567 = arith.subf %397, %566 : vector<1x256xf32>
    %568 = math.absf %567 : vector<1x256xf32>
    %cst_258 = arith.constant 1.000000e+00 : f32
    %569 = vector.broadcast %cst_258 : f32 to vector<1x256xf32>
    %570 = arith.subf %569, %568 : vector<1x256xf32>
    %cst_259 = arith.constant 0.000000e+00 : f32
    %571 = vector.broadcast %cst_259 : f32 to vector<1x256xf32>
    %572 = arith.maximumf %571, %570 : vector<1x256xf32>
    %c56_260 = arith.constant 56 : index
    %c0_261 = arith.constant 0 : index
    %573 = vector.load %arg6[%c56_260, %c0_261] : memref<64x256xf32, #tpu.memory_space<vmem>>, vector<4x256xf32>
    %574 = vector.broadcast %572 : vector<1x256xf32> to vector<4x256xf32>
    %575 = arith.mulf %573, %574 : vector<4x256xf32>
    %576 = arith.addf %565, %575 : vector<4x256xf32>
    %cst_262 = arith.constant 1.500000e+01 : f32
    %577 = vector.broadcast %cst_262 : f32 to vector<1x256xf32>
    %578 = arith.subf %397, %577 : vector<1x256xf32>
    %579 = math.absf %578 : vector<1x256xf32>
    %cst_263 = arith.constant 1.000000e+00 : f32
    %580 = vector.broadcast %cst_263 : f32 to vector<1x256xf32>
    %581 = arith.subf %580, %579 : vector<1x256xf32>
    %cst_264 = arith.constant 0.000000e+00 : f32
    %582 = vector.broadcast %cst_264 : f32 to vector<1x256xf32>
    %583 = arith.maximumf %582, %581 : vector<1x256xf32>
    %c60_265 = arith.constant 60 : index
    %c0_266 = arith.constant 0 : index
    %584 = vector.load %arg6[%c60_265, %c0_266] : memref<64x256xf32, #tpu.memory_space<vmem>>, vector<4x256xf32>
    %585 = vector.broadcast %583 : vector<1x256xf32> to vector<4x256xf32>
    %586 = arith.mulf %584, %585 : vector<4x256xf32>
    %587 = arith.addf %576, %586 : vector<4x256xf32>
    %588 = arith.truncf %587 : vector<4x256xf32> to vector<4x256xbf16>
    %c8_267 = arith.constant 8 : index
    %c0_268 = arith.constant 0 : index
    %589 = vector.load %arg7[%c8_267, %c0_268] : memref<36x256xbf16, #tpu.memory_space<vmem>>, vector<4x256xbf16>
    tpu.vector_store %arg7[%c8_267, %c0_268], %588 {strides = array<i32>} : memref<36x256xbf16, #tpu.memory_space<vmem>>, vector<4x256xbf16>,
    %c0_269 = arith.constant 0 : index
    %c3 = arith.constant 3 : index
    %c0_270 = arith.constant 0 : index
    %590 = vector.load %arg3[%c0_269, %c3, %c0_270] : memref<1x18x256xf32, #tpu.memory_space<vmem>>, vector<1x1x256xf32>
    %591 = vector.shape_cast %590 : vector<1x1x256xf32> to vector<1x256xf32>
    %c0_271 = arith.constant 0 : index
    %c12_272 = arith.constant 12 : index
    %c0_273 = arith.constant 0 : index
    %592 = vector.load %arg3[%c0_271, %c12_272, %c0_273] : memref<1x18x256xf32, #tpu.memory_space<vmem>>, vector<1x1x256xf32>
    %593 = vector.shape_cast %592 : vector<1x1x256xf32> to vector<1x256xf32>
    %594 = vector.broadcast %591 : vector<1x256xf32> to vector<16x256xf32>
    %595 = vector.broadcast %1 : vector<16x1xf32> to vector<16x256xf32>
    %596 = arith.subf %594, %595 : vector<16x256xf32>
    %597 = math.absf %596 : vector<16x256xf32>
    %cst_274 = arith.constant 1.000000e+00 : f32
    %598 = vector.broadcast %cst_274 : f32 to vector<16x256xf32>
    %599 = arith.subf %598, %597 : vector<16x256xf32>
    %cst_275 = arith.constant 0.000000e+00 : f32
    %600 = vector.broadcast %cst_275 : f32 to vector<16x256xf32>
    %601 = arith.maximumf %600, %599 : vector<16x256xf32>
    %602 = arith.truncf %601 : vector<16x256xf32> to vector<16x256xbf16>
    %cst_276 = arith.constant 0.000000e+00 : f32
    %603 = vector.broadcast %cst_276 : f32 to vector<4x256xf32>
    %c0_277 = arith.constant 0 : index
    %c0_278 = arith.constant 0 : index
    %c0_279 = arith.constant 0 : index
    %604 = vector.load %arg2[%c0_277, %c0_278, %c0_279] : memref<1x64x16xbf16, #tpu.memory_space<vmem>>, vector<1x64x16xbf16>
    %605 = vector.shape_cast %604 : vector<1x64x16xbf16> to vector<64x16xbf16>
    %cst_280 = arith.constant dense<0.000000e+00> : vector<64x256xf32>
    %606 = tpu.matmul %605, %602, %cst_280 {dimension_numbers = #tpu.dot_dimension_numbers<[1], [0], [0], [1], [0, 0, 1, 1], [], []>} : vector<64x16xbf16>, vector<16x256xbf16>, vector<64x256xf32> -> vector<64x256xf32>
    %c0_281 = arith.constant 0 : index
    %c0_282 = arith.constant 0 : index
    %607 = vector.load %arg6[%c0_281, %c0_282] : memref<64x256xf32, #tpu.memory_space<vmem>>, vector<64x256xf32>
    tpu.vector_store %arg6[%c0_281, %c0_282], %606 {strides = array<i32>} : memref<64x256xf32, #tpu.memory_space<vmem>>, vector<64x256xf32>,
    %cst_283 = arith.constant 0.000000e+00 : f32
    %608 = vector.broadcast %cst_283 : f32 to vector<1x256xf32>
    %609 = arith.subf %593, %608 : vector<1x256xf32>
    %610 = math.absf %609 : vector<1x256xf32>
    %cst_284 = arith.constant 1.000000e+00 : f32
    %611 = vector.broadcast %cst_284 : f32 to vector<1x256xf32>
    %612 = arith.subf %611, %610 : vector<1x256xf32>
    %cst_285 = arith.constant 0.000000e+00 : f32
    %613 = vector.broadcast %cst_285 : f32 to vector<1x256xf32>
    %614 = arith.maximumf %613, %612 : vector<1x256xf32>
    %c0_286 = arith.constant 0 : index
    %c0_287 = arith.constant 0 : index
    %615 = vector.load %arg6[%c0_286, %c0_287] : memref<64x256xf32, #tpu.memory_space<vmem>>, vector<4x256xf32>
    %616 = vector.broadcast %614 : vector<1x256xf32> to vector<4x256xf32>
    %617 = arith.mulf %615, %616 : vector<4x256xf32>
    %618 = arith.addf %603, %617 : vector<4x256xf32>
    %cst_288 = arith.constant 1.000000e+00 : f32
    %619 = vector.broadcast %cst_288 : f32 to vector<1x256xf32>
    %620 = arith.subf %593, %619 : vector<1x256xf32>
    %621 = math.absf %620 : vector<1x256xf32>
    %cst_289 = arith.constant 1.000000e+00 : f32
    %622 = vector.broadcast %cst_289 : f32 to vector<1x256xf32>
    %623 = arith.subf %622, %621 : vector<1x256xf32>
    %cst_290 = arith.constant 0.000000e+00 : f32
    %624 = vector.broadcast %cst_290 : f32 to vector<1x256xf32>
    %625 = arith.maximumf %624, %623 : vector<1x256xf32>
    %c4_291 = arith.constant 4 : index
    %c0_292 = arith.constant 0 : index
    %626 = vector.load %arg6[%c4_291, %c0_292] : memref<64x256xf32, #tpu.memory_space<vmem>>, vector<4x256xf32>
    %627 = vector.broadcast %625 : vector<1x256xf32> to vector<4x256xf32>
    %628 = arith.mulf %626, %627 : vector<4x256xf32>
    %629 = arith.addf %618, %628 : vector<4x256xf32>
    %cst_293 = arith.constant 2.000000e+00 : f32
    %630 = vector.broadcast %cst_293 : f32 to vector<1x256xf32>
    %631 = arith.subf %593, %630 : vector<1x256xf32>
    %632 = math.absf %631 : vector<1x256xf32>
    %cst_294 = arith.constant 1.000000e+00 : f32
    %633 = vector.broadcast %cst_294 : f32 to vector<1x256xf32>
    %634 = arith.subf %633, %632 : vector<1x256xf32>
    %cst_295 = arith.constant 0.000000e+00 : f32
    %635 = vector.broadcast %cst_295 : f32 to vector<1x256xf32>
    %636 = arith.maximumf %635, %634 : vector<1x256xf32>
    %c8_296 = arith.constant 8 : index
    %c0_297 = arith.constant 0 : index
    %637 = vector.load %arg6[%c8_296, %c0_297] : memref<64x256xf32, #tpu.memory_space<vmem>>, vector<4x256xf32>
    %638 = vector.broadcast %636 : vector<1x256xf32> to vector<4x256xf32>
    %639 = arith.mulf %637, %638 : vector<4x256xf32>
    %640 = arith.addf %629, %639 : vector<4x256xf32>
    %cst_298 = arith.constant 3.000000e+00 : f32
    %641 = vector.broadcast %cst_298 : f32 to vector<1x256xf32>
    %642 = arith.subf %593, %641 : vector<1x256xf32>
    %643 = math.absf %642 : vector<1x256xf32>
    %cst_299 = arith.constant 1.000000e+00 : f32
    %644 = vector.broadcast %cst_299 : f32 to vector<1x256xf32>
    %645 = arith.subf %644, %643 : vector<1x256xf32>
    %cst_300 = arith.constant 0.000000e+00 : f32
    %646 = vector.broadcast %cst_300 : f32 to vector<1x256xf32>
    %647 = arith.maximumf %646, %645 : vector<1x256xf32>
    %c12_301 = arith.constant 12 : index
    %c0_302 = arith.constant 0 : index
    %648 = vector.load %arg6[%c12_301, %c0_302] : memref<64x256xf32, #tpu.memory_space<vmem>>, vector<4x256xf32>
    %649 = vector.broadcast %647 : vector<1x256xf32> to vector<4x256xf32>
    %650 = arith.mulf %648, %649 : vector<4x256xf32>
    %651 = arith.addf %640, %650 : vector<4x256xf32>
    %cst_303 = arith.constant 4.000000e+00 : f32
    %652 = vector.broadcast %cst_303 : f32 to vector<1x256xf32>
    %653 = arith.subf %593, %652 : vector<1x256xf32>
    %654 = math.absf %653 : vector<1x256xf32>
    %cst_304 = arith.constant 1.000000e+00 : f32
    %655 = vector.broadcast %cst_304 : f32 to vector<1x256xf32>
    %656 = arith.subf %655, %654 : vector<1x256xf32>
    %cst_305 = arith.constant 0.000000e+00 : f32
    %657 = vector.broadcast %cst_305 : f32 to vector<1x256xf32>
    %658 = arith.maximumf %657, %656 : vector<1x256xf32>
    %c16_306 = arith.constant 16 : index
    %c0_307 = arith.constant 0 : index
    %659 = vector.load %arg6[%c16_306, %c0_307] : memref<64x256xf32, #tpu.memory_space<vmem>>, vector<4x256xf32>
    %660 = vector.broadcast %658 : vector<1x256xf32> to vector<4x256xf32>
    %661 = arith.mulf %659, %660 : vector<4x256xf32>
    %662 = arith.addf %651, %661 : vector<4x256xf32>
    %cst_308 = arith.constant 5.000000e+00 : f32
    %663 = vector.broadcast %cst_308 : f32 to vector<1x256xf32>
    %664 = arith.subf %593, %663 : vector<1x256xf32>
    %665 = math.absf %664 : vector<1x256xf32>
    %cst_309 = arith.constant 1.000000e+00 : f32
    %666 = vector.broadcast %cst_309 : f32 to vector<1x256xf32>
    %667 = arith.subf %666, %665 : vector<1x256xf32>
    %cst_310 = arith.constant 0.000000e+00 : f32
    %668 = vector.broadcast %cst_310 : f32 to vector<1x256xf32>
    %669 = arith.maximumf %668, %667 : vector<1x256xf32>
    %c20_311 = arith.constant 20 : index
    %c0_312 = arith.constant 0 : index
    %670 = vector.load %arg6[%c20_311, %c0_312] : memref<64x256xf32, #tpu.memory_space<vmem>>, vector<4x256xf32>
    %671 = vector.broadcast %669 : vector<1x256xf32> to vector<4x256xf32>
    %672 = arith.mulf %670, %671 : vector<4x256xf32>
    %673 = arith.addf %662, %672 : vector<4x256xf32>
    %cst_313 = arith.constant 6.000000e+00 : f32
    %674 = vector.broadcast %cst_313 : f32 to vector<1x256xf32>
    %675 = arith.subf %593, %674 : vector<1x256xf32>
    %676 = math.absf %675 : vector<1x256xf32>
    %cst_314 = arith.constant 1.000000e+00 : f32
    %677 = vector.broadcast %cst_314 : f32 to vector<1x256xf32>
    %678 = arith.subf %677, %676 : vector<1x256xf32>
    %cst_315 = arith.constant 0.000000e+00 : f32
    %679 = vector.broadcast %cst_315 : f32 to vector<1x256xf32>
    %680 = arith.maximumf %679, %678 : vector<1x256xf32>
    %c24_316 = arith.constant 24 : index
    %c0_317 = arith.constant 0 : index
    %681 = vector.load %arg6[%c24_316, %c0_317] : memref<64x256xf32, #tpu.memory_space<vmem>>, vector<4x256xf32>
    %682 = vector.broadcast %680 : vector<1x256xf32> to vector<4x256xf32>
    %683 = arith.mulf %681, %682 : vector<4x256xf32>
    %684 = arith.addf %673, %683 : vector<4x256xf32>
    %cst_318 = arith.constant 7.000000e+00 : f32
    %685 = vector.broadcast %cst_318 : f32 to vector<1x256xf32>
    %686 = arith.subf %593, %685 : vector<1x256xf32>
    %687 = math.absf %686 : vector<1x256xf32>
    %cst_319 = arith.constant 1.000000e+00 : f32
    %688 = vector.broadcast %cst_319 : f32 to vector<1x256xf32>
    %689 = arith.subf %688, %687 : vector<1x256xf32>
    %cst_320 = arith.constant 0.000000e+00 : f32
    %690 = vector.broadcast %cst_320 : f32 to vector<1x256xf32>
    %691 = arith.maximumf %690, %689 : vector<1x256xf32>
    %c28_321 = arith.constant 28 : index
    %c0_322 = arith.constant 0 : index
    %692 = vector.load %arg6[%c28_321, %c0_322] : memref<64x256xf32, #tpu.memory_space<vmem>>, vector<4x256xf32>
    %693 = vector.broadcast %691 : vector<1x256xf32> to vector<4x256xf32>
    %694 = arith.mulf %692, %693 : vector<4x256xf32>
    %695 = arith.addf %684, %694 : vector<4x256xf32>
    %cst_323 = arith.constant 8.000000e+00 : f32
    %696 = vector.broadcast %cst_323 : f32 to vector<1x256xf32>
    %697 = arith.subf %593, %696 : vector<1x256xf32>
    %698 = math.absf %697 : vector<1x256xf32>
    %cst_324 = arith.constant 1.000000e+00 : f32
    %699 = vector.broadcast %cst_324 : f32 to vector<1x256xf32>
    %700 = arith.subf %699, %698 : vector<1x256xf32>
    %cst_325 = arith.constant 0.000000e+00 : f32
    %701 = vector.broadcast %cst_325 : f32 to vector<1x256xf32>
    %702 = arith.maximumf %701, %700 : vector<1x256xf32>
    %c32_326 = arith.constant 32 : index
    %c0_327 = arith.constant 0 : index
    %703 = vector.load %arg6[%c32_326, %c0_327] : memref<64x256xf32, #tpu.memory_space<vmem>>, vector<4x256xf32>
    %704 = vector.broadcast %702 : vector<1x256xf32> to vector<4x256xf32>
    %705 = arith.mulf %703, %704 : vector<4x256xf32>
    %706 = arith.addf %695, %705 : vector<4x256xf32>
    %cst_328 = arith.constant 9.000000e+00 : f32
    %707 = vector.broadcast %cst_328 : f32 to vector<1x256xf32>
    %708 = arith.subf %593, %707 : vector<1x256xf32>
    %709 = math.absf %708 : vector<1x256xf32>
    %cst_329 = arith.constant 1.000000e+00 : f32
    %710 = vector.broadcast %cst_329 : f32 to vector<1x256xf32>
    %711 = arith.subf %710, %709 : vector<1x256xf32>
    %cst_330 = arith.constant 0.000000e+00 : f32
    %712 = vector.broadcast %cst_330 : f32 to vector<1x256xf32>
    %713 = arith.maximumf %712, %711 : vector<1x256xf32>
    %c36_331 = arith.constant 36 : index
    %c0_332 = arith.constant 0 : index
    %714 = vector.load %arg6[%c36_331, %c0_332] : memref<64x256xf32, #tpu.memory_space<vmem>>, vector<4x256xf32>
    %715 = vector.broadcast %713 : vector<1x256xf32> to vector<4x256xf32>
    %716 = arith.mulf %714, %715 : vector<4x256xf32>
    %717 = arith.addf %706, %716 : vector<4x256xf32>
    %cst_333 = arith.constant 1.000000e+01 : f32
    %718 = vector.broadcast %cst_333 : f32 to vector<1x256xf32>
    %719 = arith.subf %593, %718 : vector<1x256xf32>
    %720 = math.absf %719 : vector<1x256xf32>
    %cst_334 = arith.constant 1.000000e+00 : f32
    %721 = vector.broadcast %cst_334 : f32 to vector<1x256xf32>
    %722 = arith.subf %721, %720 : vector<1x256xf32>
    %cst_335 = arith.constant 0.000000e+00 : f32
    %723 = vector.broadcast %cst_335 : f32 to vector<1x256xf32>
    %724 = arith.maximumf %723, %722 : vector<1x256xf32>
    %c40_336 = arith.constant 40 : index
    %c0_337 = arith.constant 0 : index
    %725 = vector.load %arg6[%c40_336, %c0_337] : memref<64x256xf32, #tpu.memory_space<vmem>>, vector<4x256xf32>
    %726 = vector.broadcast %724 : vector<1x256xf32> to vector<4x256xf32>
    %727 = arith.mulf %725, %726 : vector<4x256xf32>
    %728 = arith.addf %717, %727 : vector<4x256xf32>
    %cst_338 = arith.constant 1.100000e+01 : f32
    %729 = vector.broadcast %cst_338 : f32 to vector<1x256xf32>
    %730 = arith.subf %593, %729 : vector<1x256xf32>
    %731 = math.absf %730 : vector<1x256xf32>
    %cst_339 = arith.constant 1.000000e+00 : f32
    %732 = vector.broadcast %cst_339 : f32 to vector<1x256xf32>
    %733 = arith.subf %732, %731 : vector<1x256xf32>
    %cst_340 = arith.constant 0.000000e+00 : f32
    %734 = vector.broadcast %cst_340 : f32 to vector<1x256xf32>
    %735 = arith.maximumf %734, %733 : vector<1x256xf32>
    %c44_341 = arith.constant 44 : index
    %c0_342 = arith.constant 0 : index
    %736 = vector.load %arg6[%c44_341, %c0_342] : memref<64x256xf32, #tpu.memory_space<vmem>>, vector<4x256xf32>
    %737 = vector.broadcast %735 : vector<1x256xf32> to vector<4x256xf32>
    %738 = arith.mulf %736, %737 : vector<4x256xf32>
    %739 = arith.addf %728, %738 : vector<4x256xf32>
    %cst_343 = arith.constant 1.200000e+01 : f32
    %740 = vector.broadcast %cst_343 : f32 to vector<1x256xf32>
    %741 = arith.subf %593, %740 : vector<1x256xf32>
    %742 = math.absf %741 : vector<1x256xf32>
    %cst_344 = arith.constant 1.000000e+00 : f32
    %743 = vector.broadcast %cst_344 : f32 to vector<1x256xf32>
    %744 = arith.subf %743, %742 : vector<1x256xf32>
    %cst_345 = arith.constant 0.000000e+00 : f32
    %745 = vector.broadcast %cst_345 : f32 to vector<1x256xf32>
    %746 = arith.maximumf %745, %744 : vector<1x256xf32>
    %c48_346 = arith.constant 48 : index
    %c0_347 = arith.constant 0 : index
    %747 = vector.load %arg6[%c48_346, %c0_347] : memref<64x256xf32, #tpu.memory_space<vmem>>, vector<4x256xf32>
    %748 = vector.broadcast %746 : vector<1x256xf32> to vector<4x256xf32>
    %749 = arith.mulf %747, %748 : vector<4x256xf32>
    %750 = arith.addf %739, %749 : vector<4x256xf32>
    %cst_348 = arith.constant 1.300000e+01 : f32
    %751 = vector.broadcast %cst_348 : f32 to vector<1x256xf32>
    %752 = arith.subf %593, %751 : vector<1x256xf32>
    %753 = math.absf %752 : vector<1x256xf32>
    %cst_349 = arith.constant 1.000000e+00 : f32
    %754 = vector.broadcast %cst_349 : f32 to vector<1x256xf32>
    %755 = arith.subf %754, %753 : vector<1x256xf32>
    %cst_350 = arith.constant 0.000000e+00 : f32
    %756 = vector.broadcast %cst_350 : f32 to vector<1x256xf32>
    %757 = arith.maximumf %756, %755 : vector<1x256xf32>
    %c52_351 = arith.constant 52 : index
    %c0_352 = arith.constant 0 : index
    %758 = vector.load %arg6[%c52_351, %c0_352] : memref<64x256xf32, #tpu.memory_space<vmem>>, vector<4x256xf32>
    %759 = vector.broadcast %757 : vector<1x256xf32> to vector<4x256xf32>
    %760 = arith.mulf %758, %759 : vector<4x256xf32>
    %761 = arith.addf %750, %760 : vector<4x256xf32>
    %cst_353 = arith.constant 1.400000e+01 : f32
    %762 = vector.broadcast %cst_353 : f32 to vector<1x256xf32>
    %763 = arith.subf %593, %762 : vector<1x256xf32>
    %764 = math.absf %763 : vector<1x256xf32>
    %cst_354 = arith.constant 1.000000e+00 : f32
    %765 = vector.broadcast %cst_354 : f32 to vector<1x256xf32>
    %766 = arith.subf %765, %764 : vector<1x256xf32>
    %cst_355 = arith.constant 0.000000e+00 : f32
    %767 = vector.broadcast %cst_355 : f32 to vector<1x256xf32>
    %768 = arith.maximumf %767, %766 : vector<1x256xf32>
    %c56_356 = arith.constant 56 : index
    %c0_357 = arith.constant 0 : index
    %769 = vector.load %arg6[%c56_356, %c0_357] : memref<64x256xf32, #tpu.memory_space<vmem>>, vector<4x256xf32>
    %770 = vector.broadcast %768 : vector<1x256xf32> to vector<4x256xf32>
    %771 = arith.mulf %769, %770 : vector<4x256xf32>
    %772 = arith.addf %761, %771 : vector<4x256xf32>
    %cst_358 = arith.constant 1.500000e+01 : f32
    %773 = vector.broadcast %cst_358 : f32 to vector<1x256xf32>
    %774 = arith.subf %593, %773 : vector<1x256xf32>
    %775 = math.absf %774 : vector<1x256xf32>
    %cst_359 = arith.constant 1.000000e+00 : f32
    %776 = vector.broadcast %cst_359 : f32 to vector<1x256xf32>
    %777 = arith.subf %776, %775 : vector<1x256xf32>
    %cst_360 = arith.constant 0.000000e+00 : f32
    %778 = vector.broadcast %cst_360 : f32 to vector<1x256xf32>
    %779 = arith.maximumf %778, %777 : vector<1x256xf32>
    %c60_361 = arith.constant 60 : index
    %c0_362 = arith.constant 0 : index
    %780 = vector.load %arg6[%c60_361, %c0_362] : memref<64x256xf32, #tpu.memory_space<vmem>>, vector<4x256xf32>
    %781 = vector.broadcast %779 : vector<1x256xf32> to vector<4x256xf32>
    %782 = arith.mulf %780, %781 : vector<4x256xf32>
    %783 = arith.addf %772, %782 : vector<4x256xf32>
    %784 = arith.truncf %783 : vector<4x256xf32> to vector<4x256xbf16>
    %c12_363 = arith.constant 12 : index
    %c0_364 = arith.constant 0 : index
    %785 = vector.load %arg7[%c12_363, %c0_364] : memref<36x256xbf16, #tpu.memory_space<vmem>>, vector<4x256xbf16>
    tpu.vector_store %arg7[%c12_363, %c0_364], %784 {strides = array<i32>} : memref<36x256xbf16, #tpu.memory_space<vmem>>, vector<4x256xbf16>,
    %c0_365 = arith.constant 0 : index
    %c4_366 = arith.constant 4 : index
    %c0_367 = arith.constant 0 : index
    %786 = vector.load %arg3[%c0_365, %c4_366, %c0_367] : memref<1x18x256xf32, #tpu.memory_space<vmem>>, vector<1x1x256xf32>
    %787 = vector.shape_cast %786 : vector<1x1x256xf32> to vector<1x256xf32>
    %c0_368 = arith.constant 0 : index
    %c13 = arith.constant 13 : index
    %c0_369 = arith.constant 0 : index
    %788 = vector.load %arg3[%c0_368, %c13, %c0_369] : memref<1x18x256xf32, #tpu.memory_space<vmem>>, vector<1x1x256xf32>
    %789 = vector.shape_cast %788 : vector<1x1x256xf32> to vector<1x256xf32>
    %790 = vector.broadcast %787 : vector<1x256xf32> to vector<16x256xf32>
    %791 = vector.broadcast %1 : vector<16x1xf32> to vector<16x256xf32>
    %792 = arith.subf %790, %791 : vector<16x256xf32>
    %793 = math.absf %792 : vector<16x256xf32>
    %cst_370 = arith.constant 1.000000e+00 : f32
    %794 = vector.broadcast %cst_370 : f32 to vector<16x256xf32>
    %795 = arith.subf %794, %793 : vector<16x256xf32>
    %cst_371 = arith.constant 0.000000e+00 : f32
    %796 = vector.broadcast %cst_371 : f32 to vector<16x256xf32>
    %797 = arith.maximumf %796, %795 : vector<16x256xf32>
    %798 = arith.truncf %797 : vector<16x256xf32> to vector<16x256xbf16>
    %cst_372 = arith.constant 0.000000e+00 : f32
    %799 = vector.broadcast %cst_372 : f32 to vector<4x256xf32>
    %c0_373 = arith.constant 0 : index
    %c0_374 = arith.constant 0 : index
    %c0_375 = arith.constant 0 : index
    %800 = vector.load %arg2[%c0_373, %c0_374, %c0_375] : memref<1x64x16xbf16, #tpu.memory_space<vmem>>, vector<1x64x16xbf16>
    %801 = vector.shape_cast %800 : vector<1x64x16xbf16> to vector<64x16xbf16>
    %cst_376 = arith.constant dense<0.000000e+00> : vector<64x256xf32>
    %802 = tpu.matmul %801, %798, %cst_376 {dimension_numbers = #tpu.dot_dimension_numbers<[1], [0], [0], [1], [0, 0, 1, 1], [], []>} : vector<64x16xbf16>, vector<16x256xbf16>, vector<64x256xf32> -> vector<64x256xf32>
    %c0_377 = arith.constant 0 : index
    %c0_378 = arith.constant 0 : index
    %803 = vector.load %arg6[%c0_377, %c0_378] : memref<64x256xf32, #tpu.memory_space<vmem>>, vector<64x256xf32>
    tpu.vector_store %arg6[%c0_377, %c0_378], %802 {strides = array<i32>} : memref<64x256xf32, #tpu.memory_space<vmem>>, vector<64x256xf32>,
    %cst_379 = arith.constant 0.000000e+00 : f32
    %804 = vector.broadcast %cst_379 : f32 to vector<1x256xf32>
    %805 = arith.subf %789, %804 : vector<1x256xf32>
    %806 = math.absf %805 : vector<1x256xf32>
    %cst_380 = arith.constant 1.000000e+00 : f32
    %807 = vector.broadcast %cst_380 : f32 to vector<1x256xf32>
    %808 = arith.subf %807, %806 : vector<1x256xf32>
    %cst_381 = arith.constant 0.000000e+00 : f32
    %809 = vector.broadcast %cst_381 : f32 to vector<1x256xf32>
    %810 = arith.maximumf %809, %808 : vector<1x256xf32>
    %c0_382 = arith.constant 0 : index
    %c0_383 = arith.constant 0 : index
    %811 = vector.load %arg6[%c0_382, %c0_383] : memref<64x256xf32, #tpu.memory_space<vmem>>, vector<4x256xf32>
    %812 = vector.broadcast %810 : vector<1x256xf32> to vector<4x256xf32>
    %813 = arith.mulf %811, %812 : vector<4x256xf32>
    %814 = arith.addf %799, %813 : vector<4x256xf32>
    %cst_384 = arith.constant 1.000000e+00 : f32
    %815 = vector.broadcast %cst_384 : f32 to vector<1x256xf32>
    %816 = arith.subf %789, %815 : vector<1x256xf32>
    %817 = math.absf %816 : vector<1x256xf32>
    %cst_385 = arith.constant 1.000000e+00 : f32
    %818 = vector.broadcast %cst_385 : f32 to vector<1x256xf32>
    %819 = arith.subf %818, %817 : vector<1x256xf32>
    %cst_386 = arith.constant 0.000000e+00 : f32
    %820 = vector.broadcast %cst_386 : f32 to vector<1x256xf32>
    %821 = arith.maximumf %820, %819 : vector<1x256xf32>
    %c4_387 = arith.constant 4 : index
    %c0_388 = arith.constant 0 : index
    %822 = vector.load %arg6[%c4_387, %c0_388] : memref<64x256xf32, #tpu.memory_space<vmem>>, vector<4x256xf32>
    %823 = vector.broadcast %821 : vector<1x256xf32> to vector<4x256xf32>
    %824 = arith.mulf %822, %823 : vector<4x256xf32>
    %825 = arith.addf %814, %824 : vector<4x256xf32>
    %cst_389 = arith.constant 2.000000e+00 : f32
    %826 = vector.broadcast %cst_389 : f32 to vector<1x256xf32>
    %827 = arith.subf %789, %826 : vector<1x256xf32>
    %828 = math.absf %827 : vector<1x256xf32>
    %cst_390 = arith.constant 1.000000e+00 : f32
    %829 = vector.broadcast %cst_390 : f32 to vector<1x256xf32>
    %830 = arith.subf %829, %828 : vector<1x256xf32>
    %cst_391 = arith.constant 0.000000e+00 : f32
    %831 = vector.broadcast %cst_391 : f32 to vector<1x256xf32>
    %832 = arith.maximumf %831, %830 : vector<1x256xf32>
    %c8_392 = arith.constant 8 : index
    %c0_393 = arith.constant 0 : index
    %833 = vector.load %arg6[%c8_392, %c0_393] : memref<64x256xf32, #tpu.memory_space<vmem>>, vector<4x256xf32>
    %834 = vector.broadcast %832 : vector<1x256xf32> to vector<4x256xf32>
    %835 = arith.mulf %833, %834 : vector<4x256xf32>
    %836 = arith.addf %825, %835 : vector<4x256xf32>
    %cst_394 = arith.constant 3.000000e+00 : f32
    %837 = vector.broadcast %cst_394 : f32 to vector<1x256xf32>
    %838 = arith.subf %789, %837 : vector<1x256xf32>
    %839 = math.absf %838 : vector<1x256xf32>
    %cst_395 = arith.constant 1.000000e+00 : f32
    %840 = vector.broadcast %cst_395 : f32 to vector<1x256xf32>
    %841 = arith.subf %840, %839 : vector<1x256xf32>
    %cst_396 = arith.constant 0.000000e+00 : f32
    %842 = vector.broadcast %cst_396 : f32 to vector<1x256xf32>
    %843 = arith.maximumf %842, %841 : vector<1x256xf32>
    %c12_397 = arith.constant 12 : index
    %c0_398 = arith.constant 0 : index
    %844 = vector.load %arg6[%c12_397, %c0_398] : memref<64x256xf32, #tpu.memory_space<vmem>>, vector<4x256xf32>
    %845 = vector.broadcast %843 : vector<1x256xf32> to vector<4x256xf32>
    %846 = arith.mulf %844, %845 : vector<4x256xf32>
    %847 = arith.addf %836, %846 : vector<4x256xf32>
    %cst_399 = arith.constant 4.000000e+00 : f32
    %848 = vector.broadcast %cst_399 : f32 to vector<1x256xf32>
    %849 = arith.subf %789, %848 : vector<1x256xf32>
    %850 = math.absf %849 : vector<1x256xf32>
    %cst_400 = arith.constant 1.000000e+00 : f32
    %851 = vector.broadcast %cst_400 : f32 to vector<1x256xf32>
    %852 = arith.subf %851, %850 : vector<1x256xf32>
    %cst_401 = arith.constant 0.000000e+00 : f32
    %853 = vector.broadcast %cst_401 : f32 to vector<1x256xf32>
    %854 = arith.maximumf %853, %852 : vector<1x256xf32>
    %c16_402 = arith.constant 16 : index
    %c0_403 = arith.constant 0 : index
    %855 = vector.load %arg6[%c16_402, %c0_403] : memref<64x256xf32, #tpu.memory_space<vmem>>, vector<4x256xf32>
    %856 = vector.broadcast %854 : vector<1x256xf32> to vector<4x256xf32>
    %857 = arith.mulf %855, %856 : vector<4x256xf32>
    %858 = arith.addf %847, %857 : vector<4x256xf32>
    %cst_404 = arith.constant 5.000000e+00 : f32
    %859 = vector.broadcast %cst_404 : f32 to vector<1x256xf32>
    %860 = arith.subf %789, %859 : vector<1x256xf32>
    %861 = math.absf %860 : vector<1x256xf32>
    %cst_405 = arith.constant 1.000000e+00 : f32
    %862 = vector.broadcast %cst_405 : f32 to vector<1x256xf32>
    %863 = arith.subf %862, %861 : vector<1x256xf32>
    %cst_406 = arith.constant 0.000000e+00 : f32
    %864 = vector.broadcast %cst_406 : f32 to vector<1x256xf32>
    %865 = arith.maximumf %864, %863 : vector<1x256xf32>
    %c20_407 = arith.constant 20 : index
    %c0_408 = arith.constant 0 : index
    %866 = vector.load %arg6[%c20_407, %c0_408] : memref<64x256xf32, #tpu.memory_space<vmem>>, vector<4x256xf32>
    %867 = vector.broadcast %865 : vector<1x256xf32> to vector<4x256xf32>
    %868 = arith.mulf %866, %867 : vector<4x256xf32>
    %869 = arith.addf %858, %868 : vector<4x256xf32>
    %cst_409 = arith.constant 6.000000e+00 : f32
    %870 = vector.broadcast %cst_409 : f32 to vector<1x256xf32>
    %871 = arith.subf %789, %870 : vector<1x256xf32>
    %872 = math.absf %871 : vector<1x256xf32>
    %cst_410 = arith.constant 1.000000e+00 : f32
    %873 = vector.broadcast %cst_410 : f32 to vector<1x256xf32>
    %874 = arith.subf %873, %872 : vector<1x256xf32>
    %cst_411 = arith.constant 0.000000e+00 : f32
    %875 = vector.broadcast %cst_411 : f32 to vector<1x256xf32>
    %876 = arith.maximumf %875, %874 : vector<1x256xf32>
    %c24_412 = arith.constant 24 : index
    %c0_413 = arith.constant 0 : index
    %877 = vector.load %arg6[%c24_412, %c0_413] : memref<64x256xf32, #tpu.memory_space<vmem>>, vector<4x256xf32>
    %878 = vector.broadcast %876 : vector<1x256xf32> to vector<4x256xf32>
    %879 = arith.mulf %877, %878 : vector<4x256xf32>
    %880 = arith.addf %869, %879 : vector<4x256xf32>
    %cst_414 = arith.constant 7.000000e+00 : f32
    %881 = vector.broadcast %cst_414 : f32 to vector<1x256xf32>
    %882 = arith.subf %789, %881 : vector<1x256xf32>
    %883 = math.absf %882 : vector<1x256xf32>
    %cst_415 = arith.constant 1.000000e+00 : f32
    %884 = vector.broadcast %cst_415 : f32 to vector<1x256xf32>
    %885 = arith.subf %884, %883 : vector<1x256xf32>
    %cst_416 = arith.constant 0.000000e+00 : f32
    %886 = vector.broadcast %cst_416 : f32 to vector<1x256xf32>
    %887 = arith.maximumf %886, %885 : vector<1x256xf32>
    %c28_417 = arith.constant 28 : index
    %c0_418 = arith.constant 0 : index
    %888 = vector.load %arg6[%c28_417, %c0_418] : memref<64x256xf32, #tpu.memory_space<vmem>>, vector<4x256xf32>
    %889 = vector.broadcast %887 : vector<1x256xf32> to vector<4x256xf32>
    %890 = arith.mulf %888, %889 : vector<4x256xf32>
    %891 = arith.addf %880, %890 : vector<4x256xf32>
    %cst_419 = arith.constant 8.000000e+00 : f32
    %892 = vector.broadcast %cst_419 : f32 to vector<1x256xf32>
    %893 = arith.subf %789, %892 : vector<1x256xf32>
    %894 = math.absf %893 : vector<1x256xf32>
    %cst_420 = arith.constant 1.000000e+00 : f32
    %895 = vector.broadcast %cst_420 : f32 to vector<1x256xf32>
    %896 = arith.subf %895, %894 : vector<1x256xf32>
    %cst_421 = arith.constant 0.000000e+00 : f32
    %897 = vector.broadcast %cst_421 : f32 to vector<1x256xf32>
    %898 = arith.maximumf %897, %896 : vector<1x256xf32>
    %c32_422 = arith.constant 32 : index
    %c0_423 = arith.constant 0 : index
    %899 = vector.load %arg6[%c32_422, %c0_423] : memref<64x256xf32, #tpu.memory_space<vmem>>, vector<4x256xf32>
    %900 = vector.broadcast %898 : vector<1x256xf32> to vector<4x256xf32>
    %901 = arith.mulf %899, %900 : vector<4x256xf32>
    %902 = arith.addf %891, %901 : vector<4x256xf32>
    %cst_424 = arith.constant 9.000000e+00 : f32
    %903 = vector.broadcast %cst_424 : f32 to vector<1x256xf32>
    %904 = arith.subf %789, %903 : vector<1x256xf32>
    %905 = math.absf %904 : vector<1x256xf32>
    %cst_425 = arith.constant 1.000000e+00 : f32
    %906 = vector.broadcast %cst_425 : f32 to vector<1x256xf32>
    %907 = arith.subf %906, %905 : vector<1x256xf32>
    %cst_426 = arith.constant 0.000000e+00 : f32
    %908 = vector.broadcast %cst_426 : f32 to vector<1x256xf32>
    %909 = arith.maximumf %908, %907 : vector<1x256xf32>
    %c36_427 = arith.constant 36 : index
    %c0_428 = arith.constant 0 : index
    %910 = vector.load %arg6[%c36_427, %c0_428] : memref<64x256xf32, #tpu.memory_space<vmem>>, vector<4x256xf32>
    %911 = vector.broadcast %909 : vector<1x256xf32> to vector<4x256xf32>
    %912 = arith.mulf %910, %911 : vector<4x256xf32>
    %913 = arith.addf %902, %912 : vector<4x256xf32>
    %cst_429 = arith.constant 1.000000e+01 : f32
    %914 = vector.broadcast %cst_429 : f32 to vector<1x256xf32>
    %915 = arith.subf %789, %914 : vector<1x256xf32>
    %916 = math.absf %915 : vector<1x256xf32>
    %cst_430 = arith.constant 1.000000e+00 : f32
    %917 = vector.broadcast %cst_430 : f32 to vector<1x256xf32>
    %918 = arith.subf %917, %916 : vector<1x256xf32>
    %cst_431 = arith.constant 0.000000e+00 : f32
    %919 = vector.broadcast %cst_431 : f32 to vector<1x256xf32>
    %920 = arith.maximumf %919, %918 : vector<1x256xf32>
    %c40_432 = arith.constant 40 : index
    %c0_433 = arith.constant 0 : index
    %921 = vector.load %arg6[%c40_432, %c0_433] : memref<64x256xf32, #tpu.memory_space<vmem>>, vector<4x256xf32>
    %922 = vector.broadcast %920 : vector<1x256xf32> to vector<4x256xf32>
    %923 = arith.mulf %921, %922 : vector<4x256xf32>
    %924 = arith.addf %913, %923 : vector<4x256xf32>
    %cst_434 = arith.constant 1.100000e+01 : f32
    %925 = vector.broadcast %cst_434 : f32 to vector<1x256xf32>
    %926 = arith.subf %789, %925 : vector<1x256xf32>
    %927 = math.absf %926 : vector<1x256xf32>
    %cst_435 = arith.constant 1.000000e+00 : f32
    %928 = vector.broadcast %cst_435 : f32 to vector<1x256xf32>
    %929 = arith.subf %928, %927 : vector<1x256xf32>
    %cst_436 = arith.constant 0.000000e+00 : f32
    %930 = vector.broadcast %cst_436 : f32 to vector<1x256xf32>
    %931 = arith.maximumf %930, %929 : vector<1x256xf32>
    %c44_437 = arith.constant 44 : index
    %c0_438 = arith.constant 0 : index
    %932 = vector.load %arg6[%c44_437, %c0_438] : memref<64x256xf32, #tpu.memory_space<vmem>>, vector<4x256xf32>
    %933 = vector.broadcast %931 : vector<1x256xf32> to vector<4x256xf32>
    %934 = arith.mulf %932, %933 : vector<4x256xf32>
    %935 = arith.addf %924, %934 : vector<4x256xf32>
    %cst_439 = arith.constant 1.200000e+01 : f32
    %936 = vector.broadcast %cst_439 : f32 to vector<1x256xf32>
    %937 = arith.subf %789, %936 : vector<1x256xf32>
    %938 = math.absf %937 : vector<1x256xf32>
    %cst_440 = arith.constant 1.000000e+00 : f32
    %939 = vector.broadcast %cst_440 : f32 to vector<1x256xf32>
    %940 = arith.subf %939, %938 : vector<1x256xf32>
    %cst_441 = arith.constant 0.000000e+00 : f32
    %941 = vector.broadcast %cst_441 : f32 to vector<1x256xf32>
    %942 = arith.maximumf %941, %940 : vector<1x256xf32>
    %c48_442 = arith.constant 48 : index
    %c0_443 = arith.constant 0 : index
    %943 = vector.load %arg6[%c48_442, %c0_443] : memref<64x256xf32, #tpu.memory_space<vmem>>, vector<4x256xf32>
    %944 = vector.broadcast %942 : vector<1x256xf32> to vector<4x256xf32>
    %945 = arith.mulf %943, %944 : vector<4x256xf32>
    %946 = arith.addf %935, %945 : vector<4x256xf32>
    %cst_444 = arith.constant 1.300000e+01 : f32
    %947 = vector.broadcast %cst_444 : f32 to vector<1x256xf32>
    %948 = arith.subf %789, %947 : vector<1x256xf32>
    %949 = math.absf %948 : vector<1x256xf32>
    %cst_445 = arith.constant 1.000000e+00 : f32
    %950 = vector.broadcast %cst_445 : f32 to vector<1x256xf32>
    %951 = arith.subf %950, %949 : vector<1x256xf32>
    %cst_446 = arith.constant 0.000000e+00 : f32
    %952 = vector.broadcast %cst_446 : f32 to vector<1x256xf32>
    %953 = arith.maximumf %952, %951 : vector<1x256xf32>
    %c52_447 = arith.constant 52 : index
    %c0_448 = arith.constant 0 : index
    %954 = vector.load %arg6[%c52_447, %c0_448] : memref<64x256xf32, #tpu.memory_space<vmem>>, vector<4x256xf32>
    %955 = vector.broadcast %953 : vector<1x256xf32> to vector<4x256xf32>
    %956 = arith.mulf %954, %955 : vector<4x256xf32>
    %957 = arith.addf %946, %956 : vector<4x256xf32>
    %cst_449 = arith.constant 1.400000e+01 : f32
    %958 = vector.broadcast %cst_449 : f32 to vector<1x256xf32>
    %959 = arith.subf %789, %958 : vector<1x256xf32>
    %960 = math.absf %959 : vector<1x256xf32>
    %cst_450 = arith.constant 1.000000e+00 : f32
    %961 = vector.broadcast %cst_450 : f32 to vector<1x256xf32>
    %962 = arith.subf %961, %960 : vector<1x256xf32>
    %cst_451 = arith.constant 0.000000e+00 : f32
    %963 = vector.broadcast %cst_451 : f32 to vector<1x256xf32>
    %964 = arith.maximumf %963, %962 : vector<1x256xf32>
    %c56_452 = arith.constant 56 : index
    %c0_453 = arith.constant 0 : index
    %965 = vector.load %arg6[%c56_452, %c0_453] : memref<64x256xf32, #tpu.memory_space<vmem>>, vector<4x256xf32>
    %966 = vector.broadcast %964 : vector<1x256xf32> to vector<4x256xf32>
    %967 = arith.mulf %965, %966 : vector<4x256xf32>
    %968 = arith.addf %957, %967 : vector<4x256xf32>
    %cst_454 = arith.constant 1.500000e+01 : f32
    %969 = vector.broadcast %cst_454 : f32 to vector<1x256xf32>
    %970 = arith.subf %789, %969 : vector<1x256xf32>
    %971 = math.absf %970 : vector<1x256xf32>
    %cst_455 = arith.constant 1.000000e+00 : f32
    %972 = vector.broadcast %cst_455 : f32 to vector<1x256xf32>
    %973 = arith.subf %972, %971 : vector<1x256xf32>
    %cst_456 = arith.constant 0.000000e+00 : f32
    %974 = vector.broadcast %cst_456 : f32 to vector<1x256xf32>
    %975 = arith.maximumf %974, %973 : vector<1x256xf32>
    %c60_457 = arith.constant 60 : index
    %c0_458 = arith.constant 0 : index
    %976 = vector.load %arg6[%c60_457, %c0_458] : memref<64x256xf32, #tpu.memory_space<vmem>>, vector<4x256xf32>
    %977 = vector.broadcast %975 : vector<1x256xf32> to vector<4x256xf32>
    %978 = arith.mulf %976, %977 : vector<4x256xf32>
    %979 = arith.addf %968, %978 : vector<4x256xf32>
    %980 = arith.truncf %979 : vector<4x256xf32> to vector<4x256xbf16>
    %c16_459 = arith.constant 16 : index
    %c0_460 = arith.constant 0 : index
    %981 = vector.load %arg7[%c16_459, %c0_460] : memref<36x256xbf16, #tpu.memory_space<vmem>>, vector<4x256xbf16>
    tpu.vector_store %arg7[%c16_459, %c0_460], %980 {strides = array<i32>} : memref<36x256xbf16, #tpu.memory_space<vmem>>, vector<4x256xbf16>,
    %c0_461 = arith.constant 0 : index
    %c5 = arith.constant 5 : index
    %c0_462 = arith.constant 0 : index
    %982 = vector.load %arg3[%c0_461, %c5, %c0_462] : memref<1x18x256xf32, #tpu.memory_space<vmem>>, vector<1x1x256xf32>
    %983 = vector.shape_cast %982 : vector<1x1x256xf32> to vector<1x256xf32>
    %c0_463 = arith.constant 0 : index
    %c14 = arith.constant 14 : index
    %c0_464 = arith.constant 0 : index
    %984 = vector.load %arg3[%c0_463, %c14, %c0_464] : memref<1x18x256xf32, #tpu.memory_space<vmem>>, vector<1x1x256xf32>
    %985 = vector.shape_cast %984 : vector<1x1x256xf32> to vector<1x256xf32>
    %986 = vector.broadcast %983 : vector<1x256xf32> to vector<16x256xf32>
    %987 = vector.broadcast %1 : vector<16x1xf32> to vector<16x256xf32>
    %988 = arith.subf %986, %987 : vector<16x256xf32>
    %989 = math.absf %988 : vector<16x256xf32>
    %cst_465 = arith.constant 1.000000e+00 : f32
    %990 = vector.broadcast %cst_465 : f32 to vector<16x256xf32>
    %991 = arith.subf %990, %989 : vector<16x256xf32>
    %cst_466 = arith.constant 0.000000e+00 : f32
    %992 = vector.broadcast %cst_466 : f32 to vector<16x256xf32>
    %993 = arith.maximumf %992, %991 : vector<16x256xf32>
    %994 = arith.truncf %993 : vector<16x256xf32> to vector<16x256xbf16>
    %cst_467 = arith.constant 0.000000e+00 : f32
    %995 = vector.broadcast %cst_467 : f32 to vector<4x256xf32>
    %c0_468 = arith.constant 0 : index
    %c0_469 = arith.constant 0 : index
    %c0_470 = arith.constant 0 : index
    %996 = vector.load %arg2[%c0_468, %c0_469, %c0_470] : memref<1x64x16xbf16, #tpu.memory_space<vmem>>, vector<1x64x16xbf16>
    %997 = vector.shape_cast %996 : vector<1x64x16xbf16> to vector<64x16xbf16>
    %cst_471 = arith.constant dense<0.000000e+00> : vector<64x256xf32>
    %998 = tpu.matmul %997, %994, %cst_471 {dimension_numbers = #tpu.dot_dimension_numbers<[1], [0], [0], [1], [0, 0, 1, 1], [], []>} : vector<64x16xbf16>, vector<16x256xbf16>, vector<64x256xf32> -> vector<64x256xf32>
    %c0_472 = arith.constant 0 : index
    %c0_473 = arith.constant 0 : index
    %999 = vector.load %arg6[%c0_472, %c0_473] : memref<64x256xf32, #tpu.memory_space<vmem>>, vector<64x256xf32>
    tpu.vector_store %arg6[%c0_472, %c0_473], %998 {strides = array<i32>} : memref<64x256xf32, #tpu.memory_space<vmem>>, vector<64x256xf32>,
    %cst_474 = arith.constant 0.000000e+00 : f32
    %1000 = vector.broadcast %cst_474 : f32 to vector<1x256xf32>
    %1001 = arith.subf %985, %1000 : vector<1x256xf32>
    %1002 = math.absf %1001 : vector<1x256xf32>
    %cst_475 = arith.constant 1.000000e+00 : f32
    %1003 = vector.broadcast %cst_475 : f32 to vector<1x256xf32>
    %1004 = arith.subf %1003, %1002 : vector<1x256xf32>
    %cst_476 = arith.constant 0.000000e+00 : f32
    %1005 = vector.broadcast %cst_476 : f32 to vector<1x256xf32>
    %1006 = arith.maximumf %1005, %1004 : vector<1x256xf32>
    %c0_477 = arith.constant 0 : index
    %c0_478 = arith.constant 0 : index
    %1007 = vector.load %arg6[%c0_477, %c0_478] : memref<64x256xf32, #tpu.memory_space<vmem>>, vector<4x256xf32>
    %1008 = vector.broadcast %1006 : vector<1x256xf32> to vector<4x256xf32>
    %1009 = arith.mulf %1007, %1008 : vector<4x256xf32>
    %1010 = arith.addf %995, %1009 : vector<4x256xf32>
    %cst_479 = arith.constant 1.000000e+00 : f32
    %1011 = vector.broadcast %cst_479 : f32 to vector<1x256xf32>
    %1012 = arith.subf %985, %1011 : vector<1x256xf32>
    %1013 = math.absf %1012 : vector<1x256xf32>
    %cst_480 = arith.constant 1.000000e+00 : f32
    %1014 = vector.broadcast %cst_480 : f32 to vector<1x256xf32>
    %1015 = arith.subf %1014, %1013 : vector<1x256xf32>
    %cst_481 = arith.constant 0.000000e+00 : f32
    %1016 = vector.broadcast %cst_481 : f32 to vector<1x256xf32>
    %1017 = arith.maximumf %1016, %1015 : vector<1x256xf32>
    %c4_482 = arith.constant 4 : index
    %c0_483 = arith.constant 0 : index
    %1018 = vector.load %arg6[%c4_482, %c0_483] : memref<64x256xf32, #tpu.memory_space<vmem>>, vector<4x256xf32>
    %1019 = vector.broadcast %1017 : vector<1x256xf32> to vector<4x256xf32>
    %1020 = arith.mulf %1018, %1019 : vector<4x256xf32>
    %1021 = arith.addf %1010, %1020 : vector<4x256xf32>
    %cst_484 = arith.constant 2.000000e+00 : f32
    %1022 = vector.broadcast %cst_484 : f32 to vector<1x256xf32>
    %1023 = arith.subf %985, %1022 : vector<1x256xf32>
    %1024 = math.absf %1023 : vector<1x256xf32>
    %cst_485 = arith.constant 1.000000e+00 : f32
    %1025 = vector.broadcast %cst_485 : f32 to vector<1x256xf32>
    %1026 = arith.subf %1025, %1024 : vector<1x256xf32>
    %cst_486 = arith.constant 0.000000e+00 : f32
    %1027 = vector.broadcast %cst_486 : f32 to vector<1x256xf32>
    %1028 = arith.maximumf %1027, %1026 : vector<1x256xf32>
    %c8_487 = arith.constant 8 : index
    %c0_488 = arith.constant 0 : index
    %1029 = vector.load %arg6[%c8_487, %c0_488] : memref<64x256xf32, #tpu.memory_space<vmem>>, vector<4x256xf32>
    %1030 = vector.broadcast %1028 : vector<1x256xf32> to vector<4x256xf32>
    %1031 = arith.mulf %1029, %1030 : vector<4x256xf32>
    %1032 = arith.addf %1021, %1031 : vector<4x256xf32>
    %cst_489 = arith.constant 3.000000e+00 : f32
    %1033 = vector.broadcast %cst_489 : f32 to vector<1x256xf32>
    %1034 = arith.subf %985, %1033 : vector<1x256xf32>
    %1035 = math.absf %1034 : vector<1x256xf32>
    %cst_490 = arith.constant 1.000000e+00 : f32
    %1036 = vector.broadcast %cst_490 : f32 to vector<1x256xf32>
    %1037 = arith.subf %1036, %1035 : vector<1x256xf32>
    %cst_491 = arith.constant 0.000000e+00 : f32
    %1038 = vector.broadcast %cst_491 : f32 to vector<1x256xf32>
    %1039 = arith.maximumf %1038, %1037 : vector<1x256xf32>
    %c12_492 = arith.constant 12 : index
    %c0_493 = arith.constant 0 : index
    %1040 = vector.load %arg6[%c12_492, %c0_493] : memref<64x256xf32, #tpu.memory_space<vmem>>, vector<4x256xf32>
    %1041 = vector.broadcast %1039 : vector<1x256xf32> to vector<4x256xf32>
    %1042 = arith.mulf %1040, %1041 : vector<4x256xf32>
    %1043 = arith.addf %1032, %1042 : vector<4x256xf32>
    %cst_494 = arith.constant 4.000000e+00 : f32
    %1044 = vector.broadcast %cst_494 : f32 to vector<1x256xf32>
    %1045 = arith.subf %985, %1044 : vector<1x256xf32>
    %1046 = math.absf %1045 : vector<1x256xf32>
    %cst_495 = arith.constant 1.000000e+00 : f32
    %1047 = vector.broadcast %cst_495 : f32 to vector<1x256xf32>
    %1048 = arith.subf %1047, %1046 : vector<1x256xf32>
    %cst_496 = arith.constant 0.000000e+00 : f32
    %1049 = vector.broadcast %cst_496 : f32 to vector<1x256xf32>
    %1050 = arith.maximumf %1049, %1048 : vector<1x256xf32>
    %c16_497 = arith.constant 16 : index
    %c0_498 = arith.constant 0 : index
    %1051 = vector.load %arg6[%c16_497, %c0_498] : memref<64x256xf32, #tpu.memory_space<vmem>>, vector<4x256xf32>
    %1052 = vector.broadcast %1050 : vector<1x256xf32> to vector<4x256xf32>
    %1053 = arith.mulf %1051, %1052 : vector<4x256xf32>
    %1054 = arith.addf %1043, %1053 : vector<4x256xf32>
    %cst_499 = arith.constant 5.000000e+00 : f32
    %1055 = vector.broadcast %cst_499 : f32 to vector<1x256xf32>
    %1056 = arith.subf %985, %1055 : vector<1x256xf32>
    %1057 = math.absf %1056 : vector<1x256xf32>
    %cst_500 = arith.constant 1.000000e+00 : f32
    %1058 = vector.broadcast %cst_500 : f32 to vector<1x256xf32>
    %1059 = arith.subf %1058, %1057 : vector<1x256xf32>
    %cst_501 = arith.constant 0.000000e+00 : f32
    %1060 = vector.broadcast %cst_501 : f32 to vector<1x256xf32>
    %1061 = arith.maximumf %1060, %1059 : vector<1x256xf32>
    %c20_502 = arith.constant 20 : index
    %c0_503 = arith.constant 0 : index
    %1062 = vector.load %arg6[%c20_502, %c0_503] : memref<64x256xf32, #tpu.memory_space<vmem>>, vector<4x256xf32>
    %1063 = vector.broadcast %1061 : vector<1x256xf32> to vector<4x256xf32>
    %1064 = arith.mulf %1062, %1063 : vector<4x256xf32>
    %1065 = arith.addf %1054, %1064 : vector<4x256xf32>
    %cst_504 = arith.constant 6.000000e+00 : f32
    %1066 = vector.broadcast %cst_504 : f32 to vector<1x256xf32>
    %1067 = arith.subf %985, %1066 : vector<1x256xf32>
    %1068 = math.absf %1067 : vector<1x256xf32>
    %cst_505 = arith.constant 1.000000e+00 : f32
    %1069 = vector.broadcast %cst_505 : f32 to vector<1x256xf32>
    %1070 = arith.subf %1069, %1068 : vector<1x256xf32>
    %cst_506 = arith.constant 0.000000e+00 : f32
    %1071 = vector.broadcast %cst_506 : f32 to vector<1x256xf32>
    %1072 = arith.maximumf %1071, %1070 : vector<1x256xf32>
    %c24_507 = arith.constant 24 : index
    %c0_508 = arith.constant 0 : index
    %1073 = vector.load %arg6[%c24_507, %c0_508] : memref<64x256xf32, #tpu.memory_space<vmem>>, vector<4x256xf32>
    %1074 = vector.broadcast %1072 : vector<1x256xf32> to vector<4x256xf32>
    %1075 = arith.mulf %1073, %1074 : vector<4x256xf32>
    %1076 = arith.addf %1065, %1075 : vector<4x256xf32>
    %cst_509 = arith.constant 7.000000e+00 : f32
    %1077 = vector.broadcast %cst_509 : f32 to vector<1x256xf32>
    %1078 = arith.subf %985, %1077 : vector<1x256xf32>
    %1079 = math.absf %1078 : vector<1x256xf32>
    %cst_510 = arith.constant 1.000000e+00 : f32
    %1080 = vector.broadcast %cst_510 : f32 to vector<1x256xf32>
    %1081 = arith.subf %1080, %1079 : vector<1x256xf32>
    %cst_511 = arith.constant 0.000000e+00 : f32
    %1082 = vector.broadcast %cst_511 : f32 to vector<1x256xf32>
    %1083 = arith.maximumf %1082, %1081 : vector<1x256xf32>
    %c28_512 = arith.constant 28 : index
    %c0_513 = arith.constant 0 : index
    %1084 = vector.load %arg6[%c28_512, %c0_513] : memref<64x256xf32, #tpu.memory_space<vmem>>, vector<4x256xf32>
    %1085 = vector.broadcast %1083 : vector<1x256xf32> to vector<4x256xf32>
    %1086 = arith.mulf %1084, %1085 : vector<4x256xf32>
    %1087 = arith.addf %1076, %1086 : vector<4x256xf32>
    %cst_514 = arith.constant 8.000000e+00 : f32
    %1088 = vector.broadcast %cst_514 : f32 to vector<1x256xf32>
    %1089 = arith.subf %985, %1088 : vector<1x256xf32>
    %1090 = math.absf %1089 : vector<1x256xf32>
    %cst_515 = arith.constant 1.000000e+00 : f32
    %1091 = vector.broadcast %cst_515 : f32 to vector<1x256xf32>
    %1092 = arith.subf %1091, %1090 : vector<1x256xf32>
    %cst_516 = arith.constant 0.000000e+00 : f32
    %1093 = vector.broadcast %cst_516 : f32 to vector<1x256xf32>
    %1094 = arith.maximumf %1093, %1092 : vector<1x256xf32>
    %c32_517 = arith.constant 32 : index
    %c0_518 = arith.constant 0 : index
    %1095 = vector.load %arg6[%c32_517, %c0_518] : memref<64x256xf32, #tpu.memory_space<vmem>>, vector<4x256xf32>
    %1096 = vector.broadcast %1094 : vector<1x256xf32> to vector<4x256xf32>
    %1097 = arith.mulf %1095, %1096 : vector<4x256xf32>
    %1098 = arith.addf %1087, %1097 : vector<4x256xf32>
    %cst_519 = arith.constant 9.000000e+00 : f32
    %1099 = vector.broadcast %cst_519 : f32 to vector<1x256xf32>
    %1100 = arith.subf %985, %1099 : vector<1x256xf32>
    %1101 = math.absf %1100 : vector<1x256xf32>
    %cst_520 = arith.constant 1.000000e+00 : f32
    %1102 = vector.broadcast %cst_520 : f32 to vector<1x256xf32>
    %1103 = arith.subf %1102, %1101 : vector<1x256xf32>
    %cst_521 = arith.constant 0.000000e+00 : f32
    %1104 = vector.broadcast %cst_521 : f32 to vector<1x256xf32>
    %1105 = arith.maximumf %1104, %1103 : vector<1x256xf32>
    %c36_522 = arith.constant 36 : index
    %c0_523 = arith.constant 0 : index
    %1106 = vector.load %arg6[%c36_522, %c0_523] : memref<64x256xf32, #tpu.memory_space<vmem>>, vector<4x256xf32>
    %1107 = vector.broadcast %1105 : vector<1x256xf32> to vector<4x256xf32>
    %1108 = arith.mulf %1106, %1107 : vector<4x256xf32>
    %1109 = arith.addf %1098, %1108 : vector<4x256xf32>
    %cst_524 = arith.constant 1.000000e+01 : f32
    %1110 = vector.broadcast %cst_524 : f32 to vector<1x256xf32>
    %1111 = arith.subf %985, %1110 : vector<1x256xf32>
    %1112 = math.absf %1111 : vector<1x256xf32>
    %cst_525 = arith.constant 1.000000e+00 : f32
    %1113 = vector.broadcast %cst_525 : f32 to vector<1x256xf32>
    %1114 = arith.subf %1113, %1112 : vector<1x256xf32>
    %cst_526 = arith.constant 0.000000e+00 : f32
    %1115 = vector.broadcast %cst_526 : f32 to vector<1x256xf32>
    %1116 = arith.maximumf %1115, %1114 : vector<1x256xf32>
    %c40_527 = arith.constant 40 : index
    %c0_528 = arith.constant 0 : index
    %1117 = vector.load %arg6[%c40_527, %c0_528] : memref<64x256xf32, #tpu.memory_space<vmem>>, vector<4x256xf32>
    %1118 = vector.broadcast %1116 : vector<1x256xf32> to vector<4x256xf32>
    %1119 = arith.mulf %1117, %1118 : vector<4x256xf32>
    %1120 = arith.addf %1109, %1119 : vector<4x256xf32>
    %cst_529 = arith.constant 1.100000e+01 : f32
    %1121 = vector.broadcast %cst_529 : f32 to vector<1x256xf32>
    %1122 = arith.subf %985, %1121 : vector<1x256xf32>
    %1123 = math.absf %1122 : vector<1x256xf32>
    %cst_530 = arith.constant 1.000000e+00 : f32
    %1124 = vector.broadcast %cst_530 : f32 to vector<1x256xf32>
    %1125 = arith.subf %1124, %1123 : vector<1x256xf32>
    %cst_531 = arith.constant 0.000000e+00 : f32
    %1126 = vector.broadcast %cst_531 : f32 to vector<1x256xf32>
    %1127 = arith.maximumf %1126, %1125 : vector<1x256xf32>
    %c44_532 = arith.constant 44 : index
    %c0_533 = arith.constant 0 : index
    %1128 = vector.load %arg6[%c44_532, %c0_533] : memref<64x256xf32, #tpu.memory_space<vmem>>, vector<4x256xf32>
    %1129 = vector.broadcast %1127 : vector<1x256xf32> to vector<4x256xf32>
    %1130 = arith.mulf %1128, %1129 : vector<4x256xf32>
    %1131 = arith.addf %1120, %1130 : vector<4x256xf32>
    %cst_534 = arith.constant 1.200000e+01 : f32
    %1132 = vector.broadcast %cst_534 : f32 to vector<1x256xf32>
    %1133 = arith.subf %985, %1132 : vector<1x256xf32>
    %1134 = math.absf %1133 : vector<1x256xf32>
    %cst_535 = arith.constant 1.000000e+00 : f32
    %1135 = vector.broadcast %cst_535 : f32 to vector<1x256xf32>
    %1136 = arith.subf %1135, %1134 : vector<1x256xf32>
    %cst_536 = arith.constant 0.000000e+00 : f32
    %1137 = vector.broadcast %cst_536 : f32 to vector<1x256xf32>
    %1138 = arith.maximumf %1137, %1136 : vector<1x256xf32>
    %c48_537 = arith.constant 48 : index
    %c0_538 = arith.constant 0 : index
    %1139 = vector.load %arg6[%c48_537, %c0_538] : memref<64x256xf32, #tpu.memory_space<vmem>>, vector<4x256xf32>
    %1140 = vector.broadcast %1138 : vector<1x256xf32> to vector<4x256xf32>
    %1141 = arith.mulf %1139, %1140 : vector<4x256xf32>
    %1142 = arith.addf %1131, %1141 : vector<4x256xf32>
    %cst_539 = arith.constant 1.300000e+01 : f32
    %1143 = vector.broadcast %cst_539 : f32 to vector<1x256xf32>
    %1144 = arith.subf %985, %1143 : vector<1x256xf32>
    %1145 = math.absf %1144 : vector<1x256xf32>
    %cst_540 = arith.constant 1.000000e+00 : f32
    %1146 = vector.broadcast %cst_540 : f32 to vector<1x256xf32>
    %1147 = arith.subf %1146, %1145 : vector<1x256xf32>
    %cst_541 = arith.constant 0.000000e+00 : f32
    %1148 = vector.broadcast %cst_541 : f32 to vector<1x256xf32>
    %1149 = arith.maximumf %1148, %1147 : vector<1x256xf32>
    %c52_542 = arith.constant 52 : index
    %c0_543 = arith.constant 0 : index
    %1150 = vector.load %arg6[%c52_542, %c0_543] : memref<64x256xf32, #tpu.memory_space<vmem>>, vector<4x256xf32>
    %1151 = vector.broadcast %1149 : vector<1x256xf32> to vector<4x256xf32>
    %1152 = arith.mulf %1150, %1151 : vector<4x256xf32>
    %1153 = arith.addf %1142, %1152 : vector<4x256xf32>
    %cst_544 = arith.constant 1.400000e+01 : f32
    %1154 = vector.broadcast %cst_544 : f32 to vector<1x256xf32>
    %1155 = arith.subf %985, %1154 : vector<1x256xf32>
    %1156 = math.absf %1155 : vector<1x256xf32>
    %cst_545 = arith.constant 1.000000e+00 : f32
    %1157 = vector.broadcast %cst_545 : f32 to vector<1x256xf32>
    %1158 = arith.subf %1157, %1156 : vector<1x256xf32>
    %cst_546 = arith.constant 0.000000e+00 : f32
    %1159 = vector.broadcast %cst_546 : f32 to vector<1x256xf32>
    %1160 = arith.maximumf %1159, %1158 : vector<1x256xf32>
    %c56_547 = arith.constant 56 : index
    %c0_548 = arith.constant 0 : index
    %1161 = vector.load %arg6[%c56_547, %c0_548] : memref<64x256xf32, #tpu.memory_space<vmem>>, vector<4x256xf32>
    %1162 = vector.broadcast %1160 : vector<1x256xf32> to vector<4x256xf32>
    %1163 = arith.mulf %1161, %1162 : vector<4x256xf32>
    %1164 = arith.addf %1153, %1163 : vector<4x256xf32>
    %cst_549 = arith.constant 1.500000e+01 : f32
    %1165 = vector.broadcast %cst_549 : f32 to vector<1x256xf32>
    %1166 = arith.subf %985, %1165 : vector<1x256xf32>
    %1167 = math.absf %1166 : vector<1x256xf32>
    %cst_550 = arith.constant 1.000000e+00 : f32
    %1168 = vector.broadcast %cst_550 : f32 to vector<1x256xf32>
    %1169 = arith.subf %1168, %1167 : vector<1x256xf32>
    %cst_551 = arith.constant 0.000000e+00 : f32
    %1170 = vector.broadcast %cst_551 : f32 to vector<1x256xf32>
    %1171 = arith.maximumf %1170, %1169 : vector<1x256xf32>
    %c60_552 = arith.constant 60 : index
    %c0_553 = arith.constant 0 : index
    %1172 = vector.load %arg6[%c60_552, %c0_553] : memref<64x256xf32, #tpu.memory_space<vmem>>, vector<4x256xf32>
    %1173 = vector.broadcast %1171 : vector<1x256xf32> to vector<4x256xf32>
    %1174 = arith.mulf %1172, %1173 : vector<4x256xf32>
    %1175 = arith.addf %1164, %1174 : vector<4x256xf32>
    %1176 = arith.truncf %1175 : vector<4x256xf32> to vector<4x256xbf16>
    %c20_554 = arith.constant 20 : index
    %c0_555 = arith.constant 0 : index
    %1177 = vector.load %arg7[%c20_554, %c0_555] : memref<36x256xbf16, #tpu.memory_space<vmem>>, vector<4x256xbf16>
    tpu.vector_store %arg7[%c20_554, %c0_555], %1176 {strides = array<i32>} : memref<36x256xbf16, #tpu.memory_space<vmem>>, vector<4x256xbf16>,
    %c0_556 = arith.constant 0 : index
    %c6 = arith.constant 6 : index
    %c0_557 = arith.constant 0 : index
    %1178 = vector.load %arg3[%c0_556, %c6, %c0_557] : memref<1x18x256xf32, #tpu.memory_space<vmem>>, vector<1x1x256xf32>
    %1179 = vector.shape_cast %1178 : vector<1x1x256xf32> to vector<1x256xf32>
    %c0_558 = arith.constant 0 : index
    %c15 = arith.constant 15 : index
    %c0_559 = arith.constant 0 : index
    %1180 = vector.load %arg3[%c0_558, %c15, %c0_559] : memref<1x18x256xf32, #tpu.memory_space<vmem>>, vector<1x1x256xf32>
    %1181 = vector.shape_cast %1180 : vector<1x1x256xf32> to vector<1x256xf32>
    %1182 = vector.broadcast %1179 : vector<1x256xf32> to vector<16x256xf32>
    %1183 = vector.broadcast %1 : vector<16x1xf32> to vector<16x256xf32>
    %1184 = arith.subf %1182, %1183 : vector<16x256xf32>
    %1185 = math.absf %1184 : vector<16x256xf32>
    %cst_560 = arith.constant 1.000000e+00 : f32
    %1186 = vector.broadcast %cst_560 : f32 to vector<16x256xf32>
    %1187 = arith.subf %1186, %1185 : vector<16x256xf32>
    %cst_561 = arith.constant 0.000000e+00 : f32
    %1188 = vector.broadcast %cst_561 : f32 to vector<16x256xf32>
    %1189 = arith.maximumf %1188, %1187 : vector<16x256xf32>
    %1190 = arith.truncf %1189 : vector<16x256xf32> to vector<16x256xbf16>
    %cst_562 = arith.constant 0.000000e+00 : f32
    %1191 = vector.broadcast %cst_562 : f32 to vector<4x256xf32>
    %c0_563 = arith.constant 0 : index
    %c0_564 = arith.constant 0 : index
    %c0_565 = arith.constant 0 : index
    %1192 = vector.load %arg2[%c0_563, %c0_564, %c0_565] : memref<1x64x16xbf16, #tpu.memory_space<vmem>>, vector<1x64x16xbf16>
    %1193 = vector.shape_cast %1192 : vector<1x64x16xbf16> to vector<64x16xbf16>
    %cst_566 = arith.constant dense<0.000000e+00> : vector<64x256xf32>
    %1194 = tpu.matmul %1193, %1190, %cst_566 {dimension_numbers = #tpu.dot_dimension_numbers<[1], [0], [0], [1], [0, 0, 1, 1], [], []>} : vector<64x16xbf16>, vector<16x256xbf16>, vector<64x256xf32> -> vector<64x256xf32>
    %c0_567 = arith.constant 0 : index
    %c0_568 = arith.constant 0 : index
    %1195 = vector.load %arg6[%c0_567, %c0_568] : memref<64x256xf32, #tpu.memory_space<vmem>>, vector<64x256xf32>
    tpu.vector_store %arg6[%c0_567, %c0_568], %1194 {strides = array<i32>} : memref<64x256xf32, #tpu.memory_space<vmem>>, vector<64x256xf32>,
    %cst_569 = arith.constant 0.000000e+00 : f32
    %1196 = vector.broadcast %cst_569 : f32 to vector<1x256xf32>
    %1197 = arith.subf %1181, %1196 : vector<1x256xf32>
    %1198 = math.absf %1197 : vector<1x256xf32>
    %cst_570 = arith.constant 1.000000e+00 : f32
    %1199 = vector.broadcast %cst_570 : f32 to vector<1x256xf32>
    %1200 = arith.subf %1199, %1198 : vector<1x256xf32>
    %cst_571 = arith.constant 0.000000e+00 : f32
    %1201 = vector.broadcast %cst_571 : f32 to vector<1x256xf32>
    %1202 = arith.maximumf %1201, %1200 : vector<1x256xf32>
    %c0_572 = arith.constant 0 : index
    %c0_573 = arith.constant 0 : index
    %1203 = vector.load %arg6[%c0_572, %c0_573] : memref<64x256xf32, #tpu.memory_space<vmem>>, vector<4x256xf32>
    %1204 = vector.broadcast %1202 : vector<1x256xf32> to vector<4x256xf32>
    %1205 = arith.mulf %1203, %1204 : vector<4x256xf32>
    %1206 = arith.addf %1191, %1205 : vector<4x256xf32>
    %cst_574 = arith.constant 1.000000e+00 : f32
    %1207 = vector.broadcast %cst_574 : f32 to vector<1x256xf32>
    %1208 = arith.subf %1181, %1207 : vector<1x256xf32>
    %1209 = math.absf %1208 : vector<1x256xf32>
    %cst_575 = arith.constant 1.000000e+00 : f32
    %1210 = vector.broadcast %cst_575 : f32 to vector<1x256xf32>
    %1211 = arith.subf %1210, %1209 : vector<1x256xf32>
    %cst_576 = arith.constant 0.000000e+00 : f32
    %1212 = vector.broadcast %cst_576 : f32 to vector<1x256xf32>
    %1213 = arith.maximumf %1212, %1211 : vector<1x256xf32>
    %c4_577 = arith.constant 4 : index
    %c0_578 = arith.constant 0 : index
    %1214 = vector.load %arg6[%c4_577, %c0_578] : memref<64x256xf32, #tpu.memory_space<vmem>>, vector<4x256xf32>
    %1215 = vector.broadcast %1213 : vector<1x256xf32> to vector<4x256xf32>
    %1216 = arith.mulf %1214, %1215 : vector<4x256xf32>
    %1217 = arith.addf %1206, %1216 : vector<4x256xf32>
    %cst_579 = arith.constant 2.000000e+00 : f32
    %1218 = vector.broadcast %cst_579 : f32 to vector<1x256xf32>
    %1219 = arith.subf %1181, %1218 : vector<1x256xf32>
    %1220 = math.absf %1219 : vector<1x256xf32>
    %cst_580 = arith.constant 1.000000e+00 : f32
    %1221 = vector.broadcast %cst_580 : f32 to vector<1x256xf32>
    %1222 = arith.subf %1221, %1220 : vector<1x256xf32>
    %cst_581 = arith.constant 0.000000e+00 : f32
    %1223 = vector.broadcast %cst_581 : f32 to vector<1x256xf32>
    %1224 = arith.maximumf %1223, %1222 : vector<1x256xf32>
    %c8_582 = arith.constant 8 : index
    %c0_583 = arith.constant 0 : index
    %1225 = vector.load %arg6[%c8_582, %c0_583] : memref<64x256xf32, #tpu.memory_space<vmem>>, vector<4x256xf32>
    %1226 = vector.broadcast %1224 : vector<1x256xf32> to vector<4x256xf32>
    %1227 = arith.mulf %1225, %1226 : vector<4x256xf32>
    %1228 = arith.addf %1217, %1227 : vector<4x256xf32>
    %cst_584 = arith.constant 3.000000e+00 : f32
    %1229 = vector.broadcast %cst_584 : f32 to vector<1x256xf32>
    %1230 = arith.subf %1181, %1229 : vector<1x256xf32>
    %1231 = math.absf %1230 : vector<1x256xf32>
    %cst_585 = arith.constant 1.000000e+00 : f32
    %1232 = vector.broadcast %cst_585 : f32 to vector<1x256xf32>
    %1233 = arith.subf %1232, %1231 : vector<1x256xf32>
    %cst_586 = arith.constant 0.000000e+00 : f32
    %1234 = vector.broadcast %cst_586 : f32 to vector<1x256xf32>
    %1235 = arith.maximumf %1234, %1233 : vector<1x256xf32>
    %c12_587 = arith.constant 12 : index
    %c0_588 = arith.constant 0 : index
    %1236 = vector.load %arg6[%c12_587, %c0_588] : memref<64x256xf32, #tpu.memory_space<vmem>>, vector<4x256xf32>
    %1237 = vector.broadcast %1235 : vector<1x256xf32> to vector<4x256xf32>
    %1238 = arith.mulf %1236, %1237 : vector<4x256xf32>
    %1239 = arith.addf %1228, %1238 : vector<4x256xf32>
    %cst_589 = arith.constant 4.000000e+00 : f32
    %1240 = vector.broadcast %cst_589 : f32 to vector<1x256xf32>
    %1241 = arith.subf %1181, %1240 : vector<1x256xf32>
    %1242 = math.absf %1241 : vector<1x256xf32>
    %cst_590 = arith.constant 1.000000e+00 : f32
    %1243 = vector.broadcast %cst_590 : f32 to vector<1x256xf32>
    %1244 = arith.subf %1243, %1242 : vector<1x256xf32>
    %cst_591 = arith.constant 0.000000e+00 : f32
    %1245 = vector.broadcast %cst_591 : f32 to vector<1x256xf32>
    %1246 = arith.maximumf %1245, %1244 : vector<1x256xf32>
    %c16_592 = arith.constant 16 : index
    %c0_593 = arith.constant 0 : index
    %1247 = vector.load %arg6[%c16_592, %c0_593] : memref<64x256xf32, #tpu.memory_space<vmem>>, vector<4x256xf32>
    %1248 = vector.broadcast %1246 : vector<1x256xf32> to vector<4x256xf32>
    %1249 = arith.mulf %1247, %1248 : vector<4x256xf32>
    %1250 = arith.addf %1239, %1249 : vector<4x256xf32>
    %cst_594 = arith.constant 5.000000e+00 : f32
    %1251 = vector.broadcast %cst_594 : f32 to vector<1x256xf32>
    %1252 = arith.subf %1181, %1251 : vector<1x256xf32>
    %1253 = math.absf %1252 : vector<1x256xf32>
    %cst_595 = arith.constant 1.000000e+00 : f32
    %1254 = vector.broadcast %cst_595 : f32 to vector<1x256xf32>
    %1255 = arith.subf %1254, %1253 : vector<1x256xf32>
    %cst_596 = arith.constant 0.000000e+00 : f32
    %1256 = vector.broadcast %cst_596 : f32 to vector<1x256xf32>
    %1257 = arith.maximumf %1256, %1255 : vector<1x256xf32>
    %c20_597 = arith.constant 20 : index
    %c0_598 = arith.constant 0 : index
    %1258 = vector.load %arg6[%c20_597, %c0_598] : memref<64x256xf32, #tpu.memory_space<vmem>>, vector<4x256xf32>
    %1259 = vector.broadcast %1257 : vector<1x256xf32> to vector<4x256xf32>
    %1260 = arith.mulf %1258, %1259 : vector<4x256xf32>
    %1261 = arith.addf %1250, %1260 : vector<4x256xf32>
    %cst_599 = arith.constant 6.000000e+00 : f32
    %1262 = vector.broadcast %cst_599 : f32 to vector<1x256xf32>
    %1263 = arith.subf %1181, %1262 : vector<1x256xf32>
    %1264 = math.absf %1263 : vector<1x256xf32>
    %cst_600 = arith.constant 1.000000e+00 : f32
    %1265 = vector.broadcast %cst_600 : f32 to vector<1x256xf32>
    %1266 = arith.subf %1265, %1264 : vector<1x256xf32>
    %cst_601 = arith.constant 0.000000e+00 : f32
    %1267 = vector.broadcast %cst_601 : f32 to vector<1x256xf32>
    %1268 = arith.maximumf %1267, %1266 : vector<1x256xf32>
    %c24_602 = arith.constant 24 : index
    %c0_603 = arith.constant 0 : index
    %1269 = vector.load %arg6[%c24_602, %c0_603] : memref<64x256xf32, #tpu.memory_space<vmem>>, vector<4x256xf32>
    %1270 = vector.broadcast %1268 : vector<1x256xf32> to vector<4x256xf32>
    %1271 = arith.mulf %1269, %1270 : vector<4x256xf32>
    %1272 = arith.addf %1261, %1271 : vector<4x256xf32>
    %cst_604 = arith.constant 7.000000e+00 : f32
    %1273 = vector.broadcast %cst_604 : f32 to vector<1x256xf32>
    %1274 = arith.subf %1181, %1273 : vector<1x256xf32>
    %1275 = math.absf %1274 : vector<1x256xf32>
    %cst_605 = arith.constant 1.000000e+00 : f32
    %1276 = vector.broadcast %cst_605 : f32 to vector<1x256xf32>
    %1277 = arith.subf %1276, %1275 : vector<1x256xf32>
    %cst_606 = arith.constant 0.000000e+00 : f32
    %1278 = vector.broadcast %cst_606 : f32 to vector<1x256xf32>
    %1279 = arith.maximumf %1278, %1277 : vector<1x256xf32>
    %c28_607 = arith.constant 28 : index
    %c0_608 = arith.constant 0 : index
    %1280 = vector.load %arg6[%c28_607, %c0_608] : memref<64x256xf32, #tpu.memory_space<vmem>>, vector<4x256xf32>
    %1281 = vector.broadcast %1279 : vector<1x256xf32> to vector<4x256xf32>
    %1282 = arith.mulf %1280, %1281 : vector<4x256xf32>
    %1283 = arith.addf %1272, %1282 : vector<4x256xf32>
    %cst_609 = arith.constant 8.000000e+00 : f32
    %1284 = vector.broadcast %cst_609 : f32 to vector<1x256xf32>
    %1285 = arith.subf %1181, %1284 : vector<1x256xf32>
    %1286 = math.absf %1285 : vector<1x256xf32>
    %cst_610 = arith.constant 1.000000e+00 : f32
    %1287 = vector.broadcast %cst_610 : f32 to vector<1x256xf32>
    %1288 = arith.subf %1287, %1286 : vector<1x256xf32>
    %cst_611 = arith.constant 0.000000e+00 : f32
    %1289 = vector.broadcast %cst_611 : f32 to vector<1x256xf32>
    %1290 = arith.maximumf %1289, %1288 : vector<1x256xf32>
    %c32_612 = arith.constant 32 : index
    %c0_613 = arith.constant 0 : index
    %1291 = vector.load %arg6[%c32_612, %c0_613] : memref<64x256xf32, #tpu.memory_space<vmem>>, vector<4x256xf32>
    %1292 = vector.broadcast %1290 : vector<1x256xf32> to vector<4x256xf32>
    %1293 = arith.mulf %1291, %1292 : vector<4x256xf32>
    %1294 = arith.addf %1283, %1293 : vector<4x256xf32>
    %cst_614 = arith.constant 9.000000e+00 : f32
    %1295 = vector.broadcast %cst_614 : f32 to vector<1x256xf32>
    %1296 = arith.subf %1181, %1295 : vector<1x256xf32>
    %1297 = math.absf %1296 : vector<1x256xf32>
    %cst_615 = arith.constant 1.000000e+00 : f32
    %1298 = vector.broadcast %cst_615 : f32 to vector<1x256xf32>
    %1299 = arith.subf %1298, %1297 : vector<1x256xf32>
    %cst_616 = arith.constant 0.000000e+00 : f32
    %1300 = vector.broadcast %cst_616 : f32 to vector<1x256xf32>
    %1301 = arith.maximumf %1300, %1299 : vector<1x256xf32>
    %c36_617 = arith.constant 36 : index
    %c0_618 = arith.constant 0 : index
    %1302 = vector.load %arg6[%c36_617, %c0_618] : memref<64x256xf32, #tpu.memory_space<vmem>>, vector<4x256xf32>
    %1303 = vector.broadcast %1301 : vector<1x256xf32> to vector<4x256xf32>
    %1304 = arith.mulf %1302, %1303 : vector<4x256xf32>
    %1305 = arith.addf %1294, %1304 : vector<4x256xf32>
    %cst_619 = arith.constant 1.000000e+01 : f32
    %1306 = vector.broadcast %cst_619 : f32 to vector<1x256xf32>
    %1307 = arith.subf %1181, %1306 : vector<1x256xf32>
    %1308 = math.absf %1307 : vector<1x256xf32>
    %cst_620 = arith.constant 1.000000e+00 : f32
    %1309 = vector.broadcast %cst_620 : f32 to vector<1x256xf32>
    %1310 = arith.subf %1309, %1308 : vector<1x256xf32>
    %cst_621 = arith.constant 0.000000e+00 : f32
    %1311 = vector.broadcast %cst_621 : f32 to vector<1x256xf32>
    %1312 = arith.maximumf %1311, %1310 : vector<1x256xf32>
    %c40_622 = arith.constant 40 : index
    %c0_623 = arith.constant 0 : index
    %1313 = vector.load %arg6[%c40_622, %c0_623] : memref<64x256xf32, #tpu.memory_space<vmem>>, vector<4x256xf32>
    %1314 = vector.broadcast %1312 : vector<1x256xf32> to vector<4x256xf32>
    %1315 = arith.mulf %1313, %1314 : vector<4x256xf32>
    %1316 = arith.addf %1305, %1315 : vector<4x256xf32>
    %cst_624 = arith.constant 1.100000e+01 : f32
    %1317 = vector.broadcast %cst_624 : f32 to vector<1x256xf32>
    %1318 = arith.subf %1181, %1317 : vector<1x256xf32>
    %1319 = math.absf %1318 : vector<1x256xf32>
    %cst_625 = arith.constant 1.000000e+00 : f32
    %1320 = vector.broadcast %cst_625 : f32 to vector<1x256xf32>
    %1321 = arith.subf %1320, %1319 : vector<1x256xf32>
    %cst_626 = arith.constant 0.000000e+00 : f32
    %1322 = vector.broadcast %cst_626 : f32 to vector<1x256xf32>
    %1323 = arith.maximumf %1322, %1321 : vector<1x256xf32>
    %c44_627 = arith.constant 44 : index
    %c0_628 = arith.constant 0 : index
    %1324 = vector.load %arg6[%c44_627, %c0_628] : memref<64x256xf32, #tpu.memory_space<vmem>>, vector<4x256xf32>
    %1325 = vector.broadcast %1323 : vector<1x256xf32> to vector<4x256xf32>
    %1326 = arith.mulf %1324, %1325 : vector<4x256xf32>
    %1327 = arith.addf %1316, %1326 : vector<4x256xf32>
    %cst_629 = arith.constant 1.200000e+01 : f32
    %1328 = vector.broadcast %cst_629 : f32 to vector<1x256xf32>
    %1329 = arith.subf %1181, %1328 : vector<1x256xf32>
    %1330 = math.absf %1329 : vector<1x256xf32>
    %cst_630 = arith.constant 1.000000e+00 : f32
    %1331 = vector.broadcast %cst_630 : f32 to vector<1x256xf32>
    %1332 = arith.subf %1331, %1330 : vector<1x256xf32>
    %cst_631 = arith.constant 0.000000e+00 : f32
    %1333 = vector.broadcast %cst_631 : f32 to vector<1x256xf32>
    %1334 = arith.maximumf %1333, %1332 : vector<1x256xf32>
    %c48_632 = arith.constant 48 : index
    %c0_633 = arith.constant 0 : index
    %1335 = vector.load %arg6[%c48_632, %c0_633] : memref<64x256xf32, #tpu.memory_space<vmem>>, vector<4x256xf32>
    %1336 = vector.broadcast %1334 : vector<1x256xf32> to vector<4x256xf32>
    %1337 = arith.mulf %1335, %1336 : vector<4x256xf32>
    %1338 = arith.addf %1327, %1337 : vector<4x256xf32>
    %cst_634 = arith.constant 1.300000e+01 : f32
    %1339 = vector.broadcast %cst_634 : f32 to vector<1x256xf32>
    %1340 = arith.subf %1181, %1339 : vector<1x256xf32>
    %1341 = math.absf %1340 : vector<1x256xf32>
    %cst_635 = arith.constant 1.000000e+00 : f32
    %1342 = vector.broadcast %cst_635 : f32 to vector<1x256xf32>
    %1343 = arith.subf %1342, %1341 : vector<1x256xf32>
    %cst_636 = arith.constant 0.000000e+00 : f32
    %1344 = vector.broadcast %cst_636 : f32 to vector<1x256xf32>
    %1345 = arith.maximumf %1344, %1343 : vector<1x256xf32>
    %c52_637 = arith.constant 52 : index
    %c0_638 = arith.constant 0 : index
    %1346 = vector.load %arg6[%c52_637, %c0_638] : memref<64x256xf32, #tpu.memory_space<vmem>>, vector<4x256xf32>
    %1347 = vector.broadcast %1345 : vector<1x256xf32> to vector<4x256xf32>
    %1348 = arith.mulf %1346, %1347 : vector<4x256xf32>
    %1349 = arith.addf %1338, %1348 : vector<4x256xf32>
    %cst_639 = arith.constant 1.400000e+01 : f32
    %1350 = vector.broadcast %cst_639 : f32 to vector<1x256xf32>
    %1351 = arith.subf %1181, %1350 : vector<1x256xf32>
    %1352 = math.absf %1351 : vector<1x256xf32>
    %cst_640 = arith.constant 1.000000e+00 : f32
    %1353 = vector.broadcast %cst_640 : f32 to vector<1x256xf32>
    %1354 = arith.subf %1353, %1352 : vector<1x256xf32>
    %cst_641 = arith.constant 0.000000e+00 : f32
    %1355 = vector.broadcast %cst_641 : f32 to vector<1x256xf32>
    %1356 = arith.maximumf %1355, %1354 : vector<1x256xf32>
    %c56_642 = arith.constant 56 : index
    %c0_643 = arith.constant 0 : index
    %1357 = vector.load %arg6[%c56_642, %c0_643] : memref<64x256xf32, #tpu.memory_space<vmem>>, vector<4x256xf32>
    %1358 = vector.broadcast %1356 : vector<1x256xf32> to vector<4x256xf32>
    %1359 = arith.mulf %1357, %1358 : vector<4x256xf32>
    %1360 = arith.addf %1349, %1359 : vector<4x256xf32>
    %cst_644 = arith.constant 1.500000e+01 : f32
    %1361 = vector.broadcast %cst_644 : f32 to vector<1x256xf32>
    %1362 = arith.subf %1181, %1361 : vector<1x256xf32>
    %1363 = math.absf %1362 : vector<1x256xf32>
    %cst_645 = arith.constant 1.000000e+00 : f32
    %1364 = vector.broadcast %cst_645 : f32 to vector<1x256xf32>
    %1365 = arith.subf %1364, %1363 : vector<1x256xf32>
    %cst_646 = arith.constant 0.000000e+00 : f32
    %1366 = vector.broadcast %cst_646 : f32 to vector<1x256xf32>
    %1367 = arith.maximumf %1366, %1365 : vector<1x256xf32>
    %c60_647 = arith.constant 60 : index
    %c0_648 = arith.constant 0 : index
    %1368 = vector.load %arg6[%c60_647, %c0_648] : memref<64x256xf32, #tpu.memory_space<vmem>>, vector<4x256xf32>
    %1369 = vector.broadcast %1367 : vector<1x256xf32> to vector<4x256xf32>
    %1370 = arith.mulf %1368, %1369 : vector<4x256xf32>
    %1371 = arith.addf %1360, %1370 : vector<4x256xf32>
    %1372 = arith.truncf %1371 : vector<4x256xf32> to vector<4x256xbf16>
    %c24_649 = arith.constant 24 : index
    %c0_650 = arith.constant 0 : index
    %1373 = vector.load %arg7[%c24_649, %c0_650] : memref<36x256xbf16, #tpu.memory_space<vmem>>, vector<4x256xbf16>
    tpu.vector_store %arg7[%c24_649, %c0_650], %1372 {strides = array<i32>} : memref<36x256xbf16, #tpu.memory_space<vmem>>, vector<4x256xbf16>,
    %c0_651 = arith.constant 0 : index
    %c7 = arith.constant 7 : index
    %c0_652 = arith.constant 0 : index
    %1374 = vector.load %arg3[%c0_651, %c7, %c0_652] : memref<1x18x256xf32, #tpu.memory_space<vmem>>, vector<1x1x256xf32>
    %1375 = vector.shape_cast %1374 : vector<1x1x256xf32> to vector<1x256xf32>
    %c0_653 = arith.constant 0 : index
    %c16_654 = arith.constant 16 : index
    %c0_655 = arith.constant 0 : index
    %1376 = vector.load %arg3[%c0_653, %c16_654, %c0_655] : memref<1x18x256xf32, #tpu.memory_space<vmem>>, vector<1x1x256xf32>
    %1377 = vector.shape_cast %1376 : vector<1x1x256xf32> to vector<1x256xf32>
    %1378 = vector.broadcast %1375 : vector<1x256xf32> to vector<16x256xf32>
    %1379 = vector.broadcast %1 : vector<16x1xf32> to vector<16x256xf32>
    %1380 = arith.subf %1378, %1379 : vector<16x256xf32>
    %1381 = math.absf %1380 : vector<16x256xf32>
    %cst_656 = arith.constant 1.000000e+00 : f32
    %1382 = vector.broadcast %cst_656 : f32 to vector<16x256xf32>
    %1383 = arith.subf %1382, %1381 : vector<16x256xf32>
    %cst_657 = arith.constant 0.000000e+00 : f32
    %1384 = vector.broadcast %cst_657 : f32 to vector<16x256xf32>
    %1385 = arith.maximumf %1384, %1383 : vector<16x256xf32>
    %1386 = arith.truncf %1385 : vector<16x256xf32> to vector<16x256xbf16>
    %cst_658 = arith.constant 0.000000e+00 : f32
    %1387 = vector.broadcast %cst_658 : f32 to vector<4x256xf32>
    %c0_659 = arith.constant 0 : index
    %c0_660 = arith.constant 0 : index
    %c0_661 = arith.constant 0 : index
    %1388 = vector.load %arg2[%c0_659, %c0_660, %c0_661] : memref<1x64x16xbf16, #tpu.memory_space<vmem>>, vector<1x64x16xbf16>
    %1389 = vector.shape_cast %1388 : vector<1x64x16xbf16> to vector<64x16xbf16>
    %cst_662 = arith.constant dense<0.000000e+00> : vector<64x256xf32>
    %1390 = tpu.matmul %1389, %1386, %cst_662 {dimension_numbers = #tpu.dot_dimension_numbers<[1], [0], [0], [1], [0, 0, 1, 1], [], []>} : vector<64x16xbf16>, vector<16x256xbf16>, vector<64x256xf32> -> vector<64x256xf32>
    %c0_663 = arith.constant 0 : index
    %c0_664 = arith.constant 0 : index
    %1391 = vector.load %arg6[%c0_663, %c0_664] : memref<64x256xf32, #tpu.memory_space<vmem>>, vector<64x256xf32>
    tpu.vector_store %arg6[%c0_663, %c0_664], %1390 {strides = array<i32>} : memref<64x256xf32, #tpu.memory_space<vmem>>, vector<64x256xf32>,
    %cst_665 = arith.constant 0.000000e+00 : f32
    %1392 = vector.broadcast %cst_665 : f32 to vector<1x256xf32>
    %1393 = arith.subf %1377, %1392 : vector<1x256xf32>
    %1394 = math.absf %1393 : vector<1x256xf32>
    %cst_666 = arith.constant 1.000000e+00 : f32
    %1395 = vector.broadcast %cst_666 : f32 to vector<1x256xf32>
    %1396 = arith.subf %1395, %1394 : vector<1x256xf32>
    %cst_667 = arith.constant 0.000000e+00 : f32
    %1397 = vector.broadcast %cst_667 : f32 to vector<1x256xf32>
    %1398 = arith.maximumf %1397, %1396 : vector<1x256xf32>
    %c0_668 = arith.constant 0 : index
    %c0_669 = arith.constant 0 : index
    %1399 = vector.load %arg6[%c0_668, %c0_669] : memref<64x256xf32, #tpu.memory_space<vmem>>, vector<4x256xf32>
    %1400 = vector.broadcast %1398 : vector<1x256xf32> to vector<4x256xf32>
    %1401 = arith.mulf %1399, %1400 : vector<4x256xf32>
    %1402 = arith.addf %1387, %1401 : vector<4x256xf32>
    %cst_670 = arith.constant 1.000000e+00 : f32
    %1403 = vector.broadcast %cst_670 : f32 to vector<1x256xf32>
    %1404 = arith.subf %1377, %1403 : vector<1x256xf32>
    %1405 = math.absf %1404 : vector<1x256xf32>
    %cst_671 = arith.constant 1.000000e+00 : f32
    %1406 = vector.broadcast %cst_671 : f32 to vector<1x256xf32>
    %1407 = arith.subf %1406, %1405 : vector<1x256xf32>
    %cst_672 = arith.constant 0.000000e+00 : f32
    %1408 = vector.broadcast %cst_672 : f32 to vector<1x256xf32>
    %1409 = arith.maximumf %1408, %1407 : vector<1x256xf32>
    %c4_673 = arith.constant 4 : index
    %c0_674 = arith.constant 0 : index
    %1410 = vector.load %arg6[%c4_673, %c0_674] : memref<64x256xf32, #tpu.memory_space<vmem>>, vector<4x256xf32>
    %1411 = vector.broadcast %1409 : vector<1x256xf32> to vector<4x256xf32>
    %1412 = arith.mulf %1410, %1411 : vector<4x256xf32>
    %1413 = arith.addf %1402, %1412 : vector<4x256xf32>
    %cst_675 = arith.constant 2.000000e+00 : f32
    %1414 = vector.broadcast %cst_675 : f32 to vector<1x256xf32>
    %1415 = arith.subf %1377, %1414 : vector<1x256xf32>
    %1416 = math.absf %1415 : vector<1x256xf32>
    %cst_676 = arith.constant 1.000000e+00 : f32
    %1417 = vector.broadcast %cst_676 : f32 to vector<1x256xf32>
    %1418 = arith.subf %1417, %1416 : vector<1x256xf32>
    %cst_677 = arith.constant 0.000000e+00 : f32
    %1419 = vector.broadcast %cst_677 : f32 to vector<1x256xf32>
    %1420 = arith.maximumf %1419, %1418 : vector<1x256xf32>
    %c8_678 = arith.constant 8 : index
    %c0_679 = arith.constant 0 : index
    %1421 = vector.load %arg6[%c8_678, %c0_679] : memref<64x256xf32, #tpu.memory_space<vmem>>, vector<4x256xf32>
    %1422 = vector.broadcast %1420 : vector<1x256xf32> to vector<4x256xf32>
    %1423 = arith.mulf %1421, %1422 : vector<4x256xf32>
    %1424 = arith.addf %1413, %1423 : vector<4x256xf32>
    %cst_680 = arith.constant 3.000000e+00 : f32
    %1425 = vector.broadcast %cst_680 : f32 to vector<1x256xf32>
    %1426 = arith.subf %1377, %1425 : vector<1x256xf32>
    %1427 = math.absf %1426 : vector<1x256xf32>
    %cst_681 = arith.constant 1.000000e+00 : f32
    %1428 = vector.broadcast %cst_681 : f32 to vector<1x256xf32>
    %1429 = arith.subf %1428, %1427 : vector<1x256xf32>
    %cst_682 = arith.constant 0.000000e+00 : f32
    %1430 = vector.broadcast %cst_682 : f32 to vector<1x256xf32>
    %1431 = arith.maximumf %1430, %1429 : vector<1x256xf32>
    %c12_683 = arith.constant 12 : index
    %c0_684 = arith.constant 0 : index
    %1432 = vector.load %arg6[%c12_683, %c0_684] : memref<64x256xf32, #tpu.memory_space<vmem>>, vector<4x256xf32>
    %1433 = vector.broadcast %1431 : vector<1x256xf32> to vector<4x256xf32>
    %1434 = arith.mulf %1432, %1433 : vector<4x256xf32>
    %1435 = arith.addf %1424, %1434 : vector<4x256xf32>
    %cst_685 = arith.constant 4.000000e+00 : f32
    %1436 = vector.broadcast %cst_685 : f32 to vector<1x256xf32>
    %1437 = arith.subf %1377, %1436 : vector<1x256xf32>
    %1438 = math.absf %1437 : vector<1x256xf32>
    %cst_686 = arith.constant 1.000000e+00 : f32
    %1439 = vector.broadcast %cst_686 : f32 to vector<1x256xf32>
    %1440 = arith.subf %1439, %1438 : vector<1x256xf32>
    %cst_687 = arith.constant 0.000000e+00 : f32
    %1441 = vector.broadcast %cst_687 : f32 to vector<1x256xf32>
    %1442 = arith.maximumf %1441, %1440 : vector<1x256xf32>
    %c16_688 = arith.constant 16 : index
    %c0_689 = arith.constant 0 : index
    %1443 = vector.load %arg6[%c16_688, %c0_689] : memref<64x256xf32, #tpu.memory_space<vmem>>, vector<4x256xf32>
    %1444 = vector.broadcast %1442 : vector<1x256xf32> to vector<4x256xf32>
    %1445 = arith.mulf %1443, %1444 : vector<4x256xf32>
    %1446 = arith.addf %1435, %1445 : vector<4x256xf32>
    %cst_690 = arith.constant 5.000000e+00 : f32
    %1447 = vector.broadcast %cst_690 : f32 to vector<1x256xf32>
    %1448 = arith.subf %1377, %1447 : vector<1x256xf32>
    %1449 = math.absf %1448 : vector<1x256xf32>
    %cst_691 = arith.constant 1.000000e+00 : f32
    %1450 = vector.broadcast %cst_691 : f32 to vector<1x256xf32>
    %1451 = arith.subf %1450, %1449 : vector<1x256xf32>
    %cst_692 = arith.constant 0.000000e+00 : f32
    %1452 = vector.broadcast %cst_692 : f32 to vector<1x256xf32>
    %1453 = arith.maximumf %1452, %1451 : vector<1x256xf32>
    %c20_693 = arith.constant 20 : index
    %c0_694 = arith.constant 0 : index
    %1454 = vector.load %arg6[%c20_693, %c0_694] : memref<64x256xf32, #tpu.memory_space<vmem>>, vector<4x256xf32>
    %1455 = vector.broadcast %1453 : vector<1x256xf32> to vector<4x256xf32>
    %1456 = arith.mulf %1454, %1455 : vector<4x256xf32>
    %1457 = arith.addf %1446, %1456 : vector<4x256xf32>
    %cst_695 = arith.constant 6.000000e+00 : f32
    %1458 = vector.broadcast %cst_695 : f32 to vector<1x256xf32>
    %1459 = arith.subf %1377, %1458 : vector<1x256xf32>
    %1460 = math.absf %1459 : vector<1x256xf32>
    %cst_696 = arith.constant 1.000000e+00 : f32
    %1461 = vector.broadcast %cst_696 : f32 to vector<1x256xf32>
    %1462 = arith.subf %1461, %1460 : vector<1x256xf32>
    %cst_697 = arith.constant 0.000000e+00 : f32
    %1463 = vector.broadcast %cst_697 : f32 to vector<1x256xf32>
    %1464 = arith.maximumf %1463, %1462 : vector<1x256xf32>
    %c24_698 = arith.constant 24 : index
    %c0_699 = arith.constant 0 : index
    %1465 = vector.load %arg6[%c24_698, %c0_699] : memref<64x256xf32, #tpu.memory_space<vmem>>, vector<4x256xf32>
    %1466 = vector.broadcast %1464 : vector<1x256xf32> to vector<4x256xf32>
    %1467 = arith.mulf %1465, %1466 : vector<4x256xf32>
    %1468 = arith.addf %1457, %1467 : vector<4x256xf32>
    %cst_700 = arith.constant 7.000000e+00 : f32
    %1469 = vector.broadcast %cst_700 : f32 to vector<1x256xf32>
    %1470 = arith.subf %1377, %1469 : vector<1x256xf32>
    %1471 = math.absf %1470 : vector<1x256xf32>
    %cst_701 = arith.constant 1.000000e+00 : f32
    %1472 = vector.broadcast %cst_701 : f32 to vector<1x256xf32>
    %1473 = arith.subf %1472, %1471 : vector<1x256xf32>
    %cst_702 = arith.constant 0.000000e+00 : f32
    %1474 = vector.broadcast %cst_702 : f32 to vector<1x256xf32>
    %1475 = arith.maximumf %1474, %1473 : vector<1x256xf32>
    %c28_703 = arith.constant 28 : index
    %c0_704 = arith.constant 0 : index
    %1476 = vector.load %arg6[%c28_703, %c0_704] : memref<64x256xf32, #tpu.memory_space<vmem>>, vector<4x256xf32>
    %1477 = vector.broadcast %1475 : vector<1x256xf32> to vector<4x256xf32>
    %1478 = arith.mulf %1476, %1477 : vector<4x256xf32>
    %1479 = arith.addf %1468, %1478 : vector<4x256xf32>
    %cst_705 = arith.constant 8.000000e+00 : f32
    %1480 = vector.broadcast %cst_705 : f32 to vector<1x256xf32>
    %1481 = arith.subf %1377, %1480 : vector<1x256xf32>
    %1482 = math.absf %1481 : vector<1x256xf32>
    %cst_706 = arith.constant 1.000000e+00 : f32
    %1483 = vector.broadcast %cst_706 : f32 to vector<1x256xf32>
    %1484 = arith.subf %1483, %1482 : vector<1x256xf32>
    %cst_707 = arith.constant 0.000000e+00 : f32
    %1485 = vector.broadcast %cst_707 : f32 to vector<1x256xf32>
    %1486 = arith.maximumf %1485, %1484 : vector<1x256xf32>
    %c32_708 = arith.constant 32 : index
    %c0_709 = arith.constant 0 : index
    %1487 = vector.load %arg6[%c32_708, %c0_709] : memref<64x256xf32, #tpu.memory_space<vmem>>, vector<4x256xf32>
    %1488 = vector.broadcast %1486 : vector<1x256xf32> to vector<4x256xf32>
    %1489 = arith.mulf %1487, %1488 : vector<4x256xf32>
    %1490 = arith.addf %1479, %1489 : vector<4x256xf32>
    %cst_710 = arith.constant 9.000000e+00 : f32
    %1491 = vector.broadcast %cst_710 : f32 to vector<1x256xf32>
    %1492 = arith.subf %1377, %1491 : vector<1x256xf32>
    %1493 = math.absf %1492 : vector<1x256xf32>
    %cst_711 = arith.constant 1.000000e+00 : f32
    %1494 = vector.broadcast %cst_711 : f32 to vector<1x256xf32>
    %1495 = arith.subf %1494, %1493 : vector<1x256xf32>
    %cst_712 = arith.constant 0.000000e+00 : f32
    %1496 = vector.broadcast %cst_712 : f32 to vector<1x256xf32>
    %1497 = arith.maximumf %1496, %1495 : vector<1x256xf32>
    %c36_713 = arith.constant 36 : index
    %c0_714 = arith.constant 0 : index
    %1498 = vector.load %arg6[%c36_713, %c0_714] : memref<64x256xf32, #tpu.memory_space<vmem>>, vector<4x256xf32>
    %1499 = vector.broadcast %1497 : vector<1x256xf32> to vector<4x256xf32>
    %1500 = arith.mulf %1498, %1499 : vector<4x256xf32>
    %1501 = arith.addf %1490, %1500 : vector<4x256xf32>
    %cst_715 = arith.constant 1.000000e+01 : f32
    %1502 = vector.broadcast %cst_715 : f32 to vector<1x256xf32>
    %1503 = arith.subf %1377, %1502 : vector<1x256xf32>
    %1504 = math.absf %1503 : vector<1x256xf32>
    %cst_716 = arith.constant 1.000000e+00 : f32
    %1505 = vector.broadcast %cst_716 : f32 to vector<1x256xf32>
    %1506 = arith.subf %1505, %1504 : vector<1x256xf32>
    %cst_717 = arith.constant 0.000000e+00 : f32
    %1507 = vector.broadcast %cst_717 : f32 to vector<1x256xf32>
    %1508 = arith.maximumf %1507, %1506 : vector<1x256xf32>
    %c40_718 = arith.constant 40 : index
    %c0_719 = arith.constant 0 : index
    %1509 = vector.load %arg6[%c40_718, %c0_719] : memref<64x256xf32, #tpu.memory_space<vmem>>, vector<4x256xf32>
    %1510 = vector.broadcast %1508 : vector<1x256xf32> to vector<4x256xf32>
    %1511 = arith.mulf %1509, %1510 : vector<4x256xf32>
    %1512 = arith.addf %1501, %1511 : vector<4x256xf32>
    %cst_720 = arith.constant 1.100000e+01 : f32
    %1513 = vector.broadcast %cst_720 : f32 to vector<1x256xf32>
    %1514 = arith.subf %1377, %1513 : vector<1x256xf32>
    %1515 = math.absf %1514 : vector<1x256xf32>
    %cst_721 = arith.constant 1.000000e+00 : f32
    %1516 = vector.broadcast %cst_721 : f32 to vector<1x256xf32>
    %1517 = arith.subf %1516, %1515 : vector<1x256xf32>
    %cst_722 = arith.constant 0.000000e+00 : f32
    %1518 = vector.broadcast %cst_722 : f32 to vector<1x256xf32>
    %1519 = arith.maximumf %1518, %1517 : vector<1x256xf32>
    %c44_723 = arith.constant 44 : index
    %c0_724 = arith.constant 0 : index
    %1520 = vector.load %arg6[%c44_723, %c0_724] : memref<64x256xf32, #tpu.memory_space<vmem>>, vector<4x256xf32>
    %1521 = vector.broadcast %1519 : vector<1x256xf32> to vector<4x256xf32>
    %1522 = arith.mulf %1520, %1521 : vector<4x256xf32>
    %1523 = arith.addf %1512, %1522 : vector<4x256xf32>
    %cst_725 = arith.constant 1.200000e+01 : f32
    %1524 = vector.broadcast %cst_725 : f32 to vector<1x256xf32>
    %1525 = arith.subf %1377, %1524 : vector<1x256xf32>
    %1526 = math.absf %1525 : vector<1x256xf32>
    %cst_726 = arith.constant 1.000000e+00 : f32
    %1527 = vector.broadcast %cst_726 : f32 to vector<1x256xf32>
    %1528 = arith.subf %1527, %1526 : vector<1x256xf32>
    %cst_727 = arith.constant 0.000000e+00 : f32
    %1529 = vector.broadcast %cst_727 : f32 to vector<1x256xf32>
    %1530 = arith.maximumf %1529, %1528 : vector<1x256xf32>
    %c48_728 = arith.constant 48 : index
    %c0_729 = arith.constant 0 : index
    %1531 = vector.load %arg6[%c48_728, %c0_729] : memref<64x256xf32, #tpu.memory_space<vmem>>, vector<4x256xf32>
    %1532 = vector.broadcast %1530 : vector<1x256xf32> to vector<4x256xf32>
    %1533 = arith.mulf %1531, %1532 : vector<4x256xf32>
    %1534 = arith.addf %1523, %1533 : vector<4x256xf32>
    %cst_730 = arith.constant 1.300000e+01 : f32
    %1535 = vector.broadcast %cst_730 : f32 to vector<1x256xf32>
    %1536 = arith.subf %1377, %1535 : vector<1x256xf32>
    %1537 = math.absf %1536 : vector<1x256xf32>
    %cst_731 = arith.constant 1.000000e+00 : f32
    %1538 = vector.broadcast %cst_731 : f32 to vector<1x256xf32>
    %1539 = arith.subf %1538, %1537 : vector<1x256xf32>
    %cst_732 = arith.constant 0.000000e+00 : f32
    %1540 = vector.broadcast %cst_732 : f32 to vector<1x256xf32>
    %1541 = arith.maximumf %1540, %1539 : vector<1x256xf32>
    %c52_733 = arith.constant 52 : index
    %c0_734 = arith.constant 0 : index
    %1542 = vector.load %arg6[%c52_733, %c0_734] : memref<64x256xf32, #tpu.memory_space<vmem>>, vector<4x256xf32>
    %1543 = vector.broadcast %1541 : vector<1x256xf32> to vector<4x256xf32>
    %1544 = arith.mulf %1542, %1543 : vector<4x256xf32>
    %1545 = arith.addf %1534, %1544 : vector<4x256xf32>
    %cst_735 = arith.constant 1.400000e+01 : f32
    %1546 = vector.broadcast %cst_735 : f32 to vector<1x256xf32>
    %1547 = arith.subf %1377, %1546 : vector<1x256xf32>
    %1548 = math.absf %1547 : vector<1x256xf32>
    %cst_736 = arith.constant 1.000000e+00 : f32
    %1549 = vector.broadcast %cst_736 : f32 to vector<1x256xf32>
    %1550 = arith.subf %1549, %1548 : vector<1x256xf32>
    %cst_737 = arith.constant 0.000000e+00 : f32
    %1551 = vector.broadcast %cst_737 : f32 to vector<1x256xf32>
    %1552 = arith.maximumf %1551, %1550 : vector<1x256xf32>
    %c56_738 = arith.constant 56 : index
    %c0_739 = arith.constant 0 : index
    %1553 = vector.load %arg6[%c56_738, %c0_739] : memref<64x256xf32, #tpu.memory_space<vmem>>, vector<4x256xf32>
    %1554 = vector.broadcast %1552 : vector<1x256xf32> to vector<4x256xf32>
    %1555 = arith.mulf %1553, %1554 : vector<4x256xf32>
    %1556 = arith.addf %1545, %1555 : vector<4x256xf32>
    %cst_740 = arith.constant 1.500000e+01 : f32
    %1557 = vector.broadcast %cst_740 : f32 to vector<1x256xf32>
    %1558 = arith.subf %1377, %1557 : vector<1x256xf32>
    %1559 = math.absf %1558 : vector<1x256xf32>
    %cst_741 = arith.constant 1.000000e+00 : f32
    %1560 = vector.broadcast %cst_741 : f32 to vector<1x256xf32>
    %1561 = arith.subf %1560, %1559 : vector<1x256xf32>
    %cst_742 = arith.constant 0.000000e+00 : f32
    %1562 = vector.broadcast %cst_742 : f32 to vector<1x256xf32>
    %1563 = arith.maximumf %1562, %1561 : vector<1x256xf32>
    %c60_743 = arith.constant 60 : index
    %c0_744 = arith.constant 0 : index
    %1564 = vector.load %arg6[%c60_743, %c0_744] : memref<64x256xf32, #tpu.memory_space<vmem>>, vector<4x256xf32>
    %1565 = vector.broadcast %1563 : vector<1x256xf32> to vector<4x256xf32>
    %1566 = arith.mulf %1564, %1565 : vector<4x256xf32>
    %1567 = arith.addf %1556, %1566 : vector<4x256xf32>
    %1568 = arith.truncf %1567 : vector<4x256xf32> to vector<4x256xbf16>
    %c28_745 = arith.constant 28 : index
    %c0_746 = arith.constant 0 : index
    %1569 = vector.load %arg7[%c28_745, %c0_746] : memref<36x256xbf16, #tpu.memory_space<vmem>>, vector<4x256xbf16>
    tpu.vector_store %arg7[%c28_745, %c0_746], %1568 {strides = array<i32>} : memref<36x256xbf16, #tpu.memory_space<vmem>>, vector<4x256xbf16>,
    %c0_747 = arith.constant 0 : index
    %c8_748 = arith.constant 8 : index
    %c0_749 = arith.constant 0 : index
    %1570 = vector.load %arg3[%c0_747, %c8_748, %c0_749] : memref<1x18x256xf32, #tpu.memory_space<vmem>>, vector<1x1x256xf32>
    %1571 = vector.shape_cast %1570 : vector<1x1x256xf32> to vector<1x256xf32>
    %c0_750 = arith.constant 0 : index
    %c17 = arith.constant 17 : index
    %c0_751 = arith.constant 0 : index
    %1572 = vector.load %arg3[%c0_750, %c17, %c0_751] : memref<1x18x256xf32, #tpu.memory_space<vmem>>, vector<1x1x256xf32>
    %1573 = vector.shape_cast %1572 : vector<1x1x256xf32> to vector<1x256xf32>
    %1574 = vector.broadcast %1571 : vector<1x256xf32> to vector<16x256xf32>
    %1575 = vector.broadcast %1 : vector<16x1xf32> to vector<16x256xf32>
    %1576 = arith.subf %1574, %1575 : vector<16x256xf32>
    %1577 = math.absf %1576 : vector<16x256xf32>
    %cst_752 = arith.constant 1.000000e+00 : f32
    %1578 = vector.broadcast %cst_752 : f32 to vector<16x256xf32>
    %1579 = arith.subf %1578, %1577 : vector<16x256xf32>
    %cst_753 = arith.constant 0.000000e+00 : f32
    %1580 = vector.broadcast %cst_753 : f32 to vector<16x256xf32>
    %1581 = arith.maximumf %1580, %1579 : vector<16x256xf32>
    %1582 = arith.truncf %1581 : vector<16x256xf32> to vector<16x256xbf16>
    %cst_754 = arith.constant 0.000000e+00 : f32
    %1583 = vector.broadcast %cst_754 : f32 to vector<4x256xf32>
    %c0_755 = arith.constant 0 : index
    %c0_756 = arith.constant 0 : index
    %c0_757 = arith.constant 0 : index
    %1584 = vector.load %arg2[%c0_755, %c0_756, %c0_757] : memref<1x64x16xbf16, #tpu.memory_space<vmem>>, vector<1x64x16xbf16>
    %1585 = vector.shape_cast %1584 : vector<1x64x16xbf16> to vector<64x16xbf16>
    %cst_758 = arith.constant dense<0.000000e+00> : vector<64x256xf32>
    %1586 = tpu.matmul %1585, %1582, %cst_758 {dimension_numbers = #tpu.dot_dimension_numbers<[1], [0], [0], [1], [0, 0, 1, 1], [], []>} : vector<64x16xbf16>, vector<16x256xbf16>, vector<64x256xf32> -> vector<64x256xf32>
    %c0_759 = arith.constant 0 : index
    %c0_760 = arith.constant 0 : index
    %1587 = vector.load %arg6[%c0_759, %c0_760] : memref<64x256xf32, #tpu.memory_space<vmem>>, vector<64x256xf32>
    tpu.vector_store %arg6[%c0_759, %c0_760], %1586 {strides = array<i32>} : memref<64x256xf32, #tpu.memory_space<vmem>>, vector<64x256xf32>,
    %cst_761 = arith.constant 0.000000e+00 : f32
    %1588 = vector.broadcast %cst_761 : f32 to vector<1x256xf32>
    %1589 = arith.subf %1573, %1588 : vector<1x256xf32>
    %1590 = math.absf %1589 : vector<1x256xf32>
    %cst_762 = arith.constant 1.000000e+00 : f32
    %1591 = vector.broadcast %cst_762 : f32 to vector<1x256xf32>
    %1592 = arith.subf %1591, %1590 : vector<1x256xf32>
    %cst_763 = arith.constant 0.000000e+00 : f32
    %1593 = vector.broadcast %cst_763 : f32 to vector<1x256xf32>
    %1594 = arith.maximumf %1593, %1592 : vector<1x256xf32>
    %c0_764 = arith.constant 0 : index
    %c0_765 = arith.constant 0 : index
    %1595 = vector.load %arg6[%c0_764, %c0_765] : memref<64x256xf32, #tpu.memory_space<vmem>>, vector<4x256xf32>
    %1596 = vector.broadcast %1594 : vector<1x256xf32> to vector<4x256xf32>
    %1597 = arith.mulf %1595, %1596 : vector<4x256xf32>
    %1598 = arith.addf %1583, %1597 : vector<4x256xf32>
    %cst_766 = arith.constant 1.000000e+00 : f32
    %1599 = vector.broadcast %cst_766 : f32 to vector<1x256xf32>
    %1600 = arith.subf %1573, %1599 : vector<1x256xf32>
    %1601 = math.absf %1600 : vector<1x256xf32>
    %cst_767 = arith.constant 1.000000e+00 : f32
    %1602 = vector.broadcast %cst_767 : f32 to vector<1x256xf32>
    %1603 = arith.subf %1602, %1601 : vector<1x256xf32>
    %cst_768 = arith.constant 0.000000e+00 : f32
    %1604 = vector.broadcast %cst_768 : f32 to vector<1x256xf32>
    %1605 = arith.maximumf %1604, %1603 : vector<1x256xf32>
    %c4_769 = arith.constant 4 : index
    %c0_770 = arith.constant 0 : index
    %1606 = vector.load %arg6[%c4_769, %c0_770] : memref<64x256xf32, #tpu.memory_space<vmem>>, vector<4x256xf32>
    %1607 = vector.broadcast %1605 : vector<1x256xf32> to vector<4x256xf32>
    %1608 = arith.mulf %1606, %1607 : vector<4x256xf32>
    %1609 = arith.addf %1598, %1608 : vector<4x256xf32>
    %cst_771 = arith.constant 2.000000e+00 : f32
    %1610 = vector.broadcast %cst_771 : f32 to vector<1x256xf32>
    %1611 = arith.subf %1573, %1610 : vector<1x256xf32>
    %1612 = math.absf %1611 : vector<1x256xf32>
    %cst_772 = arith.constant 1.000000e+00 : f32
    %1613 = vector.broadcast %cst_772 : f32 to vector<1x256xf32>
    %1614 = arith.subf %1613, %1612 : vector<1x256xf32>
    %cst_773 = arith.constant 0.000000e+00 : f32
    %1615 = vector.broadcast %cst_773 : f32 to vector<1x256xf32>
    %1616 = arith.maximumf %1615, %1614 : vector<1x256xf32>
    %c8_774 = arith.constant 8 : index
    %c0_775 = arith.constant 0 : index
    %1617 = vector.load %arg6[%c8_774, %c0_775] : memref<64x256xf32, #tpu.memory_space<vmem>>, vector<4x256xf32>
    %1618 = vector.broadcast %1616 : vector<1x256xf32> to vector<4x256xf32>
    %1619 = arith.mulf %1617, %1618 : vector<4x256xf32>
    %1620 = arith.addf %1609, %1619 : vector<4x256xf32>
    %cst_776 = arith.constant 3.000000e+00 : f32
    %1621 = vector.broadcast %cst_776 : f32 to vector<1x256xf32>
    %1622 = arith.subf %1573, %1621 : vector<1x256xf32>
    %1623 = math.absf %1622 : vector<1x256xf32>
    %cst_777 = arith.constant 1.000000e+00 : f32
    %1624 = vector.broadcast %cst_777 : f32 to vector<1x256xf32>
    %1625 = arith.subf %1624, %1623 : vector<1x256xf32>
    %cst_778 = arith.constant 0.000000e+00 : f32
    %1626 = vector.broadcast %cst_778 : f32 to vector<1x256xf32>
    %1627 = arith.maximumf %1626, %1625 : vector<1x256xf32>
    %c12_779 = arith.constant 12 : index
    %c0_780 = arith.constant 0 : index
    %1628 = vector.load %arg6[%c12_779, %c0_780] : memref<64x256xf32, #tpu.memory_space<vmem>>, vector<4x256xf32>
    %1629 = vector.broadcast %1627 : vector<1x256xf32> to vector<4x256xf32>
    %1630 = arith.mulf %1628, %1629 : vector<4x256xf32>
    %1631 = arith.addf %1620, %1630 : vector<4x256xf32>
    %cst_781 = arith.constant 4.000000e+00 : f32
    %1632 = vector.broadcast %cst_781 : f32 to vector<1x256xf32>
    %1633 = arith.subf %1573, %1632 : vector<1x256xf32>
    %1634 = math.absf %1633 : vector<1x256xf32>
    %cst_782 = arith.constant 1.000000e+00 : f32
    %1635 = vector.broadcast %cst_782 : f32 to vector<1x256xf32>
    %1636 = arith.subf %1635, %1634 : vector<1x256xf32>
    %cst_783 = arith.constant 0.000000e+00 : f32
    %1637 = vector.broadcast %cst_783 : f32 to vector<1x256xf32>
    %1638 = arith.maximumf %1637, %1636 : vector<1x256xf32>
    %c16_784 = arith.constant 16 : index
    %c0_785 = arith.constant 0 : index
    %1639 = vector.load %arg6[%c16_784, %c0_785] : memref<64x256xf32, #tpu.memory_space<vmem>>, vector<4x256xf32>
    %1640 = vector.broadcast %1638 : vector<1x256xf32> to vector<4x256xf32>
    %1641 = arith.mulf %1639, %1640 : vector<4x256xf32>
    %1642 = arith.addf %1631, %1641 : vector<4x256xf32>
    %cst_786 = arith.constant 5.000000e+00 : f32
    %1643 = vector.broadcast %cst_786 : f32 to vector<1x256xf32>
    %1644 = arith.subf %1573, %1643 : vector<1x256xf32>
    %1645 = math.absf %1644 : vector<1x256xf32>
    %cst_787 = arith.constant 1.000000e+00 : f32
    %1646 = vector.broadcast %cst_787 : f32 to vector<1x256xf32>
    %1647 = arith.subf %1646, %1645 : vector<1x256xf32>
    %cst_788 = arith.constant 0.000000e+00 : f32
    %1648 = vector.broadcast %cst_788 : f32 to vector<1x256xf32>
    %1649 = arith.maximumf %1648, %1647 : vector<1x256xf32>
    %c20_789 = arith.constant 20 : index
    %c0_790 = arith.constant 0 : index
    %1650 = vector.load %arg6[%c20_789, %c0_790] : memref<64x256xf32, #tpu.memory_space<vmem>>, vector<4x256xf32>
    %1651 = vector.broadcast %1649 : vector<1x256xf32> to vector<4x256xf32>
    %1652 = arith.mulf %1650, %1651 : vector<4x256xf32>
    %1653 = arith.addf %1642, %1652 : vector<4x256xf32>
    %cst_791 = arith.constant 6.000000e+00 : f32
    %1654 = vector.broadcast %cst_791 : f32 to vector<1x256xf32>
    %1655 = arith.subf %1573, %1654 : vector<1x256xf32>
    %1656 = math.absf %1655 : vector<1x256xf32>
    %cst_792 = arith.constant 1.000000e+00 : f32
    %1657 = vector.broadcast %cst_792 : f32 to vector<1x256xf32>
    %1658 = arith.subf %1657, %1656 : vector<1x256xf32>
    %cst_793 = arith.constant 0.000000e+00 : f32
    %1659 = vector.broadcast %cst_793 : f32 to vector<1x256xf32>
    %1660 = arith.maximumf %1659, %1658 : vector<1x256xf32>
    %c24_794 = arith.constant 24 : index
    %c0_795 = arith.constant 0 : index
    %1661 = vector.load %arg6[%c24_794, %c0_795] : memref<64x256xf32, #tpu.memory_space<vmem>>, vector<4x256xf32>
    %1662 = vector.broadcast %1660 : vector<1x256xf32> to vector<4x256xf32>
    %1663 = arith.mulf %1661, %1662 : vector<4x256xf32>
    %1664 = arith.addf %1653, %1663 : vector<4x256xf32>
    %cst_796 = arith.constant 7.000000e+00 : f32
    %1665 = vector.broadcast %cst_796 : f32 to vector<1x256xf32>
    %1666 = arith.subf %1573, %1665 : vector<1x256xf32>
    %1667 = math.absf %1666 : vector<1x256xf32>
    %cst_797 = arith.constant 1.000000e+00 : f32
    %1668 = vector.broadcast %cst_797 : f32 to vector<1x256xf32>
    %1669 = arith.subf %1668, %1667 : vector<1x256xf32>
    %cst_798 = arith.constant 0.000000e+00 : f32
    %1670 = vector.broadcast %cst_798 : f32 to vector<1x256xf32>
    %1671 = arith.maximumf %1670, %1669 : vector<1x256xf32>
    %c28_799 = arith.constant 28 : index
    %c0_800 = arith.constant 0 : index
    %1672 = vector.load %arg6[%c28_799, %c0_800] : memref<64x256xf32, #tpu.memory_space<vmem>>, vector<4x256xf32>
    %1673 = vector.broadcast %1671 : vector<1x256xf32> to vector<4x256xf32>
    %1674 = arith.mulf %1672, %1673 : vector<4x256xf32>
    %1675 = arith.addf %1664, %1674 : vector<4x256xf32>
    %cst_801 = arith.constant 8.000000e+00 : f32
    %1676 = vector.broadcast %cst_801 : f32 to vector<1x256xf32>
    %1677 = arith.subf %1573, %1676 : vector<1x256xf32>
    %1678 = math.absf %1677 : vector<1x256xf32>
    %cst_802 = arith.constant 1.000000e+00 : f32
    %1679 = vector.broadcast %cst_802 : f32 to vector<1x256xf32>
    %1680 = arith.subf %1679, %1678 : vector<1x256xf32>
    %cst_803 = arith.constant 0.000000e+00 : f32
    %1681 = vector.broadcast %cst_803 : f32 to vector<1x256xf32>
    %1682 = arith.maximumf %1681, %1680 : vector<1x256xf32>
    %c32_804 = arith.constant 32 : index
    %c0_805 = arith.constant 0 : index
    %1683 = vector.load %arg6[%c32_804, %c0_805] : memref<64x256xf32, #tpu.memory_space<vmem>>, vector<4x256xf32>
    %1684 = vector.broadcast %1682 : vector<1x256xf32> to vector<4x256xf32>
    %1685 = arith.mulf %1683, %1684 : vector<4x256xf32>
    %1686 = arith.addf %1675, %1685 : vector<4x256xf32>
    %cst_806 = arith.constant 9.000000e+00 : f32
    %1687 = vector.broadcast %cst_806 : f32 to vector<1x256xf32>
    %1688 = arith.subf %1573, %1687 : vector<1x256xf32>
    %1689 = math.absf %1688 : vector<1x256xf32>
    %cst_807 = arith.constant 1.000000e+00 : f32
    %1690 = vector.broadcast %cst_807 : f32 to vector<1x256xf32>
    %1691 = arith.subf %1690, %1689 : vector<1x256xf32>
    %cst_808 = arith.constant 0.000000e+00 : f32
    %1692 = vector.broadcast %cst_808 : f32 to vector<1x256xf32>
    %1693 = arith.maximumf %1692, %1691 : vector<1x256xf32>
    %c36_809 = arith.constant 36 : index
    %c0_810 = arith.constant 0 : index
    %1694 = vector.load %arg6[%c36_809, %c0_810] : memref<64x256xf32, #tpu.memory_space<vmem>>, vector<4x256xf32>
    %1695 = vector.broadcast %1693 : vector<1x256xf32> to vector<4x256xf32>
    %1696 = arith.mulf %1694, %1695 : vector<4x256xf32>
    %1697 = arith.addf %1686, %1696 : vector<4x256xf32>
    %cst_811 = arith.constant 1.000000e+01 : f32
    %1698 = vector.broadcast %cst_811 : f32 to vector<1x256xf32>
    %1699 = arith.subf %1573, %1698 : vector<1x256xf32>
    %1700 = math.absf %1699 : vector<1x256xf32>
    %cst_812 = arith.constant 1.000000e+00 : f32
    %1701 = vector.broadcast %cst_812 : f32 to vector<1x256xf32>
    %1702 = arith.subf %1701, %1700 : vector<1x256xf32>
    %cst_813 = arith.constant 0.000000e+00 : f32
    %1703 = vector.broadcast %cst_813 : f32 to vector<1x256xf32>
    %1704 = arith.maximumf %1703, %1702 : vector<1x256xf32>
    %c40_814 = arith.constant 40 : index
    %c0_815 = arith.constant 0 : index
    %1705 = vector.load %arg6[%c40_814, %c0_815] : memref<64x256xf32, #tpu.memory_space<vmem>>, vector<4x256xf32>
    %1706 = vector.broadcast %1704 : vector<1x256xf32> to vector<4x256xf32>
    %1707 = arith.mulf %1705, %1706 : vector<4x256xf32>
    %1708 = arith.addf %1697, %1707 : vector<4x256xf32>
    %cst_816 = arith.constant 1.100000e+01 : f32
    %1709 = vector.broadcast %cst_816 : f32 to vector<1x256xf32>
    %1710 = arith.subf %1573, %1709 : vector<1x256xf32>
    %1711 = math.absf %1710 : vector<1x256xf32>
    %cst_817 = arith.constant 1.000000e+00 : f32
    %1712 = vector.broadcast %cst_817 : f32 to vector<1x256xf32>
    %1713 = arith.subf %1712, %1711 : vector<1x256xf32>
    %cst_818 = arith.constant 0.000000e+00 : f32
    %1714 = vector.broadcast %cst_818 : f32 to vector<1x256xf32>
    %1715 = arith.maximumf %1714, %1713 : vector<1x256xf32>
    %c44_819 = arith.constant 44 : index
    %c0_820 = arith.constant 0 : index
    %1716 = vector.load %arg6[%c44_819, %c0_820] : memref<64x256xf32, #tpu.memory_space<vmem>>, vector<4x256xf32>
    %1717 = vector.broadcast %1715 : vector<1x256xf32> to vector<4x256xf32>
    %1718 = arith.mulf %1716, %1717 : vector<4x256xf32>
    %1719 = arith.addf %1708, %1718 : vector<4x256xf32>
    %cst_821 = arith.constant 1.200000e+01 : f32
    %1720 = vector.broadcast %cst_821 : f32 to vector<1x256xf32>
    %1721 = arith.subf %1573, %1720 : vector<1x256xf32>
    %1722 = math.absf %1721 : vector<1x256xf32>
    %cst_822 = arith.constant 1.000000e+00 : f32
    %1723 = vector.broadcast %cst_822 : f32 to vector<1x256xf32>
    %1724 = arith.subf %1723, %1722 : vector<1x256xf32>
    %cst_823 = arith.constant 0.000000e+00 : f32
    %1725 = vector.broadcast %cst_823 : f32 to vector<1x256xf32>
    %1726 = arith.maximumf %1725, %1724 : vector<1x256xf32>
    %c48_824 = arith.constant 48 : index
    %c0_825 = arith.constant 0 : index
    %1727 = vector.load %arg6[%c48_824, %c0_825] : memref<64x256xf32, #tpu.memory_space<vmem>>, vector<4x256xf32>
    %1728 = vector.broadcast %1726 : vector<1x256xf32> to vector<4x256xf32>
    %1729 = arith.mulf %1727, %1728 : vector<4x256xf32>
    %1730 = arith.addf %1719, %1729 : vector<4x256xf32>
    %cst_826 = arith.constant 1.300000e+01 : f32
    %1731 = vector.broadcast %cst_826 : f32 to vector<1x256xf32>
    %1732 = arith.subf %1573, %1731 : vector<1x256xf32>
    %1733 = math.absf %1732 : vector<1x256xf32>
    %cst_827 = arith.constant 1.000000e+00 : f32
    %1734 = vector.broadcast %cst_827 : f32 to vector<1x256xf32>
    %1735 = arith.subf %1734, %1733 : vector<1x256xf32>
    %cst_828 = arith.constant 0.000000e+00 : f32
    %1736 = vector.broadcast %cst_828 : f32 to vector<1x256xf32>
    %1737 = arith.maximumf %1736, %1735 : vector<1x256xf32>
    %c52_829 = arith.constant 52 : index
    %c0_830 = arith.constant 0 : index
    %1738 = vector.load %arg6[%c52_829, %c0_830] : memref<64x256xf32, #tpu.memory_space<vmem>>, vector<4x256xf32>
    %1739 = vector.broadcast %1737 : vector<1x256xf32> to vector<4x256xf32>
    %1740 = arith.mulf %1738, %1739 : vector<4x256xf32>
    %1741 = arith.addf %1730, %1740 : vector<4x256xf32>
    %cst_831 = arith.constant 1.400000e+01 : f32
    %1742 = vector.broadcast %cst_831 : f32 to vector<1x256xf32>
    %1743 = arith.subf %1573, %1742 : vector<1x256xf32>
    %1744 = math.absf %1743 : vector<1x256xf32>
    %cst_832 = arith.constant 1.000000e+00 : f32
    %1745 = vector.broadcast %cst_832 : f32 to vector<1x256xf32>
    %1746 = arith.subf %1745, %1744 : vector<1x256xf32>
    %cst_833 = arith.constant 0.000000e+00 : f32
    %1747 = vector.broadcast %cst_833 : f32 to vector<1x256xf32>
    %1748 = arith.maximumf %1747, %1746 : vector<1x256xf32>
    %c56_834 = arith.constant 56 : index
    %c0_835 = arith.constant 0 : index
    %1749 = vector.load %arg6[%c56_834, %c0_835] : memref<64x256xf32, #tpu.memory_space<vmem>>, vector<4x256xf32>
    %1750 = vector.broadcast %1748 : vector<1x256xf32> to vector<4x256xf32>
    %1751 = arith.mulf %1749, %1750 : vector<4x256xf32>
    %1752 = arith.addf %1741, %1751 : vector<4x256xf32>
    %cst_836 = arith.constant 1.500000e+01 : f32
    %1753 = vector.broadcast %cst_836 : f32 to vector<1x256xf32>
    %1754 = arith.subf %1573, %1753 : vector<1x256xf32>
    %1755 = math.absf %1754 : vector<1x256xf32>
    %cst_837 = arith.constant 1.000000e+00 : f32
    %1756 = vector.broadcast %cst_837 : f32 to vector<1x256xf32>
    %1757 = arith.subf %1756, %1755 : vector<1x256xf32>
    %cst_838 = arith.constant 0.000000e+00 : f32
    %1758 = vector.broadcast %cst_838 : f32 to vector<1x256xf32>
    %1759 = arith.maximumf %1758, %1757 : vector<1x256xf32>
    %c60_839 = arith.constant 60 : index
    %c0_840 = arith.constant 0 : index
    %1760 = vector.load %arg6[%c60_839, %c0_840] : memref<64x256xf32, #tpu.memory_space<vmem>>, vector<4x256xf32>
    %1761 = vector.broadcast %1759 : vector<1x256xf32> to vector<4x256xf32>
    %1762 = arith.mulf %1760, %1761 : vector<4x256xf32>
    %1763 = arith.addf %1752, %1762 : vector<4x256xf32>
    %1764 = arith.truncf %1763 : vector<4x256xf32> to vector<4x256xbf16>
    %c32_841 = arith.constant 32 : index
    %c0_842 = arith.constant 0 : index
    %1765 = vector.load %arg7[%c32_841, %c0_842] : memref<36x256xbf16, #tpu.memory_space<vmem>>, vector<4x256xbf16>
    tpu.vector_store %arg7[%c32_841, %c0_842], %1764 {strides = array<i32>} : memref<36x256xbf16, #tpu.memory_space<vmem>>, vector<4x256xbf16>,
    %c0_843 = arith.constant 0 : index
    %c0_844 = arith.constant 0 : index
    %1766 = vector.load %arg7[%c0_843, %c0_844] : memref<36x256xbf16, #tpu.memory_space<vmem>>, vector<36x256xbf16>
    %c0_845 = arith.constant 0 : index
    %c0_846 = arith.constant 0 : index
    %1767 = vector.load %arg4[%c0_845, %c0_846] : memref<8x36xbf16, #tpu.memory_space<vmem>>, vector<8x36xbf16>
    %cst_847 = arith.constant dense<0.000000e+00> : vector<8x256xf32>
    %1768 = tpu.matmul %1767, %1766, %cst_847 {dimension_numbers = #tpu.dot_dimension_numbers<[1], [0], [0], [1], [0, 0, 1, 1], [], []>} : vector<8x36xbf16>, vector<36x256xbf16>, vector<8x256xf32> -> vector<8x256xf32>
    %c0_848 = arith.constant 0 : index
    %c0_849 = arith.constant 0 : index
    %c0_850 = arith.constant 0 : index
    %1769 = vector.load %arg5[%c0_848, %c0_849, %c0_850] : memref<1x8x256xf32, #tpu.memory_space<vmem>>, vector<1x8x256xf32>
    %1770 = vector.shape_cast %1769 : vector<1x8x256xf32> to vector<8x256xf32>
    %1771 = vector.shape_cast %1768 : vector<8x256xf32> to vector<1x8x256xf32>
    tpu.vector_store %arg5[%c0_848, %c0_849, %c0_850], %1771 {strides = array<i32>} : memref<1x8x256xf32, #tpu.memory_space<vmem>>, vector<1x8x256xf32>,
    return
  }
  func.func @transform_0(%arg0: i32, %arg1: i32) -> (i32, i32, i32) {
    %c0_i32 = arith.constant 0 : i32
    %c0_i32_0 = arith.constant 0 : i32
    %c0_i32_1 = arith.constant 0 : i32
    return %arg0, %c0_i32, %c0_i32_0 : i32, i32, i32
  }
  func.func @transform_1(%arg0: i32, %arg1: i32) -> (i32, i32, i32) {
    %c0_i32 = arith.constant 0 : i32
    %c0_i32_0 = arith.constant 0 : i32
    return %arg0, %c0_i32, %arg1 : i32, i32, i32
  }
  func.func @transform_2(%arg0: i32, %arg1: i32) -> (i32, i32) {
    %c0_i32 = arith.constant 0 : i32
    %c0_i32_0 = arith.constant 0 : i32
    %c0_i32_1 = arith.constant 0 : i32
    return %c0_i32, %c0_i32_0 : i32, i32
  }
  func.func @transform_3(%arg0: i32, %arg1: i32) -> (i32, i32, i32) {
    %c0_i32 = arith.constant 0 : i32
    %c0_i32_0 = arith.constant 0 : i32
    return %arg0, %c0_i32, %arg1 : i32, i32, i32
  }
}

</mosaic_0001>

<llo_original>
// kernel: tpu_custom_call.1
$region0: #{tpu_custom_call.1}
  #allocation0 [shape = 'u32[]', space=smem, size = 0x4, offset = 0x4, fixed_abs, tag = 'smem constant byte address 0x4 - core index']
  #allocation1 [shape = 'u32[144,128]{1,0:T(1,128)}', space=vmem, size = 0x12000, scoped, tag = 'internal scratch']
  #allocation2 [shape = 'f32[64,256]{1,0:T(8,128)}', space=vmem, size = 0x10000, scoped, tag = 'scratch operand']
  #allocation3 [shape = 'bf16[36,256]{1,0:T(8,128)(2,1)}', space=vmem, size = 0x5000, scoped, tag = 'scratch operand']
  %s0 = inlined_call_operand.vmem [shape: bf16[2,64,16], index: 0, kind: input, shape index: {}]
  %s1 = inlined_call_operand.vmem [shape: f32[2,18,256], index: 1, kind: input, shape index: {}]
  %s2 = inlined_call_operand.vmem [shape: bf16[8,36], index: 2, kind: input, shape index: {}]
  %s3 = inlined_call_operand.hbm [shape: f32[2,8,256], index: 3, kind: output, shape index: {}]
  %s4 = sld [smem:[#allocation0]]
  $region45: #{tpu_custom_call.1} parent=0
    _
  %s6 = ssub.s32 1, %s4
  %s7 = scalar_select 0, %s6, %s4
  $region1: #{tpu_custom_call.1} parent=0
    #allocation4 [shape = 'u8[16384]{0}', space=vmem, size = 0x4000, scoped, tag = 'output window, operand 0']
    #allocation5 [shape = 's32[2]{0}', space=sflag, size = 0x8, scoped, tag = 'scoped memory for tpu_custom_call.1']
    %8 = vsyncpa [#allocation5], 0
    %s9 = scalar_lea.sflag [#allocation5], 1
    %10 = vsyncpa %s9, 0
    loop: start=0, step=1, limit=4
    $region2: #{tpu_custom_call.1} parent=1 // loop_pre_header
      _
    $region3: #{tpu_custom_call.1} parent=1 // loop_header
      %s12 = sphi 0, %s16
      %p13 = scmp.ge.s32.totalorder %s12, 4
      %s19 = sphi 0, %s31
      %s20 = sphi 0, %s27
      %s21 = sphi 0, %s19
      %s22 = sphi 0, %s20
      %s23 = sphi 0, %s21
      %s24 = sphi 0, %s22
      %s34 = sphi 0, %s36
      %s37 = sphi 0, %s34
      %s38 = sphi 0, %s37
      %s54 = sphi 0, %s38
      %s62 = sphi 0, %s64
      %s65 = sphi 0, %s62
      %s66 = sphi 0, %s65
      %s82 = sphi 0, %s66
      %s86 = sphi 0, %s86
      %s88 = sphi 0, %s86
      %s89 = sphi 0, %s88
      %s103 = sphi 0, %s89
      %s111 = sphi 0, %s113
      %s114 = sphi 0, %s111
      %s115 = sphi 0, %s114
      %s131 = sphi 0, %s115
    $region4: #{tpu_custom_call.1} parent=1 // loop_header_branch
      %15 = sbr.rel (%p13) target = $region8
    $region5: #{tpu_custom_call.1} parent=1 // loop_body
      %s17 = ssub.s32 %s12, 1
      %s18 = ssub.s32 %s12, 2
      %s25 = sadd.s32 1, %s20
      %p26 = scmp.ge.s32.totalorder %s25, 1
      %s27 = scalar_select %p26, 0, %s25
      %s28 = sadd.s32 1, %s19
      %s29 = scalar_select %p26, %s28, %s19
      %p30 = scmp.ge.s32.totalorder %s29, 2
      %s31 = scalar_select %p30, 0, %s29
      %s32 = ssub.s32 %s19, %s31
      %p33 = scmp.eq.s32.totalorder %s32, 0
      %s35 = sadd.s32 %s34, 1
      %s36 = scalar_select %p33, %s34, %s35
      %p39 = pneg %p33
      %p40 = scmp.eq.s32.totalorder %s12, 1
      %p41 = por %p39, %p40
      %p42 = scmp.ne.s32.totalorder %s34, %s37
      %p43 = scmp.eq.s32.totalorder %s12, 0
      %p44 = por %p42, %p43
      %p45 = scmp.ne.s32.totalorder %s34, %s37
      %p46 = scmp.eq.s32.totalorder %s17, 1
      %p47 = por %p45, %p46
      %p48 = scmp.ne.s32.totalorder %s37, %s38
      %p49 = scmp.eq.s32.totalorder %s17, 0
      %p50 = por %p48, %p49
      %p51 = scmp.ne.s32.totalorder %s37, %s38
      %p52 = scmp.eq.s32.totalorder %s18, 1
      %p53 = por %p51, %p52
      %p55 = scmp.ne.s32.totalorder %s38, %s54
      %p56 = scmp.eq.s32.totalorder %s18, 0
      %p57 = por %p55, %p56
      %s58 = ssub.s32 %s19, %s31
      %s59 = ssub.s32 %s20, %s27
      %s60 = sor.u32 %s58, %s59
      %p61 = scmp.eq.s32.totalorder %s60, 0
      %s63 = sadd.s32 %s62, 1
      %s64 = scalar_select %p61, %s62, %s63
      %p67 = pneg %p61
      %p68 = scmp.eq.s32.totalorder %s12, 1
      %p69 = por %p67, %p68
      %p70 = scmp.ne.s32.totalorder %s62, %s65
      %p71 = scmp.eq.s32.totalorder %s12, 0
      %p72 = por %p70, %p71
      %p73 = scmp.ne.s32.totalorder %s62, %s65
      %p74 = scmp.eq.s32.totalorder %s17, 1
      %p75 = por %p73, %p74
      %p76 = scmp.ne.s32.totalorder %s65, %s66
      %p77 = scmp.eq.s32.totalorder %s17, 0
      %p78 = por %p76, %p77
      %p79 = scmp.ne.s32.totalorder %s65, %s66
      %p80 = scmp.eq.s32.totalorder %s18, 1
      %p81 = por %p79, %p80
      %p83 = scmp.ne.s32.totalorder %s66, %s82
      %p84 = scmp.eq.s32.totalorder %s18, 0
      %p85 = por %p83, %p84
      %s87 = sadd.s32 %s86, 1
      %p90 = scmp.eq.s32.totalorder %s12, 1
      %p91 = scmp.ne.s32.totalorder %s86, %s88
      %p92 = scmp.eq.s32.totalorder %s12, 0
      %p93 = por %p91, %p92
      %p94 = scmp.ne.s32.totalorder %s86, %s88
      %p95 = scmp.eq.s32.totalorder %s17, 1
      %p96 = por %p94, %p95
      %p97 = scmp.ne.s32.totalorder %s88, %s89
      %p98 = scmp.eq.s32.totalorder %s17, 0
      %p99 = por %p97, %p98
      %p100 = scmp.ne.s32.totalorder %s88, %s89
      %p101 = scmp.eq.s32.totalorder %s18, 1
      %p102 = por %p100, %p101
      %p104 = scmp.ne.s32.totalorder %s89, %s103
      %p105 = scmp.eq.s32.totalorder %s18, 0
      %p106 = por %p104, %p105
      %s107 = ssub.s32 %s19, %s31
      %s108 = ssub.s32 %s20, %s27
      %s109 = sor.u32 %s107, %s108
      %p110 = scmp.eq.s32.totalorder %s109, 0
      %s112 = sadd.s32 %s111, 1
      %s113 = scalar_select %p110, %s111, %s112
      %p116 = pneg %p110
      %p117 = scmp.eq.s32.totalorder %s12, 1
      %p118 = por %p116, %p117
      %p119 = scmp.ne.s32.totalorder %s111, %s114
      %p120 = scmp.eq.s32.totalorder %s12, 0
      %p121 = por %p119, %p120
      %p122 = scmp.ne.s32.totalorder %s111, %s114
      %p123 = scmp.eq.s32.totalorder %s17, 1
      %p124 = por %p122, %p123
      %p125 = scmp.ne.s32.totalorder %s114, %s115
      %p126 = scmp.eq.s32.totalorder %s17, 0
      %p127 = por %p125, %p126
      %p128 = scmp.ne.s32.totalorder %s114, %s115
      %p129 = scmp.eq.s32.totalorder %s18, 1
      %p130 = por %p128, %p129
      %p132 = scmp.ne.s32.totalorder %s115, %s131
      %p133 = scmp.eq.s32.totalorder %s18, 0
      %p134 = por %p132, %p133
      %p135 = scmp.le.s32.totalorder 1, %s12
      %p136 = scmp.lt.s32.totalorder %s12, 3
      %p137 = pnand %p135, %p136
      %p138 = pneg %p137
      // Predicated region
      $region9: #{tpu_custom_call.1} parent=5 // pred_check
        _
      $region10: #{tpu_custom_call.1} parent=5 // pred_check_branch
        %140 = sbr.rel (%p137) target = $region12
      $region11: #{tpu_custom_call.1} parent=5 // pred_region
        %s141 = ssub.s32 %s12, 1
        // Predicated region
        $region13: #{tpu_custom_call.1} parent=11 // pred_check
          %p142 = pneg %p99
        $region14: #{tpu_custom_call.1} parent=11 // pred_check_branch
          %144 = sbr.rel (%p142) target = $region16
        $region15: #{tpu_custom_call.1} parent=11 // pred_region
          _
        $region16: #{tpu_custom_call.1} parent=11 // pred_fallthru
          _
      $region12: #{tpu_custom_call.1} parent=5 // pred_fallthru
        _
      %p145 = scmp.lt.s32.totalorder %s12, 2
      // Predicated region
      $region17: #{tpu_custom_call.1} parent=5 // pred_check
        %p146 = pneg %p145
      $region18: #{tpu_custom_call.1} parent=5 // pred_check_branch
        %148 = sbr.rel (%p146) target = $region20
      $region19: #{tpu_custom_call.1} parent=5 // pred_region
        // Predicated region
        $region21: #{tpu_custom_call.1} parent=19 // pred_check
          %p149 = pneg %p44
        $region22: #{tpu_custom_call.1} parent=19 // pred_check_branch
          %151 = sbr.rel (%p149) target = $region24
        $region23: #{tpu_custom_call.1} parent=19 // pred_region
          %p152 = scmp.lt.s32.totalorder %s19, 1
          %s153 = scalar_select %p152, %s19, 1
          %s154 = smul.addr %s153, 8
          %s155 = smul.addr %s154, 4
          %s156 = scalar_lea.vmem %s0, %s155
        $region24: #{tpu_custom_call.1} parent=19 // pred_fallthru
          _
        // Predicated region
        $region25: #{tpu_custom_call.1} parent=19 // pred_check
          %p157 = pneg %p72
        $region26: #{tpu_custom_call.1} parent=19 // pred_check_branch
          %159 = sbr.rel (%p157) target = $region28
        $region27: #{tpu_custom_call.1} parent=19 // pred_region
          %s160 = smul.u32 2, %s20
          %p161 = scmp.lt.s32.totalorder %s19, 1
          %s162 = scalar_select %p161, %s19, 1
          %p163 = scmp.lt.s32.totalorder %s160, 1
          %s164 = scalar_select %p163, %s160, 1
          %s165 = smul.addr %s162, 6
          %s166 = sadd.s32 %s164, %s165
          %s167 = smul.addr %s166, 8
          %s168 = scalar_lea.vmem %s1, %s167
          %s169 = smul.u32 2, %s20
        $region28: #{tpu_custom_call.1} parent=19 // pred_fallthru
          _
      $region20: #{tpu_custom_call.1} parent=5 // pred_fallthru
        _
      %p170 = scmp.le.s32.totalorder 1, %s12
      %p171 = scmp.lt.s32.totalorder %s12, 3
      %p172 = pnand %p170, %p171
      %p173 = pneg %p172
      // Predicated region
      $region29: #{tpu_custom_call.1} parent=5 // pred_check
        _
      $region30: #{tpu_custom_call.1} parent=5 // pred_check_branch
        %175 = sbr.rel (%p172) target = $region32
      $region31: #{tpu_custom_call.1} parent=5 // pred_region
        %s176 = ssub.s32 %s12, 1
        %p177 = scmp.lt.s32.totalorder %s21, 1
        %s178 = scalar_select %p177, %s21, 1
        %s179 = smul.addr %s178, 8
        %s180 = smul.addr %s179, 4
        %s181 = scalar_lea.vmem %s0, %s180
        %p182 = pneg %p50
        %p183 = pneg %p47
        %s184 = smul.u32 2, %s22
        %p185 = scmp.lt.s32.totalorder %s21, 1
        %s186 = scalar_select %p185, %s21, 1
        %p187 = scmp.lt.s32.totalorder %s184, 1
        %s188 = scalar_select %p187, %s184, 1
        %s189 = smul.addr %s186, 6
        %s190 = sadd.s32 %s188, %s189
        %s191 = smul.addr %s190, 8
        %s192 = scalar_lea.vmem %s1, %s191
        %p193 = pneg %p78
        %p194 = pneg %p75
        %p195 = pneg %p99
        %p196 = pneg %p96
        %p197 = pneg %p127
        %p198 = pneg %p124
        %s199 = sand.u32 %s114, 1
        %s200 = scalar_lea.sflag [#allocation5], %s199
        %s201 = sand.u32 %s114, 1
        %s202 = smul.addr %s201, 16
        %s203 = scalar_lea.vmem [#allocation4], %s202
        %p204 = scmp.lt.s32.totalorder %s21, 1
        %s205 = scalar_select %p204, %s21, 1
        %s206 = smul.addr %s205, 8
        %s207 = smul.addr %s206, 4
        %s208 = scalar_lea.vmem %s0, %s207
        %s209 = smul.u32 2, %s22
        %p210 = scmp.lt.s32.totalorder %s21, 1
        %s211 = scalar_select %p210, %s21, 1
        %p212 = scmp.lt.s32.totalorder %s209, 1
        %s213 = scalar_select %p212, %s209, 1
        %s214 = smul.addr %s211, 6
        %s215 = sadd.s32 %s213, %s214
        %s216 = smul.addr %s215, 8
        %s217 = scalar_lea.vmem %s1, %s216
        %s218 = smul.u32 2, %s22
        %s219 = smul.u32 2, %s22
        %v221 = vlaneseq
        %v222 = vshrl.u32 %v221, 7
        %v223 = vadd.s32 %v222, 8
        %v224 = vcvt.s32.f32 %v222
        %v225 = vcvt.s32.f32 %v223
        %v226 = vld [vmem:[%s217] ss:$8 sm:$0x3]
        %s227 = scalar_lea.vmem %s217, 17
        %v228 = vld [vmem:[%s227] ss:$8 sm:$0x3]
        %v230 = vlaneseq
        %v231 = vshrl.u32 %v230, 7
        %v232 = vsub.s32 0, %v231
        %v233 = vrot.slane %v226, %v232
        %v234 = vlaneseq
        %v235 = vshrl.u32 %v234, 7
        %v236 = vsub.s32 1, %v235
        %v237 = vrot.slane %v226, %v236
        %v240 = vsub.f32 %v233, %v224
        %v241 = vsub.f32 %v237, %v224
        %v242 = vsub.f32 %v233, %v225
        %v243 = vsub.f32 %v237, %v225
        %v244 = vand.u32 2147483647, %v240
        %v245 = vand.u32 2147483647, %v241
        %v246 = vand.u32 2147483647, %v242
        %v247 = vand.u32 2147483647, %v243
        %v248 = vsub.f32 1.0, %v244
        %v249 = vsub.f32 1.0, %v245
        %v250 = vsub.f32 1.0, %v246
        %v251 = vsub.f32 1.0, %v247
        %v252 = vmax.f32 %v248, 0.0
        %v253 = vmax.f32 %v249, 0.0
        %v254 = vmax.f32 %v250, 0.0
        %v255 = vmax.f32 %v251, 0.0
        %v256 = vpack.c.bf16 %v254, %v252
        %v257 = vpack.c.bf16 %v255, %v253
        %v258 = vld [vmem:[%s208] sm:$0xf]
        %v259 = vld [vmem:[%s208 + $0x4] sm:$0xf]
        %v260 = vld [vmem:[%s208 + $0x8] sm:$0xf]
        %v261 = vld [vmem:[%s208 + $0xc] sm:$0xf]
        %v262 = vld [vmem:[%s208 + $0x10] sm:$0xf]
        %v263 = vld [vmem:[%s208 + $0x14] sm:$0xf]
        %v264 = vld [vmem:[%s208 + $0x18] sm:$0xf]
        %v265 = vld [vmem:[%s208 + $0x1c] sm:$0xf]
        %v274 = vunpack.c.l.b16 %v258
        %v275 = vunpack.c.l.b16 %v259
        %v276 = vunpack.c.l.b16 %v260
        %v277 = vunpack.c.l.b16 %v261
        %v278 = vunpack.c.l.b16 %v262
        %v279 = vunpack.c.l.b16 %v263
        %v280 = vunpack.c.l.b16 %v264
        %v281 = vunpack.c.l.b16 %v265
        %v282 = vpack.c.b16 %v275, %v274
        %v283 = vpack.c.b16 %v277, %v276
        %v284 = vpack.c.b16 %v279, %v278
        %v285 = vpack.c.b16 %v281, %v280
        %vm286 = vcmask 130048
        %v288 = vsel %vm286, %v282, 0
        %v291 = vsel %vm286, %v283, 0
        %v294 = vsel %vm286, %v284, 0
        %v297 = vsel %vm286, %v285, 0
        %299 = vmatprep.subr.bf16.mxu0 %v257
        %300 = vmatpush1.bf16.msra.mxu0 %v256
        %301 = vmatprep.subr.bf16.mxu0 0
        %302 = vmatpush1.bf16.msra.mxu0 0
        %303 = vmatprep.subr.bf16.mxu0 0
        %304 = vmatpush1.bf16.msra.mxu0 0
        %305 = vmatprep.subr.bf16.mxu0 0
        %306 = vmatpush1.bf16.msra.mxu0 0
        %307 = vmatprep.subr.bf16.mxu0 0
        %308 = vmatpush1.bf16.msra.mxu0 0
        %309 = vmatprep.subr.bf16.mxu0 0
        %310 = vmatpush1.bf16.msra.mxu0 0
        %311 = vmatprep.subr.bf16.mxu0 0
        %312 = vmatpush1.bf16.msra.mxu0 0
        %313 = vmatprep.subr.bf16.mxu0 0
        %314 = vmatpush1.bf16.msra.mxu0 0
        %315 = vmatprep.subr.bf16.mxu0 0
        %316 = vmatpush1.bf16.msra.mxu0 0
        %317 = vmatprep.subr.bf16.mxu0 0
        %318 = vmatpush1.bf16.msra.mxu0 0
        %319 = vmatprep.subr.bf16.mxu0 0
        %320 = vmatpush1.bf16.msra.mxu0 0
        %321 = vmatprep.subr.bf16.mxu0 0
        %322 = vmatpush1.bf16.msra.mxu0 0
        %323 = vmatprep.subr.bf16.mxu0 0
        %324 = vmatpush1.bf16.msra.mxu0 0
        %325 = vmatprep.subr.bf16.mxu0 0
        %326 = vmatpush1.bf16.msra.mxu0 0
        %327 = vmatprep.subr.bf16.mxu0 0
        %328 = vmatpush1.bf16.msra.mxu0 0
        %329 = vmatprep.subr.bf16.mxu0 0
        %330 = vmatpush1.bf16.msra.mxu0 0
        %331 = vmatprep.mubr.bf16.mxu0 0
        %332 = vmatmul.mubr.bf16.gmra.mrb[0].mxu0 %v288
        %v333 = vpop.f32.mrb[0].mxu0
        %v334 = vadd.f32 0.0, %v333
        %v335 = vpop.f32.mrb[0].mxu0
        %v336 = vadd.f32 0.0, %v335
        %v337 = vpop.f32.mrb[0].mxu0
        %v338 = vadd.f32 0.0, %v337
        %v339 = vpop.f32.mrb[0].mxu0
        %v340 = vadd.f32 0.0, %v339
        %341 = vmatprep.mubr.bf16.mxu0 0
        %342 = vmatmul.mubr.bf16.gmra.mrb[0].mxu0 %v291
        %v343 = vpop.f32.mrb[0].mxu0
        %v344 = vadd.f32 0.0, %v343
        %v345 = vpop.f32.mrb[0].mxu0
        %v346 = vadd.f32 0.0, %v345
        %v347 = vpop.f32.mrb[0].mxu0
        %v348 = vadd.f32 0.0, %v347
        %v349 = vpop.f32.mrb[0].mxu0
        %v350 = vadd.f32 0.0, %v349
        %351 = vmatprep.mubr.bf16.mxu0 0
        %352 = vmatmul.mubr.bf16.gmra.mrb[0].mxu0 %v294
        %v353 = vpop.f32.mrb[0].mxu0
        %v354 = vadd.f32 0.0, %v353
        %v355 = vpop.f32.mrb[0].mxu0
        %v356 = vadd.f32 0.0, %v355
        %v357 = vpop.f32.mrb[0].mxu0
        %v358 = vadd.f32 0.0, %v357
        %v359 = vpop.f32.mrb[0].mxu0
        %v360 = vadd.f32 0.0, %v359
        %361 = vmatprep.mubr.bf16.mxu0 0
        %362 = vmatmul.mubr.bf16.gmra.mrb[0].mxu0 %v297
        %v363 = vpop.f32.mrb[0].mxu0
        %v364 = vadd.f32 0.0, %v363
        %v365 = vpop.f32.mrb[0].mxu0
        %v366 = vadd.f32 0.0, %v365
        %v367 = vpop.f32.mrb[0].mxu0
        %v368 = vadd.f32 0.0, %v367
        %v369 = vpop.f32.mrb[0].mxu0
        %v370 = vadd.f32 0.0, %v369
        %371 = vdwg.mxu0
        %372 = vst [vmem:[#allocation2] sm:$0xff] %v334
        %373 = vst [vmem:[#allocation2 + $0x8] sm:$0xff] %v336
        %374 = vst [vmem:[#allocation2 + $0x10] sm:$0xff] %v338
        %375 = vst [vmem:[#allocation2 + $0x18] sm:$0xff] %v340
        %376 = vst [vmem:[#allocation2 + $0x20] sm:$0xff] %v344
        %377 = vst [vmem:[#allocation2 + $0x28] sm:$0xff] %v346
        %378 = vst [vmem:[#allocation2 + $0x30] sm:$0xff] %v348
        %379 = vst [vmem:[#allocation2 + $0x38] sm:$0xff] %v350
        %380 = vst [vmem:[#allocation2 + $0x40] sm:$0xff] %v354
        %381 = vst [vmem:[#allocation2 + $0x48] sm:$0xff] %v356
        %382 = vst [vmem:[#allocation2 + $0x50] sm:$0xff] %v358
        %383 = vst [vmem:[#allocation2 + $0x58] sm:$0xff] %v360
        %384 = vst [vmem:[#allocation2 + $0x60] sm:$0xff] %v364
        %385 = vst [vmem:[#allocation2 + $0x68] sm:$0xff] %v366
        %386 = vst [vmem:[#allocation2 + $0x70] sm:$0xff] %v368
        %387 = vst [vmem:[#allocation2 + $0x78] sm:$0xff] %v370
        %v388 = vand.u32 2147483647, %v228
        %v389 = vsub.f32 1.0, %v388
        %v390 = vmax.f32 %v389, 0.0
        %v391 = vld [vmem:[#allocation2] sm:$0xf]
        %v392 = vld [vmem:[#allocation2 + $0x8] sm:$0xf]
        %v394 = vlaneseq
        %v395 = vshrl.u32 %v394, 7
        %v396 = vsub.s32 0, %v395
        %v397 = vrot.slane %v390, %v396
        %v398 = vlaneseq
        %v399 = vshrl.u32 %v398, 7
        %v400 = vsub.s32 1, %v399
        %v401 = vrot.slane %v390, %v400
        %v404 = vmul.f32 %v391, %v397
        %v405 = vmul.f32 %v392, %v401
        %v406 = vadd.f32 %v404, 0.0
        %v407 = vadd.f32 %v405, 0.0
        %v408 = vsub.f32 %v228, 1.0
        %v409 = vand.u32 2147483647, %v408
        %v410 = vsub.f32 1.0, %v409
        %v411 = vmax.f32 %v410, 0.0
        %v412 = vld [vmem:[#allocation2] sm:$0xf0]
        %v413 = vld [vmem:[#allocation2 + $0x8] sm:$0xf0]
        %v415 = vlaneseq
        %v416 = vshrl.u32 %v415, 7
        %v417 = vsub.s32 0, %v416
        %v418 = vrot.slane %v411, %v417
        %v419 = vlaneseq
        %v420 = vshrl.u32 %v419, 7
        %v421 = vsub.s32 1, %v420
        %v422 = vrot.slane %v411, %v421
        %v425 = vmul.f32 %v412, %v418
        %v426 = vmul.f32 %v413, %v422
        %v429 = vrot.slane %v425, 4
        %v430 = vrot.slane %v426, 4
        %v433 = vadd.f32 %v406, %v429
        %v434 = vadd.f32 %v407, %v430
        %v435 = vsub.f32 %v228, 2.0
        %v436 = vand.u32 2147483647, %v435
        %v437 = vsub.f32 1.0, %v436
        %v438 = vmax.f32 %v437, 0.0
        %v439 = vld [vmem:[#allocation2 + $0x10] sm:$0xf]
        %v440 = vld [vmem:[#allocation2 + $0x18] sm:$0xf]
        %v442 = vlaneseq
        %v443 = vshrl.u32 %v442, 7
        %v444 = vsub.s32 0, %v443
        %v445 = vrot.slane %v438, %v444
        %v446 = vlaneseq
        %v447 = vshrl.u32 %v446, 7
        %v448 = vsub.s32 1, %v447
        %v449 = vrot.slane %v438, %v448
        %v452 = vmul.f32 %v439, %v445
        %v453 = vmul.f32 %v440, %v449
        %v454 = vadd.f32 %v433, %v452
        %v455 = vadd.f32 %v434, %v453
        %v456 = vsub.f32 %v228, 3.0
        %v457 = vand.u32 2147483647, %v456
        %v458 = vsub.f32 1.0, %v457
        %v459 = vmax.f32 %v458, 0.0
        %v460 = vld [vmem:[#allocation2 + $0x10] sm:$0xf0]
        %v461 = vld [vmem:[#allocation2 + $0x18] sm:$0xf0]
        %v463 = vlaneseq
        %v464 = vshrl.u32 %v463, 7
        %v465 = vsub.s32 0, %v464
        %v466 = vrot.slane %v459, %v465
        %v467 = vlaneseq
        %v468 = vshrl.u32 %v467, 7
        %v469 = vsub.s32 1, %v468
        %v470 = vrot.slane %v459, %v469
        %v473 = vmul.f32 %v460, %v466
        %v474 = vmul.f32 %v461, %v470
        %v477 = vrot.slane %v473, 4
        %v478 = vrot.slane %v474, 4
        %v481 = vadd.f32 %v454, %v477
        %v482 = vadd.f32 %v455, %v478
        %v483 = vsub.f32 %v228, 4.0
        %v484 = vand.u32 2147483647, %v483
        %v485 = vsub.f32 1.0, %v484
        %v486 = vmax.f32 %v485, 0.0
        %v487 = vld [vmem:[#allocation2 + $0x20] sm:$0xf]
        %v488 = vld [vmem:[#allocation2 + $0x28] sm:$0xf]
        %v490 = vlaneseq
        %v491 = vshrl.u32 %v490, 7
        %v492 = vsub.s32 0, %v491
        %v493 = vrot.slane %v486, %v492
        %v494 = vlaneseq
        %v495 = vshrl.u32 %v494, 7
        %v496 = vsub.s32 1, %v495
        %v497 = vrot.slane %v486, %v496
        %v500 = vmul.f32 %v487, %v493
        %v501 = vmul.f32 %v488, %v497
        %v502 = vadd.f32 %v481, %v500
        %v503 = vadd.f32 %v482, %v501
        %v504 = vsub.f32 %v228, 5.0
        %v505 = vand.u32 2147483647, %v504
        %v506 = vsub.f32 1.0, %v505
        %v507 = vmax.f32 %v506, 0.0
        %v508 = vld [vmem:[#allocation2 + $0x20] sm:$0xf0]
        %v509 = vld [vmem:[#allocation2 + $0x28] sm:$0xf0]
        %v511 = vlaneseq
        %v512 = vshrl.u32 %v511, 7
        %v513 = vsub.s32 0, %v512
        %v514 = vrot.slane %v507, %v513
        %v515 = vlaneseq
        %v516 = vshrl.u32 %v515, 7
        %v517 = vsub.s32 1, %v516
        %v518 = vrot.slane %v507, %v517
        %v521 = vmul.f32 %v508, %v514
        %v522 = vmul.f32 %v509, %v518
        %v525 = vrot.slane %v521, 4
        %v526 = vrot.slane %v522, 4
        %v529 = vadd.f32 %v502, %v525
        %v530 = vadd.f32 %v503, %v526
        %v531 = vsub.f32 %v228, 6.0
        %v532 = vand.u32 2147483647, %v531
        %v533 = vsub.f32 1.0, %v532
        %v534 = vmax.f32 %v533, 0.0
        %v535 = vld [vmem:[#allocation2 + $0x30] sm:$0xf]
        %v536 = vld [vmem:[#allocation2 + $0x38] sm:$0xf]
        %v538 = vlaneseq
        %v539 = vshrl.u32 %v538, 7
        %v540 = vsub.s32 0, %v539
        %v541 = vrot.slane %v534, %v540
        %v542 = vlaneseq
        %v543 = vshrl.u32 %v542, 7
        %v544 = vsub.s32 1, %v543
        %v545 = vrot.slane %v534, %v544
        %v548 = vmul.f32 %v535, %v541
        %v549 = vmul.f32 %v536, %v545
        %v550 = vadd.f32 %v529, %v548
        %v551 = vadd.f32 %v530, %v549
        %v552 = vsub.f32 %v228, 7.0
        %v553 = vand.u32 2147483647, %v552
        %v554 = vsub.f32 1.0, %v553
        %v555 = vmax.f32 %v554, 0.0
        %v556 = vld [vmem:[#allocation2 + $0x30] sm:$0xf0]
        %v557 = vld [vmem:[#allocation2 + $0x38] sm:$0xf0]
        %v559 = vlaneseq
        %v560 = vshrl.u32 %v559, 7
        %v561 = vsub.s32 0, %v560
        %v562 = vrot.slane %v555, %v561
        %v563 = vlaneseq
        %v564 = vshrl.u32 %v563, 7
        %v565 = vsub.s32 1, %v564
        %v566 = vrot.slane %v555, %v565
        %v569 = vmul.f32 %v556, %v562
        %v570 = vmul.f32 %v557, %v566
        %v573 = vrot.slane %v569, 4
        %v574 = vrot.slane %v570, 4
        %v577 = vadd.f32 %v550, %v573
        %v578 = vadd.f32 %v551, %v574
        %v579 = vsub.f32 %v228, 8.0
        %v580 = vand.u32 2147483647, %v579
        %v581 = vsub.f32 1.0, %v580
        %v582 = vmax.f32 %v581, 0.0
        %v583 = vld [vmem:[#allocation2 + $0x40] sm:$0xf]
        %v584 = vld [vmem:[#allocation2 + $0x48] sm:$0xf]
        %v586 = vlaneseq
        %v587 = vshrl.u32 %v586, 7
        %v588 = vsub.s32 0, %v587
        %v589 = vrot.slane %v582, %v588
        %v590 = vlaneseq
        %v591 = vshrl.u32 %v590, 7
        %v592 = vsub.s32 1, %v591
        %v593 = vrot.slane %v582, %v592
        %v596 = vmul.f32 %v583, %v589
        %v597 = vmul.f32 %v584, %v593
        %v598 = vadd.f32 %v577, %v596
        %v599 = vadd.f32 %v578, %v597
        %v600 = vsub.f32 %v228, 9.0
        %v601 = vand.u32 2147483647, %v600
        %v602 = vsub.f32 1.0, %v601
        %v603 = vmax.f32 %v602, 0.0
        %v604 = vld [vmem:[#allocation2 + $0x40] sm:$0xf0]
        %v605 = vld [vmem:[#allocation2 + $0x48] sm:$0xf0]
        %v607 = vlaneseq
        %v608 = vshrl.u32 %v607, 7
        %v609 = vsub.s32 0, %v608
        %v610 = vrot.slane %v603, %v609
        %v611 = vlaneseq
        %v612 = vshrl.u32 %v611, 7
        %v613 = vsub.s32 1, %v612
        %v614 = vrot.slane %v603, %v613
        %v617 = vmul.f32 %v604, %v610
        %v618 = vmul.f32 %v605, %v614
        %v621 = vrot.slane %v617, 4
        %v622 = vrot.slane %v618, 4
        %v625 = vadd.f32 %v598, %v621
        %v626 = vadd.f32 %v599, %v622
        %v627 = vsub.f32 %v228, 10.0
        %v628 = vand.u32 2147483647, %v627
        %v629 = vsub.f32 1.0, %v628
        %v630 = vmax.f32 %v629, 0.0
        %v631 = vld [vmem:[#allocation2 + $0x50] sm:$0xf]
        %v632 = vld [vmem:[#allocation2 + $0x58] sm:$0xf]
        %v634 = vlaneseq
        %v635 = vshrl.u32 %v634, 7
        %v636 = vsub.s32 0, %v635
        %v637 = vrot.slane %v630, %v636
        %v638 = vlaneseq
        %v639 = vshrl.u32 %v638, 7
        %v640 = vsub.s32 1, %v639
        %v641 = vrot.slane %v630, %v640
        %v644 = vmul.f32 %v631, %v637
        %v645 = vmul.f32 %v632, %v641
        %v646 = vadd.f32 %v625, %v644
        %v647 = vadd.f32 %v626, %v645
        %v648 = vsub.f32 %v228, 11.0
        %v649 = vand.u32 2147483647, %v648
        %v650 = vsub.f32 1.0, %v649
        %v651 = vmax.f32 %v650, 0.0
        %v652 = vld [vmem:[#allocation2 + $0x50] sm:$0xf0]
        %v653 = vld [vmem:[#allocation2 + $0x58] sm:$0xf0]
        %v655 = vlaneseq
        %v656 = vshrl.u32 %v655, 7
        %v657 = vsub.s32 0, %v656
        %v658 = vrot.slane %v651, %v657
        %v659 = vlaneseq
        %v660 = vshrl.u32 %v659, 7
        %v661 = vsub.s32 1, %v660
        %v662 = vrot.slane %v651, %v661
        %v665 = vmul.f32 %v652, %v658
        %v666 = vmul.f32 %v653, %v662
        %v669 = vrot.slane %v665, 4
        %v670 = vrot.slane %v666, 4
        %v673 = vadd.f32 %v646, %v669
        %v674 = vadd.f32 %v647, %v670
        %v675 = vsub.f32 %v228, 12.0
        %v676 = vand.u32 2147483647, %v675
        %v677 = vsub.f32 1.0, %v676
        %v678 = vmax.f32 %v677, 0.0
        %v679 = vld [vmem:[#allocation2 + $0x60] sm:$0xf]
        %v680 = vld [vmem:[#allocation2 + $0x68] sm:$0xf]
        %v682 = vlaneseq
        %v683 = vshrl.u32 %v682, 7
        %v684 = vsub.s32 0, %v683
        %v685 = vrot.slane %v678, %v684
        %v686 = vlaneseq
        %v687 = vshrl.u32 %v686, 7
        %v688 = vsub.s32 1, %v687
        %v689 = vrot.slane %v678, %v688
        %v692 = vmul.f32 %v679, %v685
        %v693 = vmul.f32 %v680, %v689
        %v694 = vadd.f32 %v673, %v692
        %v695 = vadd.f32 %v674, %v693
        %v696 = vsub.f32 %v228, 13.0
        %v697 = vand.u32 2147483647, %v696
        %v698 = vsub.f32 1.0, %v697
        %v699 = vmax.f32 %v698, 0.0
        %v700 = vld [vmem:[#allocation2 + $0x60] sm:$0xf0]
        %v701 = vld [vmem:[#allocation2 + $0x68] sm:$0xf0]
        %v703 = vlaneseq
        %v704 = vshrl.u32 %v703, 7
        %v705 = vsub.s32 0, %v704
        %v706 = vrot.slane %v699, %v705
        %v707 = vlaneseq
        %v708 = vshrl.u32 %v707, 7
        %v709 = vsub.s32 1, %v708
        %v710 = vrot.slane %v699, %v709
        %v713 = vmul.f32 %v700, %v706
        %v714 = vmul.f32 %v701, %v710
        %v717 = vrot.slane %v713, 4
        %v718 = vrot.slane %v714, 4
        %v721 = vadd.f32 %v694, %v717
        %v722 = vadd.f32 %v695, %v718
        %v723 = vsub.f32 %v228, 14.0
        %v724 = vand.u32 2147483647, %v723
        %v725 = vsub.f32 1.0, %v724
        %v726 = vmax.f32 %v725, 0.0
        %v727 = vld [vmem:[#allocation2 + $0x70] sm:$0xf]
        %v728 = vld [vmem:[#allocation2 + $0x78] sm:$0xf]
        %v730 = vlaneseq
        %v731 = vshrl.u32 %v730, 7
        %v732 = vsub.s32 0, %v731
        %v733 = vrot.slane %v726, %v732
        %v734 = vlaneseq
        %v735 = vshrl.u32 %v734, 7
        %v736 = vsub.s32 1, %v735
        %v737 = vrot.slane %v726, %v736
        %v740 = vmul.f32 %v727, %v733
        %v741 = vmul.f32 %v728, %v737
        %v742 = vadd.f32 %v721, %v740
        %v743 = vadd.f32 %v722, %v741
        %v744 = vsub.f32 %v228, 15.0
        %v745 = vand.u32 2147483647, %v744
        %v746 = vsub.f32 1.0, %v745
        %v747 = vmax.f32 %v746, 0.0
        %v748 = vld [vmem:[#allocation2 + $0x70] sm:$0xf0]
        %v749 = vld [vmem:[#allocation2 + $0x78] sm:$0xf0]
        %v751 = vlaneseq
        %v752 = vshrl.u32 %v751, 7
        %v753 = vsub.s32 0, %v752
        %v754 = vrot.slane %v747, %v753
        %v755 = vlaneseq
        %v756 = vshrl.u32 %v755, 7
        %v757 = vsub.s32 1, %v756
        %v758 = vrot.slane %v747, %v757
        %v761 = vmul.f32 %v748, %v754
        %v762 = vmul.f32 %v749, %v758
        %v765 = vrot.slane %v761, 4
        %v766 = vrot.slane %v762, 4
        %v769 = vadd.f32 %v742, %v765
        %v770 = vadd.f32 %v743, %v766
        %v771 = vpack.c.bf16 %v769, %v769
        %v772 = vpack.c.bf16 %v770, %v770
        %v775 = vunpack.c.l.b16 %v771
        %v776 = vunpack.c.l.b16 %v772
        %v777 = vpack.c.b16 %v776, %v775
        %779 = vst [vmem:[#allocation3] sm:$0x33] %v777
        %s780 = scalar_lea.vmem %s217, 1
        %v781 = vld [vmem:[%s780] ss:$8 sm:$0x3]
        %s782 = scalar_lea.vmem %s217, 18
        %v783 = vld [vmem:[%s782] ss:$8 sm:$0x3]
        %v785 = vlaneseq
        %v786 = vshrl.u32 %v785, 7
        %v787 = vsub.s32 0, %v786
        %v788 = vrot.slane %v781, %v787
        %v789 = vlaneseq
        %v790 = vshrl.u32 %v789, 7
        %v791 = vsub.s32 1, %v790
        %v792 = vrot.slane %v781, %v791
        %v795 = vsub.f32 %v788, %v224
        %v796 = vsub.f32 %v792, %v224
        %v797 = vsub.f32 %v788, %v225
        %v798 = vsub.f32 %v792, %v225
        %v799 = vand.u32 2147483647, %v795
        %v800 = vand.u32 2147483647, %v796
        %v801 = vand.u32 2147483647, %v797
        %v802 = vand.u32 2147483647, %v798
        %v803 = vsub.f32 1.0, %v799
        %v804 = vsub.f32 1.0, %v800
        %v805 = vsub.f32 1.0, %v801
        %v806 = vsub.f32 1.0, %v802
        %v807 = vmax.f32 %v803, 0.0
        %v808 = vmax.f32 %v804, 0.0
        %v809 = vmax.f32 %v805, 0.0
        %v810 = vmax.f32 %v806, 0.0
        %v811 = vpack.c.bf16 %v809, %v807
        %v812 = vpack.c.bf16 %v810, %v808
        %v813 = vld [vmem:[%s208] sm:$0xf]
        %v814 = vld [vmem:[%s208 + $0x4] sm:$0xf]
        %v815 = vld [vmem:[%s208 + $0x8] sm:$0xf]
        %v816 = vld [vmem:[%s208 + $0xc] sm:$0xf]
        %v817 = vld [vmem:[%s208 + $0x10] sm:$0xf]
        %v818 = vld [vmem:[%s208 + $0x14] sm:$0xf]
        %v819 = vld [vmem:[%s208 + $0x18] sm:$0xf]
        %v820 = vld [vmem:[%s208 + $0x1c] sm:$0xf]
        %v829 = vunpack.c.l.b16 %v813
        %v830 = vunpack.c.l.b16 %v814
        %v831 = vunpack.c.l.b16 %v815
        %v832 = vunpack.c.l.b16 %v816
        %v833 = vunpack.c.l.b16 %v817
        %v834 = vunpack.c.l.b16 %v818
        %v835 = vunpack.c.l.b16 %v819
        %v836 = vunpack.c.l.b16 %v820
        %v837 = vpack.c.b16 %v830, %v829
        %v838 = vpack.c.b16 %v832, %v831
        %v839 = vpack.c.b16 %v834, %v833
        %v840 = vpack.c.b16 %v836, %v835
        %v842 = vsel %vm286, %v837, 0
        %v845 = vsel %vm286, %v838, 0
        %v848 = vsel %vm286, %v839, 0
        %v851 = vsel %vm286, %v840, 0
        %853 = vmatprep.subr.bf16.mxu0 %v812
        %854 = vmatpush1.bf16.msra.mxu0 %v811
        %855 = vmatprep.subr.bf16.mxu0 0
        %856 = vmatpush1.bf16.msra.mxu0 0
        %857 = vmatprep.subr.bf16.mxu0 0
        %858 = vmatpush1.bf16.msra.mxu0 0
        %859 = vmatprep.subr.bf16.mxu0 0
        %860 = vmatpush1.bf16.msra.mxu0 0
        %861 = vmatprep.subr.bf16.mxu0 0
        %862 = vmatpush1.bf16.msra.mxu0 0
        %863 = vmatprep.subr.bf16.mxu0 0
        %864 = vmatpush1.bf16.msra.mxu0 0
        %865 = vmatprep.subr.bf16.mxu0 0
        %866 = vmatpush1.bf16.msra.mxu0 0
        %867 = vmatprep.subr.bf16.mxu0 0
        %868 = vmatpush1.bf16.msra.mxu0 0
        %869 = vmatprep.subr.bf16.mxu0 0
        %870 = vmatpush1.bf16.msra.mxu0 0
        %871 = vmatprep.subr.bf16.mxu0 0
        %872 = vmatpush1.bf16.msra.mxu0 0
        %873 = vmatprep.subr.bf16.mxu0 0
        %874 = vmatpush1.bf16.msra.mxu0 0
        %875 = vmatprep.subr.bf16.mxu0 0
        %876 = vmatpush1.bf16.msra.mxu0 0
        %877 = vmatprep.subr.bf16.mxu0 0
        %878 = vmatpush1.bf16.msra.mxu0 0
        %879 = vmatprep.subr.bf16.mxu0 0
        %880 = vmatpush1.bf16.msra.mxu0 0
        %881 = vmatprep.subr.bf16.mxu0 0
        %882 = vmatpush1.bf16.msra.mxu0 0
        %883 = vmatprep.subr.bf16.mxu0 0
        %884 = vmatpush1.bf16.msra.mxu0 0
        %885 = vmatprep.mubr.bf16.mxu0 0
        %886 = vmatmul.mubr.bf16.gmra.mrb[0].mxu0 %v842
        %v887 = vpop.f32.mrb[0].mxu0
        %v888 = vadd.f32 0.0, %v887
        %v889 = vpop.f32.mrb[0].mxu0
        %v890 = vadd.f32 0.0, %v889
        %v891 = vpop.f32.mrb[0].mxu0
        %v892 = vadd.f32 0.0, %v891
        %v893 = vpop.f32.mrb[0].mxu0
        %v894 = vadd.f32 0.0, %v893
        %895 = vmatprep.mubr.bf16.mxu0 0
        %896 = vmatmul.mubr.bf16.gmra.mrb[0].mxu0 %v845
        %v897 = vpop.f32.mrb[0].mxu0
        %v898 = vadd.f32 0.0, %v897
        %v899 = vpop.f32.mrb[0].mxu0
        %v900 = vadd.f32 0.0, %v899
        %v901 = vpop.f32.mrb[0].mxu0
        %v902 = vadd.f32 0.0, %v901
        %v903 = vpop.f32.mrb[0].mxu0
        %v904 = vadd.f32 0.0, %v903
        %905 = vmatprep.mubr.bf16.mxu0 0
        %906 = vmatmul.mubr.bf16.gmra.mrb[0].mxu0 %v848
        %v907 = vpop.f32.mrb[0].mxu0
        %v908 = vadd.f32 0.0, %v907
        %v909 = vpop.f32.mrb[0].mxu0
        %v910 = vadd.f32 0.0, %v909
        %v911 = vpop.f32.mrb[0].mxu0
        %v912 = vadd.f32 0.0, %v911
        %v913 = vpop.f32.mrb[0].mxu0
        %v914 = vadd.f32 0.0, %v913
        %915 = vmatprep.mubr.bf16.mxu0 0
        %916 = vmatmul.mubr.bf16.gmra.mrb[0].mxu0 %v851
        %v917 = vpop.f32.mrb[0].mxu0
        %v918 = vadd.f32 0.0, %v917
        %v919 = vpop.f32.mrb[0].mxu0
        %v920 = vadd.f32 0.0, %v919
        %v921 = vpop.f32.mrb[0].mxu0
        %v922 = vadd.f32 0.0, %v921
        %v923 = vpop.f32.mrb[0].mxu0
        %v924 = vadd.f32 0.0, %v923
        %925 = vdwg.mxu0
        %926 = vst [vmem:[#allocation2] sm:$0xff] %v888
        %927 = vst [vmem:[#allocation2 + $0x8] sm:$0xff] %v890
        %928 = vst [vmem:[#allocation2 + $0x10] sm:$0xff] %v892
        %929 = vst [vmem:[#allocation2 + $0x18] sm:$0xff] %v894
        %930 = vst [vmem:[#allocation2 + $0x20] sm:$0xff] %v898
        %931 = vst [vmem:[#allocation2 + $0x28] sm:$0xff] %v900
        %932 = vst [vmem:[#allocation2 + $0x30] sm:$0xff] %v902
        %933 = vst [vmem:[#allocation2 + $0x38] sm:$0xff] %v904
        %934 = vst [vmem:[#allocation2 + $0x40] sm:$0xff] %v908
        %935 = vst [vmem:[#allocation2 + $0x48] sm:$0xff] %v910
        %936 = vst [vmem:[#allocation2 + $0x50] sm:$0xff] %v912
        %937 = vst [vmem:[#allocation2 + $0x58] sm:$0xff] %v914
        %938 = vst [vmem:[#allocation2 + $0x60] sm:$0xff] %v918
        %939 = vst [vmem:[#allocation2 + $0x68] sm:$0xff] %v920
        %940 = vst [vmem:[#allocation2 + $0x70] sm:$0xff] %v922
        %941 = vst [vmem:[#allocation2 + $0x78] sm:$0xff] %v924
        %v942 = vand.u32 2147483647, %v783
        %v943 = vsub.f32 1.0, %v942
        %v944 = vmax.f32 %v943, 0.0
        %v945 = vld [vmem:[#allocation2] sm:$0xf]
        %v946 = vld [vmem:[#allocation2 + $0x8] sm:$0xf]
        %v948 = vlaneseq
        %v949 = vshrl.u32 %v948, 7
        %v950 = vsub.s32 0, %v949
        %v951 = vrot.slane %v944, %v950
        %v952 = vlaneseq
        %v953 = vshrl.u32 %v952, 7
        %v954 = vsub.s32 1, %v953
        %v955 = vrot.slane %v944, %v954
        %v958 = vmul.f32 %v945, %v951
        %v959 = vmul.f32 %v946, %v955
        %v960 = vadd.f32 %v958, 0.0
        %v961 = vadd.f32 %v959, 0.0
        %v962 = vsub.f32 %v783, 1.0
        %v963 = vand.u32 2147483647, %v962
        %v964 = vsub.f32 1.0, %v963
        %v965 = vmax.f32 %v964, 0.0
        %v966 = vld [vmem:[#allocation2] sm:$0xf0]
        %v967 = vld [vmem:[#allocation2 + $0x8] sm:$0xf0]
        %v969 = vlaneseq
        %v970 = vshrl.u32 %v969, 7
        %v971 = vsub.s32 0, %v970
        %v972 = vrot.slane %v965, %v971
        %v973 = vlaneseq
        %v974 = vshrl.u32 %v973, 7
        %v975 = vsub.s32 1, %v974
        %v976 = vrot.slane %v965, %v975
        %v979 = vmul.f32 %v966, %v972
        %v980 = vmul.f32 %v967, %v976
        %v983 = vrot.slane %v979, 4
        %v984 = vrot.slane %v980, 4
        %v987 = vadd.f32 %v960, %v983
        %v988 = vadd.f32 %v961, %v984
        %v989 = vsub.f32 %v783, 2.0
        %v990 = vand.u32 2147483647, %v989
        %v991 = vsub.f32 1.0, %v990
        %v992 = vmax.f32 %v991, 0.0
        %v993 = vld [vmem:[#allocation2 + $0x10] sm:$0xf]
        %v994 = vld [vmem:[#allocation2 + $0x18] sm:$0xf]
        %v996 = vlaneseq
        %v997 = vshrl.u32 %v996, 7
        %v998 = vsub.s32 0, %v997
        %v999 = vrot.slane %v992, %v998
        %v1000 = vlaneseq
        %v1001 = vshrl.u32 %v1000, 7
        %v1002 = vsub.s32 1, %v1001
        %v1003 = vrot.slane %v992, %v1002
        %v1006 = vmul.f32 %v993, %v999
        %v1007 = vmul.f32 %v994, %v1003
        %v1008 = vadd.f32 %v987, %v1006
        %v1009 = vadd.f32 %v988, %v1007
        %v1010 = vsub.f32 %v783, 3.0
        %v1011 = vand.u32 2147483647, %v1010
        %v1012 = vsub.f32 1.0, %v1011
        %v1013 = vmax.f32 %v1012, 0.0
        %v1014 = vld [vmem:[#allocation2 + $0x10] sm:$0xf0]
        %v1015 = vld [vmem:[#allocation2 + $0x18] sm:$0xf0]
        %v1017 = vlaneseq
        %v1018 = vshrl.u32 %v1017, 7
        %v1019 = vsub.s32 0, %v1018
        %v1020 = vrot.slane %v1013, %v1019
        %v1021 = vlaneseq
        %v1022 = vshrl.u32 %v1021, 7
        %v1023 = vsub.s32 1, %v1022
        %v1024 = vrot.slane %v1013, %v1023
        %v1027 = vmul.f32 %v1014, %v1020
        %v1028 = vmul.f32 %v1015, %v1024
        %v1031 = vrot.slane %v1027, 4
        %v1032 = vrot.slane %v1028, 4
        %v1035 = vadd.f32 %v1008, %v1031
        %v1036 = vadd.f32 %v1009, %v1032
        %v1037 = vsub.f32 %v783, 4.0
        %v1038 = vand.u32 2147483647, %v1037
        %v1039 = vsub.f32 1.0, %v1038
        %v1040 = vmax.f32 %v1039, 0.0
        %v1041 = vld [vmem:[#allocation2 + $0x20] sm:$0xf]
        %v1042 = vld [vmem:[#allocation2 + $0x28] sm:$0xf]
        %v1044 = vlaneseq
        %v1045 = vshrl.u32 %v1044, 7
        %v1046 = vsub.s32 0, %v1045
        %v1047 = vrot.slane %v1040, %v1046
        %v1048 = vlaneseq
        %v1049 = vshrl.u32 %v1048, 7
        %v1050 = vsub.s32 1, %v1049
        %v1051 = vrot.slane %v1040, %v1050
        %v1054 = vmul.f32 %v1041, %v1047
        %v1055 = vmul.f32 %v1042, %v1051
        %v1056 = vadd.f32 %v1035, %v1054
        %v1057 = vadd.f32 %v1036, %v1055
        %v1058 = vsub.f32 %v783, 5.0
        %v1059 = vand.u32 2147483647, %v1058
        %v1060 = vsub.f32 1.0, %v1059
        %v1061 = vmax.f32 %v1060, 0.0
        %v1062 = vld [vmem:[#allocation2 + $0x20] sm:$0xf0]
        %v1063 = vld [vmem:[#allocation2 + $0x28] sm:$0xf0]
        %v1065 = vlaneseq
        %v1066 = vshrl.u32 %v1065, 7
        %v1067 = vsub.s32 0, %v1066
        %v1068 = vrot.slane %v1061, %v1067
        %v1069 = vlaneseq
        %v1070 = vshrl.u32 %v1069, 7
        %v1071 = vsub.s32 1, %v1070
        %v1072 = vrot.slane %v1061, %v1071
        %v1075 = vmul.f32 %v1062, %v1068
        %v1076 = vmul.f32 %v1063, %v1072
        %v1079 = vrot.slane %v1075, 4
        %v1080 = vrot.slane %v1076, 4
        %v1083 = vadd.f32 %v1056, %v1079
        %v1084 = vadd.f32 %v1057, %v1080
        %v1085 = vsub.f32 %v783, 6.0
        %v1086 = vand.u32 2147483647, %v1085
        %v1087 = vsub.f32 1.0, %v1086
        %v1088 = vmax.f32 %v1087, 0.0
        %v1089 = vld [vmem:[#allocation2 + $0x30] sm:$0xf]
        %v1090 = vld [vmem:[#allocation2 + $0x38] sm:$0xf]
        %v1092 = vlaneseq
        %v1093 = vshrl.u32 %v1092, 7
        %v1094 = vsub.s32 0, %v1093
        %v1095 = vrot.slane %v1088, %v1094
        %v1096 = vlaneseq
        %v1097 = vshrl.u32 %v1096, 7
        %v1098 = vsub.s32 1, %v1097
        %v1099 = vrot.slane %v1088, %v1098
        %v1102 = vmul.f32 %v1089, %v1095
        %v1103 = vmul.f32 %v1090, %v1099
        %v1104 = vadd.f32 %v1083, %v1102
        %v1105 = vadd.f32 %v1084, %v1103
        %v1106 = vsub.f32 %v783, 7.0
        %v1107 = vand.u32 2147483647, %v1106
        %v1108 = vsub.f32 1.0, %v1107
        %v1109 = vmax.f32 %v1108, 0.0
        %v1110 = vld [vmem:[#allocation2 + $0x30] sm:$0xf0]
        %v1111 = vld [vmem:[#allocation2 + $0x38] sm:$0xf0]
        %v1113 = vlaneseq
        %v1114 = vshrl.u32 %v1113, 7
        %v1115 = vsub.s32 0, %v1114
        %v1116 = vrot.slane %v1109, %v1115
        %v1117 = vlaneseq
        %v1118 = vshrl.u32 %v1117, 7
        %v1119 = vsub.s32 1, %v1118
        %v1120 = vrot.slane %v1109, %v1119
        %v1123 = vmul.f32 %v1110, %v1116
        %v1124 = vmul.f32 %v1111, %v1120
        %v1127 = vrot.slane %v1123, 4
        %v1128 = vrot.slane %v1124, 4
        %v1131 = vadd.f32 %v1104, %v1127
        %v1132 = vadd.f32 %v1105, %v1128
        %v1133 = vsub.f32 %v783, 8.0
        %v1134 = vand.u32 2147483647, %v1133
        %v1135 = vsub.f32 1.0, %v1134
        %v1136 = vmax.f32 %v1135, 0.0
        %v1137 = vld [vmem:[#allocation2 + $0x40] sm:$0xf]
        %v1138 = vld [vmem:[#allocation2 + $0x48] sm:$0xf]
        %v1140 = vlaneseq
        %v1141 = vshrl.u32 %v1140, 7
        %v1142 = vsub.s32 0, %v1141
        %v1143 = vrot.slane %v1136, %v1142
        %v1144 = vlaneseq
        %v1145 = vshrl.u32 %v1144, 7
        %v1146 = vsub.s32 1, %v1145
        %v1147 = vrot.slane %v1136, %v1146
        %v1150 = vmul.f32 %v1137, %v1143
        %v1151 = vmul.f32 %v1138, %v1147
        %v1152 = vadd.f32 %v1131, %v1150
        %v1153 = vadd.f32 %v1132, %v1151
        %v1154 = vsub.f32 %v783, 9.0
        %v1155 = vand.u32 2147483647, %v1154
        %v1156 = vsub.f32 1.0, %v1155
        %v1157 = vmax.f32 %v1156, 0.0
        %v1158 = vld [vmem:[#allocation2 + $0x40] sm:$0xf0]
        %v1159 = vld [vmem:[#allocation2 + $0x48] sm:$0xf0]
        %v1161 = vlaneseq
        %v1162 = vshrl.u32 %v1161, 7
        %v1163 = vsub.s32 0, %v1162
        %v1164 = vrot.slane %v1157, %v1163
        %v1165 = vlaneseq
        %v1166 = vshrl.u32 %v1165, 7
        %v1167 = vsub.s32 1, %v1166
        %v1168 = vrot.slane %v1157, %v1167
        %v1171 = vmul.f32 %v1158, %v1164
        %v1172 = vmul.f32 %v1159, %v1168
        %v1175 = vrot.slane %v1171, 4
        %v1176 = vrot.slane %v1172, 4
        %v1179 = vadd.f32 %v1152, %v1175
        %v1180 = vadd.f32 %v1153, %v1176
        %v1181 = vsub.f32 %v783, 10.0
        %v1182 = vand.u32 2147483647, %v1181
        %v1183 = vsub.f32 1.0, %v1182
        %v1184 = vmax.f32 %v1183, 0.0
        %v1185 = vld [vmem:[#allocation2 + $0x50] sm:$0xf]
        %v1186 = vld [vmem:[#allocation2 + $0x58] sm:$0xf]
        %v1188 = vlaneseq
        %v1189 = vshrl.u32 %v1188, 7
        %v1190 = vsub.s32 0, %v1189
        %v1191 = vrot.slane %v1184, %v1190
        %v1192 = vlaneseq
        %v1193 = vshrl.u32 %v1192, 7
        %v1194 = vsub.s32 1, %v1193
        %v1195 = vrot.slane %v1184, %v1194
        %v1198 = vmul.f32 %v1185, %v1191
        %v1199 = vmul.f32 %v1186, %v1195
        %v1200 = vadd.f32 %v1179, %v1198
        %v1201 = vadd.f32 %v1180, %v1199
        %v1202 = vsub.f32 %v783, 11.0
        %v1203 = vand.u32 2147483647, %v1202
        %v1204 = vsub.f32 1.0, %v1203
        %v1205 = vmax.f32 %v1204, 0.0
        %v1206 = vld [vmem:[#allocation2 + $0x50] sm:$0xf0]
        %v1207 = vld [vmem:[#allocation2 + $0x58] sm:$0xf0]
        %v1209 = vlaneseq
        %v1210 = vshrl.u32 %v1209, 7
        %v1211 = vsub.s32 0, %v1210
        %v1212 = vrot.slane %v1205, %v1211
        %v1213 = vlaneseq
        %v1214 = vshrl.u32 %v1213, 7
        %v1215 = vsub.s32 1, %v1214
        %v1216 = vrot.slane %v1205, %v1215
        %v1219 = vmul.f32 %v1206, %v1212
        %v1220 = vmul.f32 %v1207, %v1216
        %v1223 = vrot.slane %v1219, 4
        %v1224 = vrot.slane %v1220, 4
        %v1227 = vadd.f32 %v1200, %v1223
        %v1228 = vadd.f32 %v1201, %v1224
        %v1229 = vsub.f32 %v783, 12.0
        %v1230 = vand.u32 2147483647, %v1229
        %v1231 = vsub.f32 1.0, %v1230
        %v1232 = vmax.f32 %v1231, 0.0
        %v1233 = vld [vmem:[#allocation2 + $0x60] sm:$0xf]
        %v1234 = vld [vmem:[#allocation2 + $0x68] sm:$0xf]
        %v1236 = vlaneseq
        %v1237 = vshrl.u32 %v1236, 7
        %v1238 = vsub.s32 0, %v1237
        %v1239 = vrot.slane %v1232, %v1238
        %v1240 = vlaneseq
        %v1241 = vshrl.u32 %v1240, 7
        %v1242 = vsub.s32 1, %v1241
        %v1243 = vrot.slane %v1232, %v1242
        %v1246 = vmul.f32 %v1233, %v1239
        %v1247 = vmul.f32 %v1234, %v1243
        %v1248 = vadd.f32 %v1227, %v1246
        %v1249 = vadd.f32 %v1228, %v1247
        %v1250 = vsub.f32 %v783, 13.0
        %v1251 = vand.u32 2147483647, %v1250
        %v1252 = vsub.f32 1.0, %v1251
        %v1253 = vmax.f32 %v1252, 0.0
        %v1254 = vld [vmem:[#allocation2 + $0x60] sm:$0xf0]
        %v1255 = vld [vmem:[#allocation2 + $0x68] sm:$0xf0]
        %v1257 = vlaneseq
        %v1258 = vshrl.u32 %v1257, 7
        %v1259 = vsub.s32 0, %v1258
        %v1260 = vrot.slane %v1253, %v1259
        %v1261 = vlaneseq
        %v1262 = vshrl.u32 %v1261, 7
        %v1263 = vsub.s32 1, %v1262
        %v1264 = vrot.slane %v1253, %v1263
        %v1267 = vmul.f32 %v1254, %v1260
        %v1268 = vmul.f32 %v1255, %v1264
        %v1271 = vrot.slane %v1267, 4
        %v1272 = vrot.slane %v1268, 4
        %v1275 = vadd.f32 %v1248, %v1271
        %v1276 = vadd.f32 %v1249, %v1272
        %v1277 = vsub.f32 %v783, 14.0
        %v1278 = vand.u32 2147483647, %v1277
        %v1279 = vsub.f32 1.0, %v1278
        %v1280 = vmax.f32 %v1279, 0.0
        %v1281 = vld [vmem:[#allocation2 + $0x70] sm:$0xf]
        %v1282 = vld [vmem:[#allocation2 + $0x78] sm:$0xf]
        %v1284 = vlaneseq
        %v1285 = vshrl.u32 %v1284, 7
        %v1286 = vsub.s32 0, %v1285
        %v1287 = vrot.slane %v1280, %v1286
        %v1288 = vlaneseq
        %v1289 = vshrl.u32 %v1288, 7
        %v1290 = vsub.s32 1, %v1289
        %v1291 = vrot.slane %v1280, %v1290
        %v1294 = vmul.f32 %v1281, %v1287
        %v1295 = vmul.f32 %v1282, %v1291
        %v1296 = vadd.f32 %v1275, %v1294
        %v1297 = vadd.f32 %v1276, %v1295
        %v1298 = vsub.f32 %v783, 15.0
        %v1299 = vand.u32 2147483647, %v1298
        %v1300 = vsub.f32 1.0, %v1299
        %v1301 = vmax.f32 %v1300, 0.0
        %v1302 = vld [vmem:[#allocation2 + $0x70] sm:$0xf0]
        %v1303 = vld [vmem:[#allocation2 + $0x78] sm:$0xf0]
        %v1305 = vlaneseq
        %v1306 = vshrl.u32 %v1305, 7
        %v1307 = vsub.s32 0, %v1306
        %v1308 = vrot.slane %v1301, %v1307
        %v1309 = vlaneseq
        %v1310 = vshrl.u32 %v1309, 7
        %v1311 = vsub.s32 1, %v1310
        %v1312 = vrot.slane %v1301, %v1311
        %v1315 = vmul.f32 %v1302, %v1308
        %v1316 = vmul.f32 %v1303, %v1312
        %v1319 = vrot.slane %v1315, 4
        %v1320 = vrot.slane %v1316, 4
        %v1323 = vadd.f32 %v1296, %v1319
        %v1324 = vadd.f32 %v1297, %v1320
        %v1325 = vpack.c.bf16 %v1323, %v1323
        %v1326 = vpack.c.bf16 %v1324, %v1324
        %v1329 = vunpack.c.l.b16 %v1325
        %v1330 = vunpack.c.l.b16 %v1326
        %v1331 = vpack.c.b16 %v1330, %v1329
        %v1332 = vrot.slane %v1331, 6
        %1334 = vst [vmem:[#allocation3] sm:$0xcc] %v1332
        %s1335 = scalar_lea.vmem %s217, 2
        %v1336 = vld [vmem:[%s1335] ss:$8 sm:$0x3]
        %s1337 = scalar_lea.vmem %s217, 19
        %v1338 = vld [vmem:[%s1337] ss:$8 sm:$0x3]
        %v1340 = vlaneseq
        %v1341 = vshrl.u32 %v1340, 7
        %v1342 = vsub.s32 0, %v1341
        %v1343 = vrot.slane %v1336, %v1342
        %v1344 = vlaneseq
        %v1345 = vshrl.u32 %v1344, 7
        %v1346 = vsub.s32 1, %v1345
        %v1347 = vrot.slane %v1336, %v1346
        %v1350 = vsub.f32 %v1343, %v224
        %v1351 = vsub.f32 %v1347, %v224
        %v1352 = vsub.f32 %v1343, %v225
        %v1353 = vsub.f32 %v1347, %v225
        %v1354 = vand.u32 2147483647, %v1350
        %v1355 = vand.u32 2147483647, %v1351
        %v1356 = vand.u32 2147483647, %v1352
        %v1357 = vand.u32 2147483647, %v1353
        %v1358 = vsub.f32 1.0, %v1354
        %v1359 = vsub.f32 1.0, %v1355
        %v1360 = vsub.f32 1.0, %v1356
        %v1361 = vsub.f32 1.0, %v1357
        %v1362 = vmax.f32 %v1358, 0.0
        %v1363 = vmax.f32 %v1359, 0.0
        %v1364 = vmax.f32 %v1360, 0.0
        %v1365 = vmax.f32 %v1361, 0.0
        %v1366 = vpack.c.bf16 %v1364, %v1362
        %v1367 = vpack.c.bf16 %v1365, %v1363
        %v1368 = vld [vmem:[%s208] sm:$0xf]
        %v1369 = vld [vmem:[%s208 + $0x4] sm:$0xf]
        %v1370 = vld [vmem:[%s208 + $0x8] sm:$0xf]
        %v1371 = vld [vmem:[%s208 + $0xc] sm:$0xf]
        %v1372 = vld [vmem:[%s208 + $0x10] sm:$0xf]
        %v1373 = vld [vmem:[%s208 + $0x14] sm:$0xf]
        %v1374 = vld [vmem:[%s208 + $0x18] sm:$0xf]
        %v1375 = vld [vmem:[%s208 + $0x1c] sm:$0xf]
        %v1384 = vunpack.c.l.b16 %v1368
        %v1385 = vunpack.c.l.b16 %v1369
        %v1386 = vunpack.c.l.b16 %v1370
        %v1387 = vunpack.c.l.b16 %v1371
        %v1388 = vunpack.c.l.b16 %v1372
        %v1389 = vunpack.c.l.b16 %v1373
        %v1390 = vunpack.c.l.b16 %v1374
        %v1391 = vunpack.c.l.b16 %v1375
        %v1392 = vpack.c.b16 %v1385, %v1384
        %v1393 = vpack.c.b16 %v1387, %v1386
        %v1394 = vpack.c.b16 %v1389, %v1388
        %v1395 = vpack.c.b16 %v1391, %v1390
        %v1397 = vsel %vm286, %v1392, 0
        %v1400 = vsel %vm286, %v1393, 0
        %v1403 = vsel %vm286, %v1394, 0
        %v1406 = vsel %vm286, %v1395, 0
        %1408 = vmatprep.subr.bf16.mxu0 %v1367
        %1409 = vmatpush1.bf16.msra.mxu0 %v1366
        %1410 = vmatprep.subr.bf16.mxu0 0
        %1411 = vmatpush1.bf16.msra.mxu0 0
        %1412 = vmatprep.subr.bf16.mxu0 0
        %1413 = vmatpush1.bf16.msra.mxu0 0
        %1414 = vmatprep.subr.bf16.mxu0 0
        %1415 = vmatpush1.bf16.msra.mxu0 0
        %1416 = vmatprep.subr.bf16.mxu0 0
        %1417 = vmatpush1.bf16.msra.mxu0 0
        %1418 = vmatprep.subr.bf16.mxu0 0
        %1419 = vmatpush1.bf16.msra.mxu0 0
        %1420 = vmatprep.subr.bf16.mxu0 0
        %1421 = vmatpush1.bf16.msra.mxu0 0
        %1422 = vmatprep.subr.bf16.mxu0 0
        %1423 = vmatpush1.bf16.msra.mxu0 0
        %1424 = vmatprep.subr.bf16.mxu0 0
        %1425 = vmatpush1.bf16.msra.mxu0 0
        %1426 = vmatprep.subr.bf16.mxu0 0
        %1427 = vmatpush1.bf16.msra.mxu0 0
        %1428 = vmatprep.subr.bf16.mxu0 0
        %1429 = vmatpush1.bf16.msra.mxu0 0
        %1430 = vmatprep.subr.bf16.mxu0 0
        %1431 = vmatpush1.bf16.msra.mxu0 0
        %1432 = vmatprep.subr.bf16.mxu0 0
        %1433 = vmatpush1.bf16.msra.mxu0 0
        %1434 = vmatprep.subr.bf16.mxu0 0
        %1435 = vmatpush1.bf16.msra.mxu0 0
        %1436 = vmatprep.subr.bf16.mxu0 0
        %1437 = vmatpush1.bf16.msra.mxu0 0
        %1438 = vmatprep.subr.bf16.mxu0 0
        %1439 = vmatpush1.bf16.msra.mxu0 0
        %1440 = vmatprep.mubr.bf16.mxu0 0
        %1441 = vmatmul.mubr.bf16.gmra.mrb[0].mxu0 %v1397
        %v1442 = vpop.f32.mrb[0].mxu0
        %v1443 = vadd.f32 0.0, %v1442
        %v1444 = vpop.f32.mrb[0].mxu0
        %v1445 = vadd.f32 0.0, %v1444
        %v1446 = vpop.f32.mrb[0].mxu0
        %v1447 = vadd.f32 0.0, %v1446
        %v1448 = vpop.f32.mrb[0].mxu0
        %v1449 = vadd.f32 0.0, %v1448
        %1450 = vmatprep.mubr.bf16.mxu0 0
        %1451 = vmatmul.mubr.bf16.gmra.mrb[0].mxu0 %v1400
        %v1452 = vpop.f32.mrb[0].mxu0
        %v1453 = vadd.f32 0.0, %v1452
        %v1454 = vpop.f32.mrb[0].mxu0
        %v1455 = vadd.f32 0.0, %v1454
        %v1456 = vpop.f32.mrb[0].mxu0
        %v1457 = vadd.f32 0.0, %v1456
        %v1458 = vpop.f32.mrb[0].mxu0
        %v1459 = vadd.f32 0.0, %v1458
        %1460 = vmatprep.mubr.bf16.mxu0 0
        %1461 = vmatmul.mubr.bf16.gmra.mrb[0].mxu0 %v1403
        %v1462 = vpop.f32.mrb[0].mxu0
        %v1463 = vadd.f32 0.0, %v1462
        %v1464 = vpop.f32.mrb[0].mxu0
        %v1465 = vadd.f32 0.0, %v1464
        %v1466 = vpop.f32.mrb[0].mxu0
        %v1467 = vadd.f32 0.0, %v1466
        %v1468 = vpop.f32.mrb[0].mxu0
        %v1469 = vadd.f32 0.0, %v1468
        %1470 = vmatprep.mubr.bf16.mxu0 0
        %1471 = vmatmul.mubr.bf16.gmra.mrb[0].mxu0 %v1406
        %v1472 = vpop.f32.mrb[0].mxu0
        %v1473 = vadd.f32 0.0, %v1472
        %v1474 = vpop.f32.mrb[0].mxu0
        %v1475 = vadd.f32 0.0, %v1474
        %v1476 = vpop.f32.mrb[0].mxu0
        %v1477 = vadd.f32 0.0, %v1476
        %v1478 = vpop.f32.mrb[0].mxu0
        %v1479 = vadd.f32 0.0, %v1478
        %1480 = vdwg.mxu0
        %1481 = vst [vmem:[#allocation2] sm:$0xff] %v1443
        %1482 = vst [vmem:[#allocation2 + $0x8] sm:$0xff] %v1445
        %1483 = vst [vmem:[#allocation2 + $0x10] sm:$0xff] %v1447
        %1484 = vst [vmem:[#allocation2 + $0x18] sm:$0xff] %v1449
        %1485 = vst [vmem:[#allocation2 + $0x20] sm:$0xff] %v1453
        %1486 = vst [vmem:[#allocation2 + $0x28] sm:$0xff] %v1455
        %1487 = vst [vmem:[#allocation2 + $0x30] sm:$0xff] %v1457
        %1488 = vst [vmem:[#allocation2 + $0x38] sm:$0xff] %v1459
        %1489 = vst [vmem:[#allocation2 + $0x40] sm:$0xff] %v1463
        %1490 = vst [vmem:[#allocation2 + $0x48] sm:$0xff] %v1465
        %1491 = vst [vmem:[#allocation2 + $0x50] sm:$0xff] %v1467
        %1492 = vst [vmem:[#allocation2 + $0x58] sm:$0xff] %v1469
        %1493 = vst [vmem:[#allocation2 + $0x60] sm:$0xff] %v1473
        %1494 = vst [vmem:[#allocation2 + $0x68] sm:$0xff] %v1475
        %1495 = vst [vmem:[#allocation2 + $0x70] sm:$0xff] %v1477
        %1496 = vst [vmem:[#allocation2 + $0x78] sm:$0xff] %v1479
        %v1497 = vand.u32 2147483647, %v1338
        %v1498 = vsub.f32 1.0, %v1497
        %v1499 = vmax.f32 %v1498, 0.0
        %v1500 = vld [vmem:[#allocation2] sm:$0xf]
        %v1501 = vld [vmem:[#allocation2 + $0x8] sm:$0xf]
        %v1503 = vlaneseq
        %v1504 = vshrl.u32 %v1503, 7
        %v1505 = vsub.s32 0, %v1504
        %v1506 = vrot.slane %v1499, %v1505
        %v1507 = vlaneseq
        %v1508 = vshrl.u32 %v1507, 7
        %v1509 = vsub.s32 1, %v1508
        %v1510 = vrot.slane %v1499, %v1509
        %v1513 = vmul.f32 %v1500, %v1506
        %v1514 = vmul.f32 %v1501, %v1510
        %v1515 = vadd.f32 %v1513, 0.0
        %v1516 = vadd.f32 %v1514, 0.0
        %v1517 = vsub.f32 %v1338, 1.0
        %v1518 = vand.u32 2147483647, %v1517
        %v1519 = vsub.f32 1.0, %v1518
        %v1520 = vmax.f32 %v1519, 0.0
        %v1521 = vld [vmem:[#allocation2] sm:$0xf0]
        %v1522 = vld [vmem:[#allocation2 + $0x8] sm:$0xf0]
        %v1524 = vlaneseq
        %v1525 = vshrl.u32 %v1524, 7
        %v1526 = vsub.s32 0, %v1525
        %v1527 = vrot.slane %v1520, %v1526
        %v1528 = vlaneseq
        %v1529 = vshrl.u32 %v1528, 7
        %v1530 = vsub.s32 1, %v1529
        %v1531 = vrot.slane %v1520, %v1530
        %v1534 = vmul.f32 %v1521, %v1527
        %v1535 = vmul.f32 %v1522, %v1531
        %v1538 = vrot.slane %v1534, 4
        %v1539 = vrot.slane %v1535, 4
        %v1542 = vadd.f32 %v1515, %v1538
        %v1543 = vadd.f32 %v1516, %v1539
        %v1544 = vsub.f32 %v1338, 2.0
        %v1545 = vand.u32 2147483647, %v1544
        %v1546 = vsub.f32 1.0, %v1545
        %v1547 = vmax.f32 %v1546, 0.0
        %v1548 = vld [vmem:[#allocation2 + $0x10] sm:$0xf]
        %v1549 = vld [vmem:[#allocation2 + $0x18] sm:$0xf]
        %v1551 = vlaneseq
        %v1552 = vshrl.u32 %v1551, 7
        %v1553 = vsub.s32 0, %v1552
        %v1554 = vrot.slane %v1547, %v1553
        %v1555 = vlaneseq
        %v1556 = vshrl.u32 %v1555, 7
        %v1557 = vsub.s32 1, %v1556
        %v1558 = vrot.slane %v1547, %v1557
        %v1561 = vmul.f32 %v1548, %v1554
        %v1562 = vmul.f32 %v1549, %v1558
        %v1563 = vadd.f32 %v1542, %v1561
        %v1564 = vadd.f32 %v1543, %v1562
        %v1565 = vsub.f32 %v1338, 3.0
        %v1566 = vand.u32 2147483647, %v1565
        %v1567 = vsub.f32 1.0, %v1566
        %v1568 = vmax.f32 %v1567, 0.0
        %v1569 = vld [vmem:[#allocation2 + $0x10] sm:$0xf0]
        %v1570 = vld [vmem:[#allocation2 + $0x18] sm:$0xf0]
        %v1572 = vlaneseq
        %v1573 = vshrl.u32 %v1572, 7
        %v1574 = vsub.s32 0, %v1573
        %v1575 = vrot.slane %v1568, %v1574
        %v1576 = vlaneseq
        %v1577 = vshrl.u32 %v1576, 7
        %v1578 = vsub.s32 1, %v1577
        %v1579 = vrot.slane %v1568, %v1578
        %v1582 = vmul.f32 %v1569, %v1575
        %v1583 = vmul.f32 %v1570, %v1579
        %v1586 = vrot.slane %v1582, 4
        %v1587 = vrot.slane %v1583, 4
        %v1590 = vadd.f32 %v1563, %v1586
        %v1591 = vadd.f32 %v1564, %v1587
        %v1592 = vsub.f32 %v1338, 4.0
        %v1593 = vand.u32 2147483647, %v1592
        %v1594 = vsub.f32 1.0, %v1593
        %v1595 = vmax.f32 %v1594, 0.0
        %v1596 = vld [vmem:[#allocation2 + $0x20] sm:$0xf]
        %v1597 = vld [vmem:[#allocation2 + $0x28] sm:$0xf]
        %v1599 = vlaneseq
        %v1600 = vshrl.u32 %v1599, 7
        %v1601 = vsub.s32 0, %v1600
        %v1602 = vrot.slane %v1595, %v1601
        %v1603 = vlaneseq
        %v1604 = vshrl.u32 %v1603, 7
        %v1605 = vsub.s32 1, %v1604
        %v1606 = vrot.slane %v1595, %v1605
        %v1609 = vmul.f32 %v1596, %v1602
        %v1610 = vmul.f32 %v1597, %v1606
        %v1611 = vadd.f32 %v1590, %v1609
        %v1612 = vadd.f32 %v1591, %v1610
        %v1613 = vsub.f32 %v1338, 5.0
        %v1614 = vand.u32 2147483647, %v1613
        %v1615 = vsub.f32 1.0, %v1614
        %v1616 = vmax.f32 %v1615, 0.0
        %v1617 = vld [vmem:[#allocation2 + $0x20] sm:$0xf0]
        %v1618 = vld [vmem:[#allocation2 + $0x28] sm:$0xf0]
        %v1620 = vlaneseq
        %v1621 = vshrl.u32 %v1620, 7
        %v1622 = vsub.s32 0, %v1621
        %v1623 = vrot.slane %v1616, %v1622
        %v1624 = vlaneseq
        %v1625 = vshrl.u32 %v1624, 7
        %v1626 = vsub.s32 1, %v1625
        %v1627 = vrot.slane %v1616, %v1626
        %v1630 = vmul.f32 %v1617, %v1623
        %v1631 = vmul.f32 %v1618, %v1627
        %v1634 = vrot.slane %v1630, 4
        %v1635 = vrot.slane %v1631, 4
        %v1638 = vadd.f32 %v1611, %v1634
        %v1639 = vadd.f32 %v1612, %v1635
        %v1640 = vsub.f32 %v1338, 6.0
        %v1641 = vand.u32 2147483647, %v1640
        %v1642 = vsub.f32 1.0, %v1641
        %v1643 = vmax.f32 %v1642, 0.0
        %v1644 = vld [vmem:[#allocation2 + $0x30] sm:$0xf]
        %v1645 = vld [vmem:[#allocation2 + $0x38] sm:$0xf]
        %v1647 = vlaneseq
        %v1648 = vshrl.u32 %v1647, 7
        %v1649 = vsub.s32 0, %v1648
        %v1650 = vrot.slane %v1643, %v1649
        %v1651 = vlaneseq
        %v1652 = vshrl.u32 %v1651, 7
        %v1653 = vsub.s32 1, %v1652
        %v1654 = vrot.slane %v1643, %v1653
        %v1657 = vmul.f32 %v1644, %v1650
        %v1658 = vmul.f32 %v1645, %v1654
        %v1659 = vadd.f32 %v1638, %v1657
        %v1660 = vadd.f32 %v1639, %v1658
        %v1661 = vsub.f32 %v1338, 7.0
        %v1662 = vand.u32 2147483647, %v1661
        %v1663 = vsub.f32 1.0, %v1662
        %v1664 = vmax.f32 %v1663, 0.0
        %v1665 = vld [vmem:[#allocation2 + $0x30] sm:$0xf0]
        %v1666 = vld [vmem:[#allocation2 + $0x38] sm:$0xf0]
        %v1668 = vlaneseq
        %v1669 = vshrl.u32 %v1668, 7
        %v1670 = vsub.s32 0, %v1669
        %v1671 = vrot.slane %v1664, %v1670
        %v1672 = vlaneseq
        %v1673 = vshrl.u32 %v1672, 7
        %v1674 = vsub.s32 1, %v1673
        %v1675 = vrot.slane %v1664, %v1674
        %v1678 = vmul.f32 %v1665, %v1671
        %v1679 = vmul.f32 %v1666, %v1675
        %v1682 = vrot.slane %v1678, 4
        %v1683 = vrot.slane %v1679, 4
        %v1686 = vadd.f32 %v1659, %v1682
        %v1687 = vadd.f32 %v1660, %v1683
        %v1688 = vsub.f32 %v1338, 8.0
        %v1689 = vand.u32 2147483647, %v1688
        %v1690 = vsub.f32 1.0, %v1689
        %v1691 = vmax.f32 %v1690, 0.0
        %v1692 = vld [vmem:[#allocation2 + $0x40] sm:$0xf]
        %v1693 = vld [vmem:[#allocation2 + $0x48] sm:$0xf]
        %v1695 = vlaneseq
        %v1696 = vshrl.u32 %v1695, 7
        %v1697 = vsub.s32 0, %v1696
        %v1698 = vrot.slane %v1691, %v1697
        %v1699 = vlaneseq
        %v1700 = vshrl.u32 %v1699, 7
        %v1701 = vsub.s32 1, %v1700
        %v1702 = vrot.slane %v1691, %v1701
        %v1705 = vmul.f32 %v1692, %v1698
        %v1706 = vmul.f32 %v1693, %v1702
        %v1707 = vadd.f32 %v1686, %v1705
        %v1708 = vadd.f32 %v1687, %v1706
        %v1709 = vsub.f32 %v1338, 9.0
        %v1710 = vand.u32 2147483647, %v1709
        %v1711 = vsub.f32 1.0, %v1710
        %v1712 = vmax.f32 %v1711, 0.0
        %v1713 = vld [vmem:[#allocation2 + $0x40] sm:$0xf0]
        %v1714 = vld [vmem:[#allocation2 + $0x48] sm:$0xf0]
        %v1716 = vlaneseq
        %v1717 = vshrl.u32 %v1716, 7
        %v1718 = vsub.s32 0, %v1717
        %v1719 = vrot.slane %v1712, %v1718
        %v1720 = vlaneseq
        %v1721 = vshrl.u32 %v1720, 7
        %v1722 = vsub.s32 1, %v1721
        %v1723 = vrot.slane %v1712, %v1722
        %v1726 = vmul.f32 %v1713, %v1719
        %v1727 = vmul.f32 %v1714, %v1723
        %v1730 = vrot.slane %v1726, 4
        %v1731 = vrot.slane %v1727, 4
        %v1734 = vadd.f32 %v1707, %v1730
        %v1735 = vadd.f32 %v1708, %v1731
        %v1736 = vsub.f32 %v1338, 10.0
        %v1737 = vand.u32 2147483647, %v1736
        %v1738 = vsub.f32 1.0, %v1737
        %v1739 = vmax.f32 %v1738, 0.0
        %v1740 = vld [vmem:[#allocation2 + $0x50] sm:$0xf]
        %v1741 = vld [vmem:[#allocation2 + $0x58] sm:$0xf]
        %v1743 = vlaneseq
        %v1744 = vshrl.u32 %v1743, 7
        %v1745 = vsub.s32 0, %v1744
        %v1746 = vrot.slane %v1739, %v1745
        %v1747 = vlaneseq
        %v1748 = vshrl.u32 %v1747, 7
        %v1749 = vsub.s32 1, %v1748
        %v1750 = vrot.slane %v1739, %v1749
        %v1753 = vmul.f32 %v1740, %v1746
        %v1754 = vmul.f32 %v1741, %v1750
        %v1755 = vadd.f32 %v1734, %v1753
        %v1756 = vadd.f32 %v1735, %v1754
        %v1757 = vsub.f32 %v1338, 11.0
        %v1758 = vand.u32 2147483647, %v1757
        %v1759 = vsub.f32 1.0, %v1758
        %v1760 = vmax.f32 %v1759, 0.0
        %v1761 = vld [vmem:[#allocation2 + $0x50] sm:$0xf0]
        %v1762 = vld [vmem:[#allocation2 + $0x58] sm:$0xf0]
        %v1764 = vlaneseq
        %v1765 = vshrl.u32 %v1764, 7
        %v1766 = vsub.s32 0, %v1765
        %v1767 = vrot.slane %v1760, %v1766
        %v1768 = vlaneseq
        %v1769 = vshrl.u32 %v1768, 7
        %v1770 = vsub.s32 1, %v1769
        %v1771 = vrot.slane %v1760, %v1770
        %v1774 = vmul.f32 %v1761, %v1767
        %v1775 = vmul.f32 %v1762, %v1771
        %v1778 = vrot.slane %v1774, 4
        %v1779 = vrot.slane %v1775, 4
        %v1782 = vadd.f32 %v1755, %v1778
        %v1783 = vadd.f32 %v1756, %v1779
        %v1784 = vsub.f32 %v1338, 12.0
        %v1785 = vand.u32 2147483647, %v1784
        %v1786 = vsub.f32 1.0, %v1785
        %v1787 = vmax.f32 %v1786, 0.0
        %v1788 = vld [vmem:[#allocation2 + $0x60] sm:$0xf]
        %v1789 = vld [vmem:[#allocation2 + $0x68] sm:$0xf]
        %v1791 = vlaneseq
        %v1792 = vshrl.u32 %v1791, 7
        %v1793 = vsub.s32 0, %v1792
        %v1794 = vrot.slane %v1787, %v1793
        %v1795 = vlaneseq
        %v1796 = vshrl.u32 %v1795, 7
        %v1797 = vsub.s32 1, %v1796
        %v1798 = vrot.slane %v1787, %v1797
        %v1801 = vmul.f32 %v1788, %v1794
        %v1802 = vmul.f32 %v1789, %v1798
        %v1803 = vadd.f32 %v1782, %v1801
        %v1804 = vadd.f32 %v1783, %v1802
        %v1805 = vsub.f32 %v1338, 13.0
        %v1806 = vand.u32 2147483647, %v1805
        %v1807 = vsub.f32 1.0, %v1806
        %v1808 = vmax.f32 %v1807, 0.0
        %v1809 = vld [vmem:[#allocation2 + $0x60] sm:$0xf0]
        %v1810 = vld [vmem:[#allocation2 + $0x68] sm:$0xf0]
        %v1812 = vlaneseq
        %v1813 = vshrl.u32 %v1812, 7
        %v1814 = vsub.s32 0, %v1813
        %v1815 = vrot.slane %v1808, %v1814
        %v1816 = vlaneseq
        %v1817 = vshrl.u32 %v1816, 7
        %v1818 = vsub.s32 1, %v1817
        %v1819 = vrot.slane %v1808, %v1818
        %v1822 = vmul.f32 %v1809, %v1815
        %v1823 = vmul.f32 %v1810, %v1819
        %v1826 = vrot.slane %v1822, 4
        %v1827 = vrot.slane %v1823, 4
        %v1830 = vadd.f32 %v1803, %v1826
        %v1831 = vadd.f32 %v1804, %v1827
        %v1832 = vsub.f32 %v1338, 14.0
        %v1833 = vand.u32 2147483647, %v1832
        %v1834 = vsub.f32 1.0, %v1833
        %v1835 = vmax.f32 %v1834, 0.0
        %v1836 = vld [vmem:[#allocation2 + $0x70] sm:$0xf]
        %v1837 = vld [vmem:[#allocation2 + $0x78] sm:$0xf]
        %v1839 = vlaneseq
        %v1840 = vshrl.u32 %v1839, 7
        %v1841 = vsub.s32 0, %v1840
        %v1842 = vrot.slane %v1835, %v1841
        %v1843 = vlaneseq
        %v1844 = vshrl.u32 %v1843, 7
        %v1845 = vsub.s32 1, %v1844
        %v1846 = vrot.slane %v1835, %v1845
        %v1849 = vmul.f32 %v1836, %v1842
        %v1850 = vmul.f32 %v1837, %v1846
        %v1851 = vadd.f32 %v1830, %v1849
        %v1852 = vadd.f32 %v1831, %v1850
        %v1853 = vsub.f32 %v1338, 15.0
        %v1854 = vand.u32 2147483647, %v1853
        %v1855 = vsub.f32 1.0, %v1854
        %v1856 = vmax.f32 %v1855, 0.0
        %v1857 = vld [vmem:[#allocation2 + $0x70] sm:$0xf0]
        %v1858 = vld [vmem:[#allocation2 + $0x78] sm:$0xf0]
        %v1860 = vlaneseq
        %v1861 = vshrl.u32 %v1860, 7
        %v1862 = vsub.s32 0, %v1861
        %v1863 = vrot.slane %v1856, %v1862
        %v1864 = vlaneseq
        %v1865 = vshrl.u32 %v1864, 7
        %v1866 = vsub.s32 1, %v1865
        %v1867 = vrot.slane %v1856, %v1866
        %v1870 = vmul.f32 %v1857, %v1863
        %v1871 = vmul.f32 %v1858, %v1867
        %v1874 = vrot.slane %v1870, 4
        %v1875 = vrot.slane %v1871, 4
        %v1878 = vadd.f32 %v1851, %v1874
        %v1879 = vadd.f32 %v1852, %v1875
        %v1880 = vpack.c.bf16 %v1878, %v1878
        %v1881 = vpack.c.bf16 %v1879, %v1879
        %v1884 = vunpack.c.l.b16 %v1880
        %v1885 = vunpack.c.l.b16 %v1881
        %v1886 = vpack.c.b16 %v1885, %v1884
        %1888 = vst [vmem:[#allocation3 + $0x8] sm:$0x33] %v1886
        %s1889 = scalar_lea.vmem %s217, 3
        %v1890 = vld [vmem:[%s1889] ss:$8 sm:$0x3]
        %s1891 = scalar_lea.vmem %s217, 20
        %v1892 = vld [vmem:[%s1891] ss:$8 sm:$0x3]
        %v1894 = vlaneseq
        %v1895 = vshrl.u32 %v1894, 7
        %v1896 = vsub.s32 0, %v1895
        %v1897 = vrot.slane %v1890, %v1896
        %v1898 = vlaneseq
        %v1899 = vshrl.u32 %v1898, 7
        %v1900 = vsub.s32 1, %v1899
        %v1901 = vrot.slane %v1890, %v1900
        %v1904 = vsub.f32 %v1897, %v224
        %v1905 = vsub.f32 %v1901, %v224
        %v1906 = vsub.f32 %v1897, %v225
        %v1907 = vsub.f32 %v1901, %v225
        %v1908 = vand.u32 2147483647, %v1904
        %v1909 = vand.u32 2147483647, %v1905
        %v1910 = vand.u32 2147483647, %v1906
        %v1911 = vand.u32 2147483647, %v1907
        %v1912 = vsub.f32 1.0, %v1908
        %v1913 = vsub.f32 1.0, %v1909
        %v1914 = vsub.f32 1.0, %v1910
        %v1915 = vsub.f32 1.0, %v1911
        %v1916 = vmax.f32 %v1912, 0.0
        %v1917 = vmax.f32 %v1913, 0.0
        %v1918 = vmax.f32 %v1914, 0.0
        %v1919 = vmax.f32 %v1915, 0.0
        %v1920 = vpack.c.bf16 %v1918, %v1916
        %v1921 = vpack.c.bf16 %v1919, %v1917
        %v1922 = vld [vmem:[%s208] sm:$0xf]
        %v1923 = vld [vmem:[%s208 + $0x4] sm:$0xf]
        %v1924 = vld [vmem:[%s208 + $0x8] sm:$0xf]
        %v1925 = vld [vmem:[%s208 + $0xc] sm:$0xf]
        %v1926 = vld [vmem:[%s208 + $0x10] sm:$0xf]
        %v1927 = vld [vmem:[%s208 + $0x14] sm:$0xf]
        %v1928 = vld [vmem:[%s208 + $0x18] sm:$0xf]
        %v1929 = vld [vmem:[%s208 + $0x1c] sm:$0xf]
        %v1938 = vunpack.c.l.b16 %v1922
        %v1939 = vunpack.c.l.b16 %v1923
        %v1940 = vunpack.c.l.b16 %v1924
        %v1941 = vunpack.c.l.b16 %v1925
        %v1942 = vunpack.c.l.b16 %v1926
        %v1943 = vunpack.c.l.b16 %v1927
        %v1944 = vunpack.c.l.b16 %v1928
        %v1945 = vunpack.c.l.b16 %v1929
        %v1946 = vpack.c.b16 %v1939, %v1938
        %v1947 = vpack.c.b16 %v1941, %v1940
        %v1948 = vpack.c.b16 %v1943, %v1942
        %v1949 = vpack.c.b16 %v1945, %v1944
        %v1951 = vsel %vm286, %v1946, 0
        %v1954 = vsel %vm286, %v1947, 0
        %v1957 = vsel %vm286, %v1948, 0
        %v1960 = vsel %vm286, %v1949, 0
        %1962 = vmatprep.subr.bf16.mxu0 %v1921
        %1963 = vmatpush1.bf16.msra.mxu0 %v1920
        %1964 = vmatprep.subr.bf16.mxu0 0
        %1965 = vmatpush1.bf16.msra.mxu0 0
        %1966 = vmatprep.subr.bf16.mxu0 0
        %1967 = vmatpush1.bf16.msra.mxu0 0
        %1968 = vmatprep.subr.bf16.mxu0 0
        %1969 = vmatpush1.bf16.msra.mxu0 0
        %1970 = vmatprep.subr.bf16.mxu0 0
        %1971 = vmatpush1.bf16.msra.mxu0 0
        %1972 = vmatprep.subr.bf16.mxu0 0
        %1973 = vmatpush1.bf16.msra.mxu0 0
        %1974 = vmatprep.subr.bf16.mxu0 0
        %1975 = vmatpush1.bf16.msra.mxu0 0
        %1976 = vmatprep.subr.bf16.mxu0 0
        %1977 = vmatpush1.bf16.msra.mxu0 0
        %1978 = vmatprep.subr.bf16.mxu0 0
        %1979 = vmatpush1.bf16.msra.mxu0 0
        %1980 = vmatprep.subr.bf16.mxu0 0
        %1981 = vmatpush1.bf16.msra.mxu0 0
        %1982 = vmatprep.subr.bf16.mxu0 0
        %1983 = vmatpush1.bf16.msra.mxu0 0
        %1984 = vmatprep.subr.bf16.mxu0 0
        %1985 = vmatpush1.bf16.msra.mxu0 0
        %1986 = vmatprep.subr.bf16.mxu0 0
        %1987 = vmatpush1.bf16.msra.mxu0 0
        %1988 = vmatprep.subr.bf16.mxu0 0
        %1989 = vmatpush1.bf16.msra.mxu0 0
        %1990 = vmatprep.subr.bf16.mxu0 0
        %1991 = vmatpush1.bf16.msra.mxu0 0
        %1992 = vmatprep.subr.bf16.mxu0 0
        %1993 = vmatpush1.bf16.msra.mxu0 0
        %1994 = vmatprep.mubr.bf16.mxu0 0
        %1995 = vmatmul.mubr.bf16.gmra.mrb[0].mxu0 %v1951
        %v1996 = vpop.f32.mrb[0].mxu0
        %v1997 = vadd.f32 0.0, %v1996
        %v1998 = vpop.f32.mrb[0].mxu0
        %v1999 = vadd.f32 0.0, %v1998
        %v2000 = vpop.f32.mrb[0].mxu0
        %v2001 = vadd.f32 0.0, %v2000
        %v2002 = vpop.f32.mrb[0].mxu0
        %v2003 = vadd.f32 0.0, %v2002
        %2004 = vmatprep.mubr.bf16.mxu0 0
        %2005 = vmatmul.mubr.bf16.gmra.mrb[0].mxu0 %v1954
        %v2006 = vpop.f32.mrb[0].mxu0
        %v2007 = vadd.f32 0.0, %v2006
        %v2008 = vpop.f32.mrb[0].mxu0
        %v2009 = vadd.f32 0.0, %v2008
        %v2010 = vpop.f32.mrb[0].mxu0
        %v2011 = vadd.f32 0.0, %v2010
        %v2012 = vpop.f32.mrb[0].mxu0
        %v2013 = vadd.f32 0.0, %v2012
        %2014 = vmatprep.mubr.bf16.mxu0 0
        %2015 = vmatmul.mubr.bf16.gmra.mrb[0].mxu0 %v1957
        %v2016 = vpop.f32.mrb[0].mxu0
        %v2017 = vadd.f32 0.0, %v2016
        %v2018 = vpop.f32.mrb[0].mxu0
        %v2019 = vadd.f32 0.0, %v2018
        %v2020 = vpop.f32.mrb[0].mxu0
        %v2021 = vadd.f32 0.0, %v2020
        %v2022 = vpop.f32.mrb[0].mxu0
        %v2023 = vadd.f32 0.0, %v2022
        %2024 = vmatprep.mubr.bf16.mxu0 0
        %2025 = vmatmul.mubr.bf16.gmra.mrb[0].mxu0 %v1960
        %v2026 = vpop.f32.mrb[0].mxu0
        %v2027 = vadd.f32 0.0, %v2026
        %v2028 = vpop.f32.mrb[0].mxu0
        %v2029 = vadd.f32 0.0, %v2028
        %v2030 = vpop.f32.mrb[0].mxu0
        %v2031 = vadd.f32 0.0, %v2030
        %v2032 = vpop.f32.mrb[0].mxu0
        %v2033 = vadd.f32 0.0, %v2032
        %2034 = vdwg.mxu0
        %2035 = vst [vmem:[#allocation2] sm:$0xff] %v1997
        %2036 = vst [vmem:[#allocation2 + $0x8] sm:$0xff] %v1999
        %2037 = vst [vmem:[#allocation2 + $0x10] sm:$0xff] %v2001
        %2038 = vst [vmem:[#allocation2 + $0x18] sm:$0xff] %v2003
        %2039 = vst [vmem:[#allocation2 + $0x20] sm:$0xff] %v2007
        %2040 = vst [vmem:[#allocation2 + $0x28] sm:$0xff] %v2009
        %2041 = vst [vmem:[#allocation2 + $0x30] sm:$0xff] %v2011
        %2042 = vst [vmem:[#allocation2 + $0x38] sm:$0xff] %v2013
        %2043 = vst [vmem:[#allocation2 + $0x40] sm:$0xff] %v2017
        %2044 = vst [vmem:[#allocation2 + $0x48] sm:$0xff] %v2019
        %2045 = vst [vmem:[#allocation2 + $0x50] sm:$0xff] %v2021
        %2046 = vst [vmem:[#allocation2 + $0x58] sm:$0xff] %v2023
        %2047 = vst [vmem:[#allocation2 + $0x60] sm:$0xff] %v2027
        %2048 = vst [vmem:[#allocation2 + $0x68] sm:$0xff] %v2029
        %2049 = vst [vmem:[#allocation2 + $0x70] sm:$0xff] %v2031
        %2050 = vst [vmem:[#allocation2 + $0x78] sm:$0xff] %v2033
        %v2051 = vand.u32 2147483647, %v1892
        %v2052 = vsub.f32 1.0, %v2051
        %v2053 = vmax.f32 %v2052, 0.0
        %v2054 = vld [vmem:[#allocation2] sm:$0xf]
        %v2055 = vld [vmem:[#allocation2 + $0x8] sm:$0xf]
        %v2057 = vlaneseq
        %v2058 = vshrl.u32 %v2057, 7
        %v2059 = vsub.s32 0, %v2058
        %v2060 = vrot.slane %v2053, %v2059
        %v2061 = vlaneseq
        %v2062 = vshrl.u32 %v2061, 7
        %v2063 = vsub.s32 1, %v2062
        %v2064 = vrot.slane %v2053, %v2063
        %v2067 = vmul.f32 %v2054, %v2060
        %v2068 = vmul.f32 %v2055, %v2064
        %v2069 = vadd.f32 %v2067, 0.0
        %v2070 = vadd.f32 %v2068, 0.0
        %v2071 = vsub.f32 %v1892, 1.0
        %v2072 = vand.u32 2147483647, %v2071
        %v2073 = vsub.f32 1.0, %v2072
        %v2074 = vmax.f32 %v2073, 0.0
        %v2075 = vld [vmem:[#allocation2] sm:$0xf0]
        %v2076 = vld [vmem:[#allocation2 + $0x8] sm:$0xf0]
        %v2078 = vlaneseq
        %v2079 = vshrl.u32 %v2078, 7
        %v2080 = vsub.s32 0, %v2079
        %v2081 = vrot.slane %v2074, %v2080
        %v2082 = vlaneseq
        %v2083 = vshrl.u32 %v2082, 7
        %v2084 = vsub.s32 1, %v2083
        %v2085 = vrot.slane %v2074, %v2084
        %v2088 = vmul.f32 %v2075, %v2081
        %v2089 = vmul.f32 %v2076, %v2085
        %v2092 = vrot.slane %v2088, 4
        %v2093 = vrot.slane %v2089, 4
        %v2096 = vadd.f32 %v2069, %v2092
        %v2097 = vadd.f32 %v2070, %v2093
        %v2098 = vsub.f32 %v1892, 2.0
        %v2099 = vand.u32 2147483647, %v2098
        %v2100 = vsub.f32 1.0, %v2099
        %v2101 = vmax.f32 %v2100, 0.0
        %v2102 = vld [vmem:[#allocation2 + $0x10] sm:$0xf]
        %v2103 = vld [vmem:[#allocation2 + $0x18] sm:$0xf]
        %v2105 = vlaneseq
        %v2106 = vshrl.u32 %v2105, 7
        %v2107 = vsub.s32 0, %v2106
        %v2108 = vrot.slane %v2101, %v2107
        %v2109 = vlaneseq
        %v2110 = vshrl.u32 %v2109, 7
        %v2111 = vsub.s32 1, %v2110
        %v2112 = vrot.slane %v2101, %v2111
        %v2115 = vmul.f32 %v2102, %v2108
        %v2116 = vmul.f32 %v2103, %v2112
        %v2117 = vadd.f32 %v2096, %v2115
        %v2118 = vadd.f32 %v2097, %v2116
        %v2119 = vsub.f32 %v1892, 3.0
        %v2120 = vand.u32 2147483647, %v2119
        %v2121 = vsub.f32 1.0, %v2120
        %v2122 = vmax.f32 %v2121, 0.0
        %v2123 = vld [vmem:[#allocation2 + $0x10] sm:$0xf0]
        %v2124 = vld [vmem:[#allocation2 + $0x18] sm:$0xf0]
        %v2126 = vlaneseq
        %v2127 = vshrl.u32 %v2126, 7
        %v2128 = vsub.s32 0, %v2127
        %v2129 = vrot.slane %v2122, %v2128
        %v2130 = vlaneseq
        %v2131 = vshrl.u32 %v2130, 7
        %v2132 = vsub.s32 1, %v2131
        %v2133 = vrot.slane %v2122, %v2132
        %v2136 = vmul.f32 %v2123, %v2129
        %v2137 = vmul.f32 %v2124, %v2133
        %v2140 = vrot.slane %v2136, 4
        %v2141 = vrot.slane %v2137, 4
        %v2144 = vadd.f32 %v2117, %v2140
        %v2145 = vadd.f32 %v2118, %v2141
        %v2146 = vsub.f32 %v1892, 4.0
        %v2147 = vand.u32 2147483647, %v2146
        %v2148 = vsub.f32 1.0, %v2147
        %v2149 = vmax.f32 %v2148, 0.0
        %v2150 = vld [vmem:[#allocation2 + $0x20] sm:$0xf]
        %v2151 = vld [vmem:[#allocation2 + $0x28] sm:$0xf]
        %v2153 = vlaneseq
        %v2154 = vshrl.u32 %v2153, 7
        %v2155 = vsub.s32 0, %v2154
        %v2156 = vrot.slane %v2149, %v2155
        %v2157 = vlaneseq
        %v2158 = vshrl.u32 %v2157, 7
        %v2159 = vsub.s32 1, %v2158
        %v2160 = vrot.slane %v2149, %v2159
        %v2163 = vmul.f32 %v2150, %v2156
        %v2164 = vmul.f32 %v2151, %v2160
        %v2165 = vadd.f32 %v2144, %v2163
        %v2166 = vadd.f32 %v2145, %v2164
        %v2167 = vsub.f32 %v1892, 5.0
        %v2168 = vand.u32 2147483647, %v2167
        %v2169 = vsub.f32 1.0, %v2168
        %v2170 = vmax.f32 %v2169, 0.0
        %v2171 = vld [vmem:[#allocation2 + $0x20] sm:$0xf0]
        %v2172 = vld [vmem:[#allocation2 + $0x28] sm:$0xf0]
        %v2174 = vlaneseq
        %v2175 = vshrl.u32 %v2174, 7
        %v2176 = vsub.s32 0, %v2175
        %v2177 = vrot.slane %v2170, %v2176
        %v2178 = vlaneseq
        %v2179 = vshrl.u32 %v2178, 7
        %v2180 = vsub.s32 1, %v2179
        %v2181 = vrot.slane %v2170, %v2180
        %v2184 = vmul.f32 %v2171, %v2177
        %v2185 = vmul.f32 %v2172, %v2181
        %v2188 = vrot.slane %v2184, 4
        %v2189 = vrot.slane %v2185, 4
        %v2192 = vadd.f32 %v2165, %v2188
        %v2193 = vadd.f32 %v2166, %v2189
        %v2194 = vsub.f32 %v1892, 6.0
        %v2195 = vand.u32 2147483647, %v2194
        %v2196 = vsub.f32 1.0, %v2195
        %v2197 = vmax.f32 %v2196, 0.0
        %v2198 = vld [vmem:[#allocation2 + $0x30] sm:$0xf]
        %v2199 = vld [vmem:[#allocation2 + $0x38] sm:$0xf]
        %v2201 = vlaneseq
        %v2202 = vshrl.u32 %v2201, 7
        %v2203 = vsub.s32 0, %v2202
        %v2204 = vrot.slane %v2197, %v2203
        %v2205 = vlaneseq
        %v2206 = vshrl.u32 %v2205, 7
        %v2207 = vsub.s32 1, %v2206
        %v2208 = vrot.slane %v2197, %v2207
        %v2211 = vmul.f32 %v2198, %v2204
        %v2212 = vmul.f32 %v2199, %v2208
        %v2213 = vadd.f32 %v2192, %v2211
        %v2214 = vadd.f32 %v2193, %v2212
        %v2215 = vsub.f32 %v1892, 7.0
        %v2216 = vand.u32 2147483647, %v2215
        %v2217 = vsub.f32 1.0, %v2216
        %v2218 = vmax.f32 %v2217, 0.0
        %v2219 = vld [vmem:[#allocation2 + $0x30] sm:$0xf0]
        %v2220 = vld [vmem:[#allocation2 + $0x38] sm:$0xf0]
        %v2222 = vlaneseq
        %v2223 = vshrl.u32 %v2222, 7
        %v2224 = vsub.s32 0, %v2223
        %v2225 = vrot.slane %v2218, %v2224
        %v2226 = vlaneseq
        %v2227 = vshrl.u32 %v2226, 7
        %v2228 = vsub.s32 1, %v2227
        %v2229 = vrot.slane %v2218, %v2228
        %v2232 = vmul.f32 %v2219, %v2225
        %v2233 = vmul.f32 %v2220, %v2229
        %v2236 = vrot.slane %v2232, 4
        %v2237 = vrot.slane %v2233, 4
        %v2240 = vadd.f32 %v2213, %v2236
        %v2241 = vadd.f32 %v2214, %v2237
        %v2242 = vsub.f32 %v1892, 8.0
        %v2243 = vand.u32 2147483647, %v2242
        %v2244 = vsub.f32 1.0, %v2243
        %v2245 = vmax.f32 %v2244, 0.0
        %v2246 = vld [vmem:[#allocation2 + $0x40] sm:$0xf]
        %v2247 = vld [vmem:[#allocation2 + $0x48] sm:$0xf]
        %v2249 = vlaneseq
        %v2250 = vshrl.u32 %v2249, 7
        %v2251 = vsub.s32 0, %v2250
        %v2252 = vrot.slane %v2245, %v2251
        %v2253 = vlaneseq
        %v2254 = vshrl.u32 %v2253, 7
        %v2255 = vsub.s32 1, %v2254
        %v2256 = vrot.slane %v2245, %v2255
        %v2259 = vmul.f32 %v2246, %v2252
        %v2260 = vmul.f32 %v2247, %v2256
        %v2261 = vadd.f32 %v2240, %v2259
        %v2262 = vadd.f32 %v2241, %v2260
        %v2263 = vsub.f32 %v1892, 9.0
        %v2264 = vand.u32 2147483647, %v2263
        %v2265 = vsub.f32 1.0, %v2264
        %v2266 = vmax.f32 %v2265, 0.0
        %v2267 = vld [vmem:[#allocation2 + $0x40] sm:$0xf0]
        %v2268 = vld [vmem:[#allocation2 + $0x48] sm:$0xf0]
        %v2270 = vlaneseq
        %v2271 = vshrl.u32 %v2270, 7
        %v2272 = vsub.s32 0, %v2271
        %v2273 = vrot.slane %v2266, %v2272
        %v2274 = vlaneseq
        %v2275 = vshrl.u32 %v2274, 7
        %v2276 = vsub.s32 1, %v2275
        %v2277 = vrot.slane %v2266, %v2276
        %v2280 = vmul.f32 %v2267, %v2273
        %v2281 = vmul.f32 %v2268, %v2277
        %v2284 = vrot.slane %v2280, 4
        %v2285 = vrot.slane %v2281, 4
        %v2288 = vadd.f32 %v2261, %v2284
        %v2289 = vadd.f32 %v2262, %v2285
        %v2290 = vsub.f32 %v1892, 10.0
        %v2291 = vand.u32 2147483647, %v2290
        %v2292 = vsub.f32 1.0, %v2291
        %v2293 = vmax.f32 %v2292, 0.0
        %v2294 = vld [vmem:[#allocation2 + $0x50] sm:$0xf]
        %v2295 = vld [vmem:[#allocation2 + $0x58] sm:$0xf]
        %v2297 = vlaneseq
        %v2298 = vshrl.u32 %v2297, 7
        %v2299 = vsub.s32 0, %v2298
        %v2300 = vrot.slane %v2293, %v2299
        %v2301 = vlaneseq
        %v2302 = vshrl.u32 %v2301, 7
        %v2303 = vsub.s32 1, %v2302
        %v2304 = vrot.slane %v2293, %v2303
        %v2307 = vmul.f32 %v2294, %v2300
        %v2308 = vmul.f32 %v2295, %v2304
        %v2309 = vadd.f32 %v2288, %v2307
        %v2310 = vadd.f32 %v2289, %v2308
        %v2311 = vsub.f32 %v1892, 11.0
        %v2312 = vand.u32 2147483647, %v2311
        %v2313 = vsub.f32 1.0, %v2312
        %v2314 = vmax.f32 %v2313, 0.0
        %v2315 = vld [vmem:[#allocation2 + $0x50] sm:$0xf0]
        %v2316 = vld [vmem:[#allocation2 + $0x58] sm:$0xf0]
        %v2318 = vlaneseq
        %v2319 = vshrl.u32 %v2318, 7
        %v2320 = vsub.s32 0, %v2319
        %v2321 = vrot.slane %v2314, %v2320
        %v2322 = vlaneseq
        %v2323 = vshrl.u32 %v2322, 7
        %v2324 = vsub.s32 1, %v2323
        %v2325 = vrot.slane %v2314, %v2324
        %v2328 = vmul.f32 %v2315, %v2321
        %v2329 = vmul.f32 %v2316, %v2325
        %v2332 = vrot.slane %v2328, 4
        %v2333 = vrot.slane %v2329, 4
        %v2336 = vadd.f32 %v2309, %v2332
        %v2337 = vadd.f32 %v2310, %v2333
        %v2338 = vsub.f32 %v1892, 12.0
        %v2339 = vand.u32 2147483647, %v2338
        %v2340 = vsub.f32 1.0, %v2339
        %v2341 = vmax.f32 %v2340, 0.0
        %v2342 = vld [vmem:[#allocation2 + $0x60] sm:$0xf]
        %v2343 = vld [vmem:[#allocation2 + $0x68] sm:$0xf]
        %v2345 = vlaneseq
        %v2346 = vshrl.u32 %v2345, 7
        %v2347 = vsub.s32 0, %v2346
        %v2348 = vrot.slane %v2341, %v2347
        %v2349 = vlaneseq
        %v2350 = vshrl.u32 %v2349, 7
        %v2351 = vsub.s32 1, %v2350
        %v2352 = vrot.slane %v2341, %v2351
        %v2355 = vmul.f32 %v2342, %v2348
        %v2356 = vmul.f32 %v2343, %v2352
        %v2357 = vadd.f32 %v2336, %v2355
        %v2358 = vadd.f32 %v2337, %v2356
        %v2359 = vsub.f32 %v1892, 13.0
        %v2360 = vand.u32 2147483647, %v2359
        %v2361 = vsub.f32 1.0, %v2360
        %v2362 = vmax.f32 %v2361, 0.0
        %v2363 = vld [vmem:[#allocation2 + $0x60] sm:$0xf0]
        %v2364 = vld [vmem:[#allocation2 + $0x68] sm:$0xf0]
        %v2366 = vlaneseq
        %v2367 = vshrl.u32 %v2366, 7
        %v2368 = vsub.s32 0, %v2367
        %v2369 = vrot.slane %v2362, %v2368
        %v2370 = vlaneseq
        %v2371 = vshrl.u32 %v2370, 7
        %v2372 = vsub.s32 1, %v2371
        %v2373 = vrot.slane %v2362, %v2372
        %v2376 = vmul.f32 %v2363, %v2369
        %v2377 = vmul.f32 %v2364, %v2373
        %v2380 = vrot.slane %v2376, 4
        %v2381 = vrot.slane %v2377, 4
        %v2384 = vadd.f32 %v2357, %v2380
        %v2385 = vadd.f32 %v2358, %v2381
        %v2386 = vsub.f32 %v1892, 14.0
        %v2387 = vand.u32 2147483647, %v2386
        %v2388 = vsub.f32 1.0, %v2387
        %v2389 = vmax.f32 %v2388, 0.0
        %v2390 = vld [vmem:[#allocation2 + $0x70] sm:$0xf]
        %v2391 = vld [vmem:[#allocation2 + $0x78] sm:$0xf]
        %v2393 = vlaneseq
        %v2394 = vshrl.u32 %v2393, 7
        %v2395 = vsub.s32 0, %v2394
        %v2396 = vrot.slane %v2389, %v2395
        %v2397 = vlaneseq
        %v2398 = vshrl.u32 %v2397, 7
        %v2399 = vsub.s32 1, %v2398
        %v2400 = vrot.slane %v2389, %v2399
        %v2403 = vmul.f32 %v2390, %v2396
        %v2404 = vmul.f32 %v2391, %v2400
        %v2405 = vadd.f32 %v2384, %v2403
        %v2406 = vadd.f32 %v2385, %v2404
        %v2407 = vsub.f32 %v1892, 15.0
        %v2408 = vand.u32 2147483647, %v2407
        %v2409 = vsub.f32 1.0, %v2408
        %v2410 = vmax.f32 %v2409, 0.0
        %v2411 = vld [vmem:[#allocation2 + $0x70] sm:$0xf0]
        %v2412 = vld [vmem:[#allocation2 + $0x78] sm:$0xf0]
        %v2414 = vlaneseq
        %v2415 = vshrl.u32 %v2414, 7
        %v2416 = vsub.s32 0, %v2415
        %v2417 = vrot.slane %v2410, %v2416
        %v2418 = vlaneseq
        %v2419 = vshrl.u32 %v2418, 7
        %v2420 = vsub.s32 1, %v2419
        %v2421 = vrot.slane %v2410, %v2420
        %v2424 = vmul.f32 %v2411, %v2417
        %v2425 = vmul.f32 %v2412, %v2421
        %v2428 = vrot.slane %v2424, 4
        %v2429 = vrot.slane %v2425, 4
        %v2432 = vadd.f32 %v2405, %v2428
        %v2433 = vadd.f32 %v2406, %v2429
        %v2434 = vpack.c.bf16 %v2432, %v2432
        %v2435 = vpack.c.bf16 %v2433, %v2433
        %v2438 = vunpack.c.l.b16 %v2434
        %v2439 = vunpack.c.l.b16 %v2435
        %v2440 = vpack.c.b16 %v2439, %v2438
        %v2441 = vrot.slane %v2440, 6
        %2443 = vst [vmem:[#allocation3 + $0x8] sm:$0xcc] %v2441
        %s2444 = scalar_lea.vmem %s217, 4
        %v2445 = vld [vmem:[%s2444] ss:$8 sm:$0x3]
        %s2446 = scalar_lea.vmem %s217, 21
        %v2447 = vld [vmem:[%s2446] ss:$8 sm:$0x3]
        %v2449 = vlaneseq
        %v2450 = vshrl.u32 %v2449, 7
        %v2451 = vsub.s32 0, %v2450
        %v2452 = vrot.slane %v2445, %v2451
        %v2453 = vlaneseq
        %v2454 = vshrl.u32 %v2453, 7
        %v2455 = vsub.s32 1, %v2454
        %v2456 = vrot.slane %v2445, %v2455
        %v2459 = vsub.f32 %v2452, %v224
        %v2460 = vsub.f32 %v2456, %v224
        %v2461 = vsub.f32 %v2452, %v225
        %v2462 = vsub.f32 %v2456, %v225
        %v2463 = vand.u32 2147483647, %v2459
        %v2464 = vand.u32 2147483647, %v2460
        %v2465 = vand.u32 2147483647, %v2461
        %v2466 = vand.u32 2147483647, %v2462
        %v2467 = vsub.f32 1.0, %v2463
        %v2468 = vsub.f32 1.0, %v2464
        %v2469 = vsub.f32 1.0, %v2465
        %v2470 = vsub.f32 1.0, %v2466
        %v2471 = vmax.f32 %v2467, 0.0
        %v2472 = vmax.f32 %v2468, 0.0
        %v2473 = vmax.f32 %v2469, 0.0
        %v2474 = vmax.f32 %v2470, 0.0
        %v2475 = vpack.c.bf16 %v2473, %v2471
        %v2476 = vpack.c.bf16 %v2474, %v2472
        %v2477 = vld [vmem:[%s208] sm:$0xf]
        %v2478 = vld [vmem:[%s208 + $0x4] sm:$0xf]
        %v2479 = vld [vmem:[%s208 + $0x8] sm:$0xf]
        %v2480 = vld [vmem:[%s208 + $0xc] sm:$0xf]
        %v2481 = vld [vmem:[%s208 + $0x10] sm:$0xf]
        %v2482 = vld [vmem:[%s208 + $0x14] sm:$0xf]
        %v2483 = vld [vmem:[%s208 + $0x18] sm:$0xf]
        %v2484 = vld [vmem:[%s208 + $0x1c] sm:$0xf]
        %v2493 = vunpack.c.l.b16 %v2477
        %v2494 = vunpack.c.l.b16 %v2478
        %v2495 = vunpack.c.l.b16 %v2479
        %v2496 = vunpack.c.l.b16 %v2480
        %v2497 = vunpack.c.l.b16 %v2481
        %v2498 = vunpack.c.l.b16 %v2482
        %v2499 = vunpack.c.l.b16 %v2483
        %v2500 = vunpack.c.l.b16 %v2484
        %v2501 = vpack.c.b16 %v2494, %v2493
        %v2502 = vpack.c.b16 %v2496, %v2495
        %v2503 = vpack.c.b16 %v2498, %v2497
        %v2504 = vpack.c.b16 %v2500, %v2499
        %v2506 = vsel %vm286, %v2501, 0
        %v2509 = vsel %vm286, %v2502, 0
        %v2512 = vsel %vm286, %v2503, 0
        %v2515 = vsel %vm286, %v2504, 0
        %2517 = vmatprep.subr.bf16.mxu0 %v2476
        %2518 = vmatpush1.bf16.msra.mxu0 %v2475
        %2519 = vmatprep.subr.bf16.mxu0 0
        %2520 = vmatpush1.bf16.msra.mxu0 0
        %2521 = vmatprep.subr.bf16.mxu0 0
        %2522 = vmatpush1.bf16.msra.mxu0 0
        %2523 = vmatprep.subr.bf16.mxu0 0
        %2524 = vmatpush1.bf16.msra.mxu0 0
        %2525 = vmatprep.subr.bf16.mxu0 0
        %2526 = vmatpush1.bf16.msra.mxu0 0
        %2527 = vmatprep.subr.bf16.mxu0 0
        %2528 = vmatpush1.bf16.msra.mxu0 0
        %2529 = vmatprep.subr.bf16.mxu0 0
        %2530 = vmatpush1.bf16.msra.mxu0 0
        %2531 = vmatprep.subr.bf16.mxu0 0
        %2532 = vmatpush1.bf16.msra.mxu0 0
        %2533 = vmatprep.subr.bf16.mxu0 0
        %2534 = vmatpush1.bf16.msra.mxu0 0
        %2535 = vmatprep.subr.bf16.mxu0 0
        %2536 = vmatpush1.bf16.msra.mxu0 0
        %2537 = vmatprep.subr.bf16.mxu0 0
        %2538 = vmatpush1.bf16.msra.mxu0 0
        %2539 = vmatprep.subr.bf16.mxu0 0
        %2540 = vmatpush1.bf16.msra.mxu0 0
        %2541 = vmatprep.subr.bf16.mxu0 0
        %2542 = vmatpush1.bf16.msra.mxu0 0
        %2543 = vmatprep.subr.bf16.mxu0 0
        %2544 = vmatpush1.bf16.msra.mxu0 0
        %2545 = vmatprep.subr.bf16.mxu0 0
        %2546 = vmatpush1.bf16.msra.mxu0 0
        %2547 = vmatprep.subr.bf16.mxu0 0
        %2548 = vmatpush1.bf16.msra.mxu0 0
        %2549 = vmatprep.mubr.bf16.mxu0 0
        %2550 = vmatmul.mubr.bf16.gmra.mrb[0].mxu0 %v2506
        %v2551 = vpop.f32.mrb[0].mxu0
        %v2552 = vadd.f32 0.0, %v2551
        %v2553 = vpop.f32.mrb[0].mxu0
        %v2554 = vadd.f32 0.0, %v2553
        %v2555 = vpop.f32.mrb[0].mxu0
        %v2556 = vadd.f32 0.0, %v2555
        %v2557 = vpop.f32.mrb[0].mxu0
        %v2558 = vadd.f32 0.0, %v2557
        %2559 = vmatprep.mubr.bf16.mxu0 0
        %2560 = vmatmul.mubr.bf16.gmra.mrb[0].mxu0 %v2509
        %v2561 = vpop.f32.mrb[0].mxu0
        %v2562 = vadd.f32 0.0, %v2561
        %v2563 = vpop.f32.mrb[0].mxu0
        %v2564 = vadd.f32 0.0, %v2563
        %v2565 = vpop.f32.mrb[0].mxu0
        %v2566 = vadd.f32 0.0, %v2565
        %v2567 = vpop.f32.mrb[0].mxu0
        %v2568 = vadd.f32 0.0, %v2567
        %2569 = vmatprep.mubr.bf16.mxu0 0
        %2570 = vmatmul.mubr.bf16.gmra.mrb[0].mxu0 %v2512
        %v2571 = vpop.f32.mrb[0].mxu0
        %v2572 = vadd.f32 0.0, %v2571
        %v2573 = vpop.f32.mrb[0].mxu0
        %v2574 = vadd.f32 0.0, %v2573
        %v2575 = vpop.f32.mrb[0].mxu0
        %v2576 = vadd.f32 0.0, %v2575
        %v2577 = vpop.f32.mrb[0].mxu0
        %v2578 = vadd.f32 0.0, %v2577
        %2579 = vmatprep.mubr.bf16.mxu0 0
        %2580 = vmatmul.mubr.bf16.gmra.mrb[0].mxu0 %v2515
        %v2581 = vpop.f32.mrb[0].mxu0
        %v2582 = vadd.f32 0.0, %v2581
        %v2583 = vpop.f32.mrb[0].mxu0
        %v2584 = vadd.f32 0.0, %v2583
        %v2585 = vpop.f32.mrb[0].mxu0
        %v2586 = vadd.f32 0.0, %v2585
        %v2587 = vpop.f32.mrb[0].mxu0
        %v2588 = vadd.f32 0.0, %v2587
        %2589 = vdwg.mxu0
        %2590 = vst [vmem:[#allocation2] sm:$0xff] %v2552
        %2591 = vst [vmem:[#allocation2 + $0x8] sm:$0xff] %v2554
        %2592 = vst [vmem:[#allocation2 + $0x10] sm:$0xff] %v2556
        %2593 = vst [vmem:[#allocation2 + $0x18] sm:$0xff] %v2558
        %2594 = vst [vmem:[#allocation2 + $0x20] sm:$0xff] %v2562
        %2595 = vst [vmem:[#allocation2 + $0x28] sm:$0xff] %v2564
        %2596 = vst [vmem:[#allocation2 + $0x30] sm:$0xff] %v2566
        %2597 = vst [vmem:[#allocation2 + $0x38] sm:$0xff] %v2568
        %2598 = vst [vmem:[#allocation2 + $0x40] sm:$0xff] %v2572
        %2599 = vst [vmem:[#allocation2 + $0x48] sm:$0xff] %v2574
        %2600 = vst [vmem:[#allocation2 + $0x50] sm:$0xff] %v2576
        %2601 = vst [vmem:[#allocation2 + $0x58] sm:$0xff] %v2578
        %2602 = vst [vmem:[#allocation2 + $0x60] sm:$0xff] %v2582
        %2603 = vst [vmem:[#allocation2 + $0x68] sm:$0xff] %v2584
        %2604 = vst [vmem:[#allocation2 + $0x70] sm:$0xff] %v2586
        %2605 = vst [vmem:[#allocation2 + $0x78] sm:$0xff] %v2588
        %v2606 = vand.u32 2147483647, %v2447
        %v2607 = vsub.f32 1.0, %v2606
        %v2608 = vmax.f32 %v2607, 0.0
        %v2609 = vld [vmem:[#allocation2] sm:$0xf]
        %v2610 = vld [vmem:[#allocation2 + $0x8] sm:$0xf]
        %v2612 = vlaneseq
        %v2613 = vshrl.u32 %v2612, 7
        %v2614 = vsub.s32 0, %v2613
        %v2615 = vrot.slane %v2608, %v2614
        %v2616 = vlaneseq
        %v2617 = vshrl.u32 %v2616, 7
        %v2618 = vsub.s32 1, %v2617
        %v2619 = vrot.slane %v2608, %v2618
        %v2622 = vmul.f32 %v2609, %v2615
        %v2623 = vmul.f32 %v2610, %v2619
        %v2624 = vadd.f32 %v2622, 0.0
        %v2625 = vadd.f32 %v2623, 0.0
        %v2626 = vsub.f32 %v2447, 1.0
        %v2627 = vand.u32 2147483647, %v2626
        %v2628 = vsub.f32 1.0, %v2627
        %v2629 = vmax.f32 %v2628, 0.0
        %v2630 = vld [vmem:[#allocation2] sm:$0xf0]
        %v2631 = vld [vmem:[#allocation2 + $0x8] sm:$0xf0]
        %v2633 = vlaneseq
        %v2634 = vshrl.u32 %v2633, 7
        %v2635 = vsub.s32 0, %v2634
        %v2636 = vrot.slane %v2629, %v2635
        %v2637 = vlaneseq
        %v2638 = vshrl.u32 %v2637, 7
        %v2639 = vsub.s32 1, %v2638
        %v2640 = vrot.slane %v2629, %v2639
        %v2643 = vmul.f32 %v2630, %v2636
        %v2644 = vmul.f32 %v2631, %v2640
        %v2647 = vrot.slane %v2643, 4
        %v2648 = vrot.slane %v2644, 4
        %v2651 = vadd.f32 %v2624, %v2647
        %v2652 = vadd.f32 %v2625, %v2648
        %v2653 = vsub.f32 %v2447, 2.0
        %v2654 = vand.u32 2147483647, %v2653
        %v2655 = vsub.f32 1.0, %v2654
        %v2656 = vmax.f32 %v2655, 0.0
        %v2657 = vld [vmem:[#allocation2 + $0x10] sm:$0xf]
        %v2658 = vld [vmem:[#allocation2 + $0x18] sm:$0xf]
        %v2660 = vlaneseq
        %v2661 = vshrl.u32 %v2660, 7
        %v2662 = vsub.s32 0, %v2661
        %v2663 = vrot.slane %v2656, %v2662
        %v2664 = vlaneseq
        %v2665 = vshrl.u32 %v2664, 7
        %v2666 = vsub.s32 1, %v2665
        %v2667 = vrot.slane %v2656, %v2666
        %v2670 = vmul.f32 %v2657, %v2663
        %v2671 = vmul.f32 %v2658, %v2667
        %v2672 = vadd.f32 %v2651, %v2670
        %v2673 = vadd.f32 %v2652, %v2671
        %v2674 = vsub.f32 %v2447, 3.0
        %v2675 = vand.u32 2147483647, %v2674
        %v2676 = vsub.f32 1.0, %v2675
        %v2677 = vmax.f32 %v2676, 0.0
        %v2678 = vld [vmem:[#allocation2 + $0x10] sm:$0xf0]
        %v2679 = vld [vmem:[#allocation2 + $0x18] sm:$0xf0]
        %v2681 = vlaneseq
        %v2682 = vshrl.u32 %v2681, 7
        %v2683 = vsub.s32 0, %v2682
        %v2684 = vrot.slane %v2677, %v2683
        %v2685 = vlaneseq
        %v2686 = vshrl.u32 %v2685, 7
        %v2687 = vsub.s32 1, %v2686
        %v2688 = vrot.slane %v2677, %v2687
        %v2691 = vmul.f32 %v2678, %v2684
        %v2692 = vmul.f32 %v2679, %v2688
        %v2695 = vrot.slane %v2691, 4
        %v2696 = vrot.slane %v2692, 4
        %v2699 = vadd.f32 %v2672, %v2695
        %v2700 = vadd.f32 %v2673, %v2696
        %v2701 = vsub.f32 %v2447, 4.0
        %v2702 = vand.u32 2147483647, %v2701
        %v2703 = vsub.f32 1.0, %v2702
        %v2704 = vmax.f32 %v2703, 0.0
        %v2705 = vld [vmem:[#allocation2 + $0x20] sm:$0xf]
        %v2706 = vld [vmem:[#allocation2 + $0x28] sm:$0xf]
        %v2708 = vlaneseq
        %v2709 = vshrl.u32 %v2708, 7
        %v2710 = vsub.s32 0, %v2709
        %v2711 = vrot.slane %v2704, %v2710
        %v2712 = vlaneseq
        %v2713 = vshrl.u32 %v2712, 7
        %v2714 = vsub.s32 1, %v2713
        %v2715 = vrot.slane %v2704, %v2714
        %v2718 = vmul.f32 %v2705, %v2711
        %v2719 = vmul.f32 %v2706, %v2715
        %v2720 = vadd.f32 %v2699, %v2718
        %v2721 = vadd.f32 %v2700, %v2719
        %v2722 = vsub.f32 %v2447, 5.0
        %v2723 = vand.u32 2147483647, %v2722
        %v2724 = vsub.f32 1.0, %v2723
        %v2725 = vmax.f32 %v2724, 0.0
        %v2726 = vld [vmem:[#allocation2 + $0x20] sm:$0xf0]
        %v2727 = vld [vmem:[#allocation2 + $0x28] sm:$0xf0]
        %v2729 = vlaneseq
        %v2730 = vshrl.u32 %v2729, 7
        %v2731 = vsub.s32 0, %v2730
        %v2732 = vrot.slane %v2725, %v2731
        %v2733 = vlaneseq
        %v2734 = vshrl.u32 %v2733, 7
        %v2735 = vsub.s32 1, %v2734
        %v2736 = vrot.slane %v2725, %v2735
        %v2739 = vmul.f32 %v2726, %v2732
        %v2740 = vmul.f32 %v2727, %v2736
        %v2743 = vrot.slane %v2739, 4
        %v2744 = vrot.slane %v2740, 4
        %v2747 = vadd.f32 %v2720, %v2743
        %v2748 = vadd.f32 %v2721, %v2744
        %v2749 = vsub.f32 %v2447, 6.0
        %v2750 = vand.u32 2147483647, %v2749
        %v2751 = vsub.f32 1.0, %v2750
        %v2752 = vmax.f32 %v2751, 0.0
        %v2753 = vld [vmem:[#allocation2 + $0x30] sm:$0xf]
        %v2754 = vld [vmem:[#allocation2 + $0x38] sm:$0xf]
        %v2756 = vlaneseq
        %v2757 = vshrl.u32 %v2756, 7
        %v2758 = vsub.s32 0, %v2757
        %v2759 = vrot.slane %v2752, %v2758
        %v2760 = vlaneseq
        %v2761 = vshrl.u32 %v2760, 7
        %v2762 = vsub.s32 1, %v2761
        %v2763 = vrot.slane %v2752, %v2762
        %v2766 = vmul.f32 %v2753, %v2759
        %v2767 = vmul.f32 %v2754, %v2763
        %v2768 = vadd.f32 %v2747, %v2766
        %v2769 = vadd.f32 %v2748, %v2767
        %v2770 = vsub.f32 %v2447, 7.0
        %v2771 = vand.u32 2147483647, %v2770
        %v2772 = vsub.f32 1.0, %v2771
        %v2773 = vmax.f32 %v2772, 0.0
        %v2774 = vld [vmem:[#allocation2 + $0x30] sm:$0xf0]
        %v2775 = vld [vmem:[#allocation2 + $0x38] sm:$0xf0]
        %v2777 = vlaneseq
        %v2778 = vshrl.u32 %v2777, 7
        %v2779 = vsub.s32 0, %v2778
        %v2780 = vrot.slane %v2773, %v2779
        %v2781 = vlaneseq
        %v2782 = vshrl.u32 %v2781, 7
        %v2783 = vsub.s32 1, %v2782
        %v2784 = vrot.slane %v2773, %v2783
        %v2787 = vmul.f32 %v2774, %v2780
        %v2788 = vmul.f32 %v2775, %v2784
        %v2791 = vrot.slane %v2787, 4
        %v2792 = vrot.slane %v2788, 4
        %v2795 = vadd.f32 %v2768, %v2791
        %v2796 = vadd.f32 %v2769, %v2792
        %v2797 = vsub.f32 %v2447, 8.0
        %v2798 = vand.u32 2147483647, %v2797
        %v2799 = vsub.f32 1.0, %v2798
        %v2800 = vmax.f32 %v2799, 0.0
        %v2801 = vld [vmem:[#allocation2 + $0x40] sm:$0xf]
        %v2802 = vld [vmem:[#allocation2 + $0x48] sm:$0xf]
        %v2804 = vlaneseq
        %v2805 = vshrl.u32 %v2804, 7
        %v2806 = vsub.s32 0, %v2805
        %v2807 = vrot.slane %v2800, %v2806
        %v2808 = vlaneseq
        %v2809 = vshrl.u32 %v2808, 7
        %v2810 = vsub.s32 1, %v2809
        %v2811 = vrot.slane %v2800, %v2810
        %v2814 = vmul.f32 %v2801, %v2807
        %v2815 = vmul.f32 %v2802, %v2811
        %v2816 = vadd.f32 %v2795, %v2814
        %v2817 = vadd.f32 %v2796, %v2815
        %v2818 = vsub.f32 %v2447, 9.0
        %v2819 = vand.u32 2147483647, %v2818
        %v2820 = vsub.f32 1.0, %v2819
        %v2821 = vmax.f32 %v2820, 0.0
        %v2822 = vld [vmem:[#allocation2 + $0x40] sm:$0xf0]
        %v2823 = vld [vmem:[#allocation2 + $0x48] sm:$0xf0]
        %v2825 = vlaneseq
        %v2826 = vshrl.u32 %v2825, 7
        %v2827 = vsub.s32 0, %v2826
        %v2828 = vrot.slane %v2821, %v2827
        %v2829 = vlaneseq
        %v2830 = vshrl.u32 %v2829, 7
        %v2831 = vsub.s32 1, %v2830
        %v2832 = vrot.slane %v2821, %v2831
        %v2835 = vmul.f32 %v2822, %v2828
        %v2836 = vmul.f32 %v2823, %v2832
        %v2839 = vrot.slane %v2835, 4
        %v2840 = vrot.slane %v2836, 4
        %v2843 = vadd.f32 %v2816, %v2839
        %v2844 = vadd.f32 %v2817, %v2840
        %v2845 = vsub.f32 %v2447, 10.0
        %v2846 = vand.u32 2147483647, %v2845
        %v2847 = vsub.f32 1.0, %v2846
        %v2848 = vmax.f32 %v2847, 0.0
        %v2849 = vld [vmem:[#allocation2 + $0x50] sm:$0xf]
        %v2850 = vld [vmem:[#allocation2 + $0x58] sm:$0xf]
        %v2852 = vlaneseq
        %v2853 = vshrl.u32 %v2852, 7
        %v2854 = vsub.s32 0, %v2853
        %v2855 = vrot.slane %v2848, %v2854
        %v2856 = vlaneseq
        %v2857 = vshrl.u32 %v2856, 7
        %v2858 = vsub.s32 1, %v2857
        %v2859 = vrot.slane %v2848, %v2858
        %v2862 = vmul.f32 %v2849, %v2855
        %v2863 = vmul.f32 %v2850, %v2859
        %v2864 = vadd.f32 %v2843, %v2862
        %v2865 = vadd.f32 %v2844, %v2863
        %v2866 = vsub.f32 %v2447, 11.0
        %v2867 = vand.u32 2147483647, %v2866
        %v2868 = vsub.f32 1.0, %v2867
        %v2869 = vmax.f32 %v2868, 0.0
        %v2870 = vld [vmem:[#allocation2 + $0x50] sm:$0xf0]
        %v2871 = vld [vmem:[#allocation2 + $0x58] sm:$0xf0]
        %v2873 = vlaneseq
        %v2874 = vshrl.u32 %v2873, 7
        %v2875 = vsub.s32 0, %v2874
        %v2876 = vrot.slane %v2869, %v2875
        %v2877 = vlaneseq
        %v2878 = vshrl.u32 %v2877, 7
        %v2879 = vsub.s32 1, %v2878
        %v2880 = vrot.slane %v2869, %v2879
        %v2883 = vmul.f32 %v2870, %v2876
        %v2884 = vmul.f32 %v2871, %v2880
        %v2887 = vrot.slane %v2883, 4
        %v2888 = vrot.slane %v2884, 4
        %v2891 = vadd.f32 %v2864, %v2887
        %v2892 = vadd.f32 %v2865, %v2888
        %v2893 = vsub.f32 %v2447, 12.0
        %v2894 = vand.u32 2147483647, %v2893
        %v2895 = vsub.f32 1.0, %v2894
        %v2896 = vmax.f32 %v2895, 0.0
        %v2897 = vld [vmem:[#allocation2 + $0x60] sm:$0xf]
        %v2898 = vld [vmem:[#allocation2 + $0x68] sm:$0xf]
        %v2900 = vlaneseq
        %v2901 = vshrl.u32 %v2900, 7
        %v2902 = vsub.s32 0, %v2901
        %v2903 = vrot.slane %v2896, %v2902
        %v2904 = vlaneseq
        %v2905 = vshrl.u32 %v2904, 7
        %v2906 = vsub.s32 1, %v2905
        %v2907 = vrot.slane %v2896, %v2906
        %v2910 = vmul.f32 %v2897, %v2903
        %v2911 = vmul.f32 %v2898, %v2907
        %v2912 = vadd.f32 %v2891, %v2910
        %v2913 = vadd.f32 %v2892, %v2911
        %v2914 = vsub.f32 %v2447, 13.0
        %v2915 = vand.u32 2147483647, %v2914
        %v2916 = vsub.f32 1.0, %v2915
        %v2917 = vmax.f32 %v2916, 0.0
        %v2918 = vld [vmem:[#allocation2 + $0x60] sm:$0xf0]
        %v2919 = vld [vmem:[#allocation2 + $0x68] sm:$0xf0]
        %v2921 = vlaneseq
        %v2922 = vshrl.u32 %v2921, 7
        %v2923 = vsub.s32 0, %v2922
        %v2924 = vrot.slane %v2917, %v2923
        %v2925 = vlaneseq
        %v2926 = vshrl.u32 %v2925, 7
        %v2927 = vsub.s32 1, %v2926
        %v2928 = vrot.slane %v2917, %v2927
        %v2931 = vmul.f32 %v2918, %v2924
        %v2932 = vmul.f32 %v2919, %v2928
        %v2935 = vrot.slane %v2931, 4
        %v2936 = vrot.slane %v2932, 4
        %v2939 = vadd.f32 %v2912, %v2935
        %v2940 = vadd.f32 %v2913, %v2936
        %v2941 = vsub.f32 %v2447, 14.0
        %v2942 = vand.u32 2147483647, %v2941
        %v2943 = vsub.f32 1.0, %v2942
        %v2944 = vmax.f32 %v2943, 0.0
        %v2945 = vld [vmem:[#allocation2 + $0x70] sm:$0xf]
        %v2946 = vld [vmem:[#allocation2 + $0x78] sm:$0xf]
        %v2948 = vlaneseq
        %v2949 = vshrl.u32 %v2948, 7
        %v2950 = vsub.s32 0, %v2949
        %v2951 = vrot.slane %v2944, %v2950
        %v2952 = vlaneseq
        %v2953 = vshrl.u32 %v2952, 7
        %v2954 = vsub.s32 1, %v2953
        %v2955 = vrot.slane %v2944, %v2954
        %v2958 = vmul.f32 %v2945, %v2951
        %v2959 = vmul.f32 %v2946, %v2955
        %v2960 = vadd.f32 %v2939, %v2958
        %v2961 = vadd.f32 %v2940, %v2959
        %v2962 = vsub.f32 %v2447, 15.0
        %v2963 = vand.u32 2147483647, %v2962
        %v2964 = vsub.f32 1.0, %v2963
        %v2965 = vmax.f32 %v2964, 0.0
        %v2966 = vld [vmem:[#allocation2 + $0x70] sm:$0xf0]
        %v2967 = vld [vmem:[#allocation2 + $0x78] sm:$0xf0]
        %v2969 = vlaneseq
        %v2970 = vshrl.u32 %v2969, 7
        %v2971 = vsub.s32 0, %v2970
        %v2972 = vrot.slane %v2965, %v2971
        %v2973 = vlaneseq
        %v2974 = vshrl.u32 %v2973, 7
        %v2975 = vsub.s32 1, %v2974
        %v2976 = vrot.slane %v2965, %v2975
        %v2979 = vmul.f32 %v2966, %v2972
        %v2980 = vmul.f32 %v2967, %v2976
        %v2983 = vrot.slane %v2979, 4
        %v2984 = vrot.slane %v2980, 4
        %v2987 = vadd.f32 %v2960, %v2983
        %v2988 = vadd.f32 %v2961, %v2984
        %v2989 = vpack.c.bf16 %v2987, %v2987
        %v2990 = vpack.c.bf16 %v2988, %v2988
        %v2993 = vunpack.c.l.b16 %v2989
        %v2994 = vunpack.c.l.b16 %v2990
        %v2995 = vpack.c.b16 %v2994, %v2993
        %2997 = vst [vmem:[#allocation3 + $0x10] sm:$0x33] %v2995
        %s2998 = scalar_lea.vmem %s217, 5
        %v2999 = vld [vmem:[%s2998] ss:$8 sm:$0x3]
        %s3000 = scalar_lea.vmem %s217, 22
        %v3001 = vld [vmem:[%s3000] ss:$8 sm:$0x3]
        %v3003 = vlaneseq
        %v3004 = vshrl.u32 %v3003, 7
        %v3005 = vsub.s32 0, %v3004
        %v3006 = vrot.slane %v2999, %v3005
        %v3007 = vlaneseq
        %v3008 = vshrl.u32 %v3007, 7
        %v3009 = vsub.s32 1, %v3008
        %v3010 = vrot.slane %v2999, %v3009
        %v3013 = vsub.f32 %v3006, %v224
        %v3014 = vsub.f32 %v3010, %v224
        %v3015 = vsub.f32 %v3006, %v225
        %v3016 = vsub.f32 %v3010, %v225
        %v3017 = vand.u32 2147483647, %v3013
        %v3018 = vand.u32 2147483647, %v3014
        %v3019 = vand.u32 2147483647, %v3015
        %v3020 = vand.u32 2147483647, %v3016
        %v3021 = vsub.f32 1.0, %v3017
        %v3022 = vsub.f32 1.0, %v3018
        %v3023 = vsub.f32 1.0, %v3019
        %v3024 = vsub.f32 1.0, %v3020
        %v3025 = vmax.f32 %v3021, 0.0
        %v3026 = vmax.f32 %v3022, 0.0
        %v3027 = vmax.f32 %v3023, 0.0
        %v3028 = vmax.f32 %v3024, 0.0
        %v3029 = vpack.c.bf16 %v3027, %v3025
        %v3030 = vpack.c.bf16 %v3028, %v3026
        %v3031 = vld [vmem:[%s208] sm:$0xf]
        %v3032 = vld [vmem:[%s208 + $0x4] sm:$0xf]
        %v3033 = vld [vmem:[%s208 + $0x8] sm:$0xf]
        %v3034 = vld [vmem:[%s208 + $0xc] sm:$0xf]
        %v3035 = vld [vmem:[%s208 + $0x10] sm:$0xf]
        %v3036 = vld [vmem:[%s208 + $0x14] sm:$0xf]
        %v3037 = vld [vmem:[%s208 + $0x18] sm:$0xf]
        %v3038 = vld [vmem:[%s208 + $0x1c] sm:$0xf]
        %v3047 = vunpack.c.l.b16 %v3031
        %v3048 = vunpack.c.l.b16 %v3032
        %v3049 = vunpack.c.l.b16 %v3033
        %v3050 = vunpack.c.l.b16 %v3034
        %v3051 = vunpack.c.l.b16 %v3035
        %v3052 = vunpack.c.l.b16 %v3036
        %v3053 = vunpack.c.l.b16 %v3037
        %v3054 = vunpack.c.l.b16 %v3038
        %v3055 = vpack.c.b16 %v3048, %v3047
        %v3056 = vpack.c.b16 %v3050, %v3049
        %v3057 = vpack.c.b16 %v3052, %v3051
        %v3058 = vpack.c.b16 %v3054, %v3053
        %v3060 = vsel %vm286, %v3055, 0
        %v3063 = vsel %vm286, %v3056, 0
        %v3066 = vsel %vm286, %v3057, 0
        %v3069 = vsel %vm286, %v3058, 0
        %3071 = vmatprep.subr.bf16.mxu0 %v3030
        %3072 = vmatpush1.bf16.msra.mxu0 %v3029
        %3073 = vmatprep.subr.bf16.mxu0 0
        %3074 = vmatpush1.bf16.msra.mxu0 0
        %3075 = vmatprep.subr.bf16.mxu0 0
        %3076 = vmatpush1.bf16.msra.mxu0 0
        %3077 = vmatprep.subr.bf16.mxu0 0
        %3078 = vmatpush1.bf16.msra.mxu0 0
        %3079 = vmatprep.subr.bf16.mxu0 0
        %3080 = vmatpush1.bf16.msra.mxu0 0
        %3081 = vmatprep.subr.bf16.mxu0 0
        %3082 = vmatpush1.bf16.msra.mxu0 0
        %3083 = vmatprep.subr.bf16.mxu0 0
        %3084 = vmatpush1.bf16.msra.mxu0 0
        %3085 = vmatprep.subr.bf16.mxu0 0
        %3086 = vmatpush1.bf16.msra.mxu0 0
        %3087 = vmatprep.subr.bf16.mxu0 0
        %3088 = vmatpush1.bf16.msra.mxu0 0
        %3089 = vmatprep.subr.bf16.mxu0 0
        %3090 = vmatpush1.bf16.msra.mxu0 0
        %3091 = vmatprep.subr.bf16.mxu0 0
        %3092 = vmatpush1.bf16.msra.mxu0 0
        %3093 = vmatprep.subr.bf16.mxu0 0
        %3094 = vmatpush1.bf16.msra.mxu0 0
        %3095 = vmatprep.subr.bf16.mxu0 0
        %3096 = vmatpush1.bf16.msra.mxu0 0
        %3097 = vmatprep.subr.bf16.mxu0 0
        %3098 = vmatpush1.bf16.msra.mxu0 0
        %3099 = vmatprep.subr.bf16.mxu0 0
        %3100 = vmatpush1.bf16.msra.mxu0 0
        %3101 = vmatprep.subr.bf16.mxu0 0
        %3102 = vmatpush1.bf16.msra.mxu0 0
        %3103 = vmatprep.mubr.bf16.mxu0 0
        %3104 = vmatmul.mubr.bf16.gmra.mrb[0].mxu0 %v3060
        %v3105 = vpop.f32.mrb[0].mxu0
        %v3106 = vadd.f32 0.0, %v3105
        %v3107 = vpop.f32.mrb[0].mxu0
        %v3108 = vadd.f32 0.0, %v3107
        %v3109 = vpop.f32.mrb[0].mxu0
        %v3110 = vadd.f32 0.0, %v3109
        %v3111 = vpop.f32.mrb[0].mxu0
        %v3112 = vadd.f32 0.0, %v3111
        %3113 = vmatprep.mubr.bf16.mxu0 0
        %3114 = vmatmul.mubr.bf16.gmra.mrb[0].mxu0 %v3063
        %v3115 = vpop.f32.mrb[0].mxu0
        %v3116 = vadd.f32 0.0, %v3115
        %v3117 = vpop.f32.mrb[0].mxu0
        %v3118 = vadd.f32 0.0, %v3117
        %v3119 = vpop.f32.mrb[0].mxu0
        %v3120 = vadd.f32 0.0, %v3119
        %v3121 = vpop.f32.mrb[0].mxu0
        %v3122 = vadd.f32 0.0, %v3121
        %3123 = vmatprep.mubr.bf16.mxu0 0
        %3124 = vmatmul.mubr.bf16.gmra.mrb[0].mxu0 %v3066
        %v3125 = vpop.f32.mrb[0].mxu0
        %v3126 = vadd.f32 0.0, %v3125
        %v3127 = vpop.f32.mrb[0].mxu0
        %v3128 = vadd.f32 0.0, %v3127
        %v3129 = vpop.f32.mrb[0].mxu0
        %v3130 = vadd.f32 0.0, %v3129
        %v3131 = vpop.f32.mrb[0].mxu0
        %v3132 = vadd.f32 0.0, %v3131
        %3133 = vmatprep.mubr.bf16.mxu0 0
        %3134 = vmatmul.mubr.bf16.gmra.mrb[0].mxu0 %v3069
        %v3135 = vpop.f32.mrb[0].mxu0
        %v3136 = vadd.f32 0.0, %v3135
        %v3137 = vpop.f32.mrb[0].mxu0
        %v3138 = vadd.f32 0.0, %v3137
        %v3139 = vpop.f32.mrb[0].mxu0
        %v3140 = vadd.f32 0.0, %v3139
        %v3141 = vpop.f32.mrb[0].mxu0
        %v3142 = vadd.f32 0.0, %v3141
        %3143 = vdwg.mxu0
        %3144 = vst [vmem:[#allocation2] sm:$0xff] %v3106
        %3145 = vst [vmem:[#allocation2 + $0x8] sm:$0xff] %v3108
        %3146 = vst [vmem:[#allocation2 + $0x10] sm:$0xff] %v3110
        %3147 = vst [vmem:[#allocation2 + $0x18] sm:$0xff] %v3112
        %3148 = vst [vmem:[#allocation2 + $0x20] sm:$0xff] %v3116
        %3149 = vst [vmem:[#allocation2 + $0x28] sm:$0xff] %v3118
        %3150 = vst [vmem:[#allocation2 + $0x30] sm:$0xff] %v3120
        %3151 = vst [vmem:[#allocation2 + $0x38] sm:$0xff] %v3122
        %3152 = vst [vmem:[#allocation2 + $0x40] sm:$0xff] %v3126
        %3153 = vst [vmem:[#allocation2 + $0x48] sm:$0xff] %v3128
        %3154 = vst [vmem:[#allocation2 + $0x50] sm:$0xff] %v3130
        %3155 = vst [vmem:[#allocation2 + $0x58] sm:$0xff] %v3132
        %3156 = vst [vmem:[#allocation2 + $0x60] sm:$0xff] %v3136
        %3157 = vst [vmem:[#allocation2 + $0x68] sm:$0xff] %v3138
        %3158 = vst [vmem:[#allocation2 + $0x70] sm:$0xff] %v3140
        %3159 = vst [vmem:[#allocation2 + $0x78] sm:$0xff] %v3142
        %v3160 = vand.u32 2147483647, %v3001
        %v3161 = vsub.f32 1.0, %v3160
        %v3162 = vmax.f32 %v3161, 0.0
        %v3163 = vld [vmem:[#allocation2] sm:$0xf]
        %v3164 = vld [vmem:[#allocation2 + $0x8] sm:$0xf]
        %v3166 = vlaneseq
        %v3167 = vshrl.u32 %v3166, 7
        %v3168 = vsub.s32 0, %v3167
        %v3169 = vrot.slane %v3162, %v3168
        %v3170 = vlaneseq
        %v3171 = vshrl.u32 %v3170, 7
        %v3172 = vsub.s32 1, %v3171
        %v3173 = vrot.slane %v3162, %v3172
        %v3176 = vmul.f32 %v3163, %v3169
        %v3177 = vmul.f32 %v3164, %v3173
        %v3178 = vadd.f32 %v3176, 0.0
        %v3179 = vadd.f32 %v3177, 0.0
        %v3180 = vsub.f32 %v3001, 1.0
        %v3181 = vand.u32 2147483647, %v3180
        %v3182 = vsub.f32 1.0, %v3181
        %v3183 = vmax.f32 %v3182, 0.0
        %v3184 = vld [vmem:[#allocation2] sm:$0xf0]
        %v3185 = vld [vmem:[#allocation2 + $0x8] sm:$0xf0]
        %v3187 = vlaneseq
        %v3188 = vshrl.u32 %v3187, 7
        %v3189 = vsub.s32 0, %v3188
        %v3190 = vrot.slane %v3183, %v3189
        %v3191 = vlaneseq
        %v3192 = vshrl.u32 %v3191, 7
        %v3193 = vsub.s32 1, %v3192
        %v3194 = vrot.slane %v3183, %v3193
        %v3197 = vmul.f32 %v3184, %v3190
        %v3198 = vmul.f32 %v3185, %v3194
        %v3201 = vrot.slane %v3197, 4
        %v3202 = vrot.slane %v3198, 4
        %v3205 = vadd.f32 %v3178, %v3201
        %v3206 = vadd.f32 %v3179, %v3202
        %v3207 = vsub.f32 %v3001, 2.0
        %v3208 = vand.u32 2147483647, %v3207
        %v3209 = vsub.f32 1.0, %v3208
        %v3210 = vmax.f32 %v3209, 0.0
        %v3211 = vld [vmem:[#allocation2 + $0x10] sm:$0xf]
        %v3212 = vld [vmem:[#allocation2 + $0x18] sm:$0xf]
        %v3214 = vlaneseq
        %v3215 = vshrl.u32 %v3214, 7
        %v3216 = vsub.s32 0, %v3215
        %v3217 = vrot.slane %v3210, %v3216
        %v3218 = vlaneseq
        %v3219 = vshrl.u32 %v3218, 7
        %v3220 = vsub.s32 1, %v3219
        %v3221 = vrot.slane %v3210, %v3220
        %v3224 = vmul.f32 %v3211, %v3217
        %v3225 = vmul.f32 %v3212, %v3221
        %v3226 = vadd.f32 %v3205, %v3224
        %v3227 = vadd.f32 %v3206, %v3225
        %v3228 = vsub.f32 %v3001, 3.0
        %v3229 = vand.u32 2147483647, %v3228
        %v3230 = vsub.f32 1.0, %v3229
        %v3231 = vmax.f32 %v3230, 0.0
        %v3232 = vld [vmem:[#allocation2 + $0x10] sm:$0xf0]
        %v3233 = vld [vmem:[#allocation2 + $0x18] sm:$0xf0]
        %v3235 = vlaneseq
        %v3236 = vshrl.u32 %v3235, 7
        %v3237 = vsub.s32 0, %v3236
        %v3238 = vrot.slane %v3231, %v3237
        %v3239 = vlaneseq
        %v3240 = vshrl.u32 %v3239, 7
        %v3241 = vsub.s32 1, %v3240
        %v3242 = vrot.slane %v3231, %v3241
        %v3245 = vmul.f32 %v3232, %v3238
        %v3246 = vmul.f32 %v3233, %v3242
        %v3249 = vrot.slane %v3245, 4
        %v3250 = vrot.slane %v3246, 4
        %v3253 = vadd.f32 %v3226, %v3249
        %v3254 = vadd.f32 %v3227, %v3250
        %v3255 = vsub.f32 %v3001, 4.0
        %v3256 = vand.u32 2147483647, %v3255
        %v3257 = vsub.f32 1.0, %v3256
        %v3258 = vmax.f32 %v3257, 0.0
        %v3259 = vld [vmem:[#allocation2 + $0x20] sm:$0xf]
        %v3260 = vld [vmem:[#allocation2 + $0x28] sm:$0xf]
        %v3262 = vlaneseq
        %v3263 = vshrl.u32 %v3262, 7
        %v3264 = vsub.s32 0, %v3263
        %v3265 = vrot.slane %v3258, %v3264
        %v3266 = vlaneseq
        %v3267 = vshrl.u32 %v3266, 7
        %v3268 = vsub.s32 1, %v3267
        %v3269 = vrot.slane %v3258, %v3268
        %v3272 = vmul.f32 %v3259, %v3265
        %v3273 = vmul.f32 %v3260, %v3269
        %v3274 = vadd.f32 %v3253, %v3272
        %v3275 = vadd.f32 %v3254, %v3273
        %v3276 = vsub.f32 %v3001, 5.0
        %v3277 = vand.u32 2147483647, %v3276
        %v3278 = vsub.f32 1.0, %v3277
        %v3279 = vmax.f32 %v3278, 0.0
        %v3280 = vld [vmem:[#allocation2 + $0x20] sm:$0xf0]
        %v3281 = vld [vmem:[#allocation2 + $0x28] sm:$0xf0]
        %v3283 = vlaneseq
        %v3284 = vshrl.u32 %v3283, 7
        %v3285 = vsub.s32 0, %v3284
        %v3286 = vrot.slane %v3279, %v3285
        %v3287 = vlaneseq
        %v3288 = vshrl.u32 %v3287, 7
        %v3289 = vsub.s32 1, %v3288
        %v3290 = vrot.slane %v3279, %v3289
        %v3293 = vmul.f32 %v3280, %v3286
        %v3294 = vmul.f32 %v3281, %v3290
        %v3297 = vrot.slane %v3293, 4
        %v3298 = vrot.slane %v3294, 4
        %v3301 = vadd.f32 %v3274, %v3297
        %v3302 = vadd.f32 %v3275, %v3298
        %v3303 = vsub.f32 %v3001, 6.0
        %v3304 = vand.u32 2147483647, %v3303
        %v3305 = vsub.f32 1.0, %v3304
        %v3306 = vmax.f32 %v3305, 0.0
        %v3307 = vld [vmem:[#allocation2 + $0x30] sm:$0xf]
        %v3308 = vld [vmem:[#allocation2 + $0x38] sm:$0xf]
        %v3310 = vlaneseq
        %v3311 = vshrl.u32 %v3310, 7
        %v3312 = vsub.s32 0, %v3311
        %v3313 = vrot.slane %v3306, %v3312
        %v3314 = vlaneseq
        %v3315 = vshrl.u32 %v3314, 7
        %v3316 = vsub.s32 1, %v3315
        %v3317 = vrot.slane %v3306, %v3316
        %v3320 = vmul.f32 %v3307, %v3313
        %v3321 = vmul.f32 %v3308, %v3317
        %v3322 = vadd.f32 %v3301, %v3320
        %v3323 = vadd.f32 %v3302, %v3321
        %v3324 = vsub.f32 %v3001, 7.0
        %v3325 = vand.u32 2147483647, %v3324
        %v3326 = vsub.f32 1.0, %v3325
        %v3327 = vmax.f32 %v3326, 0.0
        %v3328 = vld [vmem:[#allocation2 + $0x30] sm:$0xf0]
        %v3329 = vld [vmem:[#allocation2 + $0x38] sm:$0xf0]
        %v3331 = vlaneseq
        %v3332 = vshrl.u32 %v3331, 7
        %v3333 = vsub.s32 0, %v3332
        %v3334 = vrot.slane %v3327, %v3333
        %v3335 = vlaneseq
        %v3336 = vshrl.u32 %v3335, 7
        %v3337 = vsub.s32 1, %v3336
        %v3338 = vrot.slane %v3327, %v3337
        %v3341 = vmul.f32 %v3328, %v3334
        %v3342 = vmul.f32 %v3329, %v3338
        %v3345 = vrot.slane %v3341, 4
        %v3346 = vrot.slane %v3342, 4
        %v3349 = vadd.f32 %v3322, %v3345
        %v3350 = vadd.f32 %v3323, %v3346
        %v3351 = vsub.f32 %v3001, 8.0
        %v3352 = vand.u32 2147483647, %v3351
        %v3353 = vsub.f32 1.0, %v3352
        %v3354 = vmax.f32 %v3353, 0.0
        %v3355 = vld [vmem:[#allocation2 + $0x40] sm:$0xf]
        %v3356 = vld [vmem:[#allocation2 + $0x48] sm:$0xf]
        %v3358 = vlaneseq
        %v3359 = vshrl.u32 %v3358, 7
        %v3360 = vsub.s32 0, %v3359
        %v3361 = vrot.slane %v3354, %v3360
        %v3362 = vlaneseq
        %v3363 = vshrl.u32 %v3362, 7
        %v3364 = vsub.s32 1, %v3363
        %v3365 = vrot.slane %v3354, %v3364
        %v3368 = vmul.f32 %v3355, %v3361
        %v3369 = vmul.f32 %v3356, %v3365
        %v3370 = vadd.f32 %v3349, %v3368
        %v3371 = vadd.f32 %v3350, %v3369
        %v3372 = vsub.f32 %v3001, 9.0
        %v3373 = vand.u32 2147483647, %v3372
        %v3374 = vsub.f32 1.0, %v3373
        %v3375 = vmax.f32 %v3374, 0.0
        %v3376 = vld [vmem:[#allocation2 + $0x40] sm:$0xf0]
        %v3377 = vld [vmem:[#allocation2 + $0x48] sm:$0xf0]
        %v3379 = vlaneseq
        %v3380 = vshrl.u32 %v3379, 7
        %v3381 = vsub.s32 0, %v3380
        %v3382 = vrot.slane %v3375, %v3381
        %v3383 = vlaneseq
        %v3384 = vshrl.u32 %v3383, 7
        %v3385 = vsub.s32 1, %v3384
        %v3386 = vrot.slane %v3375, %v3385
        %v3389 = vmul.f32 %v3376, %v3382
        %v3390 = vmul.f32 %v3377, %v3386
        %v3393 = vrot.slane %v3389, 4
        %v3394 = vrot.slane %v3390, 4
        %v3397 = vadd.f32 %v3370, %v3393
        %v3398 = vadd.f32 %v3371, %v3394
        %v3399 = vsub.f32 %v3001, 10.0
        %v3400 = vand.u32 2147483647, %v3399
        %v3401 = vsub.f32 1.0, %v3400
        %v3402 = vmax.f32 %v3401, 0.0
        %v3403 = vld [vmem:[#allocation2 + $0x50] sm:$0xf]
        %v3404 = vld [vmem:[#allocation2 + $0x58] sm:$0xf]
        %v3406 = vlaneseq
        %v3407 = vshrl.u32 %v3406, 7
        %v3408 = vsub.s32 0, %v3407
        %v3409 = vrot.slane %v3402, %v3408
        %v3410 = vlaneseq
        %v3411 = vshrl.u32 %v3410, 7
        %v3412 = vsub.s32 1, %v3411
        %v3413 = vrot.slane %v3402, %v3412
        %v3416 = vmul.f32 %v3403, %v3409
        %v3417 = vmul.f32 %v3404, %v3413
        %v3418 = vadd.f32 %v3397, %v3416
        %v3419 = vadd.f32 %v3398, %v3417
        %v3420 = vsub.f32 %v3001, 11.0
        %v3421 = vand.u32 2147483647, %v3420
        %v3422 = vsub.f32 1.0, %v3421
        %v3423 = vmax.f32 %v3422, 0.0
        %v3424 = vld [vmem:[#allocation2 + $0x50] sm:$0xf0]
        %v3425 = vld [vmem:[#allocation2 + $0x58] sm:$0xf0]
        %v3427 = vlaneseq
        %v3428 = vshrl.u32 %v3427, 7
        %v3429 = vsub.s32 0, %v3428
        %v3430 = vrot.slane %v3423, %v3429
        %v3431 = vlaneseq
        %v3432 = vshrl.u32 %v3431, 7
        %v3433 = vsub.s32 1, %v3432
        %v3434 = vrot.slane %v3423, %v3433
        %v3437 = vmul.f32 %v3424, %v3430
        %v3438 = vmul.f32 %v3425, %v3434
        %v3441 = vrot.slane %v3437, 4
        %v3442 = vrot.slane %v3438, 4
        %v3445 = vadd.f32 %v3418, %v3441
        %v3446 = vadd.f32 %v3419, %v3442
        %v3447 = vsub.f32 %v3001, 12.0
        %v3448 = vand.u32 2147483647, %v3447
        %v3449 = vsub.f32 1.0, %v3448
        %v3450 = vmax.f32 %v3449, 0.0
        %v3451 = vld [vmem:[#allocation2 + $0x60] sm:$0xf]
        %v3452 = vld [vmem:[#allocation2 + $0x68] sm:$0xf]
        %v3454 = vlaneseq
        %v3455 = vshrl.u32 %v3454, 7
        %v3456 = vsub.s32 0, %v3455
        %v3457 = vrot.slane %v3450, %v3456
        %v3458 = vlaneseq
        %v3459 = vshrl.u32 %v3458, 7
        %v3460 = vsub.s32 1, %v3459
        %v3461 = vrot.slane %v3450, %v3460
        %v3464 = vmul.f32 %v3451, %v3457
        %v3465 = vmul.f32 %v3452, %v3461
        %v3466 = vadd.f32 %v3445, %v3464
        %v3467 = vadd.f32 %v3446, %v3465
        %v3468 = vsub.f32 %v3001, 13.0
        %v3469 = vand.u32 2147483647, %v3468
        %v3470 = vsub.f32 1.0, %v3469
        %v3471 = vmax.f32 %v3470, 0.0
        %v3472 = vld [vmem:[#allocation2 + $0x60] sm:$0xf0]
        %v3473 = vld [vmem:[#allocation2 + $0x68] sm:$0xf0]
        %v3475 = vlaneseq
        %v3476 = vshrl.u32 %v3475, 7
        %v3477 = vsub.s32 0, %v3476
        %v3478 = vrot.slane %v3471, %v3477
        %v3479 = vlaneseq
        %v3480 = vshrl.u32 %v3479, 7
        %v3481 = vsub.s32 1, %v3480
        %v3482 = vrot.slane %v3471, %v3481
        %v3485 = vmul.f32 %v3472, %v3478
        %v3486 = vmul.f32 %v3473, %v3482
        %v3489 = vrot.slane %v3485, 4
        %v3490 = vrot.slane %v3486, 4
        %v3493 = vadd.f32 %v3466, %v3489
        %v3494 = vadd.f32 %v3467, %v3490
        %v3495 = vsub.f32 %v3001, 14.0
        %v3496 = vand.u32 2147483647, %v3495
        %v3497 = vsub.f32 1.0, %v3496
        %v3498 = vmax.f32 %v3497, 0.0
        %v3499 = vld [vmem:[#allocation2 + $0x70] sm:$0xf]
        %v3500 = vld [vmem:[#allocation2 + $0x78] sm:$0xf]
        %v3502 = vlaneseq
        %v3503 = vshrl.u32 %v3502, 7
        %v3504 = vsub.s32 0, %v3503
        %v3505 = vrot.slane %v3498, %v3504
        %v3506 = vlaneseq
        %v3507 = vshrl.u32 %v3506, 7
        %v3508 = vsub.s32 1, %v3507
        %v3509 = vrot.slane %v3498, %v3508
        %v3512 = vmul.f32 %v3499, %v3505
        %v3513 = vmul.f32 %v3500, %v3509
        %v3514 = vadd.f32 %v3493, %v3512
        %v3515 = vadd.f32 %v3494, %v3513
        %v3516 = vsub.f32 %v3001, 15.0
        %v3517 = vand.u32 2147483647, %v3516
        %v3518 = vsub.f32 1.0, %v3517
        %v3519 = vmax.f32 %v3518, 0.0
        %v3520 = vld [vmem:[#allocation2 + $0x70] sm:$0xf0]
        %v3521 = vld [vmem:[#allocation2 + $0x78] sm:$0xf0]
        %v3523 = vlaneseq
        %v3524 = vshrl.u32 %v3523, 7
        %v3525 = vsub.s32 0, %v3524
        %v3526 = vrot.slane %v3519, %v3525
        %v3527 = vlaneseq
        %v3528 = vshrl.u32 %v3527, 7
        %v3529 = vsub.s32 1, %v3528
        %v3530 = vrot.slane %v3519, %v3529
        %v3533 = vmul.f32 %v3520, %v3526
        %v3534 = vmul.f32 %v3521, %v3530
        %v3537 = vrot.slane %v3533, 4
        %v3538 = vrot.slane %v3534, 4
        %v3541 = vadd.f32 %v3514, %v3537
        %v3542 = vadd.f32 %v3515, %v3538
        %v3543 = vpack.c.bf16 %v3541, %v3541
        %v3544 = vpack.c.bf16 %v3542, %v3542
        %v3547 = vunpack.c.l.b16 %v3543
        %v3548 = vunpack.c.l.b16 %v3544
        %v3549 = vpack.c.b16 %v3548, %v3547
        %v3550 = vrot.slane %v3549, 6
        %3552 = vst [vmem:[#allocation3 + $0x10] sm:$0xcc] %v3550
        %s3553 = scalar_lea.vmem %s217, 6
        %v3554 = vld [vmem:[%s3553] ss:$8 sm:$0x3]
        %s3555 = scalar_lea.vmem %s217, 23
        %v3556 = vld [vmem:[%s3555] ss:$8 sm:$0x3]
        %v3558 = vlaneseq
        %v3559 = vshrl.u32 %v3558, 7
        %v3560 = vsub.s32 0, %v3559
        %v3561 = vrot.slane %v3554, %v3560
        %v3562 = vlaneseq
        %v3563 = vshrl.u32 %v3562, 7
        %v3564 = vsub.s32 1, %v3563
        %v3565 = vrot.slane %v3554, %v3564
        %v3568 = vsub.f32 %v3561, %v224
        %v3569 = vsub.f32 %v3565, %v224
        %v3570 = vsub.f32 %v3561, %v225
        %v3571 = vsub.f32 %v3565, %v225
        %v3572 = vand.u32 2147483647, %v3568
        %v3573 = vand.u32 2147483647, %v3569
        %v3574 = vand.u32 2147483647, %v3570
        %v3575 = vand.u32 2147483647, %v3571
        %v3576 = vsub.f32 1.0, %v3572
        %v3577 = vsub.f32 1.0, %v3573
        %v3578 = vsub.f32 1.0, %v3574
        %v3579 = vsub.f32 1.0, %v3575
        %v3580 = vmax.f32 %v3576, 0.0
        %v3581 = vmax.f32 %v3577, 0.0
        %v3582 = vmax.f32 %v3578, 0.0
        %v3583 = vmax.f32 %v3579, 0.0
        %v3584 = vpack.c.bf16 %v3582, %v3580
        %v3585 = vpack.c.bf16 %v3583, %v3581
        %v3586 = vld [vmem:[%s208] sm:$0xf]
        %v3587 = vld [vmem:[%s208 + $0x4] sm:$0xf]
        %v3588 = vld [vmem:[%s208 + $0x8] sm:$0xf]
        %v3589 = vld [vmem:[%s208 + $0xc] sm:$0xf]
        %v3590 = vld [vmem:[%s208 + $0x10] sm:$0xf]
        %v3591 = vld [vmem:[%s208 + $0x14] sm:$0xf]
        %v3592 = vld [vmem:[%s208 + $0x18] sm:$0xf]
        %v3593 = vld [vmem:[%s208 + $0x1c] sm:$0xf]
        %v3602 = vunpack.c.l.b16 %v3586
        %v3603 = vunpack.c.l.b16 %v3587
        %v3604 = vunpack.c.l.b16 %v3588
        %v3605 = vunpack.c.l.b16 %v3589
        %v3606 = vunpack.c.l.b16 %v3590
        %v3607 = vunpack.c.l.b16 %v3591
        %v3608 = vunpack.c.l.b16 %v3592
        %v3609 = vunpack.c.l.b16 %v3593
        %v3610 = vpack.c.b16 %v3603, %v3602
        %v3611 = vpack.c.b16 %v3605, %v3604
        %v3612 = vpack.c.b16 %v3607, %v3606
        %v3613 = vpack.c.b16 %v3609, %v3608
        %v3615 = vsel %vm286, %v3610, 0
        %v3618 = vsel %vm286, %v3611, 0
        %v3621 = vsel %vm286, %v3612, 0
        %v3624 = vsel %vm286, %v3613, 0
        %3626 = vmatprep.subr.bf16.mxu0 %v3585
        %3627 = vmatpush1.bf16.msra.mxu0 %v3584
        %3628 = vmatprep.subr.bf16.mxu0 0
        %3629 = vmatpush1.bf16.msra.mxu0 0
        %3630 = vmatprep.subr.bf16.mxu0 0
        %3631 = vmatpush1.bf16.msra.mxu0 0
        %3632 = vmatprep.subr.bf16.mxu0 0
        %3633 = vmatpush1.bf16.msra.mxu0 0
        %3634 = vmatprep.subr.bf16.mxu0 0
        %3635 = vmatpush1.bf16.msra.mxu0 0
        %3636 = vmatprep.subr.bf16.mxu0 0
        %3637 = vmatpush1.bf16.msra.mxu0 0
        %3638 = vmatprep.subr.bf16.mxu0 0
        %3639 = vmatpush1.bf16.msra.mxu0 0
        %3640 = vmatprep.subr.bf16.mxu0 0
        %3641 = vmatpush1.bf16.msra.mxu0 0
        %3642 = vmatprep.subr.bf16.mxu0 0
        %3643 = vmatpush1.bf16.msra.mxu0 0
        %3644 = vmatprep.subr.bf16.mxu0 0
        %3645 = vmatpush1.bf16.msra.mxu0 0
        %3646 = vmatprep.subr.bf16.mxu0 0
        %3647 = vmatpush1.bf16.msra.mxu0 0
        %3648 = vmatprep.subr.bf16.mxu0 0
        %3649 = vmatpush1.bf16.msra.mxu0 0
        %3650 = vmatprep.subr.bf16.mxu0 0
        %3651 = vmatpush1.bf16.msra.mxu0 0
        %3652 = vmatprep.subr.bf16.mxu0 0
        %3653 = vmatpush1.bf16.msra.mxu0 0
        %3654 = vmatprep.subr.bf16.mxu0 0
        %3655 = vmatpush1.bf16.msra.mxu0 0
        %3656 = vmatprep.subr.bf16.mxu0 0
        %3657 = vmatpush1.bf16.msra.mxu0 0
        %3658 = vmatprep.mubr.bf16.mxu0 0
        %3659 = vmatmul.mubr.bf16.gmra.mrb[0].mxu0 %v3615
        %v3660 = vpop.f32.mrb[0].mxu0
        %v3661 = vadd.f32 0.0, %v3660
        %v3662 = vpop.f32.mrb[0].mxu0
        %v3663 = vadd.f32 0.0, %v3662
        %v3664 = vpop.f32.mrb[0].mxu0
        %v3665 = vadd.f32 0.0, %v3664
        %v3666 = vpop.f32.mrb[0].mxu0
        %v3667 = vadd.f32 0.0, %v3666
        %3668 = vmatprep.mubr.bf16.mxu0 0
        %3669 = vmatmul.mubr.bf16.gmra.mrb[0].mxu0 %v3618
        %v3670 = vpop.f32.mrb[0].mxu0
        %v3671 = vadd.f32 0.0, %v3670
        %v3672 = vpop.f32.mrb[0].mxu0
        %v3673 = vadd.f32 0.0, %v3672
        %v3674 = vpop.f32.mrb[0].mxu0
        %v3675 = vadd.f32 0.0, %v3674
        %v3676 = vpop.f32.mrb[0].mxu0
        %v3677 = vadd.f32 0.0, %v3676
        %3678 = vmatprep.mubr.bf16.mxu0 0
        %3679 = vmatmul.mubr.bf16.gmra.mrb[0].mxu0 %v3621
        %v3680 = vpop.f32.mrb[0].mxu0
        %v3681 = vadd.f32 0.0, %v3680
        %v3682 = vpop.f32.mrb[0].mxu0
        %v3683 = vadd.f32 0.0, %v3682
        %v3684 = vpop.f32.mrb[0].mxu0
        %v3685 = vadd.f32 0.0, %v3684
        %v3686 = vpop.f32.mrb[0].mxu0
        %v3687 = vadd.f32 0.0, %v3686
        %3688 = vmatprep.mubr.bf16.mxu0 0
        %3689 = vmatmul.mubr.bf16.gmra.mrb[0].mxu0 %v3624
        %v3690 = vpop.f32.mrb[0].mxu0
        %v3691 = vadd.f32 0.0, %v3690
        %v3692 = vpop.f32.mrb[0].mxu0
        %v3693 = vadd.f32 0.0, %v3692
        %v3694 = vpop.f32.mrb[0].mxu0
        %v3695 = vadd.f32 0.0, %v3694
        %v3696 = vpop.f32.mrb[0].mxu0
        %v3697 = vadd.f32 0.0, %v3696
        %3698 = vdwg.mxu0
        %3699 = vst [vmem:[#allocation2] sm:$0xff] %v3661
        %3700 = vst [vmem:[#allocation2 + $0x8] sm:$0xff] %v3663
        %3701 = vst [vmem:[#allocation2 + $0x10] sm:$0xff] %v3665
        %3702 = vst [vmem:[#allocation2 + $0x18] sm:$0xff] %v3667
        %3703 = vst [vmem:[#allocation2 + $0x20] sm:$0xff] %v3671
        %3704 = vst [vmem:[#allocation2 + $0x28] sm:$0xff] %v3673
        %3705 = vst [vmem:[#allocation2 + $0x30] sm:$0xff] %v3675
        %3706 = vst [vmem:[#allocation2 + $0x38] sm:$0xff] %v3677
        %3707 = vst [vmem:[#allocation2 + $0x40] sm:$0xff] %v3681
        %3708 = vst [vmem:[#allocation2 + $0x48] sm:$0xff] %v3683
        %3709 = vst [vmem:[#allocation2 + $0x50] sm:$0xff] %v3685
        %3710 = vst [vmem:[#allocation2 + $0x58] sm:$0xff] %v3687
        %3711 = vst [vmem:[#allocation2 + $0x60] sm:$0xff] %v3691
        %3712 = vst [vmem:[#allocation2 + $0x68] sm:$0xff] %v3693
        %3713 = vst [vmem:[#allocation2 + $0x70] sm:$0xff] %v3695
        %3714 = vst [vmem:[#allocation2 + $0x78] sm:$0xff] %v3697
        %v3715 = vand.u32 2147483647, %v3556
        %v3716 = vsub.f32 1.0, %v3715
        %v3717 = vmax.f32 %v3716, 0.0
        %v3718 = vld [vmem:[#allocation2] sm:$0xf]
        %v3719 = vld [vmem:[#allocation2 + $0x8] sm:$0xf]
        %v3721 = vlaneseq
        %v3722 = vshrl.u32 %v3721, 7
        %v3723 = vsub.s32 0, %v3722
        %v3724 = vrot.slane %v3717, %v3723
        %v3725 = vlaneseq
        %v3726 = vshrl.u32 %v3725, 7
        %v3727 = vsub.s32 1, %v3726
        %v3728 = vrot.slane %v3717, %v3727
        %v3731 = vmul.f32 %v3718, %v3724
        %v3732 = vmul.f32 %v3719, %v3728
        %v3733 = vadd.f32 %v3731, 0.0
        %v3734 = vadd.f32 %v3732, 0.0
        %v3735 = vsub.f32 %v3556, 1.0
        %v3736 = vand.u32 2147483647, %v3735
        %v3737 = vsub.f32 1.0, %v3736
        %v3738 = vmax.f32 %v3737, 0.0
        %v3739 = vld [vmem:[#allocation2] sm:$0xf0]
        %v3740 = vld [vmem:[#allocation2 + $0x8] sm:$0xf0]
        %v3742 = vlaneseq
        %v3743 = vshrl.u32 %v3742, 7
        %v3744 = vsub.s32 0, %v3743
        %v3745 = vrot.slane %v3738, %v3744
        %v3746 = vlaneseq
        %v3747 = vshrl.u32 %v3746, 7
        %v3748 = vsub.s32 1, %v3747
        %v3749 = vrot.slane %v3738, %v3748
        %v3752 = vmul.f32 %v3739, %v3745
        %v3753 = vmul.f32 %v3740, %v3749
        %v3756 = vrot.slane %v3752, 4
        %v3757 = vrot.slane %v3753, 4
        %v3760 = vadd.f32 %v3733, %v3756
        %v3761 = vadd.f32 %v3734, %v3757
        %v3762 = vsub.f32 %v3556, 2.0
        %v3763 = vand.u32 2147483647, %v3762
        %v3764 = vsub.f32 1.0, %v3763
        %v3765 = vmax.f32 %v3764, 0.0
        %v3766 = vld [vmem:[#allocation2 + $0x10] sm:$0xf]
        %v3767 = vld [vmem:[#allocation2 + $0x18] sm:$0xf]
        %v3769 = vlaneseq
        %v3770 = vshrl.u32 %v3769, 7
        %v3771 = vsub.s32 0, %v3770
        %v3772 = vrot.slane %v3765, %v3771
        %v3773 = vlaneseq
        %v3774 = vshrl.u32 %v3773, 7
        %v3775 = vsub.s32 1, %v3774
        %v3776 = vrot.slane %v3765, %v3775
        %v3779 = vmul.f32 %v3766, %v3772
        %v3780 = vmul.f32 %v3767, %v3776
        %v3781 = vadd.f32 %v3760, %v3779
        %v3782 = vadd.f32 %v3761, %v3780
        %v3783 = vsub.f32 %v3556, 3.0
        %v3784 = vand.u32 2147483647, %v3783
        %v3785 = vsub.f32 1.0, %v3784
        %v3786 = vmax.f32 %v3785, 0.0
        %v3787 = vld [vmem:[#allocation2 + $0x10] sm:$0xf0]
        %v3788 = vld [vmem:[#allocation2 + $0x18] sm:$0xf0]
        %v3790 = vlaneseq
        %v3791 = vshrl.u32 %v3790, 7
        %v3792 = vsub.s32 0, %v3791
        %v3793 = vrot.slane %v3786, %v3792
        %v3794 = vlaneseq
        %v3795 = vshrl.u32 %v3794, 7
        %v3796 = vsub.s32 1, %v3795
        %v3797 = vrot.slane %v3786, %v3796
        %v3800 = vmul.f32 %v3787, %v3793
        %v3801 = vmul.f32 %v3788, %v3797
        %v3804 = vrot.slane %v3800, 4
        %v3805 = vrot.slane %v3801, 4
        %v3808 = vadd.f32 %v3781, %v3804
        %v3809 = vadd.f32 %v3782, %v3805
        %v3810 = vsub.f32 %v3556, 4.0
        %v3811 = vand.u32 2147483647, %v3810
        %v3812 = vsub.f32 1.0, %v3811
        %v3813 = vmax.f32 %v3812, 0.0
        %v3814 = vld [vmem:[#allocation2 + $0x20] sm:$0xf]
        %v3815 = vld [vmem:[#allocation2 + $0x28] sm:$0xf]
        %v3817 = vlaneseq
        %v3818 = vshrl.u32 %v3817, 7
        %v3819 = vsub.s32 0, %v3818
        %v3820 = vrot.slane %v3813, %v3819
        %v3821 = vlaneseq
        %v3822 = vshrl.u32 %v3821, 7
        %v3823 = vsub.s32 1, %v3822
        %v3824 = vrot.slane %v3813, %v3823
        %v3827 = vmul.f32 %v3814, %v3820
        %v3828 = vmul.f32 %v3815, %v3824
        %v3829 = vadd.f32 %v3808, %v3827
        %v3830 = vadd.f32 %v3809, %v3828
        %v3831 = vsub.f32 %v3556, 5.0
        %v3832 = vand.u32 2147483647, %v3831
        %v3833 = vsub.f32 1.0, %v3832
        %v3834 = vmax.f32 %v3833, 0.0
        %v3835 = vld [vmem:[#allocation2 + $0x20] sm:$0xf0]
        %v3836 = vld [vmem:[#allocation2 + $0x28] sm:$0xf0]
        %v3838 = vlaneseq
        %v3839 = vshrl.u32 %v3838, 7
        %v3840 = vsub.s32 0, %v3839
        %v3841 = vrot.slane %v3834, %v3840
        %v3842 = vlaneseq
        %v3843 = vshrl.u32 %v3842, 7
        %v3844 = vsub.s32 1, %v3843
        %v3845 = vrot.slane %v3834, %v3844
        %v3848 = vmul.f32 %v3835, %v3841
        %v3849 = vmul.f32 %v3836, %v3845
        %v3852 = vrot.slane %v3848, 4
        %v3853 = vrot.slane %v3849, 4
        %v3856 = vadd.f32 %v3829, %v3852
        %v3857 = vadd.f32 %v3830, %v3853
        %v3858 = vsub.f32 %v3556, 6.0
        %v3859 = vand.u32 2147483647, %v3858
        %v3860 = vsub.f32 1.0, %v3859
        %v3861 = vmax.f32 %v3860, 0.0
        %v3862 = vld [vmem:[#allocation2 + $0x30] sm:$0xf]
        %v3863 = vld [vmem:[#allocation2 + $0x38] sm:$0xf]
        %v3865 = vlaneseq
        %v3866 = vshrl.u32 %v3865, 7
        %v3867 = vsub.s32 0, %v3866
        %v3868 = vrot.slane %v3861, %v3867
        %v3869 = vlaneseq
        %v3870 = vshrl.u32 %v3869, 7
        %v3871 = vsub.s32 1, %v3870
        %v3872 = vrot.slane %v3861, %v3871
        %v3875 = vmul.f32 %v3862, %v3868
        %v3876 = vmul.f32 %v3863, %v3872
        %v3877 = vadd.f32 %v3856, %v3875
        %v3878 = vadd.f32 %v3857, %v3876
        %v3879 = vsub.f32 %v3556, 7.0
        %v3880 = vand.u32 2147483647, %v3879
        %v3881 = vsub.f32 1.0, %v3880
        %v3882 = vmax.f32 %v3881, 0.0
        %v3883 = vld [vmem:[#allocation2 + $0x30] sm:$0xf0]
        %v3884 = vld [vmem:[#allocation2 + $0x38] sm:$0xf0]
        %v3886 = vlaneseq
        %v3887 = vshrl.u32 %v3886, 7
        %v3888 = vsub.s32 0, %v3887
        %v3889 = vrot.slane %v3882, %v3888
        %v3890 = vlaneseq
        %v3891 = vshrl.u32 %v3890, 7
        %v3892 = vsub.s32 1, %v3891
        %v3893 = vrot.slane %v3882, %v3892
        %v3896 = vmul.f32 %v3883, %v3889
        %v3897 = vmul.f32 %v3884, %v3893
        %v3900 = vrot.slane %v3896, 4
        %v3901 = vrot.slane %v3897, 4
        %v3904 = vadd.f32 %v3877, %v3900
        %v3905 = vadd.f32 %v3878, %v3901
        %v3906 = vsub.f32 %v3556, 8.0
        %v3907 = vand.u32 2147483647, %v3906
        %v3908 = vsub.f32 1.0, %v3907
        %v3909 = vmax.f32 %v3908, 0.0
        %v3910 = vld [vmem:[#allocation2 + $0x40] sm:$0xf]
        %v3911 = vld [vmem:[#allocation2 + $0x48] sm:$0xf]
        %v3913 = vlaneseq
        %v3914 = vshrl.u32 %v3913, 7
        %v3915 = vsub.s32 0, %v3914
        %v3916 = vrot.slane %v3909, %v3915
        %v3917 = vlaneseq
        %v3918 = vshrl.u32 %v3917, 7
        %v3919 = vsub.s32 1, %v3918
        %v3920 = vrot.slane %v3909, %v3919
        %v3923 = vmul.f32 %v3910, %v3916
        %v3924 = vmul.f32 %v3911, %v3920
        %v3925 = vadd.f32 %v3904, %v3923
        %v3926 = vadd.f32 %v3905, %v3924
        %v3927 = vsub.f32 %v3556, 9.0
        %v3928 = vand.u32 2147483647, %v3927
        %v3929 = vsub.f32 1.0, %v3928
        %v3930 = vmax.f32 %v3929, 0.0
        %v3931 = vld [vmem:[#allocation2 + $0x40] sm:$0xf0]
        %v3932 = vld [vmem:[#allocation2 + $0x48] sm:$0xf0]
        %v3934 = vlaneseq
        %v3935 = vshrl.u32 %v3934, 7
        %v3936 = vsub.s32 0, %v3935
        %v3937 = vrot.slane %v3930, %v3936
        %v3938 = vlaneseq
        %v3939 = vshrl.u32 %v3938, 7
        %v3940 = vsub.s32 1, %v3939
        %v3941 = vrot.slane %v3930, %v3940
        %v3944 = vmul.f32 %v3931, %v3937
        %v3945 = vmul.f32 %v3932, %v3941
        %v3948 = vrot.slane %v3944, 4
        %v3949 = vrot.slane %v3945, 4
        %v3952 = vadd.f32 %v3925, %v3948
        %v3953 = vadd.f32 %v3926, %v3949
        %v3954 = vsub.f32 %v3556, 10.0
        %v3955 = vand.u32 2147483647, %v3954
        %v3956 = vsub.f32 1.0, %v3955
        %v3957 = vmax.f32 %v3956, 0.0
        %v3958 = vld [vmem:[#allocation2 + $0x50] sm:$0xf]
        %v3959 = vld [vmem:[#allocation2 + $0x58] sm:$0xf]
        %v3961 = vlaneseq
        %v3962 = vshrl.u32 %v3961, 7
        %v3963 = vsub.s32 0, %v3962
        %v3964 = vrot.slane %v3957, %v3963
        %v3965 = vlaneseq
        %v3966 = vshrl.u32 %v3965, 7
        %v3967 = vsub.s32 1, %v3966
        %v3968 = vrot.slane %v3957, %v3967
        %v3971 = vmul.f32 %v3958, %v3964
        %v3972 = vmul.f32 %v3959, %v3968
        %v3973 = vadd.f32 %v3952, %v3971
        %v3974 = vadd.f32 %v3953, %v3972
        %v3975 = vsub.f32 %v3556, 11.0
        %v3976 = vand.u32 2147483647, %v3975
        %v3977 = vsub.f32 1.0, %v3976
        %v3978 = vmax.f32 %v3977, 0.0
        %v3979 = vld [vmem:[#allocation2 + $0x50] sm:$0xf0]
        %v3980 = vld [vmem:[#allocation2 + $0x58] sm:$0xf0]
        %v3982 = vlaneseq
        %v3983 = vshrl.u32 %v3982, 7
        %v3984 = vsub.s32 0, %v3983
        %v3985 = vrot.slane %v3978, %v3984
        %v3986 = vlaneseq
        %v3987 = vshrl.u32 %v3986, 7
        %v3988 = vsub.s32 1, %v3987
        %v3989 = vrot.slane %v3978, %v3988
        %v3992 = vmul.f32 %v3979, %v3985
        %v3993 = vmul.f32 %v3980, %v3989
        %v3996 = vrot.slane %v3992, 4
        %v3997 = vrot.slane %v3993, 4
        %v4000 = vadd.f32 %v3973, %v3996
        %v4001 = vadd.f32 %v3974, %v3997
        %v4002 = vsub.f32 %v3556, 12.0
        %v4003 = vand.u32 2147483647, %v4002
        %v4004 = vsub.f32 1.0, %v4003
        %v4005 = vmax.f32 %v4004, 0.0
        %v4006 = vld [vmem:[#allocation2 + $0x60] sm:$0xf]
        %v4007 = vld [vmem:[#allocation2 + $0x68] sm:$0xf]
        %v4009 = vlaneseq
        %v4010 = vshrl.u32 %v4009, 7
        %v4011 = vsub.s32 0, %v4010
        %v4012 = vrot.slane %v4005, %v4011
        %v4013 = vlaneseq
        %v4014 = vshrl.u32 %v4013, 7
        %v4015 = vsub.s32 1, %v4014
        %v4016 = vrot.slane %v4005, %v4015
        %v4019 = vmul.f32 %v4006, %v4012
        %v4020 = vmul.f32 %v4007, %v4016
        %v4021 = vadd.f32 %v4000, %v4019
        %v4022 = vadd.f32 %v4001, %v4020
        %v4023 = vsub.f32 %v3556, 13.0
        %v4024 = vand.u32 2147483647, %v4023
        %v4025 = vsub.f32 1.0, %v4024
        %v4026 = vmax.f32 %v4025, 0.0
        %v4027 = vld [vmem:[#allocation2 + $0x60] sm:$0xf0]
        %v4028 = vld [vmem:[#allocation2 + $0x68] sm:$0xf0]
        %v4030 = vlaneseq
        %v4031 = vshrl.u32 %v4030, 7
        %v4032 = vsub.s32 0, %v4031
        %v4033 = vrot.slane %v4026, %v4032
        %v4034 = vlaneseq
        %v4035 = vshrl.u32 %v4034, 7
        %v4036 = vsub.s32 1, %v4035
        %v4037 = vrot.slane %v4026, %v4036
        %v4040 = vmul.f32 %v4027, %v4033
        %v4041 = vmul.f32 %v4028, %v4037
        %v4044 = vrot.slane %v4040, 4
        %v4045 = vrot.slane %v4041, 4
        %v4048 = vadd.f32 %v4021, %v4044
        %v4049 = vadd.f32 %v4022, %v4045
        %v4050 = vsub.f32 %v3556, 14.0
        %v4051 = vand.u32 2147483647, %v4050
        %v4052 = vsub.f32 1.0, %v4051
        %v4053 = vmax.f32 %v4052, 0.0
        %v4054 = vld [vmem:[#allocation2 + $0x70] sm:$0xf]
        %v4055 = vld [vmem:[#allocation2 + $0x78] sm:$0xf]
        %v4057 = vlaneseq
        %v4058 = vshrl.u32 %v4057, 7
        %v4059 = vsub.s32 0, %v4058
        %v4060 = vrot.slane %v4053, %v4059
        %v4061 = vlaneseq
        %v4062 = vshrl.u32 %v4061, 7
        %v4063 = vsub.s32 1, %v4062
        %v4064 = vrot.slane %v4053, %v4063
        %v4067 = vmul.f32 %v4054, %v4060
        %v4068 = vmul.f32 %v4055, %v4064
        %v4069 = vadd.f32 %v4048, %v4067
        %v4070 = vadd.f32 %v4049, %v4068
        %v4071 = vsub.f32 %v3556, 15.0
        %v4072 = vand.u32 2147483647, %v4071
        %v4073 = vsub.f32 1.0, %v4072
        %v4074 = vmax.f32 %v4073, 0.0
        %v4075 = vld [vmem:[#allocation2 + $0x70] sm:$0xf0]
        %v4076 = vld [vmem:[#allocation2 + $0x78] sm:$0xf0]
        %v4078 = vlaneseq
        %v4079 = vshrl.u32 %v4078, 7
        %v4080 = vsub.s32 0, %v4079
        %v4081 = vrot.slane %v4074, %v4080
        %v4082 = vlaneseq
        %v4083 = vshrl.u32 %v4082, 7
        %v4084 = vsub.s32 1, %v4083
        %v4085 = vrot.slane %v4074, %v4084
        %v4088 = vmul.f32 %v4075, %v4081
        %v4089 = vmul.f32 %v4076, %v4085
        %v4092 = vrot.slane %v4088, 4
        %v4093 = vrot.slane %v4089, 4
        %v4096 = vadd.f32 %v4069, %v4092
        %v4097 = vadd.f32 %v4070, %v4093
        %v4098 = vpack.c.bf16 %v4096, %v4096
        %v4099 = vpack.c.bf16 %v4097, %v4097
        %v4102 = vunpack.c.l.b16 %v4098
        %v4103 = vunpack.c.l.b16 %v4099
        %v4104 = vpack.c.b16 %v4103, %v4102
        %4106 = vst [vmem:[#allocation3 + $0x18] sm:$0x33] %v4104
        %s4107 = scalar_lea.vmem %s217, 7
        %v4108 = vld [vmem:[%s4107] ss:$8 sm:$0x3]
        %s4109 = scalar_lea.vmem %s217, 32
        %v4110 = vld [vmem:[%s4109] ss:$8 sm:$0x3]
        %v4112 = vlaneseq
        %v4113 = vshrl.u32 %v4112, 7
        %v4114 = vsub.s32 0, %v4113
        %v4115 = vrot.slane %v4108, %v4114
        %v4116 = vlaneseq
        %v4117 = vshrl.u32 %v4116, 7
        %v4118 = vsub.s32 1, %v4117
        %v4119 = vrot.slane %v4108, %v4118
        %v4122 = vsub.f32 %v4115, %v224
        %v4123 = vsub.f32 %v4119, %v224
        %v4124 = vsub.f32 %v4115, %v225
        %v4125 = vsub.f32 %v4119, %v225
        %v4126 = vand.u32 2147483647, %v4122
        %v4127 = vand.u32 2147483647, %v4123
        %v4128 = vand.u32 2147483647, %v4124
        %v4129 = vand.u32 2147483647, %v4125
        %v4130 = vsub.f32 1.0, %v4126
        %v4131 = vsub.f32 1.0, %v4127
        %v4132 = vsub.f32 1.0, %v4128
        %v4133 = vsub.f32 1.0, %v4129
        %v4134 = vmax.f32 %v4130, 0.0
        %v4135 = vmax.f32 %v4131, 0.0
        %v4136 = vmax.f32 %v4132, 0.0
        %v4137 = vmax.f32 %v4133, 0.0
        %v4138 = vpack.c.bf16 %v4136, %v4134
        %v4139 = vpack.c.bf16 %v4137, %v4135
        %v4140 = vld [vmem:[%s208] sm:$0xf]
        %v4141 = vld [vmem:[%s208 + $0x4] sm:$0xf]
        %v4142 = vld [vmem:[%s208 + $0x8] sm:$0xf]
        %v4143 = vld [vmem:[%s208 + $0xc] sm:$0xf]
        %v4144 = vld [vmem:[%s208 + $0x10] sm:$0xf]
        %v4145 = vld [vmem:[%s208 + $0x14] sm:$0xf]
        %v4146 = vld [vmem:[%s208 + $0x18] sm:$0xf]
        %v4147 = vld [vmem:[%s208 + $0x1c] sm:$0xf]
        %v4156 = vunpack.c.l.b16 %v4140
        %v4157 = vunpack.c.l.b16 %v4141
        %v4158 = vunpack.c.l.b16 %v4142
        %v4159 = vunpack.c.l.b16 %v4143
        %v4160 = vunpack.c.l.b16 %v4144
        %v4161 = vunpack.c.l.b16 %v4145
        %v4162 = vunpack.c.l.b16 %v4146
        %v4163 = vunpack.c.l.b16 %v4147
        %v4164 = vpack.c.b16 %v4157, %v4156
        %v4165 = vpack.c.b16 %v4159, %v4158
        %v4166 = vpack.c.b16 %v4161, %v4160
        %v4167 = vpack.c.b16 %v4163, %v4162
        %v4169 = vsel %vm286, %v4164, 0
        %v4172 = vsel %vm286, %v4165, 0
        %v4175 = vsel %vm286, %v4166, 0
        %v4178 = vsel %vm286, %v4167, 0
        %4180 = vmatprep.subr.bf16.mxu0 %v4139
        %4181 = vmatpush1.bf16.msra.mxu0 %v4138
        %4182 = vmatprep.subr.bf16.mxu0 0
        %4183 = vmatpush1.bf16.msra.mxu0 0
        %4184 = vmatprep.subr.bf16.mxu0 0
        %4185 = vmatpush1.bf16.msra.mxu0 0
        %4186 = vmatprep.subr.bf16.mxu0 0
        %4187 = vmatpush1.bf16.msra.mxu0 0
        %4188 = vmatprep.subr.bf16.mxu0 0
        %4189 = vmatpush1.bf16.msra.mxu0 0
        %4190 = vmatprep.subr.bf16.mxu0 0
        %4191 = vmatpush1.bf16.msra.mxu0 0
        %4192 = vmatprep.subr.bf16.mxu0 0
        %4193 = vmatpush1.bf16.msra.mxu0 0
        %4194 = vmatprep.subr.bf16.mxu0 0
        %4195 = vmatpush1.bf16.msra.mxu0 0
        %4196 = vmatprep.subr.bf16.mxu0 0
        %4197 = vmatpush1.bf16.msra.mxu0 0
        %4198 = vmatprep.subr.bf16.mxu0 0
        %4199 = vmatpush1.bf16.msra.mxu0 0
        %4200 = vmatprep.subr.bf16.mxu0 0
        %4201 = vmatpush1.bf16.msra.mxu0 0
        %4202 = vmatprep.subr.bf16.mxu0 0
        %4203 = vmatpush1.bf16.msra.mxu0 0
        %4204 = vmatprep.subr.bf16.mxu0 0
        %4205 = vmatpush1.bf16.msra.mxu0 0
        %4206 = vmatprep.subr.bf16.mxu0 0
        %4207 = vmatpush1.bf16.msra.mxu0 0
        %4208 = vmatprep.subr.bf16.mxu0 0
        %4209 = vmatpush1.bf16.msra.mxu0 0
        %4210 = vmatprep.subr.bf16.mxu0 0
        %4211 = vmatpush1.bf16.msra.mxu0 0
        %4212 = vmatprep.mubr.bf16.mxu0 0
        %4213 = vmatmul.mubr.bf16.gmra.mrb[0].mxu0 %v4169
        %v4214 = vpop.f32.mrb[0].mxu0
        %v4215 = vadd.f32 0.0, %v4214
        %v4216 = vpop.f32.mrb[0].mxu0
        %v4217 = vadd.f32 0.0, %v4216
        %v4218 = vpop.f32.mrb[0].mxu0
        %v4219 = vadd.f32 0.0, %v4218
        %v4220 = vpop.f32.mrb[0].mxu0
        %v4221 = vadd.f32 0.0, %v4220
        %4222 = vmatprep.mubr.bf16.mxu0 0
        %4223 = vmatmul.mubr.bf16.gmra.mrb[0].mxu0 %v4172
        %v4224 = vpop.f32.mrb[0].mxu0
        %v4225 = vadd.f32 0.0, %v4224
        %v4226 = vpop.f32.mrb[0].mxu0
        %v4227 = vadd.f32 0.0, %v4226
        %v4228 = vpop.f32.mrb[0].mxu0
        %v4229 = vadd.f32 0.0, %v4228
        %v4230 = vpop.f32.mrb[0].mxu0
        %v4231 = vadd.f32 0.0, %v4230
        %4232 = vmatprep.mubr.bf16.mxu0 0
        %4233 = vmatmul.mubr.bf16.gmra.mrb[0].mxu0 %v4175
        %v4234 = vpop.f32.mrb[0].mxu0
        %v4235 = vadd.f32 0.0, %v4234
        %v4236 = vpop.f32.mrb[0].mxu0
        %v4237 = vadd.f32 0.0, %v4236
        %v4238 = vpop.f32.mrb[0].mxu0
        %v4239 = vadd.f32 0.0, %v4238
        %v4240 = vpop.f32.mrb[0].mxu0
        %v4241 = vadd.f32 0.0, %v4240
        %4242 = vmatprep.mubr.bf16.mxu0 0
        %4243 = vmatmul.mubr.bf16.gmra.mrb[0].mxu0 %v4178
        %v4244 = vpop.f32.mrb[0].mxu0
        %v4245 = vadd.f32 0.0, %v4244
        %v4246 = vpop.f32.mrb[0].mxu0
        %v4247 = vadd.f32 0.0, %v4246
        %v4248 = vpop.f32.mrb[0].mxu0
        %v4249 = vadd.f32 0.0, %v4248
        %v4250 = vpop.f32.mrb[0].mxu0
        %v4251 = vadd.f32 0.0, %v4250
        %4252 = vdwg.mxu0
        %4253 = vst [vmem:[#allocation2] sm:$0xff] %v4215
        %4254 = vst [vmem:[#allocation2 + $0x8] sm:$0xff] %v4217
        %4255 = vst [vmem:[#allocation2 + $0x10] sm:$0xff] %v4219
        %4256 = vst [vmem:[#allocation2 + $0x18] sm:$0xff] %v4221
        %4257 = vst [vmem:[#allocation2 + $0x20] sm:$0xff] %v4225
        %4258 = vst [vmem:[#allocation2 + $0x28] sm:$0xff] %v4227
        %4259 = vst [vmem:[#allocation2 + $0x30] sm:$0xff] %v4229
        %4260 = vst [vmem:[#allocation2 + $0x38] sm:$0xff] %v4231
        %4261 = vst [vmem:[#allocation2 + $0x40] sm:$0xff] %v4235
        %4262 = vst [vmem:[#allocation2 + $0x48] sm:$0xff] %v4237
        %4263 = vst [vmem:[#allocation2 + $0x50] sm:$0xff] %v4239
        %4264 = vst [vmem:[#allocation2 + $0x58] sm:$0xff] %v4241
        %4265 = vst [vmem:[#allocation2 + $0x60] sm:$0xff] %v4245
        %4266 = vst [vmem:[#allocation2 + $0x68] sm:$0xff] %v4247
        %4267 = vst [vmem:[#allocation2 + $0x70] sm:$0xff] %v4249
        %4268 = vst [vmem:[#allocation2 + $0x78] sm:$0xff] %v4251
        %v4269 = vand.u32 2147483647, %v4110
        %v4270 = vsub.f32 1.0, %v4269
        %v4271 = vmax.f32 %v4270, 0.0
        %v4272 = vld [vmem:[#allocation2] sm:$0xf]
        %v4273 = vld [vmem:[#allocation2 + $0x8] sm:$0xf]
        %v4275 = vlaneseq
        %v4276 = vshrl.u32 %v4275, 7
        %v4277 = vsub.s32 0, %v4276
        %v4278 = vrot.slane %v4271, %v4277
        %v4279 = vlaneseq
        %v4280 = vshrl.u32 %v4279, 7
        %v4281 = vsub.s32 1, %v4280
        %v4282 = vrot.slane %v4271, %v4281
        %v4285 = vmul.f32 %v4272, %v4278
        %v4286 = vmul.f32 %v4273, %v4282
        %v4287 = vadd.f32 %v4285, 0.0
        %v4288 = vadd.f32 %v4286, 0.0
        %v4289 = vsub.f32 %v4110, 1.0
        %v4290 = vand.u32 2147483647, %v4289
        %v4291 = vsub.f32 1.0, %v4290
        %v4292 = vmax.f32 %v4291, 0.0
        %v4293 = vld [vmem:[#allocation2] sm:$0xf0]
        %v4294 = vld [vmem:[#allocation2 + $0x8] sm:$0xf0]
        %v4296 = vlaneseq
        %v4297 = vshrl.u32 %v4296, 7
        %v4298 = vsub.s32 0, %v4297
        %v4299 = vrot.slane %v4292, %v4298
        %v4300 = vlaneseq
        %v4301 = vshrl.u32 %v4300, 7
        %v4302 = vsub.s32 1, %v4301
        %v4303 = vrot.slane %v4292, %v4302
        %v4306 = vmul.f32 %v4293, %v4299
        %v4307 = vmul.f32 %v4294, %v4303
        %v4310 = vrot.slane %v4306, 4
        %v4311 = vrot.slane %v4307, 4
        %v4314 = vadd.f32 %v4287, %v4310
        %v4315 = vadd.f32 %v4288, %v4311
        %v4316 = vsub.f32 %v4110, 2.0
        %v4317 = vand.u32 2147483647, %v4316
        %v4318 = vsub.f32 1.0, %v4317
        %v4319 = vmax.f32 %v4318, 0.0
        %v4320 = vld [vmem:[#allocation2 + $0x10] sm:$0xf]
        %v4321 = vld [vmem:[#allocation2 + $0x18] sm:$0xf]
        %v4323 = vlaneseq
        %v4324 = vshrl.u32 %v4323, 7
        %v4325 = vsub.s32 0, %v4324
        %v4326 = vrot.slane %v4319, %v4325
        %v4327 = vlaneseq
        %v4328 = vshrl.u32 %v4327, 7
        %v4329 = vsub.s32 1, %v4328
        %v4330 = vrot.slane %v4319, %v4329
        %v4333 = vmul.f32 %v4320, %v4326
        %v4334 = vmul.f32 %v4321, %v4330
        %v4335 = vadd.f32 %v4314, %v4333
        %v4336 = vadd.f32 %v4315, %v4334
        %v4337 = vsub.f32 %v4110, 3.0
        %v4338 = vand.u32 2147483647, %v4337
        %v4339 = vsub.f32 1.0, %v4338
        %v4340 = vmax.f32 %v4339, 0.0
        %v4341 = vld [vmem:[#allocation2 + $0x10] sm:$0xf0]
        %v4342 = vld [vmem:[#allocation2 + $0x18] sm:$0xf0]
        %v4344 = vlaneseq
        %v4345 = vshrl.u32 %v4344, 7
        %v4346 = vsub.s32 0, %v4345
        %v4347 = vrot.slane %v4340, %v4346
        %v4348 = vlaneseq
        %v4349 = vshrl.u32 %v4348, 7
        %v4350 = vsub.s32 1, %v4349
        %v4351 = vrot.slane %v4340, %v4350
        %v4354 = vmul.f32 %v4341, %v4347
        %v4355 = vmul.f32 %v4342, %v4351
        %v4358 = vrot.slane %v4354, 4
        %v4359 = vrot.slane %v4355, 4
        %v4362 = vadd.f32 %v4335, %v4358
        %v4363 = vadd.f32 %v4336, %v4359
        %v4364 = vsub.f32 %v4110, 4.0
        %v4365 = vand.u32 2147483647, %v4364
        %v4366 = vsub.f32 1.0, %v4365
        %v4367 = vmax.f32 %v4366, 0.0
        %v4368 = vld [vmem:[#allocation2 + $0x20] sm:$0xf]
        %v4369 = vld [vmem:[#allocation2 + $0x28] sm:$0xf]
        %v4371 = vlaneseq
        %v4372 = vshrl.u32 %v4371, 7
        %v4373 = vsub.s32 0, %v4372
        %v4374 = vrot.slane %v4367, %v4373
        %v4375 = vlaneseq
        %v4376 = vshrl.u32 %v4375, 7
        %v4377 = vsub.s32 1, %v4376
        %v4378 = vrot.slane %v4367, %v4377
        %v4381 = vmul.f32 %v4368, %v4374
        %v4382 = vmul.f32 %v4369, %v4378
        %v4383 = vadd.f32 %v4362, %v4381
        %v4384 = vadd.f32 %v4363, %v4382
        %v4385 = vsub.f32 %v4110, 5.0
        %v4386 = vand.u32 2147483647, %v4385
        %v4387 = vsub.f32 1.0, %v4386
        %v4388 = vmax.f32 %v4387, 0.0
        %v4389 = vld [vmem:[#allocation2 + $0x20] sm:$0xf0]
        %v4390 = vld [vmem:[#allocation2 + $0x28] sm:$0xf0]
        %v4392 = vlaneseq
        %v4393 = vshrl.u32 %v4392, 7
        %v4394 = vsub.s32 0, %v4393
        %v4395 = vrot.slane %v4388, %v4394
        %v4396 = vlaneseq
        %v4397 = vshrl.u32 %v4396, 7
        %v4398 = vsub.s32 1, %v4397
        %v4399 = vrot.slane %v4388, %v4398
        %v4402 = vmul.f32 %v4389, %v4395
        %v4403 = vmul.f32 %v4390, %v4399
        %v4406 = vrot.slane %v4402, 4
        %v4407 = vrot.slane %v4403, 4
        %v4410 = vadd.f32 %v4383, %v4406
        %v4411 = vadd.f32 %v4384, %v4407
        %v4412 = vsub.f32 %v4110, 6.0
        %v4413 = vand.u32 2147483647, %v4412
        %v4414 = vsub.f32 1.0, %v4413
        %v4415 = vmax.f32 %v4414, 0.0
        %v4416 = vld [vmem:[#allocation2 + $0x30] sm:$0xf]
        %v4417 = vld [vmem:[#allocation2 + $0x38] sm:$0xf]
        %v4419 = vlaneseq
        %v4420 = vshrl.u32 %v4419, 7
        %v4421 = vsub.s32 0, %v4420
        %v4422 = vrot.slane %v4415, %v4421
        %v4423 = vlaneseq
        %v4424 = vshrl.u32 %v4423, 7
        %v4425 = vsub.s32 1, %v4424
        %v4426 = vrot.slane %v4415, %v4425
        %v4429 = vmul.f32 %v4416, %v4422
        %v4430 = vmul.f32 %v4417, %v4426
        %v4431 = vadd.f32 %v4410, %v4429
        %v4432 = vadd.f32 %v4411, %v4430
        %v4433 = vsub.f32 %v4110, 7.0
        %v4434 = vand.u32 2147483647, %v4433
        %v4435 = vsub.f32 1.0, %v4434
        %v4436 = vmax.f32 %v4435, 0.0
        %v4437 = vld [vmem:[#allocation2 + $0x30] sm:$0xf0]
        %v4438 = vld [vmem:[#allocation2 + $0x38] sm:$0xf0]
        %v4440 = vlaneseq
        %v4441 = vshrl.u32 %v4440, 7
        %v4442 = vsub.s32 0, %v4441
        %v4443 = vrot.slane %v4436, %v4442
        %v4444 = vlaneseq
        %v4445 = vshrl.u32 %v4444, 7
        %v4446 = vsub.s32 1, %v4445
        %v4447 = vrot.slane %v4436, %v4446
        %v4450 = vmul.f32 %v4437, %v4443
        %v4451 = vmul.f32 %v4438, %v4447
        %v4454 = vrot.slane %v4450, 4
        %v4455 = vrot.slane %v4451, 4
        %v4458 = vadd.f32 %v4431, %v4454
        %v4459 = vadd.f32 %v4432, %v4455
        %v4460 = vsub.f32 %v4110, 8.0
        %v4461 = vand.u32 2147483647, %v4460
        %v4462 = vsub.f32 1.0, %v4461
        %v4463 = vmax.f32 %v4462, 0.0
        %v4464 = vld [vmem:[#allocation2 + $0x40] sm:$0xf]
        %v4465 = vld [vmem:[#allocation2 + $0x48] sm:$0xf]
        %v4467 = vlaneseq
        %v4468 = vshrl.u32 %v4467, 7
        %v4469 = vsub.s32 0, %v4468
        %v4470 = vrot.slane %v4463, %v4469
        %v4471 = vlaneseq
        %v4472 = vshrl.u32 %v4471, 7
        %v4473 = vsub.s32 1, %v4472
        %v4474 = vrot.slane %v4463, %v4473
        %v4477 = vmul.f32 %v4464, %v4470
        %v4478 = vmul.f32 %v4465, %v4474
        %v4479 = vadd.f32 %v4458, %v4477
        %v4480 = vadd.f32 %v4459, %v4478
        %v4481 = vsub.f32 %v4110, 9.0
        %v4482 = vand.u32 2147483647, %v4481
        %v4483 = vsub.f32 1.0, %v4482
        %v4484 = vmax.f32 %v4483, 0.0
        %v4485 = vld [vmem:[#allocation2 + $0x40] sm:$0xf0]
        %v4486 = vld [vmem:[#allocation2 + $0x48] sm:$0xf0]
        %v4488 = vlaneseq
        %v4489 = vshrl.u32 %v4488, 7
        %v4490 = vsub.s32 0, %v4489
        %v4491 = vrot.slane %v4484, %v4490
        %v4492 = vlaneseq
        %v4493 = vshrl.u32 %v4492, 7
        %v4494 = vsub.s32 1, %v4493
        %v4495 = vrot.slane %v4484, %v4494
        %v4498 = vmul.f32 %v4485, %v4491
        %v4499 = vmul.f32 %v4486, %v4495
        %v4502 = vrot.slane %v4498, 4
        %v4503 = vrot.slane %v4499, 4
        %v4506 = vadd.f32 %v4479, %v4502
        %v4507 = vadd.f32 %v4480, %v4503
        %v4508 = vsub.f32 %v4110, 10.0
        %v4509 = vand.u32 2147483647, %v4508
        %v4510 = vsub.f32 1.0, %v4509
        %v4511 = vmax.f32 %v4510, 0.0
        %v4512 = vld [vmem:[#allocation2 + $0x50] sm:$0xf]
        %v4513 = vld [vmem:[#allocation2 + $0x58] sm:$0xf]
        %v4515 = vlaneseq
        %v4516 = vshrl.u32 %v4515, 7
        %v4517 = vsub.s32 0, %v4516
        %v4518 = vrot.slane %v4511, %v4517
        %v4519 = vlaneseq
        %v4520 = vshrl.u32 %v4519, 7
        %v4521 = vsub.s32 1, %v4520
        %v4522 = vrot.slane %v4511, %v4521
        %v4525 = vmul.f32 %v4512, %v4518
        %v4526 = vmul.f32 %v4513, %v4522
        %v4527 = vadd.f32 %v4506, %v4525
        %v4528 = vadd.f32 %v4507, %v4526
        %v4529 = vsub.f32 %v4110, 11.0
        %v4530 = vand.u32 2147483647, %v4529
        %v4531 = vsub.f32 1.0, %v4530
        %v4532 = vmax.f32 %v4531, 0.0
        %v4533 = vld [vmem:[#allocation2 + $0x50] sm:$0xf0]
        %v4534 = vld [vmem:[#allocation2 + $0x58] sm:$0xf0]
        %v4536 = vlaneseq
        %v4537 = vshrl.u32 %v4536, 7
        %v4538 = vsub.s32 0, %v4537
        %v4539 = vrot.slane %v4532, %v4538
        %v4540 = vlaneseq
        %v4541 = vshrl.u32 %v4540, 7
        %v4542 = vsub.s32 1, %v4541
        %v4543 = vrot.slane %v4532, %v4542
        %v4546 = vmul.f32 %v4533, %v4539
        %v4547 = vmul.f32 %v4534, %v4543
        %v4550 = vrot.slane %v4546, 4
        %v4551 = vrot.slane %v4547, 4
        %v4554 = vadd.f32 %v4527, %v4550
        %v4555 = vadd.f32 %v4528, %v4551
        %v4556 = vsub.f32 %v4110, 12.0
        %v4557 = vand.u32 2147483647, %v4556
        %v4558 = vsub.f32 1.0, %v4557
        %v4559 = vmax.f32 %v4558, 0.0
        %v4560 = vld [vmem:[#allocation2 + $0x60] sm:$0xf]
        %v4561 = vld [vmem:[#allocation2 + $0x68] sm:$0xf]
        %v4563 = vlaneseq
        %v4564 = vshrl.u32 %v4563, 7
        %v4565 = vsub.s32 0, %v4564
        %v4566 = vrot.slane %v4559, %v4565
        %v4567 = vlaneseq
        %v4568 = vshrl.u32 %v4567, 7
        %v4569 = vsub.s32 1, %v4568
        %v4570 = vrot.slane %v4559, %v4569
        %v4573 = vmul.f32 %v4560, %v4566
        %v4574 = vmul.f32 %v4561, %v4570
        %v4575 = vadd.f32 %v4554, %v4573
        %v4576 = vadd.f32 %v4555, %v4574
        %v4577 = vsub.f32 %v4110, 13.0
        %v4578 = vand.u32 2147483647, %v4577
        %v4579 = vsub.f32 1.0, %v4578
        %v4580 = vmax.f32 %v4579, 0.0
        %v4581 = vld [vmem:[#allocation2 + $0x60] sm:$0xf0]
        %v4582 = vld [vmem:[#allocation2 + $0x68] sm:$0xf0]
        %v4584 = vlaneseq
        %v4585 = vshrl.u32 %v4584, 7
        %v4586 = vsub.s32 0, %v4585
        %v4587 = vrot.slane %v4580, %v4586
        %v4588 = vlaneseq
        %v4589 = vshrl.u32 %v4588, 7
        %v4590 = vsub.s32 1, %v4589
        %v4591 = vrot.slane %v4580, %v4590
        %v4594 = vmul.f32 %v4581, %v4587
        %v4595 = vmul.f32 %v4582, %v4591
        %v4598 = vrot.slane %v4594, 4
        %v4599 = vrot.slane %v4595, 4
        %v4602 = vadd.f32 %v4575, %v4598
        %v4603 = vadd.f32 %v4576, %v4599
        %v4604 = vsub.f32 %v4110, 14.0
        %v4605 = vand.u32 2147483647, %v4604
        %v4606 = vsub.f32 1.0, %v4605
        %v4607 = vmax.f32 %v4606, 0.0
        %v4608 = vld [vmem:[#allocation2 + $0x70] sm:$0xf]
        %v4609 = vld [vmem:[#allocation2 + $0x78] sm:$0xf]
        %v4611 = vlaneseq
        %v4612 = vshrl.u32 %v4611, 7
        %v4613 = vsub.s32 0, %v4612
        %v4614 = vrot.slane %v4607, %v4613
        %v4615 = vlaneseq
        %v4616 = vshrl.u32 %v4615, 7
        %v4617 = vsub.s32 1, %v4616
        %v4618 = vrot.slane %v4607, %v4617
        %v4621 = vmul.f32 %v4608, %v4614
        %v4622 = vmul.f32 %v4609, %v4618
        %v4623 = vadd.f32 %v4602, %v4621
        %v4624 = vadd.f32 %v4603, %v4622
        %v4625 = vsub.f32 %v4110, 15.0
        %v4626 = vand.u32 2147483647, %v4625
        %v4627 = vsub.f32 1.0, %v4626
        %v4628 = vmax.f32 %v4627, 0.0
        %v4629 = vld [vmem:[#allocation2 + $0x70] sm:$0xf0]
        %v4630 = vld [vmem:[#allocation2 + $0x78] sm:$0xf0]
        %v4632 = vlaneseq
        %v4633 = vshrl.u32 %v4632, 7
        %v4634 = vsub.s32 0, %v4633
        %v4635 = vrot.slane %v4628, %v4634
        %v4636 = vlaneseq
        %v4637 = vshrl.u32 %v4636, 7
        %v4638 = vsub.s32 1, %v4637
        %v4639 = vrot.slane %v4628, %v4638
        %v4642 = vmul.f32 %v4629, %v4635
        %v4643 = vmul.f32 %v4630, %v4639
        %v4646 = vrot.slane %v4642, 4
        %v4647 = vrot.slane %v4643, 4
        %v4650 = vadd.f32 %v4623, %v4646
        %v4651 = vadd.f32 %v4624, %v4647
        %v4652 = vpack.c.bf16 %v4650, %v4650
        %v4653 = vpack.c.bf16 %v4651, %v4651
        %v4656 = vunpack.c.l.b16 %v4652
        %v4657 = vunpack.c.l.b16 %v4653
        %v4658 = vpack.c.b16 %v4657, %v4656
        %v4659 = vrot.slane %v4658, 6
        %4661 = vst [vmem:[#allocation3 + $0x18] sm:$0xcc] %v4659
        %s4662 = scalar_lea.vmem %s217, 16
        %v4663 = vld [vmem:[%s4662] ss:$8 sm:$0x3]
        %s4664 = scalar_lea.vmem %s217, 33
        %v4665 = vld [vmem:[%s4664] ss:$8 sm:$0x3]
        %v4667 = vlaneseq
        %v4668 = vshrl.u32 %v4667, 7
        %v4669 = vsub.s32 0, %v4668
        %v4670 = vrot.slane %v4663, %v4669
        %v4671 = vlaneseq
        %v4672 = vshrl.u32 %v4671, 7
        %v4673 = vsub.s32 1, %v4672
        %v4674 = vrot.slane %v4663, %v4673
        %v4677 = vsub.f32 %v4670, %v224
        %v4678 = vsub.f32 %v4674, %v224
        %v4679 = vsub.f32 %v4670, %v225
        %v4680 = vsub.f32 %v4674, %v225
        %v4681 = vand.u32 2147483647, %v4677
        %v4682 = vand.u32 2147483647, %v4678
        %v4683 = vand.u32 2147483647, %v4679
        %v4684 = vand.u32 2147483647, %v4680
        %v4685 = vsub.f32 1.0, %v4681
        %v4686 = vsub.f32 1.0, %v4682
        %v4687 = vsub.f32 1.0, %v4683
        %v4688 = vsub.f32 1.0, %v4684
        %v4689 = vmax.f32 %v4685, 0.0
        %v4690 = vmax.f32 %v4686, 0.0
        %v4691 = vmax.f32 %v4687, 0.0
        %v4692 = vmax.f32 %v4688, 0.0
        %v4693 = vpack.c.bf16 %v4691, %v4689
        %v4694 = vpack.c.bf16 %v4692, %v4690
        %v4695 = vld [vmem:[%s208] sm:$0xf]
        %v4696 = vld [vmem:[%s208 + $0x4] sm:$0xf]
        %v4697 = vld [vmem:[%s208 + $0x8] sm:$0xf]
        %v4698 = vld [vmem:[%s208 + $0xc] sm:$0xf]
        %v4699 = vld [vmem:[%s208 + $0x10] sm:$0xf]
        %v4700 = vld [vmem:[%s208 + $0x14] sm:$0xf]
        %v4701 = vld [vmem:[%s208 + $0x18] sm:$0xf]
        %v4702 = vld [vmem:[%s208 + $0x1c] sm:$0xf]
        %v4711 = vunpack.c.l.b16 %v4695
        %v4712 = vunpack.c.l.b16 %v4696
        %v4713 = vunpack.c.l.b16 %v4697
        %v4714 = vunpack.c.l.b16 %v4698
        %v4715 = vunpack.c.l.b16 %v4699
        %v4716 = vunpack.c.l.b16 %v4700
        %v4717 = vunpack.c.l.b16 %v4701
        %v4718 = vunpack.c.l.b16 %v4702
        %v4719 = vpack.c.b16 %v4712, %v4711
        %v4720 = vpack.c.b16 %v4714, %v4713
        %v4721 = vpack.c.b16 %v4716, %v4715
        %v4722 = vpack.c.b16 %v4718, %v4717
        %v4724 = vsel %vm286, %v4719, 0
        %v4727 = vsel %vm286, %v4720, 0
        %v4730 = vsel %vm286, %v4721, 0
        %v4733 = vsel %vm286, %v4722, 0
        %4735 = vmatprep.subr.bf16.mxu0 %v4694
        %4736 = vmatpush1.bf16.msra.mxu0 %v4693
        %4737 = vmatprep.subr.bf16.mxu0 0
        %4738 = vmatpush1.bf16.msra.mxu0 0
        %4739 = vmatprep.subr.bf16.mxu0 0
        %4740 = vmatpush1.bf16.msra.mxu0 0
        %4741 = vmatprep.subr.bf16.mxu0 0
        %4742 = vmatpush1.bf16.msra.mxu0 0
        %4743 = vmatprep.subr.bf16.mxu0 0
        %4744 = vmatpush1.bf16.msra.mxu0 0
        %4745 = vmatprep.subr.bf16.mxu0 0
        %4746 = vmatpush1.bf16.msra.mxu0 0
        %4747 = vmatprep.subr.bf16.mxu0 0
        %4748 = vmatpush1.bf16.msra.mxu0 0
        %4749 = vmatprep.subr.bf16.mxu0 0
        %4750 = vmatpush1.bf16.msra.mxu0 0
        %4751 = vmatprep.subr.bf16.mxu0 0
        %4752 = vmatpush1.bf16.msra.mxu0 0
        %4753 = vmatprep.subr.bf16.mxu0 0
        %4754 = vmatpush1.bf16.msra.mxu0 0
        %4755 = vmatprep.subr.bf16.mxu0 0
        %4756 = vmatpush1.bf16.msra.mxu0 0
        %4757 = vmatprep.subr.bf16.mxu0 0
        %4758 = vmatpush1.bf16.msra.mxu0 0
        %4759 = vmatprep.subr.bf16.mxu0 0
        %4760 = vmatpush1.bf16.msra.mxu0 0
        %4761 = vmatprep.subr.bf16.mxu0 0
        %4762 = vmatpush1.bf16.msra.mxu0 0
        %4763 = vmatprep.subr.bf16.mxu0 0
        %4764 = vmatpush1.bf16.msra.mxu0 0
        %4765 = vmatprep.subr.bf16.mxu0 0
        %4766 = vmatpush1.bf16.msra.mxu0 0
        %4767 = vmatprep.mubr.bf16.mxu0 0
        %4768 = vmatmul.mubr.bf16.gmra.mrb[0].mxu0 %v4724
        %v4769 = vpop.f32.mrb[0].mxu0
        %v4770 = vadd.f32 0.0, %v4769
        %v4771 = vpop.f32.mrb[0].mxu0
        %v4772 = vadd.f32 0.0, %v4771
        %v4773 = vpop.f32.mrb[0].mxu0
        %v4774 = vadd.f32 0.0, %v4773
        %v4775 = vpop.f32.mrb[0].mxu0
        %v4776 = vadd.f32 0.0, %v4775
        %4777 = vmatprep.mubr.bf16.mxu0 0
        %4778 = vmatmul.mubr.bf16.gmra.mrb[0].mxu0 %v4727
        %v4779 = vpop.f32.mrb[0].mxu0
        %v4780 = vadd.f32 0.0, %v4779
        %v4781 = vpop.f32.mrb[0].mxu0
        %v4782 = vadd.f32 0.0, %v4781
        %v4783 = vpop.f32.mrb[0].mxu0
        %v4784 = vadd.f32 0.0, %v4783
        %v4785 = vpop.f32.mrb[0].mxu0
        %v4786 = vadd.f32 0.0, %v4785
        %4787 = vmatprep.mubr.bf16.mxu0 0
        %4788 = vmatmul.mubr.bf16.gmra.mrb[0].mxu0 %v4730
        %v4789 = vpop.f32.mrb[0].mxu0
        %v4790 = vadd.f32 0.0, %v4789
        %v4791 = vpop.f32.mrb[0].mxu0
        %v4792 = vadd.f32 0.0, %v4791
        %v4793 = vpop.f32.mrb[0].mxu0
        %v4794 = vadd.f32 0.0, %v4793
        %v4795 = vpop.f32.mrb[0].mxu0
        %v4796 = vadd.f32 0.0, %v4795
        %4797 = vmatprep.mubr.bf16.mxu0 0
        %4798 = vmatmul.mubr.bf16.gmra.mrb[0].mxu0 %v4733
        %v4799 = vpop.f32.mrb[0].mxu0
        %v4800 = vadd.f32 0.0, %v4799
        %v4801 = vpop.f32.mrb[0].mxu0
        %v4802 = vadd.f32 0.0, %v4801
        %v4803 = vpop.f32.mrb[0].mxu0
        %v4804 = vadd.f32 0.0, %v4803
        %v4805 = vpop.f32.mrb[0].mxu0
        %v4806 = vadd.f32 0.0, %v4805
        %4807 = vdwg.mxu0
        %4808 = vst [vmem:[#allocation2] sm:$0xff] %v4770
        %4809 = vst [vmem:[#allocation2 + $0x8] sm:$0xff] %v4772
        %4810 = vst [vmem:[#allocation2 + $0x10] sm:$0xff] %v4774
        %4811 = vst [vmem:[#allocation2 + $0x18] sm:$0xff] %v4776
        %4812 = vst [vmem:[#allocation2 + $0x20] sm:$0xff] %v4780
        %4813 = vst [vmem:[#allocation2 + $0x28] sm:$0xff] %v4782
        %4814 = vst [vmem:[#allocation2 + $0x30] sm:$0xff] %v4784
        %4815 = vst [vmem:[#allocation2 + $0x38] sm:$0xff] %v4786
        %4816 = vst [vmem:[#allocation2 + $0x40] sm:$0xff] %v4790
        %4817 = vst [vmem:[#allocation2 + $0x48] sm:$0xff] %v4792
        %4818 = vst [vmem:[#allocation2 + $0x50] sm:$0xff] %v4794
        %4819 = vst [vmem:[#allocation2 + $0x58] sm:$0xff] %v4796
        %4820 = vst [vmem:[#allocation2 + $0x60] sm:$0xff] %v4800
        %4821 = vst [vmem:[#allocation2 + $0x68] sm:$0xff] %v4802
        %4822 = vst [vmem:[#allocation2 + $0x70] sm:$0xff] %v4804
        %4823 = vst [vmem:[#allocation2 + $0x78] sm:$0xff] %v4806
        %v4824 = vand.u32 2147483647, %v4665
        %v4825 = vsub.f32 1.0, %v4824
        %v4826 = vmax.f32 %v4825, 0.0
        %v4827 = vld [vmem:[#allocation2] sm:$0xf]
        %v4828 = vld [vmem:[#allocation2 + $0x8] sm:$0xf]
        %v4830 = vlaneseq
        %v4831 = vshrl.u32 %v4830, 7
        %v4832 = vsub.s32 0, %v4831
        %v4833 = vrot.slane %v4826, %v4832
        %v4834 = vlaneseq
        %v4835 = vshrl.u32 %v4834, 7
        %v4836 = vsub.s32 1, %v4835
        %v4837 = vrot.slane %v4826, %v4836
        %v4840 = vmul.f32 %v4827, %v4833
        %v4841 = vmul.f32 %v4828, %v4837
        %v4842 = vadd.f32 %v4840, 0.0
        %v4843 = vadd.f32 %v4841, 0.0
        %v4844 = vsub.f32 %v4665, 1.0
        %v4845 = vand.u32 2147483647, %v4844
        %v4846 = vsub.f32 1.0, %v4845
        %v4847 = vmax.f32 %v4846, 0.0
        %v4848 = vld [vmem:[#allocation2] sm:$0xf0]
        %v4849 = vld [vmem:[#allocation2 + $0x8] sm:$0xf0]
        %v4851 = vlaneseq
        %v4852 = vshrl.u32 %v4851, 7
        %v4853 = vsub.s32 0, %v4852
        %v4854 = vrot.slane %v4847, %v4853
        %v4855 = vlaneseq
        %v4856 = vshrl.u32 %v4855, 7
        %v4857 = vsub.s32 1, %v4856
        %v4858 = vrot.slane %v4847, %v4857
        %v4861 = vmul.f32 %v4848, %v4854
        %v4862 = vmul.f32 %v4849, %v4858
        %v4865 = vrot.slane %v4861, 4
        %v4866 = vrot.slane %v4862, 4
        %v4869 = vadd.f32 %v4842, %v4865
        %v4870 = vadd.f32 %v4843, %v4866
        %v4871 = vsub.f32 %v4665, 2.0
        %v4872 = vand.u32 2147483647, %v4871
        %v4873 = vsub.f32 1.0, %v4872
        %v4874 = vmax.f32 %v4873, 0.0
        %v4875 = vld [vmem:[#allocation2 + $0x10] sm:$0xf]
        %v4876 = vld [vmem:[#allocation2 + $0x18] sm:$0xf]
        %v4878 = vlaneseq
        %v4879 = vshrl.u32 %v4878, 7
        %v4880 = vsub.s32 0, %v4879
        %v4881 = vrot.slane %v4874, %v4880
        %v4882 = vlaneseq
        %v4883 = vshrl.u32 %v4882, 7
        %v4884 = vsub.s32 1, %v4883
        %v4885 = vrot.slane %v4874, %v4884
        %v4888 = vmul.f32 %v4875, %v4881
        %v4889 = vmul.f32 %v4876, %v4885
        %v4890 = vadd.f32 %v4869, %v4888
        %v4891 = vadd.f32 %v4870, %v4889
        %v4892 = vsub.f32 %v4665, 3.0
        %v4893 = vand.u32 2147483647, %v4892
        %v4894 = vsub.f32 1.0, %v4893
        %v4895 = vmax.f32 %v4894, 0.0
        %v4896 = vld [vmem:[#allocation2 + $0x10] sm:$0xf0]
        %v4897 = vld [vmem:[#allocation2 + $0x18] sm:$0xf0]
        %v4899 = vlaneseq
        %v4900 = vshrl.u32 %v4899, 7
        %v4901 = vsub.s32 0, %v4900
        %v4902 = vrot.slane %v4895, %v4901
        %v4903 = vlaneseq
        %v4904 = vshrl.u32 %v4903, 7
        %v4905 = vsub.s32 1, %v4904
        %v4906 = vrot.slane %v4895, %v4905
        %v4909 = vmul.f32 %v4896, %v4902
        %v4910 = vmul.f32 %v4897, %v4906
        %v4913 = vrot.slane %v4909, 4
        %v4914 = vrot.slane %v4910, 4
        %v4917 = vadd.f32 %v4890, %v4913
        %v4918 = vadd.f32 %v4891, %v4914
        %v4919 = vsub.f32 %v4665, 4.0
        %v4920 = vand.u32 2147483647, %v4919
        %v4921 = vsub.f32 1.0, %v4920
        %v4922 = vmax.f32 %v4921, 0.0
        %v4923 = vld [vmem:[#allocation2 + $0x20] sm:$0xf]
        %v4924 = vld [vmem:[#allocation2 + $0x28] sm:$0xf]
        %v4926 = vlaneseq
        %v4927 = vshrl.u32 %v4926, 7
        %v4928 = vsub.s32 0, %v4927
        %v4929 = vrot.slane %v4922, %v4928
        %v4930 = vlaneseq
        %v4931 = vshrl.u32 %v4930, 7
        %v4932 = vsub.s32 1, %v4931
        %v4933 = vrot.slane %v4922, %v4932
        %v4936 = vmul.f32 %v4923, %v4929
        %v4937 = vmul.f32 %v4924, %v4933
        %v4938 = vadd.f32 %v4917, %v4936
        %v4939 = vadd.f32 %v4918, %v4937
        %v4940 = vsub.f32 %v4665, 5.0
        %v4941 = vand.u32 2147483647, %v4940
        %v4942 = vsub.f32 1.0, %v4941
        %v4943 = vmax.f32 %v4942, 0.0
        %v4944 = vld [vmem:[#allocation2 + $0x20] sm:$0xf0]
        %v4945 = vld [vmem:[#allocation2 + $0x28] sm:$0xf0]
        %v4947 = vlaneseq
        %v4948 = vshrl.u32 %v4947, 7
        %v4949 = vsub.s32 0, %v4948
        %v4950 = vrot.slane %v4943, %v4949
        %v4951 = vlaneseq
        %v4952 = vshrl.u32 %v4951, 7
        %v4953 = vsub.s32 1, %v4952
        %v4954 = vrot.slane %v4943, %v4953
        %v4957 = vmul.f32 %v4944, %v4950
        %v4958 = vmul.f32 %v4945, %v4954
        %v4961 = vrot.slane %v4957, 4
        %v4962 = vrot.slane %v4958, 4
        %v4965 = vadd.f32 %v4938, %v4961
        %v4966 = vadd.f32 %v4939, %v4962
        %v4967 = vsub.f32 %v4665, 6.0
        %v4968 = vand.u32 2147483647, %v4967
        %v4969 = vsub.f32 1.0, %v4968
        %v4970 = vmax.f32 %v4969, 0.0
        %v4971 = vld [vmem:[#allocation2 + $0x30] sm:$0xf]
        %v4972 = vld [vmem:[#allocation2 + $0x38] sm:$0xf]
        %v4974 = vlaneseq
        %v4975 = vshrl.u32 %v4974, 7
        %v4976 = vsub.s32 0, %v4975
        %v4977 = vrot.slane %v4970, %v4976
        %v4978 = vlaneseq
        %v4979 = vshrl.u32 %v4978, 7
        %v4980 = vsub.s32 1, %v4979
        %v4981 = vrot.slane %v4970, %v4980
        %v4984 = vmul.f32 %v4971, %v4977
        %v4985 = vmul.f32 %v4972, %v4981
        %v4986 = vadd.f32 %v4965, %v4984
        %v4987 = vadd.f32 %v4966, %v4985
        %v4988 = vsub.f32 %v4665, 7.0
        %v4989 = vand.u32 2147483647, %v4988
        %v4990 = vsub.f32 1.0, %v4989
        %v4991 = vmax.f32 %v4990, 0.0
        %v4992 = vld [vmem:[#allocation2 + $0x30] sm:$0xf0]
        %v4993 = vld [vmem:[#allocation2 + $0x38] sm:$0xf0]
        %v4995 = vlaneseq
        %v4996 = vshrl.u32 %v4995, 7
        %v4997 = vsub.s32 0, %v4996
        %v4998 = vrot.slane %v4991, %v4997
        %v4999 = vlaneseq
        %v5000 = vshrl.u32 %v4999, 7
        %v5001 = vsub.s32 1, %v5000
        %v5002 = vrot.slane %v4991, %v5001
        %v5005 = vmul.f32 %v4992, %v4998
        %v5006 = vmul.f32 %v4993, %v5002
        %v5009 = vrot.slane %v5005, 4
        %v5010 = vrot.slane %v5006, 4
        %v5013 = vadd.f32 %v4986, %v5009
        %v5014 = vadd.f32 %v4987, %v5010
        %v5015 = vsub.f32 %v4665, 8.0
        %v5016 = vand.u32 2147483647, %v5015
        %v5017 = vsub.f32 1.0, %v5016
        %v5018 = vmax.f32 %v5017, 0.0
        %v5019 = vld [vmem:[#allocation2 + $0x40] sm:$0xf]
        %v5020 = vld [vmem:[#allocation2 + $0x48] sm:$0xf]
        %v5022 = vlaneseq
        %v5023 = vshrl.u32 %v5022, 7
        %v5024 = vsub.s32 0, %v5023
        %v5025 = vrot.slane %v5018, %v5024
        %v5026 = vlaneseq
        %v5027 = vshrl.u32 %v5026, 7
        %v5028 = vsub.s32 1, %v5027
        %v5029 = vrot.slane %v5018, %v5028
        %v5032 = vmul.f32 %v5019, %v5025
        %v5033 = vmul.f32 %v5020, %v5029
        %v5034 = vadd.f32 %v5013, %v5032
        %v5035 = vadd.f32 %v5014, %v5033
        %v5036 = vsub.f32 %v4665, 9.0
        %v5037 = vand.u32 2147483647, %v5036
        %v5038 = vsub.f32 1.0, %v5037
        %v5039 = vmax.f32 %v5038, 0.0
        %v5040 = vld [vmem:[#allocation2 + $0x40] sm:$0xf0]
        %v5041 = vld [vmem:[#allocation2 + $0x48] sm:$0xf0]
        %v5043 = vlaneseq
        %v5044 = vshrl.u32 %v5043, 7
        %v5045 = vsub.s32 0, %v5044
        %v5046 = vrot.slane %v5039, %v5045
        %v5047 = vlaneseq
        %v5048 = vshrl.u32 %v5047, 7
        %v5049 = vsub.s32 1, %v5048
        %v5050 = vrot.slane %v5039, %v5049
        %v5053 = vmul.f32 %v5040, %v5046
        %v5054 = vmul.f32 %v5041, %v5050
        %v5057 = vrot.slane %v5053, 4
        %v5058 = vrot.slane %v5054, 4
        %v5061 = vadd.f32 %v5034, %v5057
        %v5062 = vadd.f32 %v5035, %v5058
        %v5063 = vsub.f32 %v4665, 10.0
        %v5064 = vand.u32 2147483647, %v5063
        %v5065 = vsub.f32 1.0, %v5064
        %v5066 = vmax.f32 %v5065, 0.0
        %v5067 = vld [vmem:[#allocation2 + $0x50] sm:$0xf]
        %v5068 = vld [vmem:[#allocation2 + $0x58] sm:$0xf]
        %v5070 = vlaneseq
        %v5071 = vshrl.u32 %v5070, 7
        %v5072 = vsub.s32 0, %v5071
        %v5073 = vrot.slane %v5066, %v5072
        %v5074 = vlaneseq
        %v5075 = vshrl.u32 %v5074, 7
        %v5076 = vsub.s32 1, %v5075
        %v5077 = vrot.slane %v5066, %v5076
        %v5080 = vmul.f32 %v5067, %v5073
        %v5081 = vmul.f32 %v5068, %v5077
        %v5082 = vadd.f32 %v5061, %v5080
        %v5083 = vadd.f32 %v5062, %v5081
        %v5084 = vsub.f32 %v4665, 11.0
        %v5085 = vand.u32 2147483647, %v5084
        %v5086 = vsub.f32 1.0, %v5085
        %v5087 = vmax.f32 %v5086, 0.0
        %v5088 = vld [vmem:[#allocation2 + $0x50] sm:$0xf0]
        %v5089 = vld [vmem:[#allocation2 + $0x58] sm:$0xf0]
        %v5091 = vlaneseq
        %v5092 = vshrl.u32 %v5091, 7
        %v5093 = vsub.s32 0, %v5092
        %v5094 = vrot.slane %v5087, %v5093
        %v5095 = vlaneseq
        %v5096 = vshrl.u32 %v5095, 7
        %v5097 = vsub.s32 1, %v5096
        %v5098 = vrot.slane %v5087, %v5097
        %v5101 = vmul.f32 %v5088, %v5094
        %v5102 = vmul.f32 %v5089, %v5098
        %v5105 = vrot.slane %v5101, 4
        %v5106 = vrot.slane %v5102, 4
        %v5109 = vadd.f32 %v5082, %v5105
        %v5110 = vadd.f32 %v5083, %v5106
        %v5111 = vsub.f32 %v4665, 12.0
        %v5112 = vand.u32 2147483647, %v5111
        %v5113 = vsub.f32 1.0, %v5112
        %v5114 = vmax.f32 %v5113, 0.0
        %v5115 = vld [vmem:[#allocation2 + $0x60] sm:$0xf]
        %v5116 = vld [vmem:[#allocation2 + $0x68] sm:$0xf]
        %v5118 = vlaneseq
        %v5119 = vshrl.u32 %v5118, 7
        %v5120 = vsub.s32 0, %v5119
        %v5121 = vrot.slane %v5114, %v5120
        %v5122 = vlaneseq
        %v5123 = vshrl.u32 %v5122, 7
        %v5124 = vsub.s32 1, %v5123
        %v5125 = vrot.slane %v5114, %v5124
        %v5128 = vmul.f32 %v5115, %v5121
        %v5129 = vmul.f32 %v5116, %v5125
        %v5130 = vadd.f32 %v5109, %v5128
        %v5131 = vadd.f32 %v5110, %v5129
        %v5132 = vsub.f32 %v4665, 13.0
        %v5133 = vand.u32 2147483647, %v5132
        %v5134 = vsub.f32 1.0, %v5133
        %v5135 = vmax.f32 %v5134, 0.0
        %v5136 = vld [vmem:[#allocation2 + $0x60] sm:$0xf0]
        %v5137 = vld [vmem:[#allocation2 + $0x68] sm:$0xf0]
        %v5139 = vlaneseq
        %v5140 = vshrl.u32 %v5139, 7
        %v5141 = vsub.s32 0, %v5140
        %v5142 = vrot.slane %v5135, %v5141
        %v5143 = vlaneseq
        %v5144 = vshrl.u32 %v5143, 7
        %v5145 = vsub.s32 1, %v5144
        %v5146 = vrot.slane %v5135, %v5145
        %v5149 = vmul.f32 %v5136, %v5142
        %v5150 = vmul.f32 %v5137, %v5146
        %v5153 = vrot.slane %v5149, 4
        %v5154 = vrot.slane %v5150, 4
        %v5157 = vadd.f32 %v5130, %v5153
        %v5158 = vadd.f32 %v5131, %v5154
        %v5159 = vsub.f32 %v4665, 14.0
        %v5160 = vand.u32 2147483647, %v5159
        %v5161 = vsub.f32 1.0, %v5160
        %v5162 = vmax.f32 %v5161, 0.0
        %v5163 = vld [vmem:[#allocation2 + $0x70] sm:$0xf]
        %v5164 = vld [vmem:[#allocation2 + $0x78] sm:$0xf]
        %v5166 = vlaneseq
        %v5167 = vshrl.u32 %v5166, 7
        %v5168 = vsub.s32 0, %v5167
        %v5169 = vrot.slane %v5162, %v5168
        %v5170 = vlaneseq
        %v5171 = vshrl.u32 %v5170, 7
        %v5172 = vsub.s32 1, %v5171
        %v5173 = vrot.slane %v5162, %v5172
        %v5176 = vmul.f32 %v5163, %v5169
        %v5177 = vmul.f32 %v5164, %v5173
        %v5178 = vadd.f32 %v5157, %v5176
        %v5179 = vadd.f32 %v5158, %v5177
        %v5180 = vsub.f32 %v4665, 15.0
        %v5181 = vand.u32 2147483647, %v5180
        %v5182 = vsub.f32 1.0, %v5181
        %v5183 = vmax.f32 %v5182, 0.0
        %v5184 = vld [vmem:[#allocation2 + $0x70] sm:$0xf0]
        %v5185 = vld [vmem:[#allocation2 + $0x78] sm:$0xf0]
        %v5187 = vlaneseq
        %v5188 = vshrl.u32 %v5187, 7
        %v5189 = vsub.s32 0, %v5188
        %v5190 = vrot.slane %v5183, %v5189
        %v5191 = vlaneseq
        %v5192 = vshrl.u32 %v5191, 7
        %v5193 = vsub.s32 1, %v5192
        %v5194 = vrot.slane %v5183, %v5193
        %v5197 = vmul.f32 %v5184, %v5190
        %v5198 = vmul.f32 %v5185, %v5194
        %v5201 = vrot.slane %v5197, 4
        %v5202 = vrot.slane %v5198, 4
        %v5205 = vadd.f32 %v5178, %v5201
        %v5206 = vadd.f32 %v5179, %v5202
        %v5207 = vpack.c.bf16 %v5205, %v5205
        %v5208 = vpack.c.bf16 %v5206, %v5206
        %v5211 = vunpack.c.l.b16 %v5207
        %v5212 = vunpack.c.l.b16 %v5208
        %v5213 = vpack.c.b16 %v5212, %v5211
        %5215 = vst [vmem:[#allocation3 + $0x20] sm:$0x33] %v5213
        %v5216 = vld [vmem:[#allocation3] sm:$0xff]
        %v5217 = vld [vmem:[#allocation3 + $0x8] sm:$0xff]
        %v5218 = vld [vmem:[#allocation3 + $0x10] sm:$0xff]
        %v5219 = vld [vmem:[#allocation3 + $0x18] sm:$0xff]
        %v5220 = vld [vmem:[#allocation3 + $0x20] sm:$0x33]
        %v5221 = vld [vmem:[%s2] sm:$0xf]
        %v5227 = vunpack.c.l.b16 %v5216
        %v5228 = vunpack.c.h.b16 %v5216
        %v5229 = vunpack.c.l.b16 %v5217
        %v5230 = vunpack.c.h.b16 %v5217
        %v5231 = vunpack.c.l.b16 %v5218
        %v5232 = vunpack.c.h.b16 %v5218
        %v5233 = vunpack.c.l.b16 %v5219
        %v5234 = vunpack.c.h.b16 %v5219
        %v5235 = vunpack.c.l.b16 %v5220
        %v5236 = vunpack.c.h.b16 %v5220
        %v5237 = vpack.c.b16 %v5229, %v5227
        %v5238 = vpack.c.b16 %v5230, %v5228
        %v5239 = vpack.c.b16 %v5233, %v5231
        %v5240 = vpack.c.b16 %v5234, %v5232
        %v5241 = vpack.c.b16 %v5235, %v5235
        %v5242 = vpack.c.b16 %v5236, %v5236
        %vm5247 = vcmask 293888
        %v5249 = vsel %vm5247, %v5221, 0
        %vm5251 = vcmask 1041408
        %v5253 = vsel %vm5251, %v5241, 0
        %v5256 = vsel %vm5251, %v5242, 0
        %5258 = vmatprep.subr.bf16.mxu0 %v5238
        %5259 = vmatpush1.bf16.msra.mxu0 %v5237
        %5260 = vmatprep.subr.bf16.mxu0 %v5240
        %5261 = vmatpush1.bf16.msra.mxu0 %v5239
        %5262 = vmatprep.subr.bf16.mxu0 %v5256
        %5263 = vmatpush1.bf16.msra.mxu0 %v5253
        %5264 = vmatprep.subr.bf16.mxu0 0
        %5265 = vmatpush1.bf16.msra.mxu0 0
        %5266 = vmatprep.subr.bf16.mxu0 0
        %5267 = vmatpush1.bf16.msra.mxu0 0
        %5268 = vmatprep.subr.bf16.mxu0 0
        %5269 = vmatpush1.bf16.msra.mxu0 0
        %5270 = vmatprep.subr.bf16.mxu0 0
        %5271 = vmatpush1.bf16.msra.mxu0 0
        %5272 = vmatprep.subr.bf16.mxu0 0
        %5273 = vmatpush1.bf16.msra.mxu0 0
        %5274 = vmatprep.subr.bf16.mxu0 0
        %5275 = vmatpush1.bf16.msra.mxu0 0
        %5276 = vmatprep.subr.bf16.mxu0 0
        %5277 = vmatpush1.bf16.msra.mxu0 0
        %5278 = vmatprep.subr.bf16.mxu0 0
        %5279 = vmatpush1.bf16.msra.mxu0 0
        %5280 = vmatprep.subr.bf16.mxu0 0
        %5281 = vmatpush1.bf16.msra.mxu0 0
        %5282 = vmatprep.subr.bf16.mxu0 0
        %5283 = vmatpush1.bf16.msra.mxu0 0
        %5284 = vmatprep.subr.bf16.mxu0 0
        %5285 = vmatpush1.bf16.msra.mxu0 0
        %5286 = vmatprep.subr.bf16.mxu0 0
        %5287 = vmatpush1.bf16.msra.mxu0 0
        %5288 = vmatprep.subr.bf16.mxu0 0
        %5289 = vmatpush1.bf16.msra.mxu0 0
        %5290 = vmatprep.mubr.bf16.mxu0 0
        %5291 = vmatmul.mubr.bf16.gmra.mrb[0].mxu0 %v5249
        %v5292 = vpop.f32.mrb[0].mxu0
        %v5293 = vadd.f32 0.0, %v5292
        %v5294 = vpop.f32.mrb[0].mxu0
        %v5295 = vadd.f32 0.0, %v5294
        %v5296 = vpop.f32.mrb[0].mxu0
        %v5297 = vpop.f32.mrb[0].mxu0
        %5298 = vdwg.mxu0
        %5299 = vst [vmem:[%s203] sm:$0xff] %v5293
        %5300 = vst [vmem:[%s203 + $0x8] sm:$0xff] %v5295
        %s5301 = sand.u32 %s114, 1
        %s5302 = scalar_lea.sflag [#allocation5], %s5301
        %s5303 = sand.u32 %s114, 1
        %s5304 = smul.addr %s5303, 16
        %s5305 = scalar_lea.vmem [#allocation4], %s5304
        // Predicated region
        $region33: #{tpu_custom_call.1} parent=31 // pred_check
          %p5306 = pneg %p124
        $region34: #{tpu_custom_call.1} parent=31 // pred_check_branch
          %5308 = sbr.rel (%p5306) target = $region36
        $region35: #{tpu_custom_call.1} parent=31 // pred_region
          %s5309 = smul.u32 2, %s22
          %s5311 = ssub.s32 256, 256
          %5312 = vsyncadd %s5302, %s5311
          %s5313 = smul.addr %s21, 2
          %s5314 = sadd.s32 %s5309, %s5313
          %s5315 = smul.addr %s5314, 128
          %s5316 = scalar_lea.hbm %s3, %s5315
          %s5318 = sshll.u32 %s5305, 4
          %s5319 = int_to_ptr.vmem [resolvable:$true] %s5318
          %5321 = dma.vmem_to_hbm [thread:$0]  %s5319, 256, %s5316, %s5302
        $region36: #{tpu_custom_call.1} parent=31 // pred_fallthru
          _
      $region32: #{tpu_custom_call.1} parent=5 // pred_fallthru
        _
      %p5322 = scmp.le.s32.totalorder 2, %s12
      // Predicated region
      $region37: #{tpu_custom_call.1} parent=5 // pred_check
        %p5323 = pneg %p5322
      $region38: #{tpu_custom_call.1} parent=5 // pred_check_branch
        %5325 = sbr.rel (%p5323) target = $region40
      $region39: #{tpu_custom_call.1} parent=5 // pred_region
        %s5326 = ssub.s32 %s12, 2
        // Predicated region
        $region41: #{tpu_custom_call.1} parent=39 // pred_check
          %p5327 = pneg %p130
        $region42: #{tpu_custom_call.1} parent=39 // pred_check_branch
          %5329 = sbr.rel (%p5327) target = $region44
        $region43: #{tpu_custom_call.1} parent=39 // pred_region
          %s5330 = sand.u32 %s115, 1
          %s5331 = scalar_lea.sflag [#allocation5], %s5330
          %s5332 = sand.u32 %s115, 1
          %s5333 = smul.addr %s5332, 16
          %s5334 = scalar_lea.vmem [#allocation4], %s5333
          %5335 = dma.done %s5331, 256
        $region44: #{tpu_custom_call.1} parent=39 // pred_fallthru
          _
      $region40: #{tpu_custom_call.1} parent=5 // pred_fallthru
        _
    $region6: #{tpu_custom_call.1} parent=1 // loop_footer
      %s16 = sadd.s32 1, %s12
    $region7: #{tpu_custom_call.1} parent=1 // loop_footer_branch
      %11 = sbr.rel target = $region3
    $region8: #{tpu_custom_call.1} parent=1 // loop_exit
      _
    %5336 = vsyncpa [#allocation5], 1
    %s5337 = scalar_lea.sflag [#allocation5], 1
    %5338 = vsyncpa %s5337, 1

</llo_original>
